<compile_context>
chip_gen: v6e
topology: v6e:2x2x1
jax: 0.10.0
libtpu: 0.0.40
codegen_flags: <defaults>
</compile_context>

<pallas_src>
import math
import functools

import jax
import jax.numpy as jnp
from jax import lax
from jax.experimental import pallas as pl
from jax.experimental.pallas import tpu as pltpu


def _round_up(x, m):
    return ((x + m - 1) // m) * m


# ----------------------------------------------------------------------------
# Fused encoder kernel: all LSTM layers + final Linear, per (batch-block,
# time-chunk) grid point.  Layout inside the kernel is time-major.
#
# Scratch:
#   gin_scr (Tc*Bb, 4Hp) f32 : batched input-projection gates for the chunk
#   hseq_a/hseq_b (Tc*Bb, Hp) bf16 : ping-pong hidden-sequence buffers
#       (layer l writes buffer l%2; layer l+1 / final Linear read it)
# Carries:
#   h_n / c_n output blocks (constant-in-time index map) hold the (h, c)
#   state across time chunks; initialized from h0/c0 at the first chunk.
# ----------------------------------------------------------------------------
def _encoder_kernel(x_ref, wih0_ref, wihr_ref, whh_ref, bias_ref,
                    wlin_ref, blin_ref, h0_ref, c0_ref,
                    y_ref, hN_ref, cN_ref,
                    gin_scr, hseq_a, hseq_b,
                    *, num_layers, hidden_pad, out_pad, t_chunk, b_block,
                    seq_len, seq_len_padded):
    L, Hp, Op = num_layers, hidden_pad, out_pad
    Tc, Bb = t_chunk, b_block
    t_idx = pl.program_id(1)
    need_mask = seq_len_padded != seq_len

    # Initialize the cross-chunk (h, c) carries once per batch block.
    @pl.when(t_idx == 0)
    def _init():
        hN_ref[...] = h0_ref[...]
        cN_ref[...] = c0_ref[...]

    seq_bufs = (hseq_a, hseq_b)

    for l in range(L):
        # ------------------------------------------------------------------
        # 1) Input projection for ALL Tc steps of this layer in ONE GEMM
        #    (the input half of the LSTM has no time recurrence).  Bias is
        #    added here once per chunk (hoisted out of the time loop).
        # ------------------------------------------------------------------
        if l == 0:
            x_blk = x_ref[...]                                    # (Tc,Bb,Dp)
            xin = x_blk.reshape(Tc * Bb, x_blk.shape[-1])         # bf16
            w_in = wih0_ref[...]                                  # (Dp, 4Hp)
        else:
            xin = seq_bufs[(l - 1) % 2][...]                      # (Tc*Bb, Hp)
            w_in = wihr_ref[l - 1]                                # (Hp, 4Hp)
        gin_scr[...] = (jnp.dot(xin, w_in,
                                preferred_element_type=jnp.float32)
                        + bias_ref[l])                            # f32

        out_seq = seq_bufs[l % 2]

        # ------------------------------------------------------------------
        # 2) Sequential recurrence over the chunk: small recurrent GEMM +
        #    f32 gate math only.  (h, c) carried as fori_loop values in f32.
        # ------------------------------------------------------------------
        def step(s, carry):
            h, c = carry
            row = pl.multiple_of(s * Bb, 8)
            g = gin_scr[pl.ds(row, Bb), :] + jnp.dot(
                h.astype(jnp.bfloat16), whh_ref[l],
                preferred_element_type=jnp.float32)               # (Bb, 4Hp)
            i_g = jax.nn.sigmoid(g[:, 0 * Hp:1 * Hp])
            f_g = jax.nn.sigmoid(g[:, 1 * Hp:2 * Hp])
            g_g = jnp.tanh(g[:, 2 * Hp:3 * Hp])
            o_g = jax.nn.sigmoid(g[:, 3 * Hp:4 * Hp])
            c_new = f_g * c + i_g * g_g
            h_new = o_g * jnp.tanh(c_new)
            if need_mask:                  # padded tail steps keep old state
                valid = (t_idx * Tc + s) < seq_len
                c_new = jnp.where(valid, c_new, c)
                h_new = jnp.where(valid, h_new, h)
            out_seq[pl.ds(row, Bb), :] = h_new.astype(out_seq.dtype)
            return h_new, c_new

        h_fin, c_fin = lax.fori_loop(0, Tc, step,
                                     (hN_ref[l], cN_ref[l]), unroll=True)
        # One state write per layer per CHUNK (not per step).
        hN_ref[l] = h_fin
        cN_ref[l] = c_fin

    # ----------------------------------------------------------------------
    # 3) Final Linear batched over the whole chunk: one GEMM + one
    #    lane-dense unmasked full-block store.
    # ----------------------------------------------------------------------
    htop = seq_bufs[(L - 1) % 2][...]                             # (Tc*Bb, Hp)
    y = jnp.dot(htop, wlin_ref[...],
                preferred_element_type=jnp.float32) + blin_ref[...]
    y_ref[...] = y.reshape(Tc, Bb, Op)


# ----------------------------------------------------------------------------
# One-time weight packing: lane-padded, gate-blocked, bf16, W_ih / W_hh split.
# ----------------------------------------------------------------------------
def _pack_weights(params, input_size, hidden_size, output_size):
    L = len(params["lstm"])
    H = hidden_size
    Hp = _round_up(H, 128)
    Dp = _round_up(input_size, 128)
    Op = _round_up(output_size, 128)

    wih0 = jnp.zeros((Dp, 4 * Hp), jnp.float32)
    wihr = jnp.zeros((max(L - 1, 1), Hp, 4 * Hp), jnp.float32)
    whh = jnp.zeros((L, Hp, 4 * Hp), jnp.float32)
    bias = jnp.zeros((L, 1, 4 * Hp), jnp.float32)

    for l, p in enumerate(params["lstm"]):
        w_ih_t = p["w_ih"].T                 # (d_in, 4H), gate order i|f|g|o
        w_hh_t = p["w_hh"].T                 # (H, 4H)
        b = p["b_ih"] + p["b_hh"]
        d_in = w_ih_t.shape[0]
        for k in range(4):                   # PyTorch gate order i, f, g, o
            dst = slice(k * Hp, k * Hp + H)
            src = slice(k * H, (k + 1) * H)
            if l == 0:
                wih0 = wih0.at[0:d_in, dst].set(w_ih_t[:, src])
            else:
                wihr = wihr.at[l - 1, 0:d_in, dst].set(w_ih_t[:, src])
            whh = whh.at[l, 0:H, dst].set(w_hh_t[:, src])
            bias = bias.at[l, 0, dst].set(b[src])

    w_lin = jnp.zeros((Hp, Op), jnp.float32).at[0:H, 0:output_size].set(
        params["linear"]["w"].T)
    b_lin = jnp.zeros((1, Op), jnp.float32).at[0, 0:output_size].set(
        params["linear"]["b"])

    packed = dict(wih0=wih0.astype(jnp.bfloat16),
                  wihr=wihr.astype(jnp.bfloat16),
                  whh=whh.astype(jnp.bfloat16),
                  bias=bias,
                  w_lin=w_lin.astype(jnp.bfloat16),
                  b_lin=b_lin)
    dims = dict(H=H, Hp=Hp, Dp=Dp, O=output_size, Op=Op, L=L)
    return packed, dims


# ----------------------------------------------------------------------------
# Forward factory matching EncoderLayer.forward(xs, hid) -> (linear(h), hid)
# ----------------------------------------------------------------------------
def make_encoder_forward(params, input_size, hidden_size, output_size,
                         num_layers, max_time_chunk=16):
    packed, dims = _pack_weights(params, input_size, hidden_size, output_size)
    H, Hp, Dp, O, Op, L = (dims[k] for k in ("H", "Hp", "Dp", "O", "Op", "L"))
    assert L == num_layers

    @jax.jit
    def forward(xs, hid=None):
        """xs: (B, T, input_size) f32, batch_first like the PyTorch module."""
        B, T, D = xs.shape
        Bp = _round_up(B, 8)
        Bb = 8                               # one sublane tile per batch block
        Nb = Bp // Bb
        Tc = min(T, max_time_chunk)          # Bb*Tc = 128 at full chunks
        Tp = _round_up(T, Tc)                # padded tail chunk (masked)
        Nt = Tp // Tc

        # Time-major, padded, bf16 matmul operand (one host transpose total).
        x_tm = jnp.swapaxes(xs, 0, 1).astype(jnp.bfloat16)        # (T, B, D)
        x_p = jnp.zeros((Tp, Bp, Dp), jnp.bfloat16)
        x_p = x_p.at[:T, :B, :D].set(x_tm)

        if hid is None:
            h0 = jnp.zeros((L, Bp, Hp), jnp.float32)
            c0 = jnp.zeros((L, Bp, Hp), jnp.float32)
        else:
            h0_in, c0_in = hid
            h0 = jnp.zeros((L, Bp, Hp), jnp.float32).at[:, :B, :H].set(
                h0_in.astype(jnp.float32))
            c0 = jnp.zeros((L, Bp, Hp), jnp.float32).at[:, :B, :H].set(
                c0_in.astype(jnp.float32))

        kernel = functools.partial(
            _encoder_kernel, num_layers=L, hidden_pad=Hp, out_pad=Op,
            t_chunk=Tc, b_block=Bb, seq_len=T, seq_len_padded=Tp)

        grid_spec = pltpu.PrefetchScalarGridSpec(
            num_scalar_prefetch=0,
            grid=(Nb, Nt),                   # (batch-parallel, time-serial)
            in_specs=[
                pl.BlockSpec((Tc, Bb, Dp), lambda b, t: (t, b, 0)),    # x
                pl.BlockSpec((Dp, 4 * Hp), lambda b, t: (0, 0)),       # W_ih l0
                pl.BlockSpec((max(L - 1, 1), Hp, 4 * Hp),
                             lambda b, t: (0, 0, 0)),                  # W_ih l>0
                pl.BlockSpec((L, Hp, 4 * Hp), lambda b, t: (0, 0, 0)), # W_hh
                pl.BlockSpec((L, 1, 4 * Hp), lambda b, t: (0, 0, 0)),  # bias
                pl.BlockSpec((Hp, Op), lambda b, t: (0, 0)),           # W_lin
                pl.BlockSpec((1, Op), lambda b, t: (0, 0)),            # b_lin
                pl.BlockSpec((L, Bb, Hp), lambda b, t: (0, b, 0)),     # h0
                pl.BlockSpec((L, Bb, Hp), lambda b, t: (0, b, 0)),     # c0
            ],
            out_specs=[
                pl.BlockSpec((Tc, Bb, Op), lambda b, t: (t, b, 0)),    # y
                pl.BlockSpec((L, Bb, Hp), lambda b, t: (0, b, 0)),     # h_n
                pl.BlockSpec((L, Bb, Hp), lambda b, t: (0, b, 0)),     # c_n
            ],
            scratch_shapes=[
                pltpu.VMEM((Tc * Bb, 4 * Hp), jnp.float32),  # batched gates
                pltpu.VMEM((Tc * Bb, Hp), jnp.bfloat16),     # h seq (even l)
                pltpu.VMEM((Tc * Bb, Hp), jnp.bfloat16),     # h seq (odd l)
            ],
        )

        out_shapes = (
            jax.ShapeDtypeStruct((Tp, Bp, Op), jnp.float32),
            jax.ShapeDtypeStruct((L, Bp, Hp), jnp.float32),
            jax.ShapeDtypeStruct((L, Bp, Hp), jnp.float32),
        )

        y_p, hN_p, cN_p = pl.pallas_call(
            kernel,
            grid_spec=grid_spec,
            out_shape=out_shapes,
            compiler_params=pltpu.CompilerParams(
                dimension_semantics=("parallel", "arbitrary"),
                vmem_limit_bytes=48 * 1024 * 1024),
        )(x_p, packed["wih0"], packed["wihr"], packed["whh"], packed["bias"],
          packed["w_lin"], packed["b_lin"], h0, c0)

        y = jnp.swapaxes(y_p[:T, :B, :O], 0, 1)       # back to (B, T, O)
        h_n = hN_p[:, :B, :H]
        c_n = cN_p[:, :B, :H]
        return y, (h_n, c_n)

    return forward


# ----------------------------------------------------------------------------
# Parameter init (deterministic): PyTorch-style U(-1/sqrt(H), 1/sqrt(H)).
# ----------------------------------------------------------------------------
def init_params(key, input_size, output_size, hidden_size, num_layers):
    params = {"lstm": [], "linear": {}}
    stdv = 1.0 / math.sqrt(hidden_size)
    for layer in range(num_layers):
        d_in = input_size if layer == 0 else hidden_size
        key, k1, k2, k3, k4 = jax.random.split(key, 5)
        w_ih = jax.random.uniform(k1, (4 * hidden_size, d_in),
                                  minval=-stdv, maxval=stdv, dtype=jnp.float32)
        w_hh = jax.random.uniform(k2, (4 * hidden_size, hidden_size),
                                  minval=-stdv, maxval=stdv, dtype=jnp.float32)
        b_ih = jax.random.uniform(k3, (4 * hidden_size,),
                                  minval=-stdv, maxval=stdv, dtype=jnp.float32)
        b_hh = jax.random.uniform(k4, (4 * hidden_size,),
                                  minval=-stdv, maxval=stdv, dtype=jnp.float32)
        params["lstm"].append(dict(w_ih=w_ih, w_hh=w_hh, b_ih=b_ih, b_hh=b_hh))
    key, k1, k2 = jax.random.split(key, 3)
    params["linear"]["w"] = jax.random.uniform(
        k1, (output_size, hidden_size), minval=-stdv, maxval=stdv,
        dtype=jnp.float32)
    params["linear"]["b"] = jax.random.uniform(
        k2, (output_size,), minval=-stdv, maxval=stdv, dtype=jnp.float32)
    return params


# ----------------------------------------------------------------------------
# Pure-JAX f32 reference for the sanity check.
# ----------------------------------------------------------------------------
def _reference(xs, params, num_layers, hid=None):
    B, T, _ = xs.shape
    H = params["lstm"][0]["w_hh"].shape[1]
    if hid is None:
        h0 = jnp.zeros((num_layers, B, H))
        c0 = jnp.zeros((num_layers, B, H))
    else:
        h0, c0 = hid
    x = xs
    h_ns, c_ns = [], []
    for layer in range(num_layers):
        p = params["lstm"][layer]
        h, c = h0[layer], c0[layer]
        outs = []
        for t in range(T):
            g = (x[:, t] @ p["w_ih"].T + p["b_ih"]
                 + h @ p["w_hh"].T + p["b_hh"])
            i = jax.nn.sigmoid(g[:, :H]); f = jax.nn.sigmoid(g[:, H:2 * H])
            gg = jnp.tanh(g[:, 2 * H:3 * H]); o = jax.nn.sigmoid(g[:, 3 * H:])
            c = f * c + i * gg
            h = o * jnp.tanh(c)
            outs.append(h)
        x = jnp.stack(outs, axis=1)
        h_ns.append(h); c_ns.append(c)
    y = x @ params["linear"]["w"].T + params["linear"]["b"]
    return y, (jnp.stack(h_ns), jnp.stack(c_ns))


if __name__ == "__main__":
    B, T = 2, 8
    input_size, hidden_size, output_size, num_layers = 16, 32, 24, 2

    key = jax.random.PRNGKey(0)
    key, pkey, xkey = jax.random.split(key, 3)
    params = init_params(pkey, input_size, output_size, hidden_size,
                         num_layers)
    xs = jax.random.normal(xkey, (B, T, input_size), dtype=jnp.float32)

    fwd = make_encoder_forward(params, input_size, hidden_size, output_size,
                               num_layers)

    # hid = None path
    y, (h_n, c_n) = fwd(xs)
    jax.block_until_ready((y, h_n, c_n))

    y_ref, (h_ref, c_ref) = _reference(xs, params, num_layers)
    assert y.shape == (B, T, output_size)
    assert h_n.shape == (num_layers, B, hidden_size)
    assert c_n.shape == (num_layers, B, hidden_size)
    # bf16 MXU operands with f32 accumulation -> relaxed parity tolerance.
    tol = dict(atol=3e-2, rtol=3e-2)
    assert jnp.allclose(y, y_ref, **tol), float(jnp.max(jnp.abs(y - y_ref)))
    assert jnp.allclose(h_n, h_ref, **tol)
    assert jnp.allclose(c_n, c_ref, **tol)

    # explicit hid path (carry the state forward one more segment)
    y2, (h2, c2) = fwd(xs, (h_n, c_n))
    jax.block_until_ready((y2, h2, c2))
    y2_ref, (h2_ref, c2_ref) = _reference(xs, params, num_layers,
                                          (h_ref, c_ref))
    assert jnp.allclose(y2, y2_ref, **tol)
    assert jnp.allclose(h2, h2_ref, **tol)
    assert jnp.allclose(c2, c2_ref, **tol)

    print("KERNEL_OK")
</pallas_src>

<mosaic_0001>
module attributes {stable_mosaic.version = 11 : i64} {
  func.func @_encoder_kernel(%arg0: i32, %arg1: i32, %arg2: memref<8x8x128xbf16, #tpu.memory_space<vmem>>, %arg3: memref<128x512xbf16, #tpu.memory_space<vmem>>, %arg4: memref<1x128x512xbf16, #tpu.memory_space<vmem>>, %arg5: memref<2x128x512xbf16, #tpu.memory_space<vmem>>, %arg6: memref<2x1x512xf32, #tpu.memory_space<vmem>>, %arg7: memref<128x128xbf16, #tpu.memory_space<vmem>>, %arg8: memref<1x128xf32, #tpu.memory_space<vmem>>, %arg9: memref<2x8x128xf32, #tpu.memory_space<vmem>>, %arg10: memref<2x8x128xf32, #tpu.memory_space<vmem>>, %arg11: memref<8x8x128xf32, #tpu.memory_space<vmem>>, %arg12: memref<2x8x128xf32, #tpu.memory_space<vmem>>, %arg13: memref<2x8x128xf32, #tpu.memory_space<vmem>>, %arg14: memref<64x512xf32, #tpu.memory_space<vmem>>, %arg15: memref<64x128xbf16, #tpu.memory_space<vmem>>, %arg16: memref<64x128xbf16, #tpu.memory_space<vmem>>) attributes {dimension_semantics = [#tpu.dimension_semantics<parallel>, #tpu.dimension_semantics<arbitrary>], iteration_bounds = array<i64: 1, 1>, scalar_prefetch = 0 : i64, scratch_operands = 3 : i64, tpu.core_type = #tpu.core_type<tc>, window_params = [{transform_indices = @transform_0, window_bounds = array<i64: 8, 8, 128>}, {pipeline_mode = #tpu.pipeline_mode<synchronous>, transform_indices = @transform_1, window_bounds = array<i64: 128, 512>}, {pipeline_mode = #tpu.pipeline_mode<synchronous>, transform_indices = @transform_2, window_bounds = array<i64: 1, 128, 512>}, {pipeline_mode = #tpu.pipeline_mode<synchronous>, transform_indices = @transform_3, window_bounds = array<i64: 2, 128, 512>}, {pipeline_mode = #tpu.pipeline_mode<synchronous>, transform_indices = @transform_4, window_bounds = array<i64: 2, 1, 512>}, {pipeline_mode = #tpu.pipeline_mode<synchronous>, transform_indices = @transform_5, window_bounds = array<i64: 128, 128>}, {pipeline_mode = #tpu.pipeline_mode<synchronous>, transform_indices = @transform_6, window_bounds = array<i64: 1, 128>}, {transform_indices = @transform_7, window_bounds = array<i64: 2, 8, 128>}, {transform_indices = @transform_8, window_bounds = array<i64: 2, 8, 128>}, {transform_indices = @transform_9, window_bounds = array<i64: 8, 8, 128>}, {transform_indices = @transform_10, window_bounds = array<i64: 2, 8, 128>}, {transform_indices = @transform_11, window_bounds = array<i64: 2, 8, 128>}]} {
    %c0_i32 = arith.constant 0 : i32
    %0 = arith.cmpi eq, %arg1, %c0_i32 : i32
    %1 = arith.extui %0 : i1 to i32
    %c0_i32_0 = arith.constant 0 : i32
    %2 = arith.cmpi ne, %1, %c0_i32_0 : i32
    scf.if %2 {
      %c0_224 = arith.constant 0 : index
      %c0_225 = arith.constant 0 : index
      %c0_226 = arith.constant 0 : index
      %641 = vector.load %arg9[%c0_224, %c0_225, %c0_226] : memref<2x8x128xf32, #tpu.memory_space<vmem>>, vector<2x8x128xf32>
      %c0_227 = arith.constant 0 : index
      %c0_228 = arith.constant 0 : index
      %c0_229 = arith.constant 0 : index
      %642 = vector.load %arg12[%c0_227, %c0_228, %c0_229] : memref<2x8x128xf32, #tpu.memory_space<vmem>>, vector<2x8x128xf32>
      tpu.vector_store %arg12[%c0_227, %c0_228, %c0_229], %641 {strides = array<i32>} : memref<2x8x128xf32, #tpu.memory_space<vmem>>, vector<2x8x128xf32>,
      %c0_230 = arith.constant 0 : index
      %c0_231 = arith.constant 0 : index
      %c0_232 = arith.constant 0 : index
      %643 = vector.load %arg10[%c0_230, %c0_231, %c0_232] : memref<2x8x128xf32, #tpu.memory_space<vmem>>, vector<2x8x128xf32>
      %c0_233 = arith.constant 0 : index
      %c0_234 = arith.constant 0 : index
      %c0_235 = arith.constant 0 : index
      %644 = vector.load %arg13[%c0_233, %c0_234, %c0_235] : memref<2x8x128xf32, #tpu.memory_space<vmem>>, vector<2x8x128xf32>
      tpu.vector_store %arg13[%c0_233, %c0_234, %c0_235], %643 {strides = array<i32>} : memref<2x8x128xf32, #tpu.memory_space<vmem>>, vector<2x8x128xf32>,
    } else {
    }
    %c0 = arith.constant 0 : index
    %c0_1 = arith.constant 0 : index
    %c0_2 = arith.constant 0 : index
    %3 = vector.load %arg2[%c0, %c0_1, %c0_2] : memref<8x8x128xbf16, #tpu.memory_space<vmem>>, vector<8x8x128xbf16>
    %4 = vector.shape_cast %3 : vector<8x8x128xbf16> to vector<64x128xbf16>
    %c0_3 = arith.constant 0 : index
    %c0_4 = arith.constant 0 : index
    %5 = vector.load %arg3[%c0_3, %c0_4] : memref<128x512xbf16, #tpu.memory_space<vmem>>, vector<128x512xbf16>
    %cst = arith.constant dense<0.000000e+00> : vector<64x512xf32>
    %6 = tpu.matmul %4, %5, %cst {dimension_numbers = #tpu.dot_dimension_numbers<[1], [0], [0], [1], [0, 0, 1, 1], [], []>} : vector<64x128xbf16>, vector<128x512xbf16>, vector<64x512xf32> -> vector<64x512xf32>
    %c0_5 = arith.constant 0 : index
    %c0_6 = arith.constant 0 : index
    %c0_7 = arith.constant 0 : index
    %7 = vector.load %arg6[%c0_5, %c0_6, %c0_7] : memref<2x1x512xf32, #tpu.memory_space<vmem>>, vector<1x1x512xf32>
    %8 = vector.shape_cast %7 : vector<1x1x512xf32> to vector<1x512xf32>
    %9 = vector.broadcast %8 : vector<1x512xf32> to vector<64x512xf32>
    %10 = arith.addf %6, %9 : vector<64x512xf32>
    %c0_8 = arith.constant 0 : index
    %c0_9 = arith.constant 0 : index
    %11 = vector.load %arg14[%c0_8, %c0_9] : memref<64x512xf32, #tpu.memory_space<vmem>>, vector<64x512xf32>
    tpu.vector_store %arg14[%c0_8, %c0_9], %10 {strides = array<i32>} : memref<64x512xf32, #tpu.memory_space<vmem>>, vector<64x512xf32>,
    %c0_10 = arith.constant 0 : index
    %c0_11 = arith.constant 0 : index
    %c0_12 = arith.constant 0 : index
    %12 = vector.load %arg12[%c0_10, %c0_11, %c0_12] : memref<2x8x128xf32, #tpu.memory_space<vmem>>, vector<1x8x128xf32>
    %13 = vector.shape_cast %12 : vector<1x8x128xf32> to vector<8x128xf32>
    %c0_13 = arith.constant 0 : index
    %c0_14 = arith.constant 0 : index
    %c0_15 = arith.constant 0 : index
    %14 = vector.load %arg13[%c0_13, %c0_14, %c0_15] : memref<2x8x128xf32, #tpu.memory_space<vmem>>, vector<1x8x128xf32>
    %15 = vector.shape_cast %14 : vector<1x8x128xf32> to vector<8x128xf32>
    %c0_i32_16 = arith.constant 0 : i32
    %c8_i32 = arith.constant 8 : i32
    %16 = arith.muli %c0_i32_16, %c8_i32 : i32
    %17 = tpu.assume_multiple %16, 8 : i32
    %18 = arith.index_cast %17 : i32 to index
    %c0_17 = arith.constant 0 : index
    %19 = vector.load %arg14[%18, %c0_17] : memref<64x512xf32, #tpu.memory_space<vmem>>, vector<8x512xf32>
    %20 = arith.truncf %13 : vector<8x128xf32> to vector<8x128xbf16>
    %c0_18 = arith.constant 0 : index
    %c0_19 = arith.constant 0 : index
    %c0_20 = arith.constant 0 : index
    %21 = vector.load %arg5[%c0_18, %c0_19, %c0_20] : memref<2x128x512xbf16, #tpu.memory_space<vmem>>, vector<1x128x512xbf16>
    %22 = vector.shape_cast %21 : vector<1x128x512xbf16> to vector<128x512xbf16>
    %cst_21 = arith.constant dense<0.000000e+00> : vector<8x512xf32>
    %23 = tpu.matmul %20, %22, %cst_21 {dimension_numbers = #tpu.dot_dimension_numbers<[1], [0], [0], [1], [0, 0, 1, 1], [], []>} : vector<8x128xbf16>, vector<128x512xbf16>, vector<8x512xf32> -> vector<8x512xf32>
    %24 = arith.addf %19, %23 : vector<8x512xf32>
    %25 = vector.extract_strided_slice %24 {offsets = [0, 0], sizes = [8, 128], strides = [1, 1]} : vector<8x512xf32> to vector<8x128xf32>
    %26 = arith.negf %25 : vector<8x128xf32>
    %27 = math.exp %26 : vector<8x128xf32>
    %cst_22 = arith.constant 1.000000e+00 : f32
    %28 = vector.broadcast %cst_22 : f32 to vector<8x128xf32>
    %29 = arith.addf %28, %27 : vector<8x128xf32>
    %30 = arith.divf %28, %29 : vector<8x128xf32>
    %31 = vector.extract_strided_slice %24 {offsets = [0, 128], sizes = [8, 128], strides = [1, 1]} : vector<8x512xf32> to vector<8x128xf32>
    %32 = arith.negf %31 : vector<8x128xf32>
    %33 = math.exp %32 : vector<8x128xf32>
    %cst_23 = arith.constant 1.000000e+00 : f32
    %34 = vector.broadcast %cst_23 : f32 to vector<8x128xf32>
    %35 = arith.addf %34, %33 : vector<8x128xf32>
    %36 = arith.divf %34, %35 : vector<8x128xf32>
    %37 = vector.extract_strided_slice %24 {offsets = [0, 256], sizes = [8, 128], strides = [1, 1]} : vector<8x512xf32> to vector<8x128xf32>
    %38 = math.tanh %37 : vector<8x128xf32>
    %39 = vector.extract_strided_slice %24 {offsets = [0, 384], sizes = [8, 128], strides = [1, 1]} : vector<8x512xf32> to vector<8x128xf32>
    %40 = arith.negf %39 : vector<8x128xf32>
    %41 = math.exp %40 : vector<8x128xf32>
    %cst_24 = arith.constant 1.000000e+00 : f32
    %42 = vector.broadcast %cst_24 : f32 to vector<8x128xf32>
    %43 = arith.addf %42, %41 : vector<8x128xf32>
    %44 = arith.divf %42, %43 : vector<8x128xf32>
    %45 = arith.mulf %36, %15 : vector<8x128xf32>
    %46 = arith.mulf %30, %38 : vector<8x128xf32>
    %47 = arith.addf %45, %46 : vector<8x128xf32>
    %48 = math.tanh %47 : vector<8x128xf32>
    %49 = arith.mulf %44, %48 : vector<8x128xf32>
    %50 = arith.truncf %49 : vector<8x128xf32> to vector<8x128xbf16>
    %51 = arith.index_cast %17 : i32 to index
    %c0_25 = arith.constant 0 : index
    %52 = vector.load %arg15[%51, %c0_25] : memref<64x128xbf16, #tpu.memory_space<vmem>>, vector<8x128xbf16>
    tpu.vector_store %arg15[%51, %c0_25], %50 {strides = array<i32>} : memref<64x128xbf16, #tpu.memory_space<vmem>>, vector<8x128xbf16>,
    %c1_i32 = arith.constant 1 : i32
    %c8_i32_26 = arith.constant 8 : i32
    %53 = arith.muli %c1_i32, %c8_i32_26 : i32
    %54 = tpu.assume_multiple %53, 8 : i32
    %55 = arith.index_cast %54 : i32 to index
    %c0_27 = arith.constant 0 : index
    %56 = vector.load %arg14[%55, %c0_27] : memref<64x512xf32, #tpu.memory_space<vmem>>, vector<8x512xf32>
    %57 = arith.truncf %49 : vector<8x128xf32> to vector<8x128xbf16>
    %c0_28 = arith.constant 0 : index
    %c0_29 = arith.constant 0 : index
    %c0_30 = arith.constant 0 : index
    %58 = vector.load %arg5[%c0_28, %c0_29, %c0_30] : memref<2x128x512xbf16, #tpu.memory_space<vmem>>, vector<1x128x512xbf16>
    %59 = vector.shape_cast %58 : vector<1x128x512xbf16> to vector<128x512xbf16>
    %cst_31 = arith.constant dense<0.000000e+00> : vector<8x512xf32>
    %60 = tpu.matmul %57, %59, %cst_31 {dimension_numbers = #tpu.dot_dimension_numbers<[1], [0], [0], [1], [0, 0, 1, 1], [], []>} : vector<8x128xbf16>, vector<128x512xbf16>, vector<8x512xf32> -> vector<8x512xf32>
    %61 = arith.addf %56, %60 : vector<8x512xf32>
    %62 = vector.extract_strided_slice %61 {offsets = [0, 0], sizes = [8, 128], strides = [1, 1]} : vector<8x512xf32> to vector<8x128xf32>
    %63 = arith.negf %62 : vector<8x128xf32>
    %64 = math.exp %63 : vector<8x128xf32>
    %cst_32 = arith.constant 1.000000e+00 : f32
    %65 = vector.broadcast %cst_32 : f32 to vector<8x128xf32>
    %66 = arith.addf %65, %64 : vector<8x128xf32>
    %67 = arith.divf %65, %66 : vector<8x128xf32>
    %68 = vector.extract_strided_slice %61 {offsets = [0, 128], sizes = [8, 128], strides = [1, 1]} : vector<8x512xf32> to vector<8x128xf32>
    %69 = arith.negf %68 : vector<8x128xf32>
    %70 = math.exp %69 : vector<8x128xf32>
    %cst_33 = arith.constant 1.000000e+00 : f32
    %71 = vector.broadcast %cst_33 : f32 to vector<8x128xf32>
    %72 = arith.addf %71, %70 : vector<8x128xf32>
    %73 = arith.divf %71, %72 : vector<8x128xf32>
    %74 = vector.extract_strided_slice %61 {offsets = [0, 256], sizes = [8, 128], strides = [1, 1]} : vector<8x512xf32> to vector<8x128xf32>
    %75 = math.tanh %74 : vector<8x128xf32>
    %76 = vector.extract_strided_slice %61 {offsets = [0, 384], sizes = [8, 128], strides = [1, 1]} : vector<8x512xf32> to vector<8x128xf32>
    %77 = arith.negf %76 : vector<8x128xf32>
    %78 = math.exp %77 : vector<8x128xf32>
    %cst_34 = arith.constant 1.000000e+00 : f32
    %79 = vector.broadcast %cst_34 : f32 to vector<8x128xf32>
    %80 = arith.addf %79, %78 : vector<8x128xf32>
    %81 = arith.divf %79, %80 : vector<8x128xf32>
    %82 = arith.mulf %73, %47 : vector<8x128xf32>
    %83 = arith.mulf %67, %75 : vector<8x128xf32>
    %84 = arith.addf %82, %83 : vector<8x128xf32>
    %85 = math.tanh %84 : vector<8x128xf32>
    %86 = arith.mulf %81, %85 : vector<8x128xf32>
    %87 = arith.truncf %86 : vector<8x128xf32> to vector<8x128xbf16>
    %88 = arith.index_cast %54 : i32 to index
    %c0_35 = arith.constant 0 : index
    %89 = vector.load %arg15[%88, %c0_35] : memref<64x128xbf16, #tpu.memory_space<vmem>>, vector<8x128xbf16>
    tpu.vector_store %arg15[%88, %c0_35], %87 {strides = array<i32>} : memref<64x128xbf16, #tpu.memory_space<vmem>>, vector<8x128xbf16>,
    %c2_i32 = arith.constant 2 : i32
    %c8_i32_36 = arith.constant 8 : i32
    %90 = arith.muli %c2_i32, %c8_i32_36 : i32
    %91 = tpu.assume_multiple %90, 8 : i32
    %92 = arith.index_cast %91 : i32 to index
    %c0_37 = arith.constant 0 : index
    %93 = vector.load %arg14[%92, %c0_37] : memref<64x512xf32, #tpu.memory_space<vmem>>, vector<8x512xf32>
    %94 = arith.truncf %86 : vector<8x128xf32> to vector<8x128xbf16>
    %c0_38 = arith.constant 0 : index
    %c0_39 = arith.constant 0 : index
    %c0_40 = arith.constant 0 : index
    %95 = vector.load %arg5[%c0_38, %c0_39, %c0_40] : memref<2x128x512xbf16, #tpu.memory_space<vmem>>, vector<1x128x512xbf16>
    %96 = vector.shape_cast %95 : vector<1x128x512xbf16> to vector<128x512xbf16>
    %cst_41 = arith.constant dense<0.000000e+00> : vector<8x512xf32>
    %97 = tpu.matmul %94, %96, %cst_41 {dimension_numbers = #tpu.dot_dimension_numbers<[1], [0], [0], [1], [0, 0, 1, 1], [], []>} : vector<8x128xbf16>, vector<128x512xbf16>, vector<8x512xf32> -> vector<8x512xf32>
    %98 = arith.addf %93, %97 : vector<8x512xf32>
    %99 = vector.extract_strided_slice %98 {offsets = [0, 0], sizes = [8, 128], strides = [1, 1]} : vector<8x512xf32> to vector<8x128xf32>
    %100 = arith.negf %99 : vector<8x128xf32>
    %101 = math.exp %100 : vector<8x128xf32>
    %cst_42 = arith.constant 1.000000e+00 : f32
    %102 = vector.broadcast %cst_42 : f32 to vector<8x128xf32>
    %103 = arith.addf %102, %101 : vector<8x128xf32>
    %104 = arith.divf %102, %103 : vector<8x128xf32>
    %105 = vector.extract_strided_slice %98 {offsets = [0, 128], sizes = [8, 128], strides = [1, 1]} : vector<8x512xf32> to vector<8x128xf32>
    %106 = arith.negf %105 : vector<8x128xf32>
    %107 = math.exp %106 : vector<8x128xf32>
    %cst_43 = arith.constant 1.000000e+00 : f32
    %108 = vector.broadcast %cst_43 : f32 to vector<8x128xf32>
    %109 = arith.addf %108, %107 : vector<8x128xf32>
    %110 = arith.divf %108, %109 : vector<8x128xf32>
    %111 = vector.extract_strided_slice %98 {offsets = [0, 256], sizes = [8, 128], strides = [1, 1]} : vector<8x512xf32> to vector<8x128xf32>
    %112 = math.tanh %111 : vector<8x128xf32>
    %113 = vector.extract_strided_slice %98 {offsets = [0, 384], sizes = [8, 128], strides = [1, 1]} : vector<8x512xf32> to vector<8x128xf32>
    %114 = arith.negf %113 : vector<8x128xf32>
    %115 = math.exp %114 : vector<8x128xf32>
    %cst_44 = arith.constant 1.000000e+00 : f32
    %116 = vector.broadcast %cst_44 : f32 to vector<8x128xf32>
    %117 = arith.addf %116, %115 : vector<8x128xf32>
    %118 = arith.divf %116, %117 : vector<8x128xf32>
    %119 = arith.mulf %110, %84 : vector<8x128xf32>
    %120 = arith.mulf %104, %112 : vector<8x128xf32>
    %121 = arith.addf %119, %120 : vector<8x128xf32>
    %122 = math.tanh %121 : vector<8x128xf32>
    %123 = arith.mulf %118, %122 : vector<8x128xf32>
    %124 = arith.truncf %123 : vector<8x128xf32> to vector<8x128xbf16>
    %125 = arith.index_cast %91 : i32 to index
    %c0_45 = arith.constant 0 : index
    %126 = vector.load %arg15[%125, %c0_45] : memref<64x128xbf16, #tpu.memory_space<vmem>>, vector<8x128xbf16>
    tpu.vector_store %arg15[%125, %c0_45], %124 {strides = array<i32>} : memref<64x128xbf16, #tpu.memory_space<vmem>>, vector<8x128xbf16>,
    %c3_i32 = arith.constant 3 : i32
    %c8_i32_46 = arith.constant 8 : i32
    %127 = arith.muli %c3_i32, %c8_i32_46 : i32
    %128 = tpu.assume_multiple %127, 8 : i32
    %129 = arith.index_cast %128 : i32 to index
    %c0_47 = arith.constant 0 : index
    %130 = vector.load %arg14[%129, %c0_47] : memref<64x512xf32, #tpu.memory_space<vmem>>, vector<8x512xf32>
    %131 = arith.truncf %123 : vector<8x128xf32> to vector<8x128xbf16>
    %c0_48 = arith.constant 0 : index
    %c0_49 = arith.constant 0 : index
    %c0_50 = arith.constant 0 : index
    %132 = vector.load %arg5[%c0_48, %c0_49, %c0_50] : memref<2x128x512xbf16, #tpu.memory_space<vmem>>, vector<1x128x512xbf16>
    %133 = vector.shape_cast %132 : vector<1x128x512xbf16> to vector<128x512xbf16>
    %cst_51 = arith.constant dense<0.000000e+00> : vector<8x512xf32>
    %134 = tpu.matmul %131, %133, %cst_51 {dimension_numbers = #tpu.dot_dimension_numbers<[1], [0], [0], [1], [0, 0, 1, 1], [], []>} : vector<8x128xbf16>, vector<128x512xbf16>, vector<8x512xf32> -> vector<8x512xf32>
    %135 = arith.addf %130, %134 : vector<8x512xf32>
    %136 = vector.extract_strided_slice %135 {offsets = [0, 0], sizes = [8, 128], strides = [1, 1]} : vector<8x512xf32> to vector<8x128xf32>
    %137 = arith.negf %136 : vector<8x128xf32>
    %138 = math.exp %137 : vector<8x128xf32>
    %cst_52 = arith.constant 1.000000e+00 : f32
    %139 = vector.broadcast %cst_52 : f32 to vector<8x128xf32>
    %140 = arith.addf %139, %138 : vector<8x128xf32>
    %141 = arith.divf %139, %140 : vector<8x128xf32>
    %142 = vector.extract_strided_slice %135 {offsets = [0, 128], sizes = [8, 128], strides = [1, 1]} : vector<8x512xf32> to vector<8x128xf32>
    %143 = arith.negf %142 : vector<8x128xf32>
    %144 = math.exp %143 : vector<8x128xf32>
    %cst_53 = arith.constant 1.000000e+00 : f32
    %145 = vector.broadcast %cst_53 : f32 to vector<8x128xf32>
    %146 = arith.addf %145, %144 : vector<8x128xf32>
    %147 = arith.divf %145, %146 : vector<8x128xf32>
    %148 = vector.extract_strided_slice %135 {offsets = [0, 256], sizes = [8, 128], strides = [1, 1]} : vector<8x512xf32> to vector<8x128xf32>
    %149 = math.tanh %148 : vector<8x128xf32>
    %150 = vector.extract_strided_slice %135 {offsets = [0, 384], sizes = [8, 128], strides = [1, 1]} : vector<8x512xf32> to vector<8x128xf32>
    %151 = arith.negf %150 : vector<8x128xf32>
    %152 = math.exp %151 : vector<8x128xf32>
    %cst_54 = arith.constant 1.000000e+00 : f32
    %153 = vector.broadcast %cst_54 : f32 to vector<8x128xf32>
    %154 = arith.addf %153, %152 : vector<8x128xf32>
    %155 = arith.divf %153, %154 : vector<8x128xf32>
    %156 = arith.mulf %147, %121 : vector<8x128xf32>
    %157 = arith.mulf %141, %149 : vector<8x128xf32>
    %158 = arith.addf %156, %157 : vector<8x128xf32>
    %159 = math.tanh %158 : vector<8x128xf32>
    %160 = arith.mulf %155, %159 : vector<8x128xf32>
    %161 = arith.truncf %160 : vector<8x128xf32> to vector<8x128xbf16>
    %162 = arith.index_cast %128 : i32 to index
    %c0_55 = arith.constant 0 : index
    %163 = vector.load %arg15[%162, %c0_55] : memref<64x128xbf16, #tpu.memory_space<vmem>>, vector<8x128xbf16>
    tpu.vector_store %arg15[%162, %c0_55], %161 {strides = array<i32>} : memref<64x128xbf16, #tpu.memory_space<vmem>>, vector<8x128xbf16>,
    %c4_i32 = arith.constant 4 : i32
    %c8_i32_56 = arith.constant 8 : i32
    %164 = arith.muli %c4_i32, %c8_i32_56 : i32
    %165 = tpu.assume_multiple %164, 8 : i32
    %166 = arith.index_cast %165 : i32 to index
    %c0_57 = arith.constant 0 : index
    %167 = vector.load %arg14[%166, %c0_57] : memref<64x512xf32, #tpu.memory_space<vmem>>, vector<8x512xf32>
    %168 = arith.truncf %160 : vector<8x128xf32> to vector<8x128xbf16>
    %c0_58 = arith.constant 0 : index
    %c0_59 = arith.constant 0 : index
    %c0_60 = arith.constant 0 : index
    %169 = vector.load %arg5[%c0_58, %c0_59, %c0_60] : memref<2x128x512xbf16, #tpu.memory_space<vmem>>, vector<1x128x512xbf16>
    %170 = vector.shape_cast %169 : vector<1x128x512xbf16> to vector<128x512xbf16>
    %cst_61 = arith.constant dense<0.000000e+00> : vector<8x512xf32>
    %171 = tpu.matmul %168, %170, %cst_61 {dimension_numbers = #tpu.dot_dimension_numbers<[1], [0], [0], [1], [0, 0, 1, 1], [], []>} : vector<8x128xbf16>, vector<128x512xbf16>, vector<8x512xf32> -> vector<8x512xf32>
    %172 = arith.addf %167, %171 : vector<8x512xf32>
    %173 = vector.extract_strided_slice %172 {offsets = [0, 0], sizes = [8, 128], strides = [1, 1]} : vector<8x512xf32> to vector<8x128xf32>
    %174 = arith.negf %173 : vector<8x128xf32>
    %175 = math.exp %174 : vector<8x128xf32>
    %cst_62 = arith.constant 1.000000e+00 : f32
    %176 = vector.broadcast %cst_62 : f32 to vector<8x128xf32>
    %177 = arith.addf %176, %175 : vector<8x128xf32>
    %178 = arith.divf %176, %177 : vector<8x128xf32>
    %179 = vector.extract_strided_slice %172 {offsets = [0, 128], sizes = [8, 128], strides = [1, 1]} : vector<8x512xf32> to vector<8x128xf32>
    %180 = arith.negf %179 : vector<8x128xf32>
    %181 = math.exp %180 : vector<8x128xf32>
    %cst_63 = arith.constant 1.000000e+00 : f32
    %182 = vector.broadcast %cst_63 : f32 to vector<8x128xf32>
    %183 = arith.addf %182, %181 : vector<8x128xf32>
    %184 = arith.divf %182, %183 : vector<8x128xf32>
    %185 = vector.extract_strided_slice %172 {offsets = [0, 256], sizes = [8, 128], strides = [1, 1]} : vector<8x512xf32> to vector<8x128xf32>
    %186 = math.tanh %185 : vector<8x128xf32>
    %187 = vector.extract_strided_slice %172 {offsets = [0, 384], sizes = [8, 128], strides = [1, 1]} : vector<8x512xf32> to vector<8x128xf32>
    %188 = arith.negf %187 : vector<8x128xf32>
    %189 = math.exp %188 : vector<8x128xf32>
    %cst_64 = arith.constant 1.000000e+00 : f32
    %190 = vector.broadcast %cst_64 : f32 to vector<8x128xf32>
    %191 = arith.addf %190, %189 : vector<8x128xf32>
    %192 = arith.divf %190, %191 : vector<8x128xf32>
    %193 = arith.mulf %184, %158 : vector<8x128xf32>
    %194 = arith.mulf %178, %186 : vector<8x128xf32>
    %195 = arith.addf %193, %194 : vector<8x128xf32>
    %196 = math.tanh %195 : vector<8x128xf32>
    %197 = arith.mulf %192, %196 : vector<8x128xf32>
    %198 = arith.truncf %197 : vector<8x128xf32> to vector<8x128xbf16>
    %199 = arith.index_cast %165 : i32 to index
    %c0_65 = arith.constant 0 : index
    %200 = vector.load %arg15[%199, %c0_65] : memref<64x128xbf16, #tpu.memory_space<vmem>>, vector<8x128xbf16>
    tpu.vector_store %arg15[%199, %c0_65], %198 {strides = array<i32>} : memref<64x128xbf16, #tpu.memory_space<vmem>>, vector<8x128xbf16>,
    %c5_i32 = arith.constant 5 : i32
    %c8_i32_66 = arith.constant 8 : i32
    %201 = arith.muli %c5_i32, %c8_i32_66 : i32
    %202 = tpu.assume_multiple %201, 8 : i32
    %203 = arith.index_cast %202 : i32 to index
    %c0_67 = arith.constant 0 : index
    %204 = vector.load %arg14[%203, %c0_67] : memref<64x512xf32, #tpu.memory_space<vmem>>, vector<8x512xf32>
    %205 = arith.truncf %197 : vector<8x128xf32> to vector<8x128xbf16>
    %c0_68 = arith.constant 0 : index
    %c0_69 = arith.constant 0 : index
    %c0_70 = arith.constant 0 : index
    %206 = vector.load %arg5[%c0_68, %c0_69, %c0_70] : memref<2x128x512xbf16, #tpu.memory_space<vmem>>, vector<1x128x512xbf16>
    %207 = vector.shape_cast %206 : vector<1x128x512xbf16> to vector<128x512xbf16>
    %cst_71 = arith.constant dense<0.000000e+00> : vector<8x512xf32>
    %208 = tpu.matmul %205, %207, %cst_71 {dimension_numbers = #tpu.dot_dimension_numbers<[1], [0], [0], [1], [0, 0, 1, 1], [], []>} : vector<8x128xbf16>, vector<128x512xbf16>, vector<8x512xf32> -> vector<8x512xf32>
    %209 = arith.addf %204, %208 : vector<8x512xf32>
    %210 = vector.extract_strided_slice %209 {offsets = [0, 0], sizes = [8, 128], strides = [1, 1]} : vector<8x512xf32> to vector<8x128xf32>
    %211 = arith.negf %210 : vector<8x128xf32>
    %212 = math.exp %211 : vector<8x128xf32>
    %cst_72 = arith.constant 1.000000e+00 : f32
    %213 = vector.broadcast %cst_72 : f32 to vector<8x128xf32>
    %214 = arith.addf %213, %212 : vector<8x128xf32>
    %215 = arith.divf %213, %214 : vector<8x128xf32>
    %216 = vector.extract_strided_slice %209 {offsets = [0, 128], sizes = [8, 128], strides = [1, 1]} : vector<8x512xf32> to vector<8x128xf32>
    %217 = arith.negf %216 : vector<8x128xf32>
    %218 = math.exp %217 : vector<8x128xf32>
    %cst_73 = arith.constant 1.000000e+00 : f32
    %219 = vector.broadcast %cst_73 : f32 to vector<8x128xf32>
    %220 = arith.addf %219, %218 : vector<8x128xf32>
    %221 = arith.divf %219, %220 : vector<8x128xf32>
    %222 = vector.extract_strided_slice %209 {offsets = [0, 256], sizes = [8, 128], strides = [1, 1]} : vector<8x512xf32> to vector<8x128xf32>
    %223 = math.tanh %222 : vector<8x128xf32>
    %224 = vector.extract_strided_slice %209 {offsets = [0, 384], sizes = [8, 128], strides = [1, 1]} : vector<8x512xf32> to vector<8x128xf32>
    %225 = arith.negf %224 : vector<8x128xf32>
    %226 = math.exp %225 : vector<8x128xf32>
    %cst_74 = arith.constant 1.000000e+00 : f32
    %227 = vector.broadcast %cst_74 : f32 to vector<8x128xf32>
    %228 = arith.addf %227, %226 : vector<8x128xf32>
    %229 = arith.divf %227, %228 : vector<8x128xf32>
    %230 = arith.mulf %221, %195 : vector<8x128xf32>
    %231 = arith.mulf %215, %223 : vector<8x128xf32>
    %232 = arith.addf %230, %231 : vector<8x128xf32>
    %233 = math.tanh %232 : vector<8x128xf32>
    %234 = arith.mulf %229, %233 : vector<8x128xf32>
    %235 = arith.truncf %234 : vector<8x128xf32> to vector<8x128xbf16>
    %236 = arith.index_cast %202 : i32 to index
    %c0_75 = arith.constant 0 : index
    %237 = vector.load %arg15[%236, %c0_75] : memref<64x128xbf16, #tpu.memory_space<vmem>>, vector<8x128xbf16>
    tpu.vector_store %arg15[%236, %c0_75], %235 {strides = array<i32>} : memref<64x128xbf16, #tpu.memory_space<vmem>>, vector<8x128xbf16>,
    %c6_i32 = arith.constant 6 : i32
    %c8_i32_76 = arith.constant 8 : i32
    %238 = arith.muli %c6_i32, %c8_i32_76 : i32
    %239 = tpu.assume_multiple %238, 8 : i32
    %240 = arith.index_cast %239 : i32 to index
    %c0_77 = arith.constant 0 : index
    %241 = vector.load %arg14[%240, %c0_77] : memref<64x512xf32, #tpu.memory_space<vmem>>, vector<8x512xf32>
    %242 = arith.truncf %234 : vector<8x128xf32> to vector<8x128xbf16>
    %c0_78 = arith.constant 0 : index
    %c0_79 = arith.constant 0 : index
    %c0_80 = arith.constant 0 : index
    %243 = vector.load %arg5[%c0_78, %c0_79, %c0_80] : memref<2x128x512xbf16, #tpu.memory_space<vmem>>, vector<1x128x512xbf16>
    %244 = vector.shape_cast %243 : vector<1x128x512xbf16> to vector<128x512xbf16>
    %cst_81 = arith.constant dense<0.000000e+00> : vector<8x512xf32>
    %245 = tpu.matmul %242, %244, %cst_81 {dimension_numbers = #tpu.dot_dimension_numbers<[1], [0], [0], [1], [0, 0, 1, 1], [], []>} : vector<8x128xbf16>, vector<128x512xbf16>, vector<8x512xf32> -> vector<8x512xf32>
    %246 = arith.addf %241, %245 : vector<8x512xf32>
    %247 = vector.extract_strided_slice %246 {offsets = [0, 0], sizes = [8, 128], strides = [1, 1]} : vector<8x512xf32> to vector<8x128xf32>
    %248 = arith.negf %247 : vector<8x128xf32>
    %249 = math.exp %248 : vector<8x128xf32>
    %cst_82 = arith.constant 1.000000e+00 : f32
    %250 = vector.broadcast %cst_82 : f32 to vector<8x128xf32>
    %251 = arith.addf %250, %249 : vector<8x128xf32>
    %252 = arith.divf %250, %251 : vector<8x128xf32>
    %253 = vector.extract_strided_slice %246 {offsets = [0, 128], sizes = [8, 128], strides = [1, 1]} : vector<8x512xf32> to vector<8x128xf32>
    %254 = arith.negf %253 : vector<8x128xf32>
    %255 = math.exp %254 : vector<8x128xf32>
    %cst_83 = arith.constant 1.000000e+00 : f32
    %256 = vector.broadcast %cst_83 : f32 to vector<8x128xf32>
    %257 = arith.addf %256, %255 : vector<8x128xf32>
    %258 = arith.divf %256, %257 : vector<8x128xf32>
    %259 = vector.extract_strided_slice %246 {offsets = [0, 256], sizes = [8, 128], strides = [1, 1]} : vector<8x512xf32> to vector<8x128xf32>
    %260 = math.tanh %259 : vector<8x128xf32>
    %261 = vector.extract_strided_slice %246 {offsets = [0, 384], sizes = [8, 128], strides = [1, 1]} : vector<8x512xf32> to vector<8x128xf32>
    %262 = arith.negf %261 : vector<8x128xf32>
    %263 = math.exp %262 : vector<8x128xf32>
    %cst_84 = arith.constant 1.000000e+00 : f32
    %264 = vector.broadcast %cst_84 : f32 to vector<8x128xf32>
    %265 = arith.addf %264, %263 : vector<8x128xf32>
    %266 = arith.divf %264, %265 : vector<8x128xf32>
    %267 = arith.mulf %258, %232 : vector<8x128xf32>
    %268 = arith.mulf %252, %260 : vector<8x128xf32>
    %269 = arith.addf %267, %268 : vector<8x128xf32>
    %270 = math.tanh %269 : vector<8x128xf32>
    %271 = arith.mulf %266, %270 : vector<8x128xf32>
    %272 = arith.truncf %271 : vector<8x128xf32> to vector<8x128xbf16>
    %273 = arith.index_cast %239 : i32 to index
    %c0_85 = arith.constant 0 : index
    %274 = vector.load %arg15[%273, %c0_85] : memref<64x128xbf16, #tpu.memory_space<vmem>>, vector<8x128xbf16>
    tpu.vector_store %arg15[%273, %c0_85], %272 {strides = array<i32>} : memref<64x128xbf16, #tpu.memory_space<vmem>>, vector<8x128xbf16>,
    %c7_i32 = arith.constant 7 : i32
    %c8_i32_86 = arith.constant 8 : i32
    %275 = arith.muli %c7_i32, %c8_i32_86 : i32
    %276 = tpu.assume_multiple %275, 8 : i32
    %277 = arith.index_cast %276 : i32 to index
    %c0_87 = arith.constant 0 : index
    %278 = vector.load %arg14[%277, %c0_87] : memref<64x512xf32, #tpu.memory_space<vmem>>, vector<8x512xf32>
    %279 = arith.truncf %271 : vector<8x128xf32> to vector<8x128xbf16>
    %c0_88 = arith.constant 0 : index
    %c0_89 = arith.constant 0 : index
    %c0_90 = arith.constant 0 : index
    %280 = vector.load %arg5[%c0_88, %c0_89, %c0_90] : memref<2x128x512xbf16, #tpu.memory_space<vmem>>, vector<1x128x512xbf16>
    %281 = vector.shape_cast %280 : vector<1x128x512xbf16> to vector<128x512xbf16>
    %cst_91 = arith.constant dense<0.000000e+00> : vector<8x512xf32>
    %282 = tpu.matmul %279, %281, %cst_91 {dimension_numbers = #tpu.dot_dimension_numbers<[1], [0], [0], [1], [0, 0, 1, 1], [], []>} : vector<8x128xbf16>, vector<128x512xbf16>, vector<8x512xf32> -> vector<8x512xf32>
    %283 = arith.addf %278, %282 : vector<8x512xf32>
    %284 = vector.extract_strided_slice %283 {offsets = [0, 0], sizes = [8, 128], strides = [1, 1]} : vector<8x512xf32> to vector<8x128xf32>
    %285 = arith.negf %284 : vector<8x128xf32>
    %286 = math.exp %285 : vector<8x128xf32>
    %cst_92 = arith.constant 1.000000e+00 : f32
    %287 = vector.broadcast %cst_92 : f32 to vector<8x128xf32>
    %288 = arith.addf %287, %286 : vector<8x128xf32>
    %289 = arith.divf %287, %288 : vector<8x128xf32>
    %290 = vector.extract_strided_slice %283 {offsets = [0, 128], sizes = [8, 128], strides = [1, 1]} : vector<8x512xf32> to vector<8x128xf32>
    %291 = arith.negf %290 : vector<8x128xf32>
    %292 = math.exp %291 : vector<8x128xf32>
    %cst_93 = arith.constant 1.000000e+00 : f32
    %293 = vector.broadcast %cst_93 : f32 to vector<8x128xf32>
    %294 = arith.addf %293, %292 : vector<8x128xf32>
    %295 = arith.divf %293, %294 : vector<8x128xf32>
    %296 = vector.extract_strided_slice %283 {offsets = [0, 256], sizes = [8, 128], strides = [1, 1]} : vector<8x512xf32> to vector<8x128xf32>
    %297 = math.tanh %296 : vector<8x128xf32>
    %298 = vector.extract_strided_slice %283 {offsets = [0, 384], sizes = [8, 128], strides = [1, 1]} : vector<8x512xf32> to vector<8x128xf32>
    %299 = arith.negf %298 : vector<8x128xf32>
    %300 = math.exp %299 : vector<8x128xf32>
    %cst_94 = arith.constant 1.000000e+00 : f32
    %301 = vector.broadcast %cst_94 : f32 to vector<8x128xf32>
    %302 = arith.addf %301, %300 : vector<8x128xf32>
    %303 = arith.divf %301, %302 : vector<8x128xf32>
    %304 = arith.mulf %295, %269 : vector<8x128xf32>
    %305 = arith.mulf %289, %297 : vector<8x128xf32>
    %306 = arith.addf %304, %305 : vector<8x128xf32>
    %307 = math.tanh %306 : vector<8x128xf32>
    %308 = arith.mulf %303, %307 : vector<8x128xf32>
    %309 = arith.truncf %308 : vector<8x128xf32> to vector<8x128xbf16>
    %310 = arith.index_cast %276 : i32 to index
    %c0_95 = arith.constant 0 : index
    %311 = vector.load %arg15[%310, %c0_95] : memref<64x128xbf16, #tpu.memory_space<vmem>>, vector<8x128xbf16>
    tpu.vector_store %arg15[%310, %c0_95], %309 {strides = array<i32>} : memref<64x128xbf16, #tpu.memory_space<vmem>>, vector<8x128xbf16>,
    %c8_i32_96 = arith.constant 8 : i32
    %c0_97 = arith.constant 0 : index
    %c0_98 = arith.constant 0 : index
    %c0_99 = arith.constant 0 : index
    %312 = vector.load %arg12[%c0_97, %c0_98, %c0_99] : memref<2x8x128xf32, #tpu.memory_space<vmem>>, vector<1x8x128xf32>
    %313 = vector.shape_cast %312 : vector<1x8x128xf32> to vector<8x128xf32>
    %314 = vector.shape_cast %308 : vector<8x128xf32> to vector<1x8x128xf32>
    tpu.vector_store %arg12[%c0_97, %c0_98, %c0_99], %314 {strides = array<i32>} : memref<2x8x128xf32, #tpu.memory_space<vmem>>, vector<1x8x128xf32>,
    %c0_100 = arith.constant 0 : index
    %c0_101 = arith.constant 0 : index
    %c0_102 = arith.constant 0 : index
    %315 = vector.load %arg13[%c0_100, %c0_101, %c0_102] : memref<2x8x128xf32, #tpu.memory_space<vmem>>, vector<1x8x128xf32>
    %316 = vector.shape_cast %315 : vector<1x8x128xf32> to vector<8x128xf32>
    %317 = vector.shape_cast %306 : vector<8x128xf32> to vector<1x8x128xf32>
    tpu.vector_store %arg13[%c0_100, %c0_101, %c0_102], %317 {strides = array<i32>} : memref<2x8x128xf32, #tpu.memory_space<vmem>>, vector<1x8x128xf32>,
    %c0_103 = arith.constant 0 : index
    %c0_104 = arith.constant 0 : index
    %318 = vector.load %arg15[%c0_103, %c0_104] : memref<64x128xbf16, #tpu.memory_space<vmem>>, vector<64x128xbf16>
    %c0_105 = arith.constant 0 : index
    %c0_106 = arith.constant 0 : index
    %c0_107 = arith.constant 0 : index
    %319 = vector.load %arg4[%c0_105, %c0_106, %c0_107] : memref<1x128x512xbf16, #tpu.memory_space<vmem>>, vector<1x128x512xbf16>
    %320 = vector.shape_cast %319 : vector<1x128x512xbf16> to vector<128x512xbf16>
    %cst_108 = arith.constant dense<0.000000e+00> : vector<64x512xf32>
    %321 = tpu.matmul %318, %320, %cst_108 {dimension_numbers = #tpu.dot_dimension_numbers<[1], [0], [0], [1], [0, 0, 1, 1], [], []>} : vector<64x128xbf16>, vector<128x512xbf16>, vector<64x512xf32> -> vector<64x512xf32>
    %c1 = arith.constant 1 : index
    %c0_109 = arith.constant 0 : index
    %c0_110 = arith.constant 0 : index
    %322 = vector.load %arg6[%c1, %c0_109, %c0_110] : memref<2x1x512xf32, #tpu.memory_space<vmem>>, vector<1x1x512xf32>
    %323 = vector.shape_cast %322 : vector<1x1x512xf32> to vector<1x512xf32>
    %324 = vector.broadcast %323 : vector<1x512xf32> to vector<64x512xf32>
    %325 = arith.addf %321, %324 : vector<64x512xf32>
    %c0_111 = arith.constant 0 : index
    %c0_112 = arith.constant 0 : index
    %326 = vector.load %arg14[%c0_111, %c0_112] : memref<64x512xf32, #tpu.memory_space<vmem>>, vector<64x512xf32>
    tpu.vector_store %arg14[%c0_111, %c0_112], %325 {strides = array<i32>} : memref<64x512xf32, #tpu.memory_space<vmem>>, vector<64x512xf32>,
    %c1_113 = arith.constant 1 : index
    %c0_114 = arith.constant 0 : index
    %c0_115 = arith.constant 0 : index
    %327 = vector.load %arg12[%c1_113, %c0_114, %c0_115] : memref<2x8x128xf32, #tpu.memory_space<vmem>>, vector<1x8x128xf32>
    %328 = vector.shape_cast %327 : vector<1x8x128xf32> to vector<8x128xf32>
    %c1_116 = arith.constant 1 : index
    %c0_117 = arith.constant 0 : index
    %c0_118 = arith.constant 0 : index
    %329 = vector.load %arg13[%c1_116, %c0_117, %c0_118] : memref<2x8x128xf32, #tpu.memory_space<vmem>>, vector<1x8x128xf32>
    %330 = vector.shape_cast %329 : vector<1x8x128xf32> to vector<8x128xf32>
    %c0_i32_119 = arith.constant 0 : i32
    %c8_i32_120 = arith.constant 8 : i32
    %331 = arith.muli %c0_i32_119, %c8_i32_120 : i32
    %332 = tpu.assume_multiple %331, 8 : i32
    %333 = arith.index_cast %332 : i32 to index
    %c0_121 = arith.constant 0 : index
    %334 = vector.load %arg14[%333, %c0_121] : memref<64x512xf32, #tpu.memory_space<vmem>>, vector<8x512xf32>
    %335 = arith.truncf %328 : vector<8x128xf32> to vector<8x128xbf16>
    %c1_122 = arith.constant 1 : index
    %c0_123 = arith.constant 0 : index
    %c0_124 = arith.constant 0 : index
    %336 = vector.load %arg5[%c1_122, %c0_123, %c0_124] : memref<2x128x512xbf16, #tpu.memory_space<vmem>>, vector<1x128x512xbf16>
    %337 = vector.shape_cast %336 : vector<1x128x512xbf16> to vector<128x512xbf16>
    %cst_125 = arith.constant dense<0.000000e+00> : vector<8x512xf32>
    %338 = tpu.matmul %335, %337, %cst_125 {dimension_numbers = #tpu.dot_dimension_numbers<[1], [0], [0], [1], [0, 0, 1, 1], [], []>} : vector<8x128xbf16>, vector<128x512xbf16>, vector<8x512xf32> -> vector<8x512xf32>
    %339 = arith.addf %334, %338 : vector<8x512xf32>
    %340 = vector.extract_strided_slice %339 {offsets = [0, 0], sizes = [8, 128], strides = [1, 1]} : vector<8x512xf32> to vector<8x128xf32>
    %341 = arith.negf %340 : vector<8x128xf32>
    %342 = math.exp %341 : vector<8x128xf32>
    %cst_126 = arith.constant 1.000000e+00 : f32
    %343 = vector.broadcast %cst_126 : f32 to vector<8x128xf32>
    %344 = arith.addf %343, %342 : vector<8x128xf32>
    %345 = arith.divf %343, %344 : vector<8x128xf32>
    %346 = vector.extract_strided_slice %339 {offsets = [0, 128], sizes = [8, 128], strides = [1, 1]} : vector<8x512xf32> to vector<8x128xf32>
    %347 = arith.negf %346 : vector<8x128xf32>
    %348 = math.exp %347 : vector<8x128xf32>
    %cst_127 = arith.constant 1.000000e+00 : f32
    %349 = vector.broadcast %cst_127 : f32 to vector<8x128xf32>
    %350 = arith.addf %349, %348 : vector<8x128xf32>
    %351 = arith.divf %349, %350 : vector<8x128xf32>
    %352 = vector.extract_strided_slice %339 {offsets = [0, 256], sizes = [8, 128], strides = [1, 1]} : vector<8x512xf32> to vector<8x128xf32>
    %353 = math.tanh %352 : vector<8x128xf32>
    %354 = vector.extract_strided_slice %339 {offsets = [0, 384], sizes = [8, 128], strides = [1, 1]} : vector<8x512xf32> to vector<8x128xf32>
    %355 = arith.negf %354 : vector<8x128xf32>
    %356 = math.exp %355 : vector<8x128xf32>
    %cst_128 = arith.constant 1.000000e+00 : f32
    %357 = vector.broadcast %cst_128 : f32 to vector<8x128xf32>
    %358 = arith.addf %357, %356 : vector<8x128xf32>
    %359 = arith.divf %357, %358 : vector<8x128xf32>
    %360 = arith.mulf %351, %330 : vector<8x128xf32>
    %361 = arith.mulf %345, %353 : vector<8x128xf32>
    %362 = arith.addf %360, %361 : vector<8x128xf32>
    %363 = math.tanh %362 : vector<8x128xf32>
    %364 = arith.mulf %359, %363 : vector<8x128xf32>
    %365 = arith.truncf %364 : vector<8x128xf32> to vector<8x128xbf16>
    %366 = arith.index_cast %332 : i32 to index
    %c0_129 = arith.constant 0 : index
    %367 = vector.load %arg16[%366, %c0_129] : memref<64x128xbf16, #tpu.memory_space<vmem>>, vector<8x128xbf16>
    tpu.vector_store %arg16[%366, %c0_129], %365 {strides = array<i32>} : memref<64x128xbf16, #tpu.memory_space<vmem>>, vector<8x128xbf16>,
    %c1_i32_130 = arith.constant 1 : i32
    %c8_i32_131 = arith.constant 8 : i32
    %368 = arith.muli %c1_i32_130, %c8_i32_131 : i32
    %369 = tpu.assume_multiple %368, 8 : i32
    %370 = arith.index_cast %369 : i32 to index
    %c0_132 = arith.constant 0 : index
    %371 = vector.load %arg14[%370, %c0_132] : memref<64x512xf32, #tpu.memory_space<vmem>>, vector<8x512xf32>
    %372 = arith.truncf %364 : vector<8x128xf32> to vector<8x128xbf16>
    %c1_133 = arith.constant 1 : index
    %c0_134 = arith.constant 0 : index
    %c0_135 = arith.constant 0 : index
    %373 = vector.load %arg5[%c1_133, %c0_134, %c0_135] : memref<2x128x512xbf16, #tpu.memory_space<vmem>>, vector<1x128x512xbf16>
    %374 = vector.shape_cast %373 : vector<1x128x512xbf16> to vector<128x512xbf16>
    %cst_136 = arith.constant dense<0.000000e+00> : vector<8x512xf32>
    %375 = tpu.matmul %372, %374, %cst_136 {dimension_numbers = #tpu.dot_dimension_numbers<[1], [0], [0], [1], [0, 0, 1, 1], [], []>} : vector<8x128xbf16>, vector<128x512xbf16>, vector<8x512xf32> -> vector<8x512xf32>
    %376 = arith.addf %371, %375 : vector<8x512xf32>
    %377 = vector.extract_strided_slice %376 {offsets = [0, 0], sizes = [8, 128], strides = [1, 1]} : vector<8x512xf32> to vector<8x128xf32>
    %378 = arith.negf %377 : vector<8x128xf32>
    %379 = math.exp %378 : vector<8x128xf32>
    %cst_137 = arith.constant 1.000000e+00 : f32
    %380 = vector.broadcast %cst_137 : f32 to vector<8x128xf32>
    %381 = arith.addf %380, %379 : vector<8x128xf32>
    %382 = arith.divf %380, %381 : vector<8x128xf32>
    %383 = vector.extract_strided_slice %376 {offsets = [0, 128], sizes = [8, 128], strides = [1, 1]} : vector<8x512xf32> to vector<8x128xf32>
    %384 = arith.negf %383 : vector<8x128xf32>
    %385 = math.exp %384 : vector<8x128xf32>
    %cst_138 = arith.constant 1.000000e+00 : f32
    %386 = vector.broadcast %cst_138 : f32 to vector<8x128xf32>
    %387 = arith.addf %386, %385 : vector<8x128xf32>
    %388 = arith.divf %386, %387 : vector<8x128xf32>
    %389 = vector.extract_strided_slice %376 {offsets = [0, 256], sizes = [8, 128], strides = [1, 1]} : vector<8x512xf32> to vector<8x128xf32>
    %390 = math.tanh %389 : vector<8x128xf32>
    %391 = vector.extract_strided_slice %376 {offsets = [0, 384], sizes = [8, 128], strides = [1, 1]} : vector<8x512xf32> to vector<8x128xf32>
    %392 = arith.negf %391 : vector<8x128xf32>
    %393 = math.exp %392 : vector<8x128xf32>
    %cst_139 = arith.constant 1.000000e+00 : f32
    %394 = vector.broadcast %cst_139 : f32 to vector<8x128xf32>
    %395 = arith.addf %394, %393 : vector<8x128xf32>
    %396 = arith.divf %394, %395 : vector<8x128xf32>
    %397 = arith.mulf %388, %362 : vector<8x128xf32>
    %398 = arith.mulf %382, %390 : vector<8x128xf32>
    %399 = arith.addf %397, %398 : vector<8x128xf32>
    %400 = math.tanh %399 : vector<8x128xf32>
    %401 = arith.mulf %396, %400 : vector<8x128xf32>
    %402 = arith.truncf %401 : vector<8x128xf32> to vector<8x128xbf16>
    %403 = arith.index_cast %369 : i32 to index
    %c0_140 = arith.constant 0 : index
    %404 = vector.load %arg16[%403, %c0_140] : memref<64x128xbf16, #tpu.memory_space<vmem>>, vector<8x128xbf16>
    tpu.vector_store %arg16[%403, %c0_140], %402 {strides = array<i32>} : memref<64x128xbf16, #tpu.memory_space<vmem>>, vector<8x128xbf16>,
    %c2_i32_141 = arith.constant 2 : i32
    %c8_i32_142 = arith.constant 8 : i32
    %405 = arith.muli %c2_i32_141, %c8_i32_142 : i32
    %406 = tpu.assume_multiple %405, 8 : i32
    %407 = arith.index_cast %406 : i32 to index
    %c0_143 = arith.constant 0 : index
    %408 = vector.load %arg14[%407, %c0_143] : memref<64x512xf32, #tpu.memory_space<vmem>>, vector<8x512xf32>
    %409 = arith.truncf %401 : vector<8x128xf32> to vector<8x128xbf16>
    %c1_144 = arith.constant 1 : index
    %c0_145 = arith.constant 0 : index
    %c0_146 = arith.constant 0 : index
    %410 = vector.load %arg5[%c1_144, %c0_145, %c0_146] : memref<2x128x512xbf16, #tpu.memory_space<vmem>>, vector<1x128x512xbf16>
    %411 = vector.shape_cast %410 : vector<1x128x512xbf16> to vector<128x512xbf16>
    %cst_147 = arith.constant dense<0.000000e+00> : vector<8x512xf32>
    %412 = tpu.matmul %409, %411, %cst_147 {dimension_numbers = #tpu.dot_dimension_numbers<[1], [0], [0], [1], [0, 0, 1, 1], [], []>} : vector<8x128xbf16>, vector<128x512xbf16>, vector<8x512xf32> -> vector<8x512xf32>
    %413 = arith.addf %408, %412 : vector<8x512xf32>
    %414 = vector.extract_strided_slice %413 {offsets = [0, 0], sizes = [8, 128], strides = [1, 1]} : vector<8x512xf32> to vector<8x128xf32>
    %415 = arith.negf %414 : vector<8x128xf32>
    %416 = math.exp %415 : vector<8x128xf32>
    %cst_148 = arith.constant 1.000000e+00 : f32
    %417 = vector.broadcast %cst_148 : f32 to vector<8x128xf32>
    %418 = arith.addf %417, %416 : vector<8x128xf32>
    %419 = arith.divf %417, %418 : vector<8x128xf32>
    %420 = vector.extract_strided_slice %413 {offsets = [0, 128], sizes = [8, 128], strides = [1, 1]} : vector<8x512xf32> to vector<8x128xf32>
    %421 = arith.negf %420 : vector<8x128xf32>
    %422 = math.exp %421 : vector<8x128xf32>
    %cst_149 = arith.constant 1.000000e+00 : f32
    %423 = vector.broadcast %cst_149 : f32 to vector<8x128xf32>
    %424 = arith.addf %423, %422 : vector<8x128xf32>
    %425 = arith.divf %423, %424 : vector<8x128xf32>
    %426 = vector.extract_strided_slice %413 {offsets = [0, 256], sizes = [8, 128], strides = [1, 1]} : vector<8x512xf32> to vector<8x128xf32>
    %427 = math.tanh %426 : vector<8x128xf32>
    %428 = vector.extract_strided_slice %413 {offsets = [0, 384], sizes = [8, 128], strides = [1, 1]} : vector<8x512xf32> to vector<8x128xf32>
    %429 = arith.negf %428 : vector<8x128xf32>
    %430 = math.exp %429 : vector<8x128xf32>
    %cst_150 = arith.constant 1.000000e+00 : f32
    %431 = vector.broadcast %cst_150 : f32 to vector<8x128xf32>
    %432 = arith.addf %431, %430 : vector<8x128xf32>
    %433 = arith.divf %431, %432 : vector<8x128xf32>
    %434 = arith.mulf %425, %399 : vector<8x128xf32>
    %435 = arith.mulf %419, %427 : vector<8x128xf32>
    %436 = arith.addf %434, %435 : vector<8x128xf32>
    %437 = math.tanh %436 : vector<8x128xf32>
    %438 = arith.mulf %433, %437 : vector<8x128xf32>
    %439 = arith.truncf %438 : vector<8x128xf32> to vector<8x128xbf16>
    %440 = arith.index_cast %406 : i32 to index
    %c0_151 = arith.constant 0 : index
    %441 = vector.load %arg16[%440, %c0_151] : memref<64x128xbf16, #tpu.memory_space<vmem>>, vector<8x128xbf16>
    tpu.vector_store %arg16[%440, %c0_151], %439 {strides = array<i32>} : memref<64x128xbf16, #tpu.memory_space<vmem>>, vector<8x128xbf16>,
    %c3_i32_152 = arith.constant 3 : i32
    %c8_i32_153 = arith.constant 8 : i32
    %442 = arith.muli %c3_i32_152, %c8_i32_153 : i32
    %443 = tpu.assume_multiple %442, 8 : i32
    %444 = arith.index_cast %443 : i32 to index
    %c0_154 = arith.constant 0 : index
    %445 = vector.load %arg14[%444, %c0_154] : memref<64x512xf32, #tpu.memory_space<vmem>>, vector<8x512xf32>
    %446 = arith.truncf %438 : vector<8x128xf32> to vector<8x128xbf16>
    %c1_155 = arith.constant 1 : index
    %c0_156 = arith.constant 0 : index
    %c0_157 = arith.constant 0 : index
    %447 = vector.load %arg5[%c1_155, %c0_156, %c0_157] : memref<2x128x512xbf16, #tpu.memory_space<vmem>>, vector<1x128x512xbf16>
    %448 = vector.shape_cast %447 : vector<1x128x512xbf16> to vector<128x512xbf16>
    %cst_158 = arith.constant dense<0.000000e+00> : vector<8x512xf32>
    %449 = tpu.matmul %446, %448, %cst_158 {dimension_numbers = #tpu.dot_dimension_numbers<[1], [0], [0], [1], [0, 0, 1, 1], [], []>} : vector<8x128xbf16>, vector<128x512xbf16>, vector<8x512xf32> -> vector<8x512xf32>
    %450 = arith.addf %445, %449 : vector<8x512xf32>
    %451 = vector.extract_strided_slice %450 {offsets = [0, 0], sizes = [8, 128], strides = [1, 1]} : vector<8x512xf32> to vector<8x128xf32>
    %452 = arith.negf %451 : vector<8x128xf32>
    %453 = math.exp %452 : vector<8x128xf32>
    %cst_159 = arith.constant 1.000000e+00 : f32
    %454 = vector.broadcast %cst_159 : f32 to vector<8x128xf32>
    %455 = arith.addf %454, %453 : vector<8x128xf32>
    %456 = arith.divf %454, %455 : vector<8x128xf32>
    %457 = vector.extract_strided_slice %450 {offsets = [0, 128], sizes = [8, 128], strides = [1, 1]} : vector<8x512xf32> to vector<8x128xf32>
    %458 = arith.negf %457 : vector<8x128xf32>
    %459 = math.exp %458 : vector<8x128xf32>
    %cst_160 = arith.constant 1.000000e+00 : f32
    %460 = vector.broadcast %cst_160 : f32 to vector<8x128xf32>
    %461 = arith.addf %460, %459 : vector<8x128xf32>
    %462 = arith.divf %460, %461 : vector<8x128xf32>
    %463 = vector.extract_strided_slice %450 {offsets = [0, 256], sizes = [8, 128], strides = [1, 1]} : vector<8x512xf32> to vector<8x128xf32>
    %464 = math.tanh %463 : vector<8x128xf32>
    %465 = vector.extract_strided_slice %450 {offsets = [0, 384], sizes = [8, 128], strides = [1, 1]} : vector<8x512xf32> to vector<8x128xf32>
    %466 = arith.negf %465 : vector<8x128xf32>
    %467 = math.exp %466 : vector<8x128xf32>
    %cst_161 = arith.constant 1.000000e+00 : f32
    %468 = vector.broadcast %cst_161 : f32 to vector<8x128xf32>
    %469 = arith.addf %468, %467 : vector<8x128xf32>
    %470 = arith.divf %468, %469 : vector<8x128xf32>
    %471 = arith.mulf %462, %436 : vector<8x128xf32>
    %472 = arith.mulf %456, %464 : vector<8x128xf32>
    %473 = arith.addf %471, %472 : vector<8x128xf32>
    %474 = math.tanh %473 : vector<8x128xf32>
    %475 = arith.mulf %470, %474 : vector<8x128xf32>
    %476 = arith.truncf %475 : vector<8x128xf32> to vector<8x128xbf16>
    %477 = arith.index_cast %443 : i32 to index
    %c0_162 = arith.constant 0 : index
    %478 = vector.load %arg16[%477, %c0_162] : memref<64x128xbf16, #tpu.memory_space<vmem>>, vector<8x128xbf16>
    tpu.vector_store %arg16[%477, %c0_162], %476 {strides = array<i32>} : memref<64x128xbf16, #tpu.memory_space<vmem>>, vector<8x128xbf16>,
    %c4_i32_163 = arith.constant 4 : i32
    %c8_i32_164 = arith.constant 8 : i32
    %479 = arith.muli %c4_i32_163, %c8_i32_164 : i32
    %480 = tpu.assume_multiple %479, 8 : i32
    %481 = arith.index_cast %480 : i32 to index
    %c0_165 = arith.constant 0 : index
    %482 = vector.load %arg14[%481, %c0_165] : memref<64x512xf32, #tpu.memory_space<vmem>>, vector<8x512xf32>
    %483 = arith.truncf %475 : vector<8x128xf32> to vector<8x128xbf16>
    %c1_166 = arith.constant 1 : index
    %c0_167 = arith.constant 0 : index
    %c0_168 = arith.constant 0 : index
    %484 = vector.load %arg5[%c1_166, %c0_167, %c0_168] : memref<2x128x512xbf16, #tpu.memory_space<vmem>>, vector<1x128x512xbf16>
    %485 = vector.shape_cast %484 : vector<1x128x512xbf16> to vector<128x512xbf16>
    %cst_169 = arith.constant dense<0.000000e+00> : vector<8x512xf32>
    %486 = tpu.matmul %483, %485, %cst_169 {dimension_numbers = #tpu.dot_dimension_numbers<[1], [0], [0], [1], [0, 0, 1, 1], [], []>} : vector<8x128xbf16>, vector<128x512xbf16>, vector<8x512xf32> -> vector<8x512xf32>
    %487 = arith.addf %482, %486 : vector<8x512xf32>
    %488 = vector.extract_strided_slice %487 {offsets = [0, 0], sizes = [8, 128], strides = [1, 1]} : vector<8x512xf32> to vector<8x128xf32>
    %489 = arith.negf %488 : vector<8x128xf32>
    %490 = math.exp %489 : vector<8x128xf32>
    %cst_170 = arith.constant 1.000000e+00 : f32
    %491 = vector.broadcast %cst_170 : f32 to vector<8x128xf32>
    %492 = arith.addf %491, %490 : vector<8x128xf32>
    %493 = arith.divf %491, %492 : vector<8x128xf32>
    %494 = vector.extract_strided_slice %487 {offsets = [0, 128], sizes = [8, 128], strides = [1, 1]} : vector<8x512xf32> to vector<8x128xf32>
    %495 = arith.negf %494 : vector<8x128xf32>
    %496 = math.exp %495 : vector<8x128xf32>
    %cst_171 = arith.constant 1.000000e+00 : f32
    %497 = vector.broadcast %cst_171 : f32 to vector<8x128xf32>
    %498 = arith.addf %497, %496 : vector<8x128xf32>
    %499 = arith.divf %497, %498 : vector<8x128xf32>
    %500 = vector.extract_strided_slice %487 {offsets = [0, 256], sizes = [8, 128], strides = [1, 1]} : vector<8x512xf32> to vector<8x128xf32>
    %501 = math.tanh %500 : vector<8x128xf32>
    %502 = vector.extract_strided_slice %487 {offsets = [0, 384], sizes = [8, 128], strides = [1, 1]} : vector<8x512xf32> to vector<8x128xf32>
    %503 = arith.negf %502 : vector<8x128xf32>
    %504 = math.exp %503 : vector<8x128xf32>
    %cst_172 = arith.constant 1.000000e+00 : f32
    %505 = vector.broadcast %cst_172 : f32 to vector<8x128xf32>
    %506 = arith.addf %505, %504 : vector<8x128xf32>
    %507 = arith.divf %505, %506 : vector<8x128xf32>
    %508 = arith.mulf %499, %473 : vector<8x128xf32>
    %509 = arith.mulf %493, %501 : vector<8x128xf32>
    %510 = arith.addf %508, %509 : vector<8x128xf32>
    %511 = math.tanh %510 : vector<8x128xf32>
    %512 = arith.mulf %507, %511 : vector<8x128xf32>
    %513 = arith.truncf %512 : vector<8x128xf32> to vector<8x128xbf16>
    %514 = arith.index_cast %480 : i32 to index
    %c0_173 = arith.constant 0 : index
    %515 = vector.load %arg16[%514, %c0_173] : memref<64x128xbf16, #tpu.memory_space<vmem>>, vector<8x128xbf16>
    tpu.vector_store %arg16[%514, %c0_173], %513 {strides = array<i32>} : memref<64x128xbf16, #tpu.memory_space<vmem>>, vector<8x128xbf16>,
    %c5_i32_174 = arith.constant 5 : i32
    %c8_i32_175 = arith.constant 8 : i32
    %516 = arith.muli %c5_i32_174, %c8_i32_175 : i32
    %517 = tpu.assume_multiple %516, 8 : i32
    %518 = arith.index_cast %517 : i32 to index
    %c0_176 = arith.constant 0 : index
    %519 = vector.load %arg14[%518, %c0_176] : memref<64x512xf32, #tpu.memory_space<vmem>>, vector<8x512xf32>
    %520 = arith.truncf %512 : vector<8x128xf32> to vector<8x128xbf16>
    %c1_177 = arith.constant 1 : index
    %c0_178 = arith.constant 0 : index
    %c0_179 = arith.constant 0 : index
    %521 = vector.load %arg5[%c1_177, %c0_178, %c0_179] : memref<2x128x512xbf16, #tpu.memory_space<vmem>>, vector<1x128x512xbf16>
    %522 = vector.shape_cast %521 : vector<1x128x512xbf16> to vector<128x512xbf16>
    %cst_180 = arith.constant dense<0.000000e+00> : vector<8x512xf32>
    %523 = tpu.matmul %520, %522, %cst_180 {dimension_numbers = #tpu.dot_dimension_numbers<[1], [0], [0], [1], [0, 0, 1, 1], [], []>} : vector<8x128xbf16>, vector<128x512xbf16>, vector<8x512xf32> -> vector<8x512xf32>
    %524 = arith.addf %519, %523 : vector<8x512xf32>
    %525 = vector.extract_strided_slice %524 {offsets = [0, 0], sizes = [8, 128], strides = [1, 1]} : vector<8x512xf32> to vector<8x128xf32>
    %526 = arith.negf %525 : vector<8x128xf32>
    %527 = math.exp %526 : vector<8x128xf32>
    %cst_181 = arith.constant 1.000000e+00 : f32
    %528 = vector.broadcast %cst_181 : f32 to vector<8x128xf32>
    %529 = arith.addf %528, %527 : vector<8x128xf32>
    %530 = arith.divf %528, %529 : vector<8x128xf32>
    %531 = vector.extract_strided_slice %524 {offsets = [0, 128], sizes = [8, 128], strides = [1, 1]} : vector<8x512xf32> to vector<8x128xf32>
    %532 = arith.negf %531 : vector<8x128xf32>
    %533 = math.exp %532 : vector<8x128xf32>
    %cst_182 = arith.constant 1.000000e+00 : f32
    %534 = vector.broadcast %cst_182 : f32 to vector<8x128xf32>
    %535 = arith.addf %534, %533 : vector<8x128xf32>
    %536 = arith.divf %534, %535 : vector<8x128xf32>
    %537 = vector.extract_strided_slice %524 {offsets = [0, 256], sizes = [8, 128], strides = [1, 1]} : vector<8x512xf32> to vector<8x128xf32>
    %538 = math.tanh %537 : vector<8x128xf32>
    %539 = vector.extract_strided_slice %524 {offsets = [0, 384], sizes = [8, 128], strides = [1, 1]} : vector<8x512xf32> to vector<8x128xf32>
    %540 = arith.negf %539 : vector<8x128xf32>
    %541 = math.exp %540 : vector<8x128xf32>
    %cst_183 = arith.constant 1.000000e+00 : f32
    %542 = vector.broadcast %cst_183 : f32 to vector<8x128xf32>
    %543 = arith.addf %542, %541 : vector<8x128xf32>
    %544 = arith.divf %542, %543 : vector<8x128xf32>
    %545 = arith.mulf %536, %510 : vector<8x128xf32>
    %546 = arith.mulf %530, %538 : vector<8x128xf32>
    %547 = arith.addf %545, %546 : vector<8x128xf32>
    %548 = math.tanh %547 : vector<8x128xf32>
    %549 = arith.mulf %544, %548 : vector<8x128xf32>
    %550 = arith.truncf %549 : vector<8x128xf32> to vector<8x128xbf16>
    %551 = arith.index_cast %517 : i32 to index
    %c0_184 = arith.constant 0 : index
    %552 = vector.load %arg16[%551, %c0_184] : memref<64x128xbf16, #tpu.memory_space<vmem>>, vector<8x128xbf16>
    tpu.vector_store %arg16[%551, %c0_184], %550 {strides = array<i32>} : memref<64x128xbf16, #tpu.memory_space<vmem>>, vector<8x128xbf16>,
    %c6_i32_185 = arith.constant 6 : i32
    %c8_i32_186 = arith.constant 8 : i32
    %553 = arith.muli %c6_i32_185, %c8_i32_186 : i32
    %554 = tpu.assume_multiple %553, 8 : i32
    %555 = arith.index_cast %554 : i32 to index
    %c0_187 = arith.constant 0 : index
    %556 = vector.load %arg14[%555, %c0_187] : memref<64x512xf32, #tpu.memory_space<vmem>>, vector<8x512xf32>
    %557 = arith.truncf %549 : vector<8x128xf32> to vector<8x128xbf16>
    %c1_188 = arith.constant 1 : index
    %c0_189 = arith.constant 0 : index
    %c0_190 = arith.constant 0 : index
    %558 = vector.load %arg5[%c1_188, %c0_189, %c0_190] : memref<2x128x512xbf16, #tpu.memory_space<vmem>>, vector<1x128x512xbf16>
    %559 = vector.shape_cast %558 : vector<1x128x512xbf16> to vector<128x512xbf16>
    %cst_191 = arith.constant dense<0.000000e+00> : vector<8x512xf32>
    %560 = tpu.matmul %557, %559, %cst_191 {dimension_numbers = #tpu.dot_dimension_numbers<[1], [0], [0], [1], [0, 0, 1, 1], [], []>} : vector<8x128xbf16>, vector<128x512xbf16>, vector<8x512xf32> -> vector<8x512xf32>
    %561 = arith.addf %556, %560 : vector<8x512xf32>
    %562 = vector.extract_strided_slice %561 {offsets = [0, 0], sizes = [8, 128], strides = [1, 1]} : vector<8x512xf32> to vector<8x128xf32>
    %563 = arith.negf %562 : vector<8x128xf32>
    %564 = math.exp %563 : vector<8x128xf32>
    %cst_192 = arith.constant 1.000000e+00 : f32
    %565 = vector.broadcast %cst_192 : f32 to vector<8x128xf32>
    %566 = arith.addf %565, %564 : vector<8x128xf32>
    %567 = arith.divf %565, %566 : vector<8x128xf32>
    %568 = vector.extract_strided_slice %561 {offsets = [0, 128], sizes = [8, 128], strides = [1, 1]} : vector<8x512xf32> to vector<8x128xf32>
    %569 = arith.negf %568 : vector<8x128xf32>
    %570 = math.exp %569 : vector<8x128xf32>
    %cst_193 = arith.constant 1.000000e+00 : f32
    %571 = vector.broadcast %cst_193 : f32 to vector<8x128xf32>
    %572 = arith.addf %571, %570 : vector<8x128xf32>
    %573 = arith.divf %571, %572 : vector<8x128xf32>
    %574 = vector.extract_strided_slice %561 {offsets = [0, 256], sizes = [8, 128], strides = [1, 1]} : vector<8x512xf32> to vector<8x128xf32>
    %575 = math.tanh %574 : vector<8x128xf32>
    %576 = vector.extract_strided_slice %561 {offsets = [0, 384], sizes = [8, 128], strides = [1, 1]} : vector<8x512xf32> to vector<8x128xf32>
    %577 = arith.negf %576 : vector<8x128xf32>
    %578 = math.exp %577 : vector<8x128xf32>
    %cst_194 = arith.constant 1.000000e+00 : f32
    %579 = vector.broadcast %cst_194 : f32 to vector<8x128xf32>
    %580 = arith.addf %579, %578 : vector<8x128xf32>
    %581 = arith.divf %579, %580 : vector<8x128xf32>
    %582 = arith.mulf %573, %547 : vector<8x128xf32>
    %583 = arith.mulf %567, %575 : vector<8x128xf32>
    %584 = arith.addf %582, %583 : vector<8x128xf32>
    %585 = math.tanh %584 : vector<8x128xf32>
    %586 = arith.mulf %581, %585 : vector<8x128xf32>
    %587 = arith.truncf %586 : vector<8x128xf32> to vector<8x128xbf16>
    %588 = arith.index_cast %554 : i32 to index
    %c0_195 = arith.constant 0 : index
    %589 = vector.load %arg16[%588, %c0_195] : memref<64x128xbf16, #tpu.memory_space<vmem>>, vector<8x128xbf16>
    tpu.vector_store %arg16[%588, %c0_195], %587 {strides = array<i32>} : memref<64x128xbf16, #tpu.memory_space<vmem>>, vector<8x128xbf16>,
    %c7_i32_196 = arith.constant 7 : i32
    %c8_i32_197 = arith.constant 8 : i32
    %590 = arith.muli %c7_i32_196, %c8_i32_197 : i32
    %591 = tpu.assume_multiple %590, 8 : i32
    %592 = arith.index_cast %591 : i32 to index
    %c0_198 = arith.constant 0 : index
    %593 = vector.load %arg14[%592, %c0_198] : memref<64x512xf32, #tpu.memory_space<vmem>>, vector<8x512xf32>
    %594 = arith.truncf %586 : vector<8x128xf32> to vector<8x128xbf16>
    %c1_199 = arith.constant 1 : index
    %c0_200 = arith.constant 0 : index
    %c0_201 = arith.constant 0 : index
    %595 = vector.load %arg5[%c1_199, %c0_200, %c0_201] : memref<2x128x512xbf16, #tpu.memory_space<vmem>>, vector<1x128x512xbf16>
    %596 = vector.shape_cast %595 : vector<1x128x512xbf16> to vector<128x512xbf16>
    %cst_202 = arith.constant dense<0.000000e+00> : vector<8x512xf32>
    %597 = tpu.matmul %594, %596, %cst_202 {dimension_numbers = #tpu.dot_dimension_numbers<[1], [0], [0], [1], [0, 0, 1, 1], [], []>} : vector<8x128xbf16>, vector<128x512xbf16>, vector<8x512xf32> -> vector<8x512xf32>
    %598 = arith.addf %593, %597 : vector<8x512xf32>
    %599 = vector.extract_strided_slice %598 {offsets = [0, 0], sizes = [8, 128], strides = [1, 1]} : vector<8x512xf32> to vector<8x128xf32>
    %600 = arith.negf %599 : vector<8x128xf32>
    %601 = math.exp %600 : vector<8x128xf32>
    %cst_203 = arith.constant 1.000000e+00 : f32
    %602 = vector.broadcast %cst_203 : f32 to vector<8x128xf32>
    %603 = arith.addf %602, %601 : vector<8x128xf32>
    %604 = arith.divf %602, %603 : vector<8x128xf32>
    %605 = vector.extract_strided_slice %598 {offsets = [0, 128], sizes = [8, 128], strides = [1, 1]} : vector<8x512xf32> to vector<8x128xf32>
    %606 = arith.negf %605 : vector<8x128xf32>
    %607 = math.exp %606 : vector<8x128xf32>
    %cst_204 = arith.constant 1.000000e+00 : f32
    %608 = vector.broadcast %cst_204 : f32 to vector<8x128xf32>
    %609 = arith.addf %608, %607 : vector<8x128xf32>
    %610 = arith.divf %608, %609 : vector<8x128xf32>
    %611 = vector.extract_strided_slice %598 {offsets = [0, 256], sizes = [8, 128], strides = [1, 1]} : vector<8x512xf32> to vector<8x128xf32>
    %612 = math.tanh %611 : vector<8x128xf32>
    %613 = vector.extract_strided_slice %598 {offsets = [0, 384], sizes = [8, 128], strides = [1, 1]} : vector<8x512xf32> to vector<8x128xf32>
    %614 = arith.negf %613 : vector<8x128xf32>
    %615 = math.exp %614 : vector<8x128xf32>
    %cst_205 = arith.constant 1.000000e+00 : f32
    %616 = vector.broadcast %cst_205 : f32 to vector<8x128xf32>
    %617 = arith.addf %616, %615 : vector<8x128xf32>
    %618 = arith.divf %616, %617 : vector<8x128xf32>
    %619 = arith.mulf %610, %584 : vector<8x128xf32>
    %620 = arith.mulf %604, %612 : vector<8x128xf32>
    %621 = arith.addf %619, %620 : vector<8x128xf32>
    %622 = math.tanh %621 : vector<8x128xf32>
    %623 = arith.mulf %618, %622 : vector<8x128xf32>
    %624 = arith.truncf %623 : vector<8x128xf32> to vector<8x128xbf16>
    %625 = arith.index_cast %591 : i32 to index
    %c0_206 = arith.constant 0 : index
    %626 = vector.load %arg16[%625, %c0_206] : memref<64x128xbf16, #tpu.memory_space<vmem>>, vector<8x128xbf16>
    tpu.vector_store %arg16[%625, %c0_206], %624 {strides = array<i32>} : memref<64x128xbf16, #tpu.memory_space<vmem>>, vector<8x128xbf16>,
    %c8_i32_207 = arith.constant 8 : i32
    %c1_208 = arith.constant 1 : index
    %c0_209 = arith.constant 0 : index
    %c0_210 = arith.constant 0 : index
    %627 = vector.load %arg12[%c1_208, %c0_209, %c0_210] : memref<2x8x128xf32, #tpu.memory_space<vmem>>, vector<1x8x128xf32>
    %628 = vector.shape_cast %627 : vector<1x8x128xf32> to vector<8x128xf32>
    %629 = vector.shape_cast %623 : vector<8x128xf32> to vector<1x8x128xf32>
    tpu.vector_store %arg12[%c1_208, %c0_209, %c0_210], %629 {strides = array<i32>} : memref<2x8x128xf32, #tpu.memory_space<vmem>>, vector<1x8x128xf32>,
    %c1_211 = arith.constant 1 : index
    %c0_212 = arith.constant 0 : index
    %c0_213 = arith.constant 0 : index
    %630 = vector.load %arg13[%c1_211, %c0_212, %c0_213] : memref<2x8x128xf32, #tpu.memory_space<vmem>>, vector<1x8x128xf32>
    %631 = vector.shape_cast %630 : vector<1x8x128xf32> to vector<8x128xf32>
    %632 = vector.shape_cast %621 : vector<8x128xf32> to vector<1x8x128xf32>
    tpu.vector_store %arg13[%c1_211, %c0_212, %c0_213], %632 {strides = array<i32>} : memref<2x8x128xf32, #tpu.memory_space<vmem>>, vector<1x8x128xf32>,
    %c0_214 = arith.constant 0 : index
    %c0_215 = arith.constant 0 : index
    %633 = vector.load %arg16[%c0_214, %c0_215] : memref<64x128xbf16, #tpu.memory_space<vmem>>, vector<64x128xbf16>
    %c0_216 = arith.constant 0 : index
    %c0_217 = arith.constant 0 : index
    %634 = vector.load %arg7[%c0_216, %c0_217] : memref<128x128xbf16, #tpu.memory_space<vmem>>, vector<128x128xbf16>
    %cst_218 = arith.constant dense<0.000000e+00> : vector<64x128xf32>
    %635 = tpu.matmul %633, %634, %cst_218 {dimension_numbers = #tpu.dot_dimension_numbers<[1], [0], [0], [1], [0, 0, 1, 1], [], []>} : vector<64x128xbf16>, vector<128x128xbf16>, vector<64x128xf32> -> vector<64x128xf32>
    %c0_219 = arith.constant 0 : index
    %c0_220 = arith.constant 0 : index
    %636 = vector.load %arg8[%c0_219, %c0_220] : memref<1x128xf32, #tpu.memory_space<vmem>>, vector<1x128xf32>
    %637 = vector.broadcast %636 : vector<1x128xf32> to vector<64x128xf32>
    %638 = arith.addf %635, %637 : vector<64x128xf32>
    %639 = vector.shape_cast %638 : vector<64x128xf32> to vector<8x8x128xf32>
    %c0_221 = arith.constant 0 : index
    %c0_222 = arith.constant 0 : index
    %c0_223 = arith.constant 0 : index
    %640 = vector.load %arg11[%c0_221, %c0_222, %c0_223] : memref<8x8x128xf32, #tpu.memory_space<vmem>>, vector<8x8x128xf32>
    tpu.vector_store %arg11[%c0_221, %c0_222, %c0_223], %639 {strides = array<i32>} : memref<8x8x128xf32, #tpu.memory_space<vmem>>, vector<8x8x128xf32>,
    return
  }
  func.func @transform_0(%arg0: i32, %arg1: i32) -> (i32, i32, i32) {
    %c0_i32 = arith.constant 0 : i32
    %c0_i32_0 = arith.constant 0 : i32
    return %arg1, %arg0, %c0_i32 : i32, i32, i32
  }
  func.func @transform_1(%arg0: i32, %arg1: i32) -> (i32, i32) {
    %c0_i32 = arith.constant 0 : i32
    %c0_i32_0 = arith.constant 0 : i32
    %c0_i32_1 = arith.constant 0 : i32
    return %c0_i32, %c0_i32_0 : i32, i32
  }
  func.func @transform_2(%arg0: i32, %arg1: i32) -> (i32, i32, i32) {
    %c0_i32 = arith.constant 0 : i32
    %c0_i32_0 = arith.constant 0 : i32
    %c0_i32_1 = arith.constant 0 : i32
    %c0_i32_2 = arith.constant 0 : i32
    return %c0_i32, %c0_i32_0, %c0_i32_1 : i32, i32, i32
  }
  func.func @transform_3(%arg0: i32, %arg1: i32) -> (i32, i32, i32) {
    %c0_i32 = arith.constant 0 : i32
    %c0_i32_0 = arith.constant 0 : i32
    %c0_i32_1 = arith.constant 0 : i32
    %c0_i32_2 = arith.constant 0 : i32
    return %c0_i32, %c0_i32_0, %c0_i32_1 : i32, i32, i32
  }
  func.func @transform_4(%arg0: i32, %arg1: i32) -> (i32, i32, i32) {
    %c0_i32 = arith.constant 0 : i32
    %c0_i32_0 = arith.constant 0 : i32
    %c0_i32_1 = arith.constant 0 : i32
    %c0_i32_2 = arith.constant 0 : i32
    return %c0_i32, %c0_i32_0, %c0_i32_1 : i32, i32, i32
  }
  func.func @transform_5(%arg0: i32, %arg1: i32) -> (i32, i32) {
    %c0_i32 = arith.constant 0 : i32
    %c0_i32_0 = arith.constant 0 : i32
    %c0_i32_1 = arith.constant 0 : i32
    return %c0_i32, %c0_i32_0 : i32, i32
  }
  func.func @transform_6(%arg0: i32, %arg1: i32) -> (i32, i32) {
    %c0_i32 = arith.constant 0 : i32
    %c0_i32_0 = arith.constant 0 : i32
    %c0_i32_1 = arith.constant 0 : i32
    return %c0_i32, %c0_i32_0 : i32, i32
  }
  func.func @transform_7(%arg0: i32, %arg1: i32) -> (i32, i32, i32) {
    %c0_i32 = arith.constant 0 : i32
    %c0_i32_0 = arith.constant 0 : i32
    %c0_i32_1 = arith.constant 0 : i32
    return %c0_i32, %arg0, %c0_i32_0 : i32, i32, i32
  }
  func.func @transform_8(%arg0: i32, %arg1: i32) -> (i32, i32, i32) {
    %c0_i32 = arith.constant 0 : i32
    %c0_i32_0 = arith.constant 0 : i32
    %c0_i32_1 = arith.constant 0 : i32
    return %c0_i32, %arg0, %c0_i32_0 : i32, i32, i32
  }
  func.func @transform_9(%arg0: i32, %arg1: i32) -> (i32, i32, i32) {
    %c0_i32 = arith.constant 0 : i32
    %c0_i32_0 = arith.constant 0 : i32
    return %arg1, %arg0, %c0_i32 : i32, i32, i32
  }
  func.func @transform_10(%arg0: i32, %arg1: i32) -> (i32, i32, i32) {
    %c0_i32 = arith.constant 0 : i32
    %c0_i32_0 = arith.constant 0 : i32
    %c0_i32_1 = arith.constant 0 : i32
    return %c0_i32, %arg0, %c0_i32_0 : i32, i32, i32
  }
  func.func @transform_11(%arg0: i32, %arg1: i32) -> (i32, i32, i32) {
    %c0_i32 = arith.constant 0 : i32
    %c0_i32_0 = arith.constant 0 : i32
    %c0_i32_1 = arith.constant 0 : i32
    return %c0_i32, %arg0, %c0_i32_0 : i32, i32, i32
  }
}

</mosaic_0001>

<llo_original>
// kernel: forward.1
$region0: #{forward.1}
  #allocation0 [shape = 'u32[]', space=smem, size = 0x4, offset = 0x4, fixed_abs, tag = 'smem constant byte address 0x4 - core index']
  #allocation1 [shape = 'u32[144,128]{1,0:T(1,128)}', space=vmem, size = 0x12000, scoped, tag = 'internal scratch']
  #allocation2 [shape = 'f32[64,512]{1,0:T(8,128)}', space=vmem, size = 0x20000, scoped, tag = 'scratch operand']
  #allocation3 [shape = 'bf16[64,128]{1,0:T(8,128)(2,1)}', space=vmem, size = 0x4000, scoped, tag = 'scratch operand']
  #allocation4 [shape = 'bf16[64,128]{1,0:T(8,128)(2,1)}', space=vmem, size = 0x4000, scoped, tag = 'scratch operand']
  %s0 = inlined_call_operand.vmem [shape: bf16[8,8,128], index: 0, kind: input, shape index: {}]
  %s1 = inlined_call_operand.hbm [shape: bf16[128,512], index: 1, kind: input, shape index: {}]
  %s2 = inlined_call_operand.hbm [shape: bf16[1,128,512], index: 2, kind: input, shape index: {}]
  %s3 = inlined_call_operand.hbm [shape: bf16[2,128,512], index: 3, kind: input, shape index: {}]
  %s4 = inlined_call_operand.vmem [shape: f32[2,1,512], index: 4, kind: input, shape index: {}]
  %s5 = inlined_call_operand.vmem [shape: bf16[128,128], index: 5, kind: input, shape index: {}]
  %s6 = inlined_call_operand.vmem [shape: f32[1,128], index: 6, kind: input, shape index: {}]
  %s7 = inlined_call_operand.vmem [shape: f32[2,8,128], index: 7, kind: input, shape index: {}, may-alias: {7,8}]
  %s8 = inlined_call_operand.vmem [shape: f32[2,8,128], index: 8, kind: input, shape index: {}, may-alias: {7,8}]
  %s9 = inlined_call_operand.vmem [shape: f32[8,8,128], index: 9, kind: output, shape index: {0}]
  %s10 = inlined_call_operand.vmem [shape: f32[2,8,128], index: 10, kind: output, shape index: {1}]
  %s11 = inlined_call_operand.vmem [shape: f32[2,8,128], index: 11, kind: output, shape index: {2}]
  %12 = xla_tuple %s9, %s10, %s11
  %s13 = sld [smem:[#allocation0]]
  $region78: #{forward.1} parent=0
    _
  %s15 = ssub.s32 1, %s13
  %s16 = scalar_select 0, %s15, %s13
  $region1: #{forward.1} parent=0
    #allocation5 [shape = 'u8[131072]{0}', space=vmem, size = 0x20000, scoped, tag = 'input window, operand 1, single buffered']
    #allocation6 [shape = 's32[1]{0}', space=sflag, size = 0x4, scoped, tag = 'scoped memory for forward.1']
    #allocation7 [shape = 'u8[131072]{0}', space=vmem, size = 0x20000, scoped, tag = 'input window, operand 2, single buffered']
    #allocation8 [shape = 's32[1]{0}', space=sflag, size = 0x4, scoped, tag = 'scoped memory for forward.1']
    #allocation9 [shape = 'u8[262144]{0}', space=vmem, size = 0x40000, scoped, tag = 'input window, operand 3, single buffered']
    %17 = vsyncpa [#allocation6], 0
    %18 = vsyncpa [#allocation8], 0
    // Predicated region
    $region2: #{forward.1} parent=1 // pred_check
      _
    $region3: #{forward.1} parent=1 // pred_check_branch
      %20 = sbr.rel (0) target = $region5
    $region4: #{forward.1} parent=1 // pred_region
      _
    $region5: #{forward.1} parent=1 // pred_fallthru
      _
    // Predicated region
    $region6: #{forward.1} parent=1 // pred_check
      _
    $region7: #{forward.1} parent=1 // pred_check_branch
      %22 = sbr.rel (0) target = $region9
    $region8: #{forward.1} parent=1 // pred_region
      %s24 = ssub.s32 4096, 4096
      %25 = vsyncadd [#allocation6], %s24
      %s26 = sshll.u32 [#allocation5], 4
      %s27 = int_to_ptr.vmem [resolvable:$true] %s26
      %32 = dma.hbm_to_vmem [thread:$0]  %s1, 4096, %s27, [#allocation6], 256, 256, 16
    $region9: #{forward.1} parent=1 // pred_fallthru
      _
    // Predicated region
    $region10: #{forward.1} parent=1 // pred_check
      _
    $region11: #{forward.1} parent=1 // pred_check_branch
      %34 = sbr.rel (0) target = $region13
    $region12: #{forward.1} parent=1 // pred_region
      %s36 = ssub.s32 4096, 4096
      %37 = vsyncadd [#allocation8], %s36
      %s38 = sshll.u32 [#allocation7], 4
      %s39 = int_to_ptr.vmem [resolvable:$true] %s38
      %44 = dma.hbm_to_vmem [thread:$0]  %s2, 4096, %s39, [#allocation8], 256, 256, 16
    $region13: #{forward.1} parent=1 // pred_fallthru
      _
    // Predicated region
    $region14: #{forward.1} parent=1 // pred_check
      _
    $region15: #{forward.1} parent=1 // pred_check_branch
      %46 = sbr.rel (0) target = $region17
    $region16: #{forward.1} parent=1 // pred_region
      %s48 = ssub.s32 8192, 8192
      %49 = vsyncadd [#allocation8], %s48
      %s50 = sshll.u32 [#allocation9], 4
      %s51 = int_to_ptr.vmem [resolvable:$true] %s50
      %56 = dma.hbm_to_vmem [thread:$0]  %s3, 8192, %s51, [#allocation8], 256, 256, 16
    $region17: #{forward.1} parent=1 // pred_fallthru
      _
    // Predicated region
    $region18: #{forward.1} parent=1 // pred_check
      _
    $region19: #{forward.1} parent=1 // pred_check_branch
      %58 = sbr.rel (0) target = $region21
    $region20: #{forward.1} parent=1 // pred_region
      _
    $region21: #{forward.1} parent=1 // pred_fallthru
      _
    // Predicated region
    $region22: #{forward.1} parent=1 // pred_check
      _
    $region23: #{forward.1} parent=1 // pred_check_branch
      %60 = sbr.rel (0) target = $region25
    $region24: #{forward.1} parent=1 // pred_region
      _
    $region25: #{forward.1} parent=1 // pred_fallthru
      _
    // Predicated region
    $region26: #{forward.1} parent=1 // pred_check
      _
    $region27: #{forward.1} parent=1 // pred_check_branch
      %62 = sbr.rel (0) target = $region29
    $region28: #{forward.1} parent=1 // pred_region
      _
    $region29: #{forward.1} parent=1 // pred_fallthru
      _
    // Predicated region
    $region30: #{forward.1} parent=1 // pred_check
      _
    $region31: #{forward.1} parent=1 // pred_check_branch
      %64 = sbr.rel (0) target = $region33
    $region32: #{forward.1} parent=1 // pred_region
      _
    $region33: #{forward.1} parent=1 // pred_fallthru
      _
    // Predicated region
    $region34: #{forward.1} parent=1 // pred_check
      _
    $region35: #{forward.1} parent=1 // pred_check_branch
      %66 = sbr.rel (0) target = $region37
    $region36: #{forward.1} parent=1 // pred_region
      _
    $region37: #{forward.1} parent=1 // pred_fallthru
      _
    // Predicated region
    $region38: #{forward.1} parent=1 // pred_check
      _
    $region39: #{forward.1} parent=1 // pred_check_branch
      %68 = sbr.rel (0) target = $region41
    $region40: #{forward.1} parent=1 // pred_region
      %69 = dma.done [#allocation6], 4096
    $region41: #{forward.1} parent=1 // pred_fallthru
      _
    // Predicated region
    $region42: #{forward.1} parent=1 // pred_check
      _
    $region43: #{forward.1} parent=1 // pred_check_branch
      %71 = sbr.rel (0) target = $region45
    $region44: #{forward.1} parent=1 // pred_region
      %72 = dma.done [#allocation8], 4096
    $region45: #{forward.1} parent=1 // pred_fallthru
      _
    // Predicated region
    $region46: #{forward.1} parent=1 // pred_check
      _
    $region47: #{forward.1} parent=1 // pred_check_branch
      %74 = sbr.rel (0) target = $region49
    $region48: #{forward.1} parent=1 // pred_region
      %75 = dma.done [#allocation8], 8192
    $region49: #{forward.1} parent=1 // pred_fallthru
      _
    %p77 = scmp.eq.s32.totalorder 0, 0
    // Predicated region
    $region50: #{forward.1} parent=1 // pred_check
      %p78 = pneg %p77
    $region51: #{forward.1} parent=1 // pred_check_branch
      %80 = sbr.rel (%p78) target = $region53
    $region52: #{forward.1} parent=1 // pred_region
      %v81 = vld [vmem:[%s7] sm:$0xff]
      %v82 = vld [vmem:[%s7 + $0x8] sm:$0xff]
      %83 = vst [vmem:[%s10] sm:$0xff] %v81
      %84 = vst [vmem:[%s10 + $0x8] sm:$0xff] %v82
      %v85 = vld [vmem:[%s8] sm:$0xff]
      %v86 = vld [vmem:[%s8 + $0x8] sm:$0xff]
      %87 = vst [vmem:[%s11] sm:$0xff] %v85
      %88 = vst [vmem:[%s11 + $0x8] sm:$0xff] %v86
    $region53: #{forward.1} parent=1 // pred_fallthru
      _
    %v89 = vld [vmem:[%s0] sm:$0xf]
    %v90 = vld [vmem:[%s0 + $0x4] sm:$0xf]
    %v91 = vld [vmem:[%s0 + $0x8] sm:$0xf]
    %v92 = vld [vmem:[%s0 + $0xc] sm:$0xf]
    %v93 = vld [vmem:[%s0 + $0x10] sm:$0xf]
    %v94 = vld [vmem:[%s0 + $0x14] sm:$0xf]
    %v95 = vld [vmem:[%s0 + $0x18] sm:$0xf]
    %v96 = vld [vmem:[%s0 + $0x1c] sm:$0xf]
    %v97 = vld [vmem:[#allocation5] sm:$0xff]
    %v98 = vld [vmem:[#allocation5 + $0x8] sm:$0xff]
    %v99 = vld [vmem:[#allocation5 + $0x10] sm:$0xff]
    %v100 = vld [vmem:[#allocation5 + $0x18] sm:$0xff]
    %v101 = vld [vmem:[#allocation5 + $0x20] sm:$0xff]
    %v102 = vld [vmem:[#allocation5 + $0x28] sm:$0xff]
    %v103 = vld [vmem:[#allocation5 + $0x30] sm:$0xff]
    %v104 = vld [vmem:[#allocation5 + $0x38] sm:$0xff]
    %v105 = vld [vmem:[#allocation5 + $0x40] sm:$0xff]
    %v106 = vld [vmem:[#allocation5 + $0x48] sm:$0xff]
    %v107 = vld [vmem:[#allocation5 + $0x50] sm:$0xff]
    %v108 = vld [vmem:[#allocation5 + $0x58] sm:$0xff]
    %v109 = vld [vmem:[#allocation5 + $0x60] sm:$0xff]
    %v110 = vld [vmem:[#allocation5 + $0x68] sm:$0xff]
    %v111 = vld [vmem:[#allocation5 + $0x70] sm:$0xff]
    %v112 = vld [vmem:[#allocation5 + $0x78] sm:$0xff]
    %v113 = vld [vmem:[#allocation5 + $0x80] sm:$0xff]
    %v114 = vld [vmem:[#allocation5 + $0x88] sm:$0xff]
    %v115 = vld [vmem:[#allocation5 + $0x90] sm:$0xff]
    %v116 = vld [vmem:[#allocation5 + $0x98] sm:$0xff]
    %v117 = vld [vmem:[#allocation5 + $0xa0] sm:$0xff]
    %v118 = vld [vmem:[#allocation5 + $0xa8] sm:$0xff]
    %v119 = vld [vmem:[#allocation5 + $0xb0] sm:$0xff]
    %v120 = vld [vmem:[#allocation5 + $0xb8] sm:$0xff]
    %v121 = vld [vmem:[#allocation5 + $0xc0] sm:$0xff]
    %v122 = vld [vmem:[#allocation5 + $0xc8] sm:$0xff]
    %v123 = vld [vmem:[#allocation5 + $0xd0] sm:$0xff]
    %v124 = vld [vmem:[#allocation5 + $0xd8] sm:$0xff]
    %v125 = vld [vmem:[#allocation5 + $0xe0] sm:$0xff]
    %v126 = vld [vmem:[#allocation5 + $0xe8] sm:$0xff]
    %v127 = vld [vmem:[#allocation5 + $0xf0] sm:$0xff]
    %v128 = vld [vmem:[#allocation5 + $0xf8] sm:$0xff]
    %v129 = vld [vmem:[%s4] sm:$0xf]
    %v131 = vlaneseq
    %v132 = vshrl.u32 %v131, 7
    %v133 = vsub.s32 0, %v132
    %v134 = vrot.slane %v129, %v133
    %v135 = vlaneseq
    %v136 = vshrl.u32 %v135, 7
    %v137 = vsub.s32 1, %v136
    %v138 = vrot.slane %v129, %v137
    %v139 = vlaneseq
    %v140 = vshrl.u32 %v139, 7
    %v141 = vsub.s32 2, %v140
    %v142 = vrot.slane %v129, %v141
    %v143 = vlaneseq
    %v144 = vshrl.u32 %v143, 7
    %v145 = vsub.s32 3, %v144
    %v146 = vrot.slane %v129, %v145
    %v159 = vunpack.c.l.b16 %v89
    %v160 = vunpack.c.l.b16 %v90
    %v161 = vunpack.c.l.b16 %v91
    %v162 = vunpack.c.l.b16 %v92
    %v163 = vunpack.c.l.b16 %v93
    %v164 = vunpack.c.l.b16 %v94
    %v165 = vunpack.c.l.b16 %v95
    %v166 = vunpack.c.l.b16 %v96
    %v167 = vpack.c.b16 %v160, %v159
    %v168 = vpack.c.b16 %v162, %v161
    %v169 = vpack.c.b16 %v164, %v163
    %v170 = vpack.c.b16 %v166, %v165
    %v207 = vunpack.c.l.b16 %v97
    %v208 = vunpack.c.h.b16 %v97
    %v209 = vunpack.c.l.b16 %v98
    %v210 = vunpack.c.h.b16 %v98
    %v211 = vunpack.c.l.b16 %v99
    %v212 = vunpack.c.h.b16 %v99
    %v213 = vunpack.c.l.b16 %v100
    %v214 = vunpack.c.h.b16 %v100
    %v215 = vunpack.c.l.b16 %v101
    %v216 = vunpack.c.h.b16 %v101
    %v217 = vunpack.c.l.b16 %v102
    %v218 = vunpack.c.h.b16 %v102
    %v219 = vunpack.c.l.b16 %v103
    %v220 = vunpack.c.h.b16 %v103
    %v221 = vunpack.c.l.b16 %v104
    %v222 = vunpack.c.h.b16 %v104
    %v223 = vunpack.c.l.b16 %v105
    %v224 = vunpack.c.h.b16 %v105
    %v225 = vunpack.c.l.b16 %v106
    %v226 = vunpack.c.h.b16 %v106
    %v227 = vunpack.c.l.b16 %v107
    %v228 = vunpack.c.h.b16 %v107
    %v229 = vunpack.c.l.b16 %v108
    %v230 = vunpack.c.h.b16 %v108
    %v231 = vunpack.c.l.b16 %v109
    %v232 = vunpack.c.h.b16 %v109
    %v233 = vunpack.c.l.b16 %v110
    %v234 = vunpack.c.h.b16 %v110
    %v235 = vunpack.c.l.b16 %v111
    %v236 = vunpack.c.h.b16 %v111
    %v237 = vunpack.c.l.b16 %v112
    %v238 = vunpack.c.h.b16 %v112
    %v239 = vunpack.c.l.b16 %v113
    %v240 = vunpack.c.h.b16 %v113
    %v241 = vunpack.c.l.b16 %v114
    %v242 = vunpack.c.h.b16 %v114
    %v243 = vunpack.c.l.b16 %v115
    %v244 = vunpack.c.h.b16 %v115
    %v245 = vunpack.c.l.b16 %v116
    %v246 = vunpack.c.h.b16 %v116
    %v247 = vunpack.c.l.b16 %v117
    %v248 = vunpack.c.h.b16 %v117
    %v249 = vunpack.c.l.b16 %v118
    %v250 = vunpack.c.h.b16 %v118
    %v251 = vunpack.c.l.b16 %v119
    %v252 = vunpack.c.h.b16 %v119
    %v253 = vunpack.c.l.b16 %v120
    %v254 = vunpack.c.h.b16 %v120
    %v255 = vunpack.c.l.b16 %v121
    %v256 = vunpack.c.h.b16 %v121
    %v257 = vunpack.c.l.b16 %v122
    %v258 = vunpack.c.h.b16 %v122
    %v259 = vunpack.c.l.b16 %v123
    %v260 = vunpack.c.h.b16 %v123
    %v261 = vunpack.c.l.b16 %v124
    %v262 = vunpack.c.h.b16 %v124
    %v263 = vunpack.c.l.b16 %v125
    %v264 = vunpack.c.h.b16 %v125
    %v265 = vunpack.c.l.b16 %v126
    %v266 = vunpack.c.h.b16 %v126
    %v267 = vunpack.c.l.b16 %v127
    %v268 = vunpack.c.h.b16 %v127
    %v269 = vunpack.c.l.b16 %v128
    %v270 = vunpack.c.h.b16 %v128
    %v271 = vpack.c.b16 %v211, %v207
    %v272 = vpack.c.b16 %v212, %v208
    %v273 = vpack.c.b16 %v213, %v209
    %v274 = vpack.c.b16 %v214, %v210
    %v275 = vpack.c.b16 %v219, %v215
    %v276 = vpack.c.b16 %v220, %v216
    %v277 = vpack.c.b16 %v221, %v217
    %v278 = vpack.c.b16 %v222, %v218
    %v279 = vpack.c.b16 %v227, %v223
    %v280 = vpack.c.b16 %v228, %v224
    %v281 = vpack.c.b16 %v229, %v225
    %v282 = vpack.c.b16 %v230, %v226
    %v283 = vpack.c.b16 %v235, %v231
    %v284 = vpack.c.b16 %v236, %v232
    %v285 = vpack.c.b16 %v237, %v233
    %v286 = vpack.c.b16 %v238, %v234
    %v287 = vpack.c.b16 %v243, %v239
    %v288 = vpack.c.b16 %v244, %v240
    %v289 = vpack.c.b16 %v245, %v241
    %v290 = vpack.c.b16 %v246, %v242
    %v291 = vpack.c.b16 %v251, %v247
    %v292 = vpack.c.b16 %v252, %v248
    %v293 = vpack.c.b16 %v253, %v249
    %v294 = vpack.c.b16 %v254, %v250
    %v295 = vpack.c.b16 %v259, %v255
    %v296 = vpack.c.b16 %v260, %v256
    %v297 = vpack.c.b16 %v261, %v257
    %v298 = vpack.c.b16 %v262, %v258
    %v299 = vpack.c.b16 %v267, %v263
    %v300 = vpack.c.b16 %v268, %v264
    %v301 = vpack.c.b16 %v269, %v265
    %v302 = vpack.c.b16 %v270, %v266
    %335 = vmatprep.subr.bf16.mxu0 %v300
    %336 = vmatpush1.bf16.msra.mxu0 %v299
    %337 = vmatprep.subr.bf16.mxu0 %v296
    %338 = vmatpush1.bf16.msra.mxu0 %v295
    %339 = vmatprep.subr.bf16.mxu0 %v292
    %340 = vmatpush1.bf16.msra.mxu0 %v291
    %341 = vmatprep.subr.bf16.mxu0 %v288
    %342 = vmatpush1.bf16.msra.mxu0 %v287
    %343 = vmatprep.subr.bf16.mxu0 %v284
    %344 = vmatpush1.bf16.msra.mxu0 %v283
    %345 = vmatprep.subr.bf16.mxu0 %v280
    %346 = vmatpush1.bf16.msra.mxu0 %v279
    %347 = vmatprep.subr.bf16.mxu0 %v276
    %348 = vmatpush1.bf16.msra.mxu0 %v275
    %349 = vmatprep.subr.bf16.mxu0 %v272
    %350 = vmatpush1.bf16.msra.mxu0 %v271
    %351 = vmatprep.subr.bf16.mxu0 0
    %352 = vmatpush2.bf16.msra.mxu0 0
    %353 = vmatprep.subr.bf16.mxu0 0
    %354 = vmatpush2.bf16.msra.mxu0 0
    %355 = vmatprep.subr.bf16.mxu0 0
    %356 = vmatpush2.bf16.msra.mxu0 0
    %357 = vmatprep.subr.bf16.mxu0 0
    %358 = vmatpush2.bf16.msra.mxu0 0
    %359 = vmatprep.subr.bf16.mxu0 0
    %360 = vmatpush2.bf16.msra.mxu0 0
    %361 = vmatprep.subr.bf16.mxu0 0
    %362 = vmatpush2.bf16.msra.mxu0 0
    %363 = vmatprep.subr.bf16.mxu0 0
    %364 = vmatpush2.bf16.msra.mxu0 0
    %365 = vmatprep.subr.bf16.mxu0 0
    %366 = vmatpush2.bf16.msra.mxu0 0
    %367 = vmatprep.mubr.bf16.mxu0 0
    %368 = vmatmul.mubr.bf16.gmra.mxu0 %v167
    %v369 = vpop.f32.mrf.mxu0
    %v370 = vadd.f32 %v134, %v369
    %v371 = vpop.f32.mrf.mxu0
    %v372 = vadd.f32 %v138, %v371
    %v373 = vpop.f32.mrf.mxu0
    %v374 = vadd.f32 %v134, %v373
    %v375 = vpop.f32.mrf.mxu0
    %v376 = vadd.f32 %v138, %v375
    %377 = vmatprep.mubr.bf16.mxu0 0
    %378 = vmatmul.mubr.bf16.gmra.mxu0 %v168
    %v379 = vpop.f32.mrf.mxu0
    %v380 = vadd.f32 %v134, %v379
    %v381 = vpop.f32.mrf.mxu0
    %v382 = vadd.f32 %v138, %v381
    %v383 = vpop.f32.mrf.mxu0
    %v384 = vadd.f32 %v134, %v383
    %v385 = vpop.f32.mrf.mxu0
    %v386 = vadd.f32 %v138, %v385
    %387 = vmatprep.mubr.bf16.mxu0 0
    %388 = vmatmul.mubr.bf16.gmra.mxu0 %v169
    %v389 = vpop.f32.mrf.mxu0
    %v390 = vadd.f32 %v134, %v389
    %v391 = vpop.f32.mrf.mxu0
    %v392 = vadd.f32 %v138, %v391
    %v393 = vpop.f32.mrf.mxu0
    %v394 = vadd.f32 %v134, %v393
    %v395 = vpop.f32.mrf.mxu0
    %v396 = vadd.f32 %v138, %v395
    %397 = vmatprep.mubr.bf16.mxu0 0
    %398 = vmatmul.mubr.bf16.gmra.mxu0 %v170
    %v399 = vpop.f32.mrf.mxu0
    %v400 = vadd.f32 %v134, %v399
    %v401 = vpop.f32.mrf.mxu0
    %v402 = vadd.f32 %v138, %v401
    %v403 = vpop.f32.mrf.mxu0
    %v404 = vadd.f32 %v134, %v403
    %v405 = vpop.f32.mrf.mxu0
    %v406 = vadd.f32 %v138, %v405
    %407 = vdwg.mxu0
    %408 = vmatprep.subr.bf16.mxu0 %v302
    %409 = vmatpush1.bf16.msra.mxu0 %v301
    %410 = vmatprep.subr.bf16.mxu0 %v298
    %411 = vmatpush1.bf16.msra.mxu0 %v297
    %412 = vmatprep.subr.bf16.mxu0 %v294
    %413 = vmatpush1.bf16.msra.mxu0 %v293
    %414 = vmatprep.subr.bf16.mxu0 %v290
    %415 = vmatpush1.bf16.msra.mxu0 %v289
    %416 = vmatprep.subr.bf16.mxu0 %v286
    %417 = vmatpush1.bf16.msra.mxu0 %v285
    %418 = vmatprep.subr.bf16.mxu0 %v282
    %419 = vmatpush1.bf16.msra.mxu0 %v281
    %420 = vmatprep.subr.bf16.mxu0 %v278
    %421 = vmatpush1.bf16.msra.mxu0 %v277
    %422 = vmatprep.subr.bf16.mxu0 %v274
    %423 = vmatpush1.bf16.msra.mxu0 %v273
    %424 = vmatprep.subr.bf16.mxu0 0
    %425 = vmatpush2.bf16.msra.mxu0 0
    %426 = vmatprep.subr.bf16.mxu0 0
    %427 = vmatpush2.bf16.msra.mxu0 0
    %428 = vmatprep.subr.bf16.mxu0 0
    %429 = vmatpush2.bf16.msra.mxu0 0
    %430 = vmatprep.subr.bf16.mxu0 0
    %431 = vmatpush2.bf16.msra.mxu0 0
    %432 = vmatprep.subr.bf16.mxu0 0
    %433 = vmatpush2.bf16.msra.mxu0 0
    %434 = vmatprep.subr.bf16.mxu0 0
    %435 = vmatpush2.bf16.msra.mxu0 0
    %436 = vmatprep.subr.bf16.mxu0 0
    %437 = vmatpush2.bf16.msra.mxu0 0
    %438 = vmatprep.subr.bf16.mxu0 0
    %439 = vmatpush2.bf16.msra.mxu0 0
    %440 = vmatprep.mubr.bf16.mxu0 0
    %441 = vmatmul.mubr.bf16.gmra.mxu0 %v167
    %v442 = vpop.f32.mrf.mxu0
    %v443 = vadd.f32 %v142, %v442
    %v444 = vpop.f32.mrf.mxu0
    %v445 = vadd.f32 %v146, %v444
    %v446 = vpop.f32.mrf.mxu0
    %v447 = vadd.f32 %v142, %v446
    %v448 = vpop.f32.mrf.mxu0
    %v449 = vadd.f32 %v146, %v448
    %450 = vmatprep.mubr.bf16.mxu0 0
    %451 = vmatmul.mubr.bf16.gmra.mxu0 %v168
    %v452 = vpop.f32.mrf.mxu0
    %v453 = vadd.f32 %v142, %v452
    %v454 = vpop.f32.mrf.mxu0
    %v455 = vadd.f32 %v146, %v454
    %v456 = vpop.f32.mrf.mxu0
    %v457 = vadd.f32 %v142, %v456
    %v458 = vpop.f32.mrf.mxu0
    %v459 = vadd.f32 %v146, %v458
    %460 = vmatprep.mubr.bf16.mxu0 0
    %461 = vmatmul.mubr.bf16.gmra.mxu0 %v169
    %v462 = vpop.f32.mrf.mxu0
    %v463 = vadd.f32 %v142, %v462
    %v464 = vpop.f32.mrf.mxu0
    %v465 = vadd.f32 %v146, %v464
    %v466 = vpop.f32.mrf.mxu0
    %v467 = vadd.f32 %v142, %v466
    %v468 = vpop.f32.mrf.mxu0
    %v469 = vadd.f32 %v146, %v468
    %470 = vmatprep.mubr.bf16.mxu0 0
    %471 = vmatmul.mubr.bf16.gmra.mxu0 %v170
    %v472 = vpop.f32.mrf.mxu0
    %v473 = vadd.f32 %v142, %v472
    %v474 = vpop.f32.mrf.mxu0
    %v475 = vadd.f32 %v146, %v474
    %v476 = vpop.f32.mrf.mxu0
    %v477 = vadd.f32 %v142, %v476
    %v478 = vpop.f32.mrf.mxu0
    %v479 = vadd.f32 %v146, %v478
    %480 = vdwg.mxu0
    %481 = vst [vmem:[#allocation2] sm:$0xff] %v370
    %482 = vst [vmem:[#allocation2 + $0x8] sm:$0xff] %v372
    %483 = vst [vmem:[#allocation2 + $0x10] sm:$0xff] %v443
    %484 = vst [vmem:[#allocation2 + $0x18] sm:$0xff] %v445
    %485 = vst [vmem:[#allocation2 + $0x20] sm:$0xff] %v374
    %486 = vst [vmem:[#allocation2 + $0x28] sm:$0xff] %v376
    %487 = vst [vmem:[#allocation2 + $0x30] sm:$0xff] %v447
    %488 = vst [vmem:[#allocation2 + $0x38] sm:$0xff] %v449
    %489 = vst [vmem:[#allocation2 + $0x40] sm:$0xff] %v380
    %490 = vst [vmem:[#allocation2 + $0x48] sm:$0xff] %v382
    %491 = vst [vmem:[#allocation2 + $0x50] sm:$0xff] %v453
    %492 = vst [vmem:[#allocation2 + $0x58] sm:$0xff] %v455
    %493 = vst [vmem:[#allocation2 + $0x60] sm:$0xff] %v384
    %494 = vst [vmem:[#allocation2 + $0x68] sm:$0xff] %v386
    %495 = vst [vmem:[#allocation2 + $0x70] sm:$0xff] %v457
    %496 = vst [vmem:[#allocation2 + $0x78] sm:$0xff] %v459
    %497 = vst [vmem:[#allocation2 + $0x80] sm:$0xff] %v390
    %498 = vst [vmem:[#allocation2 + $0x88] sm:$0xff] %v392
    %499 = vst [vmem:[#allocation2 + $0x90] sm:$0xff] %v463
    %500 = vst [vmem:[#allocation2 + $0x98] sm:$0xff] %v465
    %501 = vst [vmem:[#allocation2 + $0xa0] sm:$0xff] %v394
    %502 = vst [vmem:[#allocation2 + $0xa8] sm:$0xff] %v396
    %503 = vst [vmem:[#allocation2 + $0xb0] sm:$0xff] %v467
    %504 = vst [vmem:[#allocation2 + $0xb8] sm:$0xff] %v469
    %505 = vst [vmem:[#allocation2 + $0xc0] sm:$0xff] %v400
    %506 = vst [vmem:[#allocation2 + $0xc8] sm:$0xff] %v402
    %507 = vst [vmem:[#allocation2 + $0xd0] sm:$0xff] %v473
    %508 = vst [vmem:[#allocation2 + $0xd8] sm:$0xff] %v475
    %509 = vst [vmem:[#allocation2 + $0xe0] sm:$0xff] %v404
    %510 = vst [vmem:[#allocation2 + $0xe8] sm:$0xff] %v406
    %511 = vst [vmem:[#allocation2 + $0xf0] sm:$0xff] %v477
    %512 = vst [vmem:[#allocation2 + $0xf8] sm:$0xff] %v479
    %v513 = vld [vmem:[%s10] sm:$0xff]
    %v514 = vld [vmem:[%s11] sm:$0xff]
    %s515 = smul.u32 0, 4
    %s516 = smul.addr %s515, 8
    %s517 = scalar_lea.vmem [#allocation2], %s516
    %v518 = vld [vmem:[%s517] sm:$0xff]
    %v519 = vld [vmem:[%s517 + $0x8] sm:$0xff]
    %v520 = vld [vmem:[%s517 + $0x10] sm:$0xff]
    %v521 = vld [vmem:[%s517 + $0x18] sm:$0xff]
    %v522 = vpack.c.bf16 %v513, %v513
    %v523 = vld [vmem:[#allocation9] sm:$0xff]
    %v524 = vld [vmem:[#allocation9 + $0x8] sm:$0xff]
    %v525 = vld [vmem:[#allocation9 + $0x10] sm:$0xff]
    %v526 = vld [vmem:[#allocation9 + $0x18] sm:$0xff]
    %v527 = vld [vmem:[#allocation9 + $0x20] sm:$0xff]
    %v528 = vld [vmem:[#allocation9 + $0x28] sm:$0xff]
    %v529 = vld [vmem:[#allocation9 + $0x30] sm:$0xff]
    %v530 = vld [vmem:[#allocation9 + $0x38] sm:$0xff]
    %v531 = vld [vmem:[#allocation9 + $0x40] sm:$0xff]
    %v532 = vld [vmem:[#allocation9 + $0x48] sm:$0xff]
    %v533 = vld [vmem:[#allocation9 + $0x50] sm:$0xff]
    %v534 = vld [vmem:[#allocation9 + $0x58] sm:$0xff]
    %v535 = vld [vmem:[#allocation9 + $0x60] sm:$0xff]
    %v536 = vld [vmem:[#allocation9 + $0x68] sm:$0xff]
    %v537 = vld [vmem:[#allocation9 + $0x70] sm:$0xff]
    %v538 = vld [vmem:[#allocation9 + $0x78] sm:$0xff]
    %v539 = vld [vmem:[#allocation9 + $0x80] sm:$0xff]
    %v540 = vld [vmem:[#allocation9 + $0x88] sm:$0xff]
    %v541 = vld [vmem:[#allocation9 + $0x90] sm:$0xff]
    %v542 = vld [vmem:[#allocation9 + $0x98] sm:$0xff]
    %v543 = vld [vmem:[#allocation9 + $0xa0] sm:$0xff]
    %v544 = vld [vmem:[#allocation9 + $0xa8] sm:$0xff]
    %v545 = vld [vmem:[#allocation9 + $0xb0] sm:$0xff]
    %v546 = vld [vmem:[#allocation9 + $0xb8] sm:$0xff]
    %v547 = vld [vmem:[#allocation9 + $0xc0] sm:$0xff]
    %v548 = vld [vmem:[#allocation9 + $0xc8] sm:$0xff]
    %v549 = vld [vmem:[#allocation9 + $0xd0] sm:$0xff]
    %v550 = vld [vmem:[#allocation9 + $0xd8] sm:$0xff]
    %v551 = vld [vmem:[#allocation9 + $0xe0] sm:$0xff]
    %v552 = vld [vmem:[#allocation9 + $0xe8] sm:$0xff]
    %v553 = vld [vmem:[#allocation9 + $0xf0] sm:$0xff]
    %v554 = vld [vmem:[#allocation9 + $0xf8] sm:$0xff]
    %v587 = vunpack.c.l.b16 %v523
    %v588 = vunpack.c.h.b16 %v523
    %v589 = vunpack.c.l.b16 %v524
    %v590 = vunpack.c.h.b16 %v524
    %v591 = vunpack.c.l.b16 %v525
    %v592 = vunpack.c.h.b16 %v525
    %v593 = vunpack.c.l.b16 %v526
    %v594 = vunpack.c.h.b16 %v526
    %v595 = vunpack.c.l.b16 %v527
    %v596 = vunpack.c.h.b16 %v527
    %v597 = vunpack.c.l.b16 %v528
    %v598 = vunpack.c.h.b16 %v528
    %v599 = vunpack.c.l.b16 %v529
    %v600 = vunpack.c.h.b16 %v529
    %v601 = vunpack.c.l.b16 %v530
    %v602 = vunpack.c.h.b16 %v530
    %v603 = vunpack.c.l.b16 %v531
    %v604 = vunpack.c.h.b16 %v531
    %v605 = vunpack.c.l.b16 %v532
    %v606 = vunpack.c.h.b16 %v532
    %v607 = vunpack.c.l.b16 %v533
    %v608 = vunpack.c.h.b16 %v533
    %v609 = vunpack.c.l.b16 %v534
    %v610 = vunpack.c.h.b16 %v534
    %v611 = vunpack.c.l.b16 %v535
    %v612 = vunpack.c.h.b16 %v535
    %v613 = vunpack.c.l.b16 %v536
    %v614 = vunpack.c.h.b16 %v536
    %v615 = vunpack.c.l.b16 %v537
    %v616 = vunpack.c.h.b16 %v537
    %v617 = vunpack.c.l.b16 %v538
    %v618 = vunpack.c.h.b16 %v538
    %v619 = vunpack.c.l.b16 %v539
    %v620 = vunpack.c.h.b16 %v539
    %v621 = vunpack.c.l.b16 %v540
    %v622 = vunpack.c.h.b16 %v540
    %v623 = vunpack.c.l.b16 %v541
    %v624 = vunpack.c.h.b16 %v541
    %v625 = vunpack.c.l.b16 %v542
    %v626 = vunpack.c.h.b16 %v542
    %v627 = vunpack.c.l.b16 %v543
    %v628 = vunpack.c.h.b16 %v543
    %v629 = vunpack.c.l.b16 %v544
    %v630 = vunpack.c.h.b16 %v544
    %v631 = vunpack.c.l.b16 %v545
    %v632 = vunpack.c.h.b16 %v545
    %v633 = vunpack.c.l.b16 %v546
    %v634 = vunpack.c.h.b16 %v546
    %v635 = vunpack.c.l.b16 %v547
    %v636 = vunpack.c.h.b16 %v547
    %v637 = vunpack.c.l.b16 %v548
    %v638 = vunpack.c.h.b16 %v548
    %v639 = vunpack.c.l.b16 %v549
    %v640 = vunpack.c.h.b16 %v549
    %v641 = vunpack.c.l.b16 %v550
    %v642 = vunpack.c.h.b16 %v550
    %v643 = vunpack.c.l.b16 %v551
    %v644 = vunpack.c.h.b16 %v551
    %v645 = vunpack.c.l.b16 %v552
    %v646 = vunpack.c.h.b16 %v552
    %v647 = vunpack.c.l.b16 %v553
    %v648 = vunpack.c.h.b16 %v553
    %v649 = vunpack.c.l.b16 %v554
    %v650 = vunpack.c.h.b16 %v554
    %v651 = vpack.c.b16 %v591, %v587
    %v652 = vpack.c.b16 %v592, %v588
    %v653 = vpack.c.b16 %v593, %v589
    %v654 = vpack.c.b16 %v594, %v590
    %v655 = vpack.c.b16 %v599, %v595
    %v656 = vpack.c.b16 %v600, %v596
    %v657 = vpack.c.b16 %v601, %v597
    %v658 = vpack.c.b16 %v602, %v598
    %v659 = vpack.c.b16 %v607, %v603
    %v660 = vpack.c.b16 %v608, %v604
    %v661 = vpack.c.b16 %v609, %v605
    %v662 = vpack.c.b16 %v610, %v606
    %v663 = vpack.c.b16 %v615, %v611
    %v664 = vpack.c.b16 %v616, %v612
    %v665 = vpack.c.b16 %v617, %v613
    %v666 = vpack.c.b16 %v618, %v614
    %v667 = vpack.c.b16 %v623, %v619
    %v668 = vpack.c.b16 %v624, %v620
    %v669 = vpack.c.b16 %v625, %v621
    %v670 = vpack.c.b16 %v626, %v622
    %v671 = vpack.c.b16 %v631, %v627
    %v672 = vpack.c.b16 %v632, %v628
    %v673 = vpack.c.b16 %v633, %v629
    %v674 = vpack.c.b16 %v634, %v630
    %v675 = vpack.c.b16 %v639, %v635
    %v676 = vpack.c.b16 %v640, %v636
    %v677 = vpack.c.b16 %v641, %v637
    %v678 = vpack.c.b16 %v642, %v638
    %v679 = vpack.c.b16 %v647, %v643
    %v680 = vpack.c.b16 %v648, %v644
    %v681 = vpack.c.b16 %v649, %v645
    %v682 = vpack.c.b16 %v650, %v646
    %715 = vmatprep.subr.bf16.mxu0 %v680
    %716 = vmatpush1.bf16.msra.mxu0 %v679
    %717 = vmatprep.subr.bf16.mxu0 %v676
    %718 = vmatpush1.bf16.msra.mxu0 %v675
    %719 = vmatprep.subr.bf16.mxu0 %v672
    %720 = vmatpush1.bf16.msra.mxu0 %v671
    %721 = vmatprep.subr.bf16.mxu0 %v668
    %722 = vmatpush1.bf16.msra.mxu0 %v667
    %723 = vmatprep.subr.bf16.mxu0 %v664
    %724 = vmatpush1.bf16.msra.mxu0 %v663
    %725 = vmatprep.subr.bf16.mxu0 %v660
    %726 = vmatpush1.bf16.msra.mxu0 %v659
    %727 = vmatprep.subr.bf16.mxu0 %v656
    %728 = vmatpush1.bf16.msra.mxu0 %v655
    %729 = vmatprep.subr.bf16.mxu0 %v652
    %730 = vmatpush1.bf16.msra.mxu0 %v651
    %731 = vmatprep.subr.bf16.mxu0 0
    %732 = vmatpush2.bf16.msra.mxu0 0
    %733 = vmatprep.subr.bf16.mxu0 0
    %734 = vmatpush2.bf16.msra.mxu0 0
    %735 = vmatprep.subr.bf16.mxu0 0
    %736 = vmatpush2.bf16.msra.mxu0 0
    %737 = vmatprep.subr.bf16.mxu0 0
    %738 = vmatpush2.bf16.msra.mxu0 0
    %739 = vmatprep.subr.bf16.mxu0 0
    %740 = vmatpush2.bf16.msra.mxu0 0
    %741 = vmatprep.subr.bf16.mxu0 0
    %742 = vmatpush2.bf16.msra.mxu0 0
    %743 = vmatprep.subr.bf16.mxu0 0
    %744 = vmatpush2.bf16.msra.mxu0 0
    %745 = vmatprep.subr.bf16.mxu0 0
    %746 = vmatpush2.bf16.msra.mxu0 0
    %747 = vmatprep.mubr.bf16.mxu0 0
    %748 = vmatmul.mubr.bf16.gmra.mxu0 %v522
    %v749 = vpop.f32.mrf.mxu0
    %v750 = vadd.f32 0.0, %v749
    %v751 = vpop.f32.mrf.mxu0
    %v752 = vadd.f32 0.0, %v751
    %v753 = vpop.f32.mrf.mxu0
    %v754 = vpop.f32.mrf.mxu0
    %755 = vdwg.mxu0
    %756 = vmatprep.subr.bf16.mxu0 %v682
    %757 = vmatpush1.bf16.msra.mxu0 %v681
    %758 = vmatprep.subr.bf16.mxu0 %v678
    %759 = vmatpush1.bf16.msra.mxu0 %v677
    %760 = vmatprep.subr.bf16.mxu0 %v674
    %761 = vmatpush1.bf16.msra.mxu0 %v673
    %762 = vmatprep.subr.bf16.mxu0 %v670
    %763 = vmatpush1.bf16.msra.mxu0 %v669
    %764 = vmatprep.subr.bf16.mxu0 %v666
    %765 = vmatpush1.bf16.msra.mxu0 %v665
    %766 = vmatprep.subr.bf16.mxu0 %v662
    %767 = vmatpush1.bf16.msra.mxu0 %v661
    %768 = vmatprep.subr.bf16.mxu0 %v658
    %769 = vmatpush1.bf16.msra.mxu0 %v657
    %770 = vmatprep.subr.bf16.mxu0 %v654
    %771 = vmatpush1.bf16.msra.mxu0 %v653
    %772 = vmatprep.subr.bf16.mxu0 0
    %773 = vmatpush2.bf16.msra.mxu0 0
    %774 = vmatprep.subr.bf16.mxu0 0
    %775 = vmatpush2.bf16.msra.mxu0 0
    %776 = vmatprep.subr.bf16.mxu0 0
    %777 = vmatpush2.bf16.msra.mxu0 0
    %778 = vmatprep.subr.bf16.mxu0 0
    %779 = vmatpush2.bf16.msra.mxu0 0
    %780 = vmatprep.subr.bf16.mxu0 0
    %781 = vmatpush2.bf16.msra.mxu0 0
    %782 = vmatprep.subr.bf16.mxu0 0
    %783 = vmatpush2.bf16.msra.mxu0 0
    %784 = vmatprep.subr.bf16.mxu0 0
    %785 = vmatpush2.bf16.msra.mxu0 0
    %786 = vmatprep.subr.bf16.mxu0 0
    %787 = vmatpush2.bf16.msra.mxu0 0
    %788 = vmatprep.mubr.bf16.mxu0 0
    %789 = vmatmul.mubr.bf16.gmra.mxu0 %v522
    %v790 = vpop.f32.mrf.mxu0
    %v791 = vadd.f32 0.0, %v790
    %v792 = vpop.f32.mrf.mxu0
    %v793 = vadd.f32 0.0, %v792
    %v794 = vpop.f32.mrf.mxu0
    %v795 = vpop.f32.mrf.mxu0
    %796 = vdwg.mxu0
    %v797 = vadd.f32 %v518, %v750
    %v798 = vadd.f32 %v519, %v752
    %v799 = vadd.f32 %v520, %v791
    %v800 = vadd.f32 %v521, %v793
    %v801 = vxor.u32 %v797, 2147483648
    %v802 = vmul.f32 %v801, 1.442695
    %v803 = vpow.pop %v802
    %v804 = vadd.f32 %v803, 1.0
    %v805 = vrcp.pop %v804
    %v806 = vmul.f32 1.0, %v805
    %v807 = vxor.u32 %v798, 2147483648
    %v808 = vmul.f32 %v807, 1.442695
    %v809 = vpow.pop %v808
    %v810 = vadd.f32 %v809, 1.0
    %v811 = vrcp.pop %v810
    %v812 = vmul.f32 1.0, %v811
    %v813 = vtanh.pop %v799
    %v814 = vxor.u32 %v800, 2147483648
    %v815 = vmul.f32 %v814, 1.442695
    %v816 = vpow.pop %v815
    %v817 = vadd.f32 %v816, 1.0
    %v818 = vrcp.pop %v817
    %v819 = vmul.f32 1.0, %v818
    %v820 = vmul.f32 %v812, %v514
    %v821 = vmul.f32 %v806, %v813
    %v822 = vadd.f32 %v820, %v821
    %v823 = vtanh.pop %v822
    %v824 = vmul.f32 %v819, %v823
    %v825 = vpack.c.bf16 %v824, %v824
    %826 = vst [vmem:[#allocation3] sm:$0xf] %v825
    %s827 = smul.u32 1, 4
    %s828 = smul.addr %s827, 8
    %s829 = scalar_lea.vmem [#allocation2], %s828
    %v830 = vld [vmem:[%s829] sm:$0xff]
    %v831 = vld [vmem:[%s829 + $0x8] sm:$0xff]
    %v832 = vld [vmem:[%s829 + $0x10] sm:$0xff]
    %v833 = vld [vmem:[%s829 + $0x18] sm:$0xff]
    %v834 = vld [vmem:[#allocation9] sm:$0xff]
    %v835 = vld [vmem:[#allocation9 + $0x8] sm:$0xff]
    %v836 = vld [vmem:[#allocation9 + $0x10] sm:$0xff]
    %v837 = vld [vmem:[#allocation9 + $0x18] sm:$0xff]
    %v838 = vld [vmem:[#allocation9 + $0x20] sm:$0xff]
    %v839 = vld [vmem:[#allocation9 + $0x28] sm:$0xff]
    %v840 = vld [vmem:[#allocation9 + $0x30] sm:$0xff]
    %v841 = vld [vmem:[#allocation9 + $0x38] sm:$0xff]
    %v842 = vld [vmem:[#allocation9 + $0x40] sm:$0xff]
    %v843 = vld [vmem:[#allocation9 + $0x48] sm:$0xff]
    %v844 = vld [vmem:[#allocation9 + $0x50] sm:$0xff]
    %v845 = vld [vmem:[#allocation9 + $0x58] sm:$0xff]
    %v846 = vld [vmem:[#allocation9 + $0x60] sm:$0xff]
    %v847 = vld [vmem:[#allocation9 + $0x68] sm:$0xff]
    %v848 = vld [vmem:[#allocation9 + $0x70] sm:$0xff]
    %v849 = vld [vmem:[#allocation9 + $0x78] sm:$0xff]
    %v850 = vld [vmem:[#allocation9 + $0x80] sm:$0xff]
    %v851 = vld [vmem:[#allocation9 + $0x88] sm:$0xff]
    %v852 = vld [vmem:[#allocation9 + $0x90] sm:$0xff]
    %v853 = vld [vmem:[#allocation9 + $0x98] sm:$0xff]
    %v854 = vld [vmem:[#allocation9 + $0xa0] sm:$0xff]
    %v855 = vld [vmem:[#allocation9 + $0xa8] sm:$0xff]
    %v856 = vld [vmem:[#allocation9 + $0xb0] sm:$0xff]
    %v857 = vld [vmem:[#allocation9 + $0xb8] sm:$0xff]
    %v858 = vld [vmem:[#allocation9 + $0xc0] sm:$0xff]
    %v859 = vld [vmem:[#allocation9 + $0xc8] sm:$0xff]
    %v860 = vld [vmem:[#allocation9 + $0xd0] sm:$0xff]
    %v861 = vld [vmem:[#allocation9 + $0xd8] sm:$0xff]
    %v862 = vld [vmem:[#allocation9 + $0xe0] sm:$0xff]
    %v863 = vld [vmem:[#allocation9 + $0xe8] sm:$0xff]
    %v864 = vld [vmem:[#allocation9 + $0xf0] sm:$0xff]
    %v865 = vld [vmem:[#allocation9 + $0xf8] sm:$0xff]
    %v898 = vunpack.c.l.b16 %v834
    %v899 = vunpack.c.h.b16 %v834
    %v900 = vunpack.c.l.b16 %v835
    %v901 = vunpack.c.h.b16 %v835
    %v902 = vunpack.c.l.b16 %v836
    %v903 = vunpack.c.h.b16 %v836
    %v904 = vunpack.c.l.b16 %v837
    %v905 = vunpack.c.h.b16 %v837
    %v906 = vunpack.c.l.b16 %v838
    %v907 = vunpack.c.h.b16 %v838
    %v908 = vunpack.c.l.b16 %v839
    %v909 = vunpack.c.h.b16 %v839
    %v910 = vunpack.c.l.b16 %v840
    %v911 = vunpack.c.h.b16 %v840
    %v912 = vunpack.c.l.b16 %v841
    %v913 = vunpack.c.h.b16 %v841
    %v914 = vunpack.c.l.b16 %v842
    %v915 = vunpack.c.h.b16 %v842
    %v916 = vunpack.c.l.b16 %v843
    %v917 = vunpack.c.h.b16 %v843
    %v918 = vunpack.c.l.b16 %v844
    %v919 = vunpack.c.h.b16 %v844
    %v920 = vunpack.c.l.b16 %v845
    %v921 = vunpack.c.h.b16 %v845
    %v922 = vunpack.c.l.b16 %v846
    %v923 = vunpack.c.h.b16 %v846
    %v924 = vunpack.c.l.b16 %v847
    %v925 = vunpack.c.h.b16 %v847
    %v926 = vunpack.c.l.b16 %v848
    %v927 = vunpack.c.h.b16 %v848
    %v928 = vunpack.c.l.b16 %v849
    %v929 = vunpack.c.h.b16 %v849
    %v930 = vunpack.c.l.b16 %v850
    %v931 = vunpack.c.h.b16 %v850
    %v932 = vunpack.c.l.b16 %v851
    %v933 = vunpack.c.h.b16 %v851
    %v934 = vunpack.c.l.b16 %v852
    %v935 = vunpack.c.h.b16 %v852
    %v936 = vunpack.c.l.b16 %v853
    %v937 = vunpack.c.h.b16 %v853
    %v938 = vunpack.c.l.b16 %v854
    %v939 = vunpack.c.h.b16 %v854
    %v940 = vunpack.c.l.b16 %v855
    %v941 = vunpack.c.h.b16 %v855
    %v942 = vunpack.c.l.b16 %v856
    %v943 = vunpack.c.h.b16 %v856
    %v944 = vunpack.c.l.b16 %v857
    %v945 = vunpack.c.h.b16 %v857
    %v946 = vunpack.c.l.b16 %v858
    %v947 = vunpack.c.h.b16 %v858
    %v948 = vunpack.c.l.b16 %v859
    %v949 = vunpack.c.h.b16 %v859
    %v950 = vunpack.c.l.b16 %v860
    %v951 = vunpack.c.h.b16 %v860
    %v952 = vunpack.c.l.b16 %v861
    %v953 = vunpack.c.h.b16 %v861
    %v954 = vunpack.c.l.b16 %v862
    %v955 = vunpack.c.h.b16 %v862
    %v956 = vunpack.c.l.b16 %v863
    %v957 = vunpack.c.h.b16 %v863
    %v958 = vunpack.c.l.b16 %v864
    %v959 = vunpack.c.h.b16 %v864
    %v960 = vunpack.c.l.b16 %v865
    %v961 = vunpack.c.h.b16 %v865
    %v962 = vpack.c.b16 %v902, %v898
    %v963 = vpack.c.b16 %v903, %v899
    %v964 = vpack.c.b16 %v904, %v900
    %v965 = vpack.c.b16 %v905, %v901
    %v966 = vpack.c.b16 %v910, %v906
    %v967 = vpack.c.b16 %v911, %v907
    %v968 = vpack.c.b16 %v912, %v908
    %v969 = vpack.c.b16 %v913, %v909
    %v970 = vpack.c.b16 %v918, %v914
    %v971 = vpack.c.b16 %v919, %v915
    %v972 = vpack.c.b16 %v920, %v916
    %v973 = vpack.c.b16 %v921, %v917
    %v974 = vpack.c.b16 %v926, %v922
    %v975 = vpack.c.b16 %v927, %v923
    %v976 = vpack.c.b16 %v928, %v924
    %v977 = vpack.c.b16 %v929, %v925
    %v978 = vpack.c.b16 %v934, %v930
    %v979 = vpack.c.b16 %v935, %v931
    %v980 = vpack.c.b16 %v936, %v932
    %v981 = vpack.c.b16 %v937, %v933
    %v982 = vpack.c.b16 %v942, %v938
    %v983 = vpack.c.b16 %v943, %v939
    %v984 = vpack.c.b16 %v944, %v940
    %v985 = vpack.c.b16 %v945, %v941
    %v986 = vpack.c.b16 %v950, %v946
    %v987 = vpack.c.b16 %v951, %v947
    %v988 = vpack.c.b16 %v952, %v948
    %v989 = vpack.c.b16 %v953, %v949
    %v990 = vpack.c.b16 %v958, %v954
    %v991 = vpack.c.b16 %v959, %v955
    %v992 = vpack.c.b16 %v960, %v956
    %v993 = vpack.c.b16 %v961, %v957
    %1026 = vmatprep.subr.bf16.mxu0 %v991
    %1027 = vmatpush1.bf16.msra.mxu0 %v990
    %1028 = vmatprep.subr.bf16.mxu0 %v987
    %1029 = vmatpush1.bf16.msra.mxu0 %v986
    %1030 = vmatprep.subr.bf16.mxu0 %v983
    %1031 = vmatpush1.bf16.msra.mxu0 %v982
    %1032 = vmatprep.subr.bf16.mxu0 %v979
    %1033 = vmatpush1.bf16.msra.mxu0 %v978
    %1034 = vmatprep.subr.bf16.mxu0 %v975
    %1035 = vmatpush1.bf16.msra.mxu0 %v974
    %1036 = vmatprep.subr.bf16.mxu0 %v971
    %1037 = vmatpush1.bf16.msra.mxu0 %v970
    %1038 = vmatprep.subr.bf16.mxu0 %v967
    %1039 = vmatpush1.bf16.msra.mxu0 %v966
    %1040 = vmatprep.subr.bf16.mxu0 %v963
    %1041 = vmatpush1.bf16.msra.mxu0 %v962
    %1042 = vmatprep.subr.bf16.mxu0 0
    %1043 = vmatpush2.bf16.msra.mxu0 0
    %1044 = vmatprep.subr.bf16.mxu0 0
    %1045 = vmatpush2.bf16.msra.mxu0 0
    %1046 = vmatprep.subr.bf16.mxu0 0
    %1047 = vmatpush2.bf16.msra.mxu0 0
    %1048 = vmatprep.subr.bf16.mxu0 0
    %1049 = vmatpush2.bf16.msra.mxu0 0
    %1050 = vmatprep.subr.bf16.mxu0 0
    %1051 = vmatpush2.bf16.msra.mxu0 0
    %1052 = vmatprep.subr.bf16.mxu0 0
    %1053 = vmatpush2.bf16.msra.mxu0 0
    %1054 = vmatprep.subr.bf16.mxu0 0
    %1055 = vmatpush2.bf16.msra.mxu0 0
    %1056 = vmatprep.subr.bf16.mxu0 0
    %1057 = vmatpush2.bf16.msra.mxu0 0
    %1058 = vmatprep.mubr.bf16.mxu0 0
    %1059 = vmatmul.mubr.bf16.gmra.mxu0 %v825
    %v1060 = vpop.f32.mrf.mxu0
    %v1061 = vadd.f32 0.0, %v1060
    %v1062 = vpop.f32.mrf.mxu0
    %v1063 = vadd.f32 0.0, %v1062
    %v1064 = vpop.f32.mrf.mxu0
    %v1065 = vpop.f32.mrf.mxu0
    %1066 = vdwg.mxu0
    %1067 = vmatprep.subr.bf16.mxu0 %v993
    %1068 = vmatpush1.bf16.msra.mxu0 %v992
    %1069 = vmatprep.subr.bf16.mxu0 %v989
    %1070 = vmatpush1.bf16.msra.mxu0 %v988
    %1071 = vmatprep.subr.bf16.mxu0 %v985
    %1072 = vmatpush1.bf16.msra.mxu0 %v984
    %1073 = vmatprep.subr.bf16.mxu0 %v981
    %1074 = vmatpush1.bf16.msra.mxu0 %v980
    %1075 = vmatprep.subr.bf16.mxu0 %v977
    %1076 = vmatpush1.bf16.msra.mxu0 %v976
    %1077 = vmatprep.subr.bf16.mxu0 %v973
    %1078 = vmatpush1.bf16.msra.mxu0 %v972
    %1079 = vmatprep.subr.bf16.mxu0 %v969
    %1080 = vmatpush1.bf16.msra.mxu0 %v968
    %1081 = vmatprep.subr.bf16.mxu0 %v965
    %1082 = vmatpush1.bf16.msra.mxu0 %v964
    %1083 = vmatprep.subr.bf16.mxu0 0
    %1084 = vmatpush2.bf16.msra.mxu0 0
    %1085 = vmatprep.subr.bf16.mxu0 0
    %1086 = vmatpush2.bf16.msra.mxu0 0
    %1087 = vmatprep.subr.bf16.mxu0 0
    %1088 = vmatpush2.bf16.msra.mxu0 0
    %1089 = vmatprep.subr.bf16.mxu0 0
    %1090 = vmatpush2.bf16.msra.mxu0 0
    %1091 = vmatprep.subr.bf16.mxu0 0
    %1092 = vmatpush2.bf16.msra.mxu0 0
    %1093 = vmatprep.subr.bf16.mxu0 0
    %1094 = vmatpush2.bf16.msra.mxu0 0
    %1095 = vmatprep.subr.bf16.mxu0 0
    %1096 = vmatpush2.bf16.msra.mxu0 0
    %1097 = vmatprep.subr.bf16.mxu0 0
    %1098 = vmatpush2.bf16.msra.mxu0 0
    %1099 = vmatprep.mubr.bf16.mxu0 0
    %1100 = vmatmul.mubr.bf16.gmra.mxu0 %v825
    %v1101 = vpop.f32.mrf.mxu0
    %v1102 = vadd.f32 0.0, %v1101
    %v1103 = vpop.f32.mrf.mxu0
    %v1104 = vadd.f32 0.0, %v1103
    %v1105 = vpop.f32.mrf.mxu0
    %v1106 = vpop.f32.mrf.mxu0
    %1107 = vdwg.mxu0
    %v1108 = vadd.f32 %v830, %v1061
    %v1109 = vadd.f32 %v831, %v1063
    %v1110 = vadd.f32 %v832, %v1102
    %v1111 = vadd.f32 %v833, %v1104
    %v1112 = vxor.u32 %v1108, 2147483648
    %v1113 = vmul.f32 %v1112, 1.442695
    %v1114 = vpow.pop %v1113
    %v1115 = vadd.f32 %v1114, 1.0
    %v1116 = vrcp.pop %v1115
    %v1117 = vmul.f32 1.0, %v1116
    %v1118 = vxor.u32 %v1109, 2147483648
    %v1119 = vmul.f32 %v1118, 1.442695
    %v1120 = vpow.pop %v1119
    %v1121 = vadd.f32 %v1120, 1.0
    %v1122 = vrcp.pop %v1121
    %v1123 = vmul.f32 1.0, %v1122
    %v1124 = vtanh.pop %v1110
    %v1125 = vxor.u32 %v1111, 2147483648
    %v1126 = vmul.f32 %v1125, 1.442695
    %v1127 = vpow.pop %v1126
    %v1128 = vadd.f32 %v1127, 1.0
    %v1129 = vrcp.pop %v1128
    %v1130 = vmul.f32 1.0, %v1129
    %v1131 = vmul.f32 %v1123, %v822
    %v1132 = vmul.f32 %v1117, %v1124
    %v1133 = vadd.f32 %v1131, %v1132
    %v1134 = vtanh.pop %v1133
    %v1135 = vmul.f32 %v1130, %v1134
    %v1136 = vpack.c.bf16 %v1135, %v1135
    %s1137 = scalar_lea.vmem [#allocation3], 4
    %1138 = vst [vmem:[%s1137] sm:$0xf] %v1136
    %s1139 = smul.u32 2, 4
    %s1140 = smul.addr %s1139, 8
    %s1141 = scalar_lea.vmem [#allocation2], %s1140
    %v1142 = vld [vmem:[%s1141] sm:$0xff]
    %v1143 = vld [vmem:[%s1141 + $0x8] sm:$0xff]
    %v1144 = vld [vmem:[%s1141 + $0x10] sm:$0xff]
    %v1145 = vld [vmem:[%s1141 + $0x18] sm:$0xff]
    %v1146 = vld [vmem:[#allocation9] sm:$0xff]
    %v1147 = vld [vmem:[#allocation9 + $0x8] sm:$0xff]
    %v1148 = vld [vmem:[#allocation9 + $0x10] sm:$0xff]
    %v1149 = vld [vmem:[#allocation9 + $0x18] sm:$0xff]
    %v1150 = vld [vmem:[#allocation9 + $0x20] sm:$0xff]
    %v1151 = vld [vmem:[#allocation9 + $0x28] sm:$0xff]
    %v1152 = vld [vmem:[#allocation9 + $0x30] sm:$0xff]
    %v1153 = vld [vmem:[#allocation9 + $0x38] sm:$0xff]
    %v1154 = vld [vmem:[#allocation9 + $0x40] sm:$0xff]
    %v1155 = vld [vmem:[#allocation9 + $0x48] sm:$0xff]
    %v1156 = vld [vmem:[#allocation9 + $0x50] sm:$0xff]
    %v1157 = vld [vmem:[#allocation9 + $0x58] sm:$0xff]
    %v1158 = vld [vmem:[#allocation9 + $0x60] sm:$0xff]
    %v1159 = vld [vmem:[#allocation9 + $0x68] sm:$0xff]
    %v1160 = vld [vmem:[#allocation9 + $0x70] sm:$0xff]
    %v1161 = vld [vmem:[#allocation9 + $0x78] sm:$0xff]
    %v1162 = vld [vmem:[#allocation9 + $0x80] sm:$0xff]
    %v1163 = vld [vmem:[#allocation9 + $0x88] sm:$0xff]
    %v1164 = vld [vmem:[#allocation9 + $0x90] sm:$0xff]
    %v1165 = vld [vmem:[#allocation9 + $0x98] sm:$0xff]
    %v1166 = vld [vmem:[#allocation9 + $0xa0] sm:$0xff]
    %v1167 = vld [vmem:[#allocation9 + $0xa8] sm:$0xff]
    %v1168 = vld [vmem:[#allocation9 + $0xb0] sm:$0xff]
    %v1169 = vld [vmem:[#allocation9 + $0xb8] sm:$0xff]
    %v1170 = vld [vmem:[#allocation9 + $0xc0] sm:$0xff]
    %v1171 = vld [vmem:[#allocation9 + $0xc8] sm:$0xff]
    %v1172 = vld [vmem:[#allocation9 + $0xd0] sm:$0xff]
    %v1173 = vld [vmem:[#allocation9 + $0xd8] sm:$0xff]
    %v1174 = vld [vmem:[#allocation9 + $0xe0] sm:$0xff]
    %v1175 = vld [vmem:[#allocation9 + $0xe8] sm:$0xff]
    %v1176 = vld [vmem:[#allocation9 + $0xf0] sm:$0xff]
    %v1177 = vld [vmem:[#allocation9 + $0xf8] sm:$0xff]
    %v1210 = vunpack.c.l.b16 %v1146
    %v1211 = vunpack.c.h.b16 %v1146
    %v1212 = vunpack.c.l.b16 %v1147
    %v1213 = vunpack.c.h.b16 %v1147
    %v1214 = vunpack.c.l.b16 %v1148
    %v1215 = vunpack.c.h.b16 %v1148
    %v1216 = vunpack.c.l.b16 %v1149
    %v1217 = vunpack.c.h.b16 %v1149
    %v1218 = vunpack.c.l.b16 %v1150
    %v1219 = vunpack.c.h.b16 %v1150
    %v1220 = vunpack.c.l.b16 %v1151
    %v1221 = vunpack.c.h.b16 %v1151
    %v1222 = vunpack.c.l.b16 %v1152
    %v1223 = vunpack.c.h.b16 %v1152
    %v1224 = vunpack.c.l.b16 %v1153
    %v1225 = vunpack.c.h.b16 %v1153
    %v1226 = vunpack.c.l.b16 %v1154
    %v1227 = vunpack.c.h.b16 %v1154
    %v1228 = vunpack.c.l.b16 %v1155
    %v1229 = vunpack.c.h.b16 %v1155
    %v1230 = vunpack.c.l.b16 %v1156
    %v1231 = vunpack.c.h.b16 %v1156
    %v1232 = vunpack.c.l.b16 %v1157
    %v1233 = vunpack.c.h.b16 %v1157
    %v1234 = vunpack.c.l.b16 %v1158
    %v1235 = vunpack.c.h.b16 %v1158
    %v1236 = vunpack.c.l.b16 %v1159
    %v1237 = vunpack.c.h.b16 %v1159
    %v1238 = vunpack.c.l.b16 %v1160
    %v1239 = vunpack.c.h.b16 %v1160
    %v1240 = vunpack.c.l.b16 %v1161
    %v1241 = vunpack.c.h.b16 %v1161
    %v1242 = vunpack.c.l.b16 %v1162
    %v1243 = vunpack.c.h.b16 %v1162
    %v1244 = vunpack.c.l.b16 %v1163
    %v1245 = vunpack.c.h.b16 %v1163
    %v1246 = vunpack.c.l.b16 %v1164
    %v1247 = vunpack.c.h.b16 %v1164
    %v1248 = vunpack.c.l.b16 %v1165
    %v1249 = vunpack.c.h.b16 %v1165
    %v1250 = vunpack.c.l.b16 %v1166
    %v1251 = vunpack.c.h.b16 %v1166
    %v1252 = vunpack.c.l.b16 %v1167
    %v1253 = vunpack.c.h.b16 %v1167
    %v1254 = vunpack.c.l.b16 %v1168
    %v1255 = vunpack.c.h.b16 %v1168
    %v1256 = vunpack.c.l.b16 %v1169
    %v1257 = vunpack.c.h.b16 %v1169
    %v1258 = vunpack.c.l.b16 %v1170
    %v1259 = vunpack.c.h.b16 %v1170
    %v1260 = vunpack.c.l.b16 %v1171
    %v1261 = vunpack.c.h.b16 %v1171
    %v1262 = vunpack.c.l.b16 %v1172
    %v1263 = vunpack.c.h.b16 %v1172
    %v1264 = vunpack.c.l.b16 %v1173
    %v1265 = vunpack.c.h.b16 %v1173
    %v1266 = vunpack.c.l.b16 %v1174
    %v1267 = vunpack.c.h.b16 %v1174
    %v1268 = vunpack.c.l.b16 %v1175
    %v1269 = vunpack.c.h.b16 %v1175
    %v1270 = vunpack.c.l.b16 %v1176
    %v1271 = vunpack.c.h.b16 %v1176
    %v1272 = vunpack.c.l.b16 %v1177
    %v1273 = vunpack.c.h.b16 %v1177
    %v1274 = vpack.c.b16 %v1214, %v1210
    %v1275 = vpack.c.b16 %v1215, %v1211
    %v1276 = vpack.c.b16 %v1216, %v1212
    %v1277 = vpack.c.b16 %v1217, %v1213
    %v1278 = vpack.c.b16 %v1222, %v1218
    %v1279 = vpack.c.b16 %v1223, %v1219
    %v1280 = vpack.c.b16 %v1224, %v1220
    %v1281 = vpack.c.b16 %v1225, %v1221
    %v1282 = vpack.c.b16 %v1230, %v1226
    %v1283 = vpack.c.b16 %v1231, %v1227
    %v1284 = vpack.c.b16 %v1232, %v1228
    %v1285 = vpack.c.b16 %v1233, %v1229
    %v1286 = vpack.c.b16 %v1238, %v1234
    %v1287 = vpack.c.b16 %v1239, %v1235
    %v1288 = vpack.c.b16 %v1240, %v1236
    %v1289 = vpack.c.b16 %v1241, %v1237
    %v1290 = vpack.c.b16 %v1246, %v1242
    %v1291 = vpack.c.b16 %v1247, %v1243
    %v1292 = vpack.c.b16 %v1248, %v1244
    %v1293 = vpack.c.b16 %v1249, %v1245
    %v1294 = vpack.c.b16 %v1254, %v1250
    %v1295 = vpack.c.b16 %v1255, %v1251
    %v1296 = vpack.c.b16 %v1256, %v1252
    %v1297 = vpack.c.b16 %v1257, %v1253
    %v1298 = vpack.c.b16 %v1262, %v1258
    %v1299 = vpack.c.b16 %v1263, %v1259
    %v1300 = vpack.c.b16 %v1264, %v1260
    %v1301 = vpack.c.b16 %v1265, %v1261
    %v1302 = vpack.c.b16 %v1270, %v1266
    %v1303 = vpack.c.b16 %v1271, %v1267
    %v1304 = vpack.c.b16 %v1272, %v1268
    %v1305 = vpack.c.b16 %v1273, %v1269
    %1338 = vmatprep.subr.bf16.mxu0 %v1303
    %1339 = vmatpush1.bf16.msra.mxu0 %v1302
    %1340 = vmatprep.subr.bf16.mxu0 %v1299
    %1341 = vmatpush1.bf16.msra.mxu0 %v1298
    %1342 = vmatprep.subr.bf16.mxu0 %v1295
    %1343 = vmatpush1.bf16.msra.mxu0 %v1294
    %1344 = vmatprep.subr.bf16.mxu0 %v1291
    %1345 = vmatpush1.bf16.msra.mxu0 %v1290
    %1346 = vmatprep.subr.bf16.mxu0 %v1287
    %1347 = vmatpush1.bf16.msra.mxu0 %v1286
    %1348 = vmatprep.subr.bf16.mxu0 %v1283
    %1349 = vmatpush1.bf16.msra.mxu0 %v1282
    %1350 = vmatprep.subr.bf16.mxu0 %v1279
    %1351 = vmatpush1.bf16.msra.mxu0 %v1278
    %1352 = vmatprep.subr.bf16.mxu0 %v1275
    %1353 = vmatpush1.bf16.msra.mxu0 %v1274
    %1354 = vmatprep.subr.bf16.mxu0 0
    %1355 = vmatpush2.bf16.msra.mxu0 0
    %1356 = vmatprep.subr.bf16.mxu0 0
    %1357 = vmatpush2.bf16.msra.mxu0 0
    %1358 = vmatprep.subr.bf16.mxu0 0
    %1359 = vmatpush2.bf16.msra.mxu0 0
    %1360 = vmatprep.subr.bf16.mxu0 0
    %1361 = vmatpush2.bf16.msra.mxu0 0
    %1362 = vmatprep.subr.bf16.mxu0 0
    %1363 = vmatpush2.bf16.msra.mxu0 0
    %1364 = vmatprep.subr.bf16.mxu0 0
    %1365 = vmatpush2.bf16.msra.mxu0 0
    %1366 = vmatprep.subr.bf16.mxu0 0
    %1367 = vmatpush2.bf16.msra.mxu0 0
    %1368 = vmatprep.subr.bf16.mxu0 0
    %1369 = vmatpush2.bf16.msra.mxu0 0
    %1370 = vmatprep.mubr.bf16.mxu0 0
    %1371 = vmatmul.mubr.bf16.gmra.mxu0 %v1136
    %v1372 = vpop.f32.mrf.mxu0
    %v1373 = vadd.f32 0.0, %v1372
    %v1374 = vpop.f32.mrf.mxu0
    %v1375 = vadd.f32 0.0, %v1374
    %v1376 = vpop.f32.mrf.mxu0
    %v1377 = vpop.f32.mrf.mxu0
    %1378 = vdwg.mxu0
    %1379 = vmatprep.subr.bf16.mxu0 %v1305
    %1380 = vmatpush1.bf16.msra.mxu0 %v1304
    %1381 = vmatprep.subr.bf16.mxu0 %v1301
    %1382 = vmatpush1.bf16.msra.mxu0 %v1300
    %1383 = vmatprep.subr.bf16.mxu0 %v1297
    %1384 = vmatpush1.bf16.msra.mxu0 %v1296
    %1385 = vmatprep.subr.bf16.mxu0 %v1293
    %1386 = vmatpush1.bf16.msra.mxu0 %v1292
    %1387 = vmatprep.subr.bf16.mxu0 %v1289
    %1388 = vmatpush1.bf16.msra.mxu0 %v1288
    %1389 = vmatprep.subr.bf16.mxu0 %v1285
    %1390 = vmatpush1.bf16.msra.mxu0 %v1284
    %1391 = vmatprep.subr.bf16.mxu0 %v1281
    %1392 = vmatpush1.bf16.msra.mxu0 %v1280
    %1393 = vmatprep.subr.bf16.mxu0 %v1277
    %1394 = vmatpush1.bf16.msra.mxu0 %v1276
    %1395 = vmatprep.subr.bf16.mxu0 0
    %1396 = vmatpush2.bf16.msra.mxu0 0
    %1397 = vmatprep.subr.bf16.mxu0 0
    %1398 = vmatpush2.bf16.msra.mxu0 0
    %1399 = vmatprep.subr.bf16.mxu0 0
    %1400 = vmatpush2.bf16.msra.mxu0 0
    %1401 = vmatprep.subr.bf16.mxu0 0
    %1402 = vmatpush2.bf16.msra.mxu0 0
    %1403 = vmatprep.subr.bf16.mxu0 0
    %1404 = vmatpush2.bf16.msra.mxu0 0
    %1405 = vmatprep.subr.bf16.mxu0 0
    %1406 = vmatpush2.bf16.msra.mxu0 0
    %1407 = vmatprep.subr.bf16.mxu0 0
    %1408 = vmatpush2.bf16.msra.mxu0 0
    %1409 = vmatprep.subr.bf16.mxu0 0
    %1410 = vmatpush2.bf16.msra.mxu0 0
    %1411 = vmatprep.mubr.bf16.mxu0 0
    %1412 = vmatmul.mubr.bf16.gmra.mxu0 %v1136
    %v1413 = vpop.f32.mrf.mxu0
    %v1414 = vadd.f32 0.0, %v1413
    %v1415 = vpop.f32.mrf.mxu0
    %v1416 = vadd.f32 0.0, %v1415
    %v1417 = vpop.f32.mrf.mxu0
    %v1418 = vpop.f32.mrf.mxu0
    %1419 = vdwg.mxu0
    %v1420 = vadd.f32 %v1142, %v1373
    %v1421 = vadd.f32 %v1143, %v1375
    %v1422 = vadd.f32 %v1144, %v1414
    %v1423 = vadd.f32 %v1145, %v1416
    %v1424 = vxor.u32 %v1420, 2147483648
    %v1425 = vmul.f32 %v1424, 1.442695
    %v1426 = vpow.pop %v1425
    %v1427 = vadd.f32 %v1426, 1.0
    %v1428 = vrcp.pop %v1427
    %v1429 = vmul.f32 1.0, %v1428
    %v1430 = vxor.u32 %v1421, 2147483648
    %v1431 = vmul.f32 %v1430, 1.442695
    %v1432 = vpow.pop %v1431
    %v1433 = vadd.f32 %v1432, 1.0
    %v1434 = vrcp.pop %v1433
    %v1435 = vmul.f32 1.0, %v1434
    %v1436 = vtanh.pop %v1422
    %v1437 = vxor.u32 %v1423, 2147483648
    %v1438 = vmul.f32 %v1437, 1.442695
    %v1439 = vpow.pop %v1438
    %v1440 = vadd.f32 %v1439, 1.0
    %v1441 = vrcp.pop %v1440
    %v1442 = vmul.f32 1.0, %v1441
    %v1443 = vmul.f32 %v1435, %v1133
    %v1444 = vmul.f32 %v1429, %v1436
    %v1445 = vadd.f32 %v1443, %v1444
    %v1446 = vtanh.pop %v1445
    %v1447 = vmul.f32 %v1442, %v1446
    %v1448 = vpack.c.bf16 %v1447, %v1447
    %s1449 = scalar_lea.vmem [#allocation3], 8
    %1450 = vst [vmem:[%s1449] sm:$0xf] %v1448
    %s1451 = smul.u32 3, 4
    %s1452 = smul.addr %s1451, 8
    %s1453 = scalar_lea.vmem [#allocation2], %s1452
    %v1454 = vld [vmem:[%s1453] sm:$0xff]
    %v1455 = vld [vmem:[%s1453 + $0x8] sm:$0xff]
    %v1456 = vld [vmem:[%s1453 + $0x10] sm:$0xff]
    %v1457 = vld [vmem:[%s1453 + $0x18] sm:$0xff]
    %v1458 = vld [vmem:[#allocation9] sm:$0xff]
    %v1459 = vld [vmem:[#allocation9 + $0x8] sm:$0xff]
    %v1460 = vld [vmem:[#allocation9 + $0x10] sm:$0xff]
    %v1461 = vld [vmem:[#allocation9 + $0x18] sm:$0xff]
    %v1462 = vld [vmem:[#allocation9 + $0x20] sm:$0xff]
    %v1463 = vld [vmem:[#allocation9 + $0x28] sm:$0xff]
    %v1464 = vld [vmem:[#allocation9 + $0x30] sm:$0xff]
    %v1465 = vld [vmem:[#allocation9 + $0x38] sm:$0xff]
    %v1466 = vld [vmem:[#allocation9 + $0x40] sm:$0xff]
    %v1467 = vld [vmem:[#allocation9 + $0x48] sm:$0xff]
    %v1468 = vld [vmem:[#allocation9 + $0x50] sm:$0xff]
    %v1469 = vld [vmem:[#allocation9 + $0x58] sm:$0xff]
    %v1470 = vld [vmem:[#allocation9 + $0x60] sm:$0xff]
    %v1471 = vld [vmem:[#allocation9 + $0x68] sm:$0xff]
    %v1472 = vld [vmem:[#allocation9 + $0x70] sm:$0xff]
    %v1473 = vld [vmem:[#allocation9 + $0x78] sm:$0xff]
    %v1474 = vld [vmem:[#allocation9 + $0x80] sm:$0xff]
    %v1475 = vld [vmem:[#allocation9 + $0x88] sm:$0xff]
    %v1476 = vld [vmem:[#allocation9 + $0x90] sm:$0xff]
    %v1477 = vld [vmem:[#allocation9 + $0x98] sm:$0xff]
    %v1478 = vld [vmem:[#allocation9 + $0xa0] sm:$0xff]
    %v1479 = vld [vmem:[#allocation9 + $0xa8] sm:$0xff]
    %v1480 = vld [vmem:[#allocation9 + $0xb0] sm:$0xff]
    %v1481 = vld [vmem:[#allocation9 + $0xb8] sm:$0xff]
    %v1482 = vld [vmem:[#allocation9 + $0xc0] sm:$0xff]
    %v1483 = vld [vmem:[#allocation9 + $0xc8] sm:$0xff]
    %v1484 = vld [vmem:[#allocation9 + $0xd0] sm:$0xff]
    %v1485 = vld [vmem:[#allocation9 + $0xd8] sm:$0xff]
    %v1486 = vld [vmem:[#allocation9 + $0xe0] sm:$0xff]
    %v1487 = vld [vmem:[#allocation9 + $0xe8] sm:$0xff]
    %v1488 = vld [vmem:[#allocation9 + $0xf0] sm:$0xff]
    %v1489 = vld [vmem:[#allocation9 + $0xf8] sm:$0xff]
    %v1522 = vunpack.c.l.b16 %v1458
    %v1523 = vunpack.c.h.b16 %v1458
    %v1524 = vunpack.c.l.b16 %v1459
    %v1525 = vunpack.c.h.b16 %v1459
    %v1526 = vunpack.c.l.b16 %v1460
    %v1527 = vunpack.c.h.b16 %v1460
    %v1528 = vunpack.c.l.b16 %v1461
    %v1529 = vunpack.c.h.b16 %v1461
    %v1530 = vunpack.c.l.b16 %v1462
    %v1531 = vunpack.c.h.b16 %v1462
    %v1532 = vunpack.c.l.b16 %v1463
    %v1533 = vunpack.c.h.b16 %v1463
    %v1534 = vunpack.c.l.b16 %v1464
    %v1535 = vunpack.c.h.b16 %v1464
    %v1536 = vunpack.c.l.b16 %v1465
    %v1537 = vunpack.c.h.b16 %v1465
    %v1538 = vunpack.c.l.b16 %v1466
    %v1539 = vunpack.c.h.b16 %v1466
    %v1540 = vunpack.c.l.b16 %v1467
    %v1541 = vunpack.c.h.b16 %v1467
    %v1542 = vunpack.c.l.b16 %v1468
    %v1543 = vunpack.c.h.b16 %v1468
    %v1544 = vunpack.c.l.b16 %v1469
    %v1545 = vunpack.c.h.b16 %v1469
    %v1546 = vunpack.c.l.b16 %v1470
    %v1547 = vunpack.c.h.b16 %v1470
    %v1548 = vunpack.c.l.b16 %v1471
    %v1549 = vunpack.c.h.b16 %v1471
    %v1550 = vunpack.c.l.b16 %v1472
    %v1551 = vunpack.c.h.b16 %v1472
    %v1552 = vunpack.c.l.b16 %v1473
    %v1553 = vunpack.c.h.b16 %v1473
    %v1554 = vunpack.c.l.b16 %v1474
    %v1555 = vunpack.c.h.b16 %v1474
    %v1556 = vunpack.c.l.b16 %v1475
    %v1557 = vunpack.c.h.b16 %v1475
    %v1558 = vunpack.c.l.b16 %v1476
    %v1559 = vunpack.c.h.b16 %v1476
    %v1560 = vunpack.c.l.b16 %v1477
    %v1561 = vunpack.c.h.b16 %v1477
    %v1562 = vunpack.c.l.b16 %v1478
    %v1563 = vunpack.c.h.b16 %v1478
    %v1564 = vunpack.c.l.b16 %v1479
    %v1565 = vunpack.c.h.b16 %v1479
    %v1566 = vunpack.c.l.b16 %v1480
    %v1567 = vunpack.c.h.b16 %v1480
    %v1568 = vunpack.c.l.b16 %v1481
    %v1569 = vunpack.c.h.b16 %v1481
    %v1570 = vunpack.c.l.b16 %v1482
    %v1571 = vunpack.c.h.b16 %v1482
    %v1572 = vunpack.c.l.b16 %v1483
    %v1573 = vunpack.c.h.b16 %v1483
    %v1574 = vunpack.c.l.b16 %v1484
    %v1575 = vunpack.c.h.b16 %v1484
    %v1576 = vunpack.c.l.b16 %v1485
    %v1577 = vunpack.c.h.b16 %v1485
    %v1578 = vunpack.c.l.b16 %v1486
    %v1579 = vunpack.c.h.b16 %v1486
    %v1580 = vunpack.c.l.b16 %v1487
    %v1581 = vunpack.c.h.b16 %v1487
    %v1582 = vunpack.c.l.b16 %v1488
    %v1583 = vunpack.c.h.b16 %v1488
    %v1584 = vunpack.c.l.b16 %v1489
    %v1585 = vunpack.c.h.b16 %v1489
    %v1586 = vpack.c.b16 %v1526, %v1522
    %v1587 = vpack.c.b16 %v1527, %v1523
    %v1588 = vpack.c.b16 %v1528, %v1524
    %v1589 = vpack.c.b16 %v1529, %v1525
    %v1590 = vpack.c.b16 %v1534, %v1530
    %v1591 = vpack.c.b16 %v1535, %v1531
    %v1592 = vpack.c.b16 %v1536, %v1532
    %v1593 = vpack.c.b16 %v1537, %v1533
    %v1594 = vpack.c.b16 %v1542, %v1538
    %v1595 = vpack.c.b16 %v1543, %v1539
    %v1596 = vpack.c.b16 %v1544, %v1540
    %v1597 = vpack.c.b16 %v1545, %v1541
    %v1598 = vpack.c.b16 %v1550, %v1546
    %v1599 = vpack.c.b16 %v1551, %v1547
    %v1600 = vpack.c.b16 %v1552, %v1548
    %v1601 = vpack.c.b16 %v1553, %v1549
    %v1602 = vpack.c.b16 %v1558, %v1554
    %v1603 = vpack.c.b16 %v1559, %v1555
    %v1604 = vpack.c.b16 %v1560, %v1556
    %v1605 = vpack.c.b16 %v1561, %v1557
    %v1606 = vpack.c.b16 %v1566, %v1562
    %v1607 = vpack.c.b16 %v1567, %v1563
    %v1608 = vpack.c.b16 %v1568, %v1564
    %v1609 = vpack.c.b16 %v1569, %v1565
    %v1610 = vpack.c.b16 %v1574, %v1570
    %v1611 = vpack.c.b16 %v1575, %v1571
    %v1612 = vpack.c.b16 %v1576, %v1572
    %v1613 = vpack.c.b16 %v1577, %v1573
    %v1614 = vpack.c.b16 %v1582, %v1578
    %v1615 = vpack.c.b16 %v1583, %v1579
    %v1616 = vpack.c.b16 %v1584, %v1580
    %v1617 = vpack.c.b16 %v1585, %v1581
    %1650 = vmatprep.subr.bf16.mxu0 %v1615
    %1651 = vmatpush1.bf16.msra.mxu0 %v1614
    %1652 = vmatprep.subr.bf16.mxu0 %v1611
    %1653 = vmatpush1.bf16.msra.mxu0 %v1610
    %1654 = vmatprep.subr.bf16.mxu0 %v1607
    %1655 = vmatpush1.bf16.msra.mxu0 %v1606
    %1656 = vmatprep.subr.bf16.mxu0 %v1603
    %1657 = vmatpush1.bf16.msra.mxu0 %v1602
    %1658 = vmatprep.subr.bf16.mxu0 %v1599
    %1659 = vmatpush1.bf16.msra.mxu0 %v1598
    %1660 = vmatprep.subr.bf16.mxu0 %v1595
    %1661 = vmatpush1.bf16.msra.mxu0 %v1594
    %1662 = vmatprep.subr.bf16.mxu0 %v1591
    %1663 = vmatpush1.bf16.msra.mxu0 %v1590
    %1664 = vmatprep.subr.bf16.mxu0 %v1587
    %1665 = vmatpush1.bf16.msra.mxu0 %v1586
    %1666 = vmatprep.subr.bf16.mxu0 0
    %1667 = vmatpush2.bf16.msra.mxu0 0
    %1668 = vmatprep.subr.bf16.mxu0 0
    %1669 = vmatpush2.bf16.msra.mxu0 0
    %1670 = vmatprep.subr.bf16.mxu0 0
    %1671 = vmatpush2.bf16.msra.mxu0 0
    %1672 = vmatprep.subr.bf16.mxu0 0
    %1673 = vmatpush2.bf16.msra.mxu0 0
    %1674 = vmatprep.subr.bf16.mxu0 0
    %1675 = vmatpush2.bf16.msra.mxu0 0
    %1676 = vmatprep.subr.bf16.mxu0 0
    %1677 = vmatpush2.bf16.msra.mxu0 0
    %1678 = vmatprep.subr.bf16.mxu0 0
    %1679 = vmatpush2.bf16.msra.mxu0 0
    %1680 = vmatprep.subr.bf16.mxu0 0
    %1681 = vmatpush2.bf16.msra.mxu0 0
    %1682 = vmatprep.mubr.bf16.mxu0 0
    %1683 = vmatmul.mubr.bf16.gmra.mxu0 %v1448
    %v1684 = vpop.f32.mrf.mxu0
    %v1685 = vadd.f32 0.0, %v1684
    %v1686 = vpop.f32.mrf.mxu0
    %v1687 = vadd.f32 0.0, %v1686
    %v1688 = vpop.f32.mrf.mxu0
    %v1689 = vpop.f32.mrf.mxu0
    %1690 = vdwg.mxu0
    %1691 = vmatprep.subr.bf16.mxu0 %v1617
    %1692 = vmatpush1.bf16.msra.mxu0 %v1616
    %1693 = vmatprep.subr.bf16.mxu0 %v1613
    %1694 = vmatpush1.bf16.msra.mxu0 %v1612
    %1695 = vmatprep.subr.bf16.mxu0 %v1609
    %1696 = vmatpush1.bf16.msra.mxu0 %v1608
    %1697 = vmatprep.subr.bf16.mxu0 %v1605
    %1698 = vmatpush1.bf16.msra.mxu0 %v1604
    %1699 = vmatprep.subr.bf16.mxu0 %v1601
    %1700 = vmatpush1.bf16.msra.mxu0 %v1600
    %1701 = vmatprep.subr.bf16.mxu0 %v1597
    %1702 = vmatpush1.bf16.msra.mxu0 %v1596
    %1703 = vmatprep.subr.bf16.mxu0 %v1593
    %1704 = vmatpush1.bf16.msra.mxu0 %v1592
    %1705 = vmatprep.subr.bf16.mxu0 %v1589
    %1706 = vmatpush1.bf16.msra.mxu0 %v1588
    %1707 = vmatprep.subr.bf16.mxu0 0
    %1708 = vmatpush2.bf16.msra.mxu0 0
    %1709 = vmatprep.subr.bf16.mxu0 0
    %1710 = vmatpush2.bf16.msra.mxu0 0
    %1711 = vmatprep.subr.bf16.mxu0 0
    %1712 = vmatpush2.bf16.msra.mxu0 0
    %1713 = vmatprep.subr.bf16.mxu0 0
    %1714 = vmatpush2.bf16.msra.mxu0 0
    %1715 = vmatprep.subr.bf16.mxu0 0
    %1716 = vmatpush2.bf16.msra.mxu0 0
    %1717 = vmatprep.subr.bf16.mxu0 0
    %1718 = vmatpush2.bf16.msra.mxu0 0
    %1719 = vmatprep.subr.bf16.mxu0 0
    %1720 = vmatpush2.bf16.msra.mxu0 0
    %1721 = vmatprep.subr.bf16.mxu0 0
    %1722 = vmatpush2.bf16.msra.mxu0 0
    %1723 = vmatprep.mubr.bf16.mxu0 0
    %1724 = vmatmul.mubr.bf16.gmra.mxu0 %v1448
    %v1725 = vpop.f32.mrf.mxu0
    %v1726 = vadd.f32 0.0, %v1725
    %v1727 = vpop.f32.mrf.mxu0
    %v1728 = vadd.f32 0.0, %v1727
    %v1729 = vpop.f32.mrf.mxu0
    %v1730 = vpop.f32.mrf.mxu0
    %1731 = vdwg.mxu0
    %v1732 = vadd.f32 %v1454, %v1685
    %v1733 = vadd.f32 %v1455, %v1687
    %v1734 = vadd.f32 %v1456, %v1726
    %v1735 = vadd.f32 %v1457, %v1728
    %v1736 = vxor.u32 %v1732, 2147483648
    %v1737 = vmul.f32 %v1736, 1.442695
    %v1738 = vpow.pop %v1737
    %v1739 = vadd.f32 %v1738, 1.0
    %v1740 = vrcp.pop %v1739
    %v1741 = vmul.f32 1.0, %v1740
    %v1742 = vxor.u32 %v1733, 2147483648
    %v1743 = vmul.f32 %v1742, 1.442695
    %v1744 = vpow.pop %v1743
    %v1745 = vadd.f32 %v1744, 1.0
    %v1746 = vrcp.pop %v1745
    %v1747 = vmul.f32 1.0, %v1746
    %v1748 = vtanh.pop %v1734
    %v1749 = vxor.u32 %v1735, 2147483648
    %v1750 = vmul.f32 %v1749, 1.442695
    %v1751 = vpow.pop %v1750
    %v1752 = vadd.f32 %v1751, 1.0
    %v1753 = vrcp.pop %v1752
    %v1754 = vmul.f32 1.0, %v1753
    %v1755 = vmul.f32 %v1747, %v1445
    %v1756 = vmul.f32 %v1741, %v1748
    %v1757 = vadd.f32 %v1755, %v1756
    %v1758 = vtanh.pop %v1757
    %v1759 = vmul.f32 %v1754, %v1758
    %v1760 = vpack.c.bf16 %v1759, %v1759
    %s1761 = scalar_lea.vmem [#allocation3], 12
    %1762 = vst [vmem:[%s1761] sm:$0xf] %v1760
    %s1763 = smul.u32 4, 4
    %s1764 = smul.addr %s1763, 8
    %s1765 = scalar_lea.vmem [#allocation2], %s1764
    %v1766 = vld [vmem:[%s1765] sm:$0xff]
    %v1767 = vld [vmem:[%s1765 + $0x8] sm:$0xff]
    %v1768 = vld [vmem:[%s1765 + $0x10] sm:$0xff]
    %v1769 = vld [vmem:[%s1765 + $0x18] sm:$0xff]
    %v1770 = vld [vmem:[#allocation9] sm:$0xff]
    %v1771 = vld [vmem:[#allocation9 + $0x8] sm:$0xff]
    %v1772 = vld [vmem:[#allocation9 + $0x10] sm:$0xff]
    %v1773 = vld [vmem:[#allocation9 + $0x18] sm:$0xff]
    %v1774 = vld [vmem:[#allocation9 + $0x20] sm:$0xff]
    %v1775 = vld [vmem:[#allocation9 + $0x28] sm:$0xff]
    %v1776 = vld [vmem:[#allocation9 + $0x30] sm:$0xff]
    %v1777 = vld [vmem:[#allocation9 + $0x38] sm:$0xff]
    %v1778 = vld [vmem:[#allocation9 + $0x40] sm:$0xff]
    %v1779 = vld [vmem:[#allocation9 + $0x48] sm:$0xff]
    %v1780 = vld [vmem:[#allocation9 + $0x50] sm:$0xff]
    %v1781 = vld [vmem:[#allocation9 + $0x58] sm:$0xff]
    %v1782 = vld [vmem:[#allocation9 + $0x60] sm:$0xff]
    %v1783 = vld [vmem:[#allocation9 + $0x68] sm:$0xff]
    %v1784 = vld [vmem:[#allocation9 + $0x70] sm:$0xff]
    %v1785 = vld [vmem:[#allocation9 + $0x78] sm:$0xff]
    %v1786 = vld [vmem:[#allocation9 + $0x80] sm:$0xff]
    %v1787 = vld [vmem:[#allocation9 + $0x88] sm:$0xff]
    %v1788 = vld [vmem:[#allocation9 + $0x90] sm:$0xff]
    %v1789 = vld [vmem:[#allocation9 + $0x98] sm:$0xff]
    %v1790 = vld [vmem:[#allocation9 + $0xa0] sm:$0xff]
    %v1791 = vld [vmem:[#allocation9 + $0xa8] sm:$0xff]
    %v1792 = vld [vmem:[#allocation9 + $0xb0] sm:$0xff]
    %v1793 = vld [vmem:[#allocation9 + $0xb8] sm:$0xff]
    %v1794 = vld [vmem:[#allocation9 + $0xc0] sm:$0xff]
    %v1795 = vld [vmem:[#allocation9 + $0xc8] sm:$0xff]
    %v1796 = vld [vmem:[#allocation9 + $0xd0] sm:$0xff]
    %v1797 = vld [vmem:[#allocation9 + $0xd8] sm:$0xff]
    %v1798 = vld [vmem:[#allocation9 + $0xe0] sm:$0xff]
    %v1799 = vld [vmem:[#allocation9 + $0xe8] sm:$0xff]
    %v1800 = vld [vmem:[#allocation9 + $0xf0] sm:$0xff]
    %v1801 = vld [vmem:[#allocation9 + $0xf8] sm:$0xff]
    %v1834 = vunpack.c.l.b16 %v1770
    %v1835 = vunpack.c.h.b16 %v1770
    %v1836 = vunpack.c.l.b16 %v1771
    %v1837 = vunpack.c.h.b16 %v1771
    %v1838 = vunpack.c.l.b16 %v1772
    %v1839 = vunpack.c.h.b16 %v1772
    %v1840 = vunpack.c.l.b16 %v1773
    %v1841 = vunpack.c.h.b16 %v1773
    %v1842 = vunpack.c.l.b16 %v1774
    %v1843 = vunpack.c.h.b16 %v1774
    %v1844 = vunpack.c.l.b16 %v1775
    %v1845 = vunpack.c.h.b16 %v1775
    %v1846 = vunpack.c.l.b16 %v1776
    %v1847 = vunpack.c.h.b16 %v1776
    %v1848 = vunpack.c.l.b16 %v1777
    %v1849 = vunpack.c.h.b16 %v1777
    %v1850 = vunpack.c.l.b16 %v1778
    %v1851 = vunpack.c.h.b16 %v1778
    %v1852 = vunpack.c.l.b16 %v1779
    %v1853 = vunpack.c.h.b16 %v1779
    %v1854 = vunpack.c.l.b16 %v1780
    %v1855 = vunpack.c.h.b16 %v1780
    %v1856 = vunpack.c.l.b16 %v1781
    %v1857 = vunpack.c.h.b16 %v1781
    %v1858 = vunpack.c.l.b16 %v1782
    %v1859 = vunpack.c.h.b16 %v1782
    %v1860 = vunpack.c.l.b16 %v1783
    %v1861 = vunpack.c.h.b16 %v1783
    %v1862 = vunpack.c.l.b16 %v1784
    %v1863 = vunpack.c.h.b16 %v1784
    %v1864 = vunpack.c.l.b16 %v1785
    %v1865 = vunpack.c.h.b16 %v1785
    %v1866 = vunpack.c.l.b16 %v1786
    %v1867 = vunpack.c.h.b16 %v1786
    %v1868 = vunpack.c.l.b16 %v1787
    %v1869 = vunpack.c.h.b16 %v1787
    %v1870 = vunpack.c.l.b16 %v1788
    %v1871 = vunpack.c.h.b16 %v1788
    %v1872 = vunpack.c.l.b16 %v1789
    %v1873 = vunpack.c.h.b16 %v1789
    %v1874 = vunpack.c.l.b16 %v1790
    %v1875 = vunpack.c.h.b16 %v1790
    %v1876 = vunpack.c.l.b16 %v1791
    %v1877 = vunpack.c.h.b16 %v1791
    %v1878 = vunpack.c.l.b16 %v1792
    %v1879 = vunpack.c.h.b16 %v1792
    %v1880 = vunpack.c.l.b16 %v1793
    %v1881 = vunpack.c.h.b16 %v1793
    %v1882 = vunpack.c.l.b16 %v1794
    %v1883 = vunpack.c.h.b16 %v1794
    %v1884 = vunpack.c.l.b16 %v1795
    %v1885 = vunpack.c.h.b16 %v1795
    %v1886 = vunpack.c.l.b16 %v1796
    %v1887 = vunpack.c.h.b16 %v1796
    %v1888 = vunpack.c.l.b16 %v1797
    %v1889 = vunpack.c.h.b16 %v1797
    %v1890 = vunpack.c.l.b16 %v1798
    %v1891 = vunpack.c.h.b16 %v1798
    %v1892 = vunpack.c.l.b16 %v1799
    %v1893 = vunpack.c.h.b16 %v1799
    %v1894 = vunpack.c.l.b16 %v1800
    %v1895 = vunpack.c.h.b16 %v1800
    %v1896 = vunpack.c.l.b16 %v1801
    %v1897 = vunpack.c.h.b16 %v1801
    %v1898 = vpack.c.b16 %v1838, %v1834
    %v1899 = vpack.c.b16 %v1839, %v1835
    %v1900 = vpack.c.b16 %v1840, %v1836
    %v1901 = vpack.c.b16 %v1841, %v1837
    %v1902 = vpack.c.b16 %v1846, %v1842
    %v1903 = vpack.c.b16 %v1847, %v1843
    %v1904 = vpack.c.b16 %v1848, %v1844
    %v1905 = vpack.c.b16 %v1849, %v1845
    %v1906 = vpack.c.b16 %v1854, %v1850
    %v1907 = vpack.c.b16 %v1855, %v1851
    %v1908 = vpack.c.b16 %v1856, %v1852
    %v1909 = vpack.c.b16 %v1857, %v1853
    %v1910 = vpack.c.b16 %v1862, %v1858
    %v1911 = vpack.c.b16 %v1863, %v1859
    %v1912 = vpack.c.b16 %v1864, %v1860
    %v1913 = vpack.c.b16 %v1865, %v1861
    %v1914 = vpack.c.b16 %v1870, %v1866
    %v1915 = vpack.c.b16 %v1871, %v1867
    %v1916 = vpack.c.b16 %v1872, %v1868
    %v1917 = vpack.c.b16 %v1873, %v1869
    %v1918 = vpack.c.b16 %v1878, %v1874
    %v1919 = vpack.c.b16 %v1879, %v1875
    %v1920 = vpack.c.b16 %v1880, %v1876
    %v1921 = vpack.c.b16 %v1881, %v1877
    %v1922 = vpack.c.b16 %v1886, %v1882
    %v1923 = vpack.c.b16 %v1887, %v1883
    %v1924 = vpack.c.b16 %v1888, %v1884
    %v1925 = vpack.c.b16 %v1889, %v1885
    %v1926 = vpack.c.b16 %v1894, %v1890
    %v1927 = vpack.c.b16 %v1895, %v1891
    %v1928 = vpack.c.b16 %v1896, %v1892
    %v1929 = vpack.c.b16 %v1897, %v1893
    %1962 = vmatprep.subr.bf16.mxu0 %v1927
    %1963 = vmatpush1.bf16.msra.mxu0 %v1926
    %1964 = vmatprep.subr.bf16.mxu0 %v1923
    %1965 = vmatpush1.bf16.msra.mxu0 %v1922
    %1966 = vmatprep.subr.bf16.mxu0 %v1919
    %1967 = vmatpush1.bf16.msra.mxu0 %v1918
    %1968 = vmatprep.subr.bf16.mxu0 %v1915
    %1969 = vmatpush1.bf16.msra.mxu0 %v1914
    %1970 = vmatprep.subr.bf16.mxu0 %v1911
    %1971 = vmatpush1.bf16.msra.mxu0 %v1910
    %1972 = vmatprep.subr.bf16.mxu0 %v1907
    %1973 = vmatpush1.bf16.msra.mxu0 %v1906
    %1974 = vmatprep.subr.bf16.mxu0 %v1903
    %1975 = vmatpush1.bf16.msra.mxu0 %v1902
    %1976 = vmatprep.subr.bf16.mxu0 %v1899
    %1977 = vmatpush1.bf16.msra.mxu0 %v1898
    %1978 = vmatprep.subr.bf16.mxu0 0
    %1979 = vmatpush2.bf16.msra.mxu0 0
    %1980 = vmatprep.subr.bf16.mxu0 0
    %1981 = vmatpush2.bf16.msra.mxu0 0
    %1982 = vmatprep.subr.bf16.mxu0 0
    %1983 = vmatpush2.bf16.msra.mxu0 0
    %1984 = vmatprep.subr.bf16.mxu0 0
    %1985 = vmatpush2.bf16.msra.mxu0 0
    %1986 = vmatprep.subr.bf16.mxu0 0
    %1987 = vmatpush2.bf16.msra.mxu0 0
    %1988 = vmatprep.subr.bf16.mxu0 0
    %1989 = vmatpush2.bf16.msra.mxu0 0
    %1990 = vmatprep.subr.bf16.mxu0 0
    %1991 = vmatpush2.bf16.msra.mxu0 0
    %1992 = vmatprep.subr.bf16.mxu0 0
    %1993 = vmatpush2.bf16.msra.mxu0 0
    %1994 = vmatprep.mubr.bf16.mxu0 0
    %1995 = vmatmul.mubr.bf16.gmra.mxu0 %v1760
    %v1996 = vpop.f32.mrf.mxu0
    %v1997 = vadd.f32 0.0, %v1996
    %v1998 = vpop.f32.mrf.mxu0
    %v1999 = vadd.f32 0.0, %v1998
    %v2000 = vpop.f32.mrf.mxu0
    %v2001 = vpop.f32.mrf.mxu0
    %2002 = vdwg.mxu0
    %2003 = vmatprep.subr.bf16.mxu0 %v1929
    %2004 = vmatpush1.bf16.msra.mxu0 %v1928
    %2005 = vmatprep.subr.bf16.mxu0 %v1925
    %2006 = vmatpush1.bf16.msra.mxu0 %v1924
    %2007 = vmatprep.subr.bf16.mxu0 %v1921
    %2008 = vmatpush1.bf16.msra.mxu0 %v1920
    %2009 = vmatprep.subr.bf16.mxu0 %v1917
    %2010 = vmatpush1.bf16.msra.mxu0 %v1916
    %2011 = vmatprep.subr.bf16.mxu0 %v1913
    %2012 = vmatpush1.bf16.msra.mxu0 %v1912
    %2013 = vmatprep.subr.bf16.mxu0 %v1909
    %2014 = vmatpush1.bf16.msra.mxu0 %v1908
    %2015 = vmatprep.subr.bf16.mxu0 %v1905
    %2016 = vmatpush1.bf16.msra.mxu0 %v1904
    %2017 = vmatprep.subr.bf16.mxu0 %v1901
    %2018 = vmatpush1.bf16.msra.mxu0 %v1900
    %2019 = vmatprep.subr.bf16.mxu0 0
    %2020 = vmatpush2.bf16.msra.mxu0 0
    %2021 = vmatprep.subr.bf16.mxu0 0
    %2022 = vmatpush2.bf16.msra.mxu0 0
    %2023 = vmatprep.subr.bf16.mxu0 0
    %2024 = vmatpush2.bf16.msra.mxu0 0
    %2025 = vmatprep.subr.bf16.mxu0 0
    %2026 = vmatpush2.bf16.msra.mxu0 0
    %2027 = vmatprep.subr.bf16.mxu0 0
    %2028 = vmatpush2.bf16.msra.mxu0 0
    %2029 = vmatprep.subr.bf16.mxu0 0
    %2030 = vmatpush2.bf16.msra.mxu0 0
    %2031 = vmatprep.subr.bf16.mxu0 0
    %2032 = vmatpush2.bf16.msra.mxu0 0
    %2033 = vmatprep.subr.bf16.mxu0 0
    %2034 = vmatpush2.bf16.msra.mxu0 0
    %2035 = vmatprep.mubr.bf16.mxu0 0
    %2036 = vmatmul.mubr.bf16.gmra.mxu0 %v1760
    %v2037 = vpop.f32.mrf.mxu0
    %v2038 = vadd.f32 0.0, %v2037
    %v2039 = vpop.f32.mrf.mxu0
    %v2040 = vadd.f32 0.0, %v2039
    %v2041 = vpop.f32.mrf.mxu0
    %v2042 = vpop.f32.mrf.mxu0
    %2043 = vdwg.mxu0
    %v2044 = vadd.f32 %v1766, %v1997
    %v2045 = vadd.f32 %v1767, %v1999
    %v2046 = vadd.f32 %v1768, %v2038
    %v2047 = vadd.f32 %v1769, %v2040
    %v2048 = vxor.u32 %v2044, 2147483648
    %v2049 = vmul.f32 %v2048, 1.442695
    %v2050 = vpow.pop %v2049
    %v2051 = vadd.f32 %v2050, 1.0
    %v2052 = vrcp.pop %v2051
    %v2053 = vmul.f32 1.0, %v2052
    %v2054 = vxor.u32 %v2045, 2147483648
    %v2055 = vmul.f32 %v2054, 1.442695
    %v2056 = vpow.pop %v2055
    %v2057 = vadd.f32 %v2056, 1.0
    %v2058 = vrcp.pop %v2057
    %v2059 = vmul.f32 1.0, %v2058
    %v2060 = vtanh.pop %v2046
    %v2061 = vxor.u32 %v2047, 2147483648
    %v2062 = vmul.f32 %v2061, 1.442695
    %v2063 = vpow.pop %v2062
    %v2064 = vadd.f32 %v2063, 1.0
    %v2065 = vrcp.pop %v2064
    %v2066 = vmul.f32 1.0, %v2065
    %v2067 = vmul.f32 %v2059, %v1757
    %v2068 = vmul.f32 %v2053, %v2060
    %v2069 = vadd.f32 %v2067, %v2068
    %v2070 = vtanh.pop %v2069
    %v2071 = vmul.f32 %v2066, %v2070
    %v2072 = vpack.c.bf16 %v2071, %v2071
    %s2073 = scalar_lea.vmem [#allocation3], 16
    %2074 = vst [vmem:[%s2073] sm:$0xf] %v2072
    %s2075 = smul.u32 5, 4
    %s2076 = smul.addr %s2075, 8
    %s2077 = scalar_lea.vmem [#allocation2], %s2076
    %v2078 = vld [vmem:[%s2077] sm:$0xff]
    %v2079 = vld [vmem:[%s2077 + $0x8] sm:$0xff]
    %v2080 = vld [vmem:[%s2077 + $0x10] sm:$0xff]
    %v2081 = vld [vmem:[%s2077 + $0x18] sm:$0xff]
    %v2082 = vld [vmem:[#allocation9] sm:$0xff]
    %v2083 = vld [vmem:[#allocation9 + $0x8] sm:$0xff]
    %v2084 = vld [vmem:[#allocation9 + $0x10] sm:$0xff]
    %v2085 = vld [vmem:[#allocation9 + $0x18] sm:$0xff]
    %v2086 = vld [vmem:[#allocation9 + $0x20] sm:$0xff]
    %v2087 = vld [vmem:[#allocation9 + $0x28] sm:$0xff]
    %v2088 = vld [vmem:[#allocation9 + $0x30] sm:$0xff]
    %v2089 = vld [vmem:[#allocation9 + $0x38] sm:$0xff]
    %v2090 = vld [vmem:[#allocation9 + $0x40] sm:$0xff]
    %v2091 = vld [vmem:[#allocation9 + $0x48] sm:$0xff]
    %v2092 = vld [vmem:[#allocation9 + $0x50] sm:$0xff]
    %v2093 = vld [vmem:[#allocation9 + $0x58] sm:$0xff]
    %v2094 = vld [vmem:[#allocation9 + $0x60] sm:$0xff]
    %v2095 = vld [vmem:[#allocation9 + $0x68] sm:$0xff]
    %v2096 = vld [vmem:[#allocation9 + $0x70] sm:$0xff]
    %v2097 = vld [vmem:[#allocation9 + $0x78] sm:$0xff]
    %v2098 = vld [vmem:[#allocation9 + $0x80] sm:$0xff]
    %v2099 = vld [vmem:[#allocation9 + $0x88] sm:$0xff]
    %v2100 = vld [vmem:[#allocation9 + $0x90] sm:$0xff]
    %v2101 = vld [vmem:[#allocation9 + $0x98] sm:$0xff]
    %v2102 = vld [vmem:[#allocation9 + $0xa0] sm:$0xff]
    %v2103 = vld [vmem:[#allocation9 + $0xa8] sm:$0xff]
    %v2104 = vld [vmem:[#allocation9 + $0xb0] sm:$0xff]
    %v2105 = vld [vmem:[#allocation9 + $0xb8] sm:$0xff]
    %v2106 = vld [vmem:[#allocation9 + $0xc0] sm:$0xff]
    %v2107 = vld [vmem:[#allocation9 + $0xc8] sm:$0xff]
    %v2108 = vld [vmem:[#allocation9 + $0xd0] sm:$0xff]
    %v2109 = vld [vmem:[#allocation9 + $0xd8] sm:$0xff]
    %v2110 = vld [vmem:[#allocation9 + $0xe0] sm:$0xff]
    %v2111 = vld [vmem:[#allocation9 + $0xe8] sm:$0xff]
    %v2112 = vld [vmem:[#allocation9 + $0xf0] sm:$0xff]
    %v2113 = vld [vmem:[#allocation9 + $0xf8] sm:$0xff]
    %v2146 = vunpack.c.l.b16 %v2082
    %v2147 = vunpack.c.h.b16 %v2082
    %v2148 = vunpack.c.l.b16 %v2083
    %v2149 = vunpack.c.h.b16 %v2083
    %v2150 = vunpack.c.l.b16 %v2084
    %v2151 = vunpack.c.h.b16 %v2084
    %v2152 = vunpack.c.l.b16 %v2085
    %v2153 = vunpack.c.h.b16 %v2085
    %v2154 = vunpack.c.l.b16 %v2086
    %v2155 = vunpack.c.h.b16 %v2086
    %v2156 = vunpack.c.l.b16 %v2087
    %v2157 = vunpack.c.h.b16 %v2087
    %v2158 = vunpack.c.l.b16 %v2088
    %v2159 = vunpack.c.h.b16 %v2088
    %v2160 = vunpack.c.l.b16 %v2089
    %v2161 = vunpack.c.h.b16 %v2089
    %v2162 = vunpack.c.l.b16 %v2090
    %v2163 = vunpack.c.h.b16 %v2090
    %v2164 = vunpack.c.l.b16 %v2091
    %v2165 = vunpack.c.h.b16 %v2091
    %v2166 = vunpack.c.l.b16 %v2092
    %v2167 = vunpack.c.h.b16 %v2092
    %v2168 = vunpack.c.l.b16 %v2093
    %v2169 = vunpack.c.h.b16 %v2093
    %v2170 = vunpack.c.l.b16 %v2094
    %v2171 = vunpack.c.h.b16 %v2094
    %v2172 = vunpack.c.l.b16 %v2095
    %v2173 = vunpack.c.h.b16 %v2095
    %v2174 = vunpack.c.l.b16 %v2096
    %v2175 = vunpack.c.h.b16 %v2096
    %v2176 = vunpack.c.l.b16 %v2097
    %v2177 = vunpack.c.h.b16 %v2097
    %v2178 = vunpack.c.l.b16 %v2098
    %v2179 = vunpack.c.h.b16 %v2098
    %v2180 = vunpack.c.l.b16 %v2099
    %v2181 = vunpack.c.h.b16 %v2099
    %v2182 = vunpack.c.l.b16 %v2100
    %v2183 = vunpack.c.h.b16 %v2100
    %v2184 = vunpack.c.l.b16 %v2101
    %v2185 = vunpack.c.h.b16 %v2101
    %v2186 = vunpack.c.l.b16 %v2102
    %v2187 = vunpack.c.h.b16 %v2102
    %v2188 = vunpack.c.l.b16 %v2103
    %v2189 = vunpack.c.h.b16 %v2103
    %v2190 = vunpack.c.l.b16 %v2104
    %v2191 = vunpack.c.h.b16 %v2104
    %v2192 = vunpack.c.l.b16 %v2105
    %v2193 = vunpack.c.h.b16 %v2105
    %v2194 = vunpack.c.l.b16 %v2106
    %v2195 = vunpack.c.h.b16 %v2106
    %v2196 = vunpack.c.l.b16 %v2107
    %v2197 = vunpack.c.h.b16 %v2107
    %v2198 = vunpack.c.l.b16 %v2108
    %v2199 = vunpack.c.h.b16 %v2108
    %v2200 = vunpack.c.l.b16 %v2109
    %v2201 = vunpack.c.h.b16 %v2109
    %v2202 = vunpack.c.l.b16 %v2110
    %v2203 = vunpack.c.h.b16 %v2110
    %v2204 = vunpack.c.l.b16 %v2111
    %v2205 = vunpack.c.h.b16 %v2111
    %v2206 = vunpack.c.l.b16 %v2112
    %v2207 = vunpack.c.h.b16 %v2112
    %v2208 = vunpack.c.l.b16 %v2113
    %v2209 = vunpack.c.h.b16 %v2113
    %v2210 = vpack.c.b16 %v2150, %v2146
    %v2211 = vpack.c.b16 %v2151, %v2147
    %v2212 = vpack.c.b16 %v2152, %v2148
    %v2213 = vpack.c.b16 %v2153, %v2149
    %v2214 = vpack.c.b16 %v2158, %v2154
    %v2215 = vpack.c.b16 %v2159, %v2155
    %v2216 = vpack.c.b16 %v2160, %v2156
    %v2217 = vpack.c.b16 %v2161, %v2157
    %v2218 = vpack.c.b16 %v2166, %v2162
    %v2219 = vpack.c.b16 %v2167, %v2163
    %v2220 = vpack.c.b16 %v2168, %v2164
    %v2221 = vpack.c.b16 %v2169, %v2165
    %v2222 = vpack.c.b16 %v2174, %v2170
    %v2223 = vpack.c.b16 %v2175, %v2171
    %v2224 = vpack.c.b16 %v2176, %v2172
    %v2225 = vpack.c.b16 %v2177, %v2173
    %v2226 = vpack.c.b16 %v2182, %v2178
    %v2227 = vpack.c.b16 %v2183, %v2179
    %v2228 = vpack.c.b16 %v2184, %v2180
    %v2229 = vpack.c.b16 %v2185, %v2181
    %v2230 = vpack.c.b16 %v2190, %v2186
    %v2231 = vpack.c.b16 %v2191, %v2187
    %v2232 = vpack.c.b16 %v2192, %v2188
    %v2233 = vpack.c.b16 %v2193, %v2189
    %v2234 = vpack.c.b16 %v2198, %v2194
    %v2235 = vpack.c.b16 %v2199, %v2195
    %v2236 = vpack.c.b16 %v2200, %v2196
    %v2237 = vpack.c.b16 %v2201, %v2197
    %v2238 = vpack.c.b16 %v2206, %v2202
    %v2239 = vpack.c.b16 %v2207, %v2203
    %v2240 = vpack.c.b16 %v2208, %v2204
    %v2241 = vpack.c.b16 %v2209, %v2205
    %2274 = vmatprep.subr.bf16.mxu0 %v2239
    %2275 = vmatpush1.bf16.msra.mxu0 %v2238
    %2276 = vmatprep.subr.bf16.mxu0 %v2235
    %2277 = vmatpush1.bf16.msra.mxu0 %v2234
    %2278 = vmatprep.subr.bf16.mxu0 %v2231
    %2279 = vmatpush1.bf16.msra.mxu0 %v2230
    %2280 = vmatprep.subr.bf16.mxu0 %v2227
    %2281 = vmatpush1.bf16.msra.mxu0 %v2226
    %2282 = vmatprep.subr.bf16.mxu0 %v2223
    %2283 = vmatpush1.bf16.msra.mxu0 %v2222
    %2284 = vmatprep.subr.bf16.mxu0 %v2219
    %2285 = vmatpush1.bf16.msra.mxu0 %v2218
    %2286 = vmatprep.subr.bf16.mxu0 %v2215
    %2287 = vmatpush1.bf16.msra.mxu0 %v2214
    %2288 = vmatprep.subr.bf16.mxu0 %v2211
    %2289 = vmatpush1.bf16.msra.mxu0 %v2210
    %2290 = vmatprep.subr.bf16.mxu0 0
    %2291 = vmatpush2.bf16.msra.mxu0 0
    %2292 = vmatprep.subr.bf16.mxu0 0
    %2293 = vmatpush2.bf16.msra.mxu0 0
    %2294 = vmatprep.subr.bf16.mxu0 0
    %2295 = vmatpush2.bf16.msra.mxu0 0
    %2296 = vmatprep.subr.bf16.mxu0 0
    %2297 = vmatpush2.bf16.msra.mxu0 0
    %2298 = vmatprep.subr.bf16.mxu0 0
    %2299 = vmatpush2.bf16.msra.mxu0 0
    %2300 = vmatprep.subr.bf16.mxu0 0
    %2301 = vmatpush2.bf16.msra.mxu0 0
    %2302 = vmatprep.subr.bf16.mxu0 0
    %2303 = vmatpush2.bf16.msra.mxu0 0
    %2304 = vmatprep.subr.bf16.mxu0 0
    %2305 = vmatpush2.bf16.msra.mxu0 0
    %2306 = vmatprep.mubr.bf16.mxu0 0
    %2307 = vmatmul.mubr.bf16.gmra.mxu0 %v2072
    %v2308 = vpop.f32.mrf.mxu0
    %v2309 = vadd.f32 0.0, %v2308
    %v2310 = vpop.f32.mrf.mxu0
    %v2311 = vadd.f32 0.0, %v2310
    %v2312 = vpop.f32.mrf.mxu0
    %v2313 = vpop.f32.mrf.mxu0
    %2314 = vdwg.mxu0
    %2315 = vmatprep.subr.bf16.mxu0 %v2241
    %2316 = vmatpush1.bf16.msra.mxu0 %v2240
    %2317 = vmatprep.subr.bf16.mxu0 %v2237
    %2318 = vmatpush1.bf16.msra.mxu0 %v2236
    %2319 = vmatprep.subr.bf16.mxu0 %v2233
    %2320 = vmatpush1.bf16.msra.mxu0 %v2232
    %2321 = vmatprep.subr.bf16.mxu0 %v2229
    %2322 = vmatpush1.bf16.msra.mxu0 %v2228
    %2323 = vmatprep.subr.bf16.mxu0 %v2225
    %2324 = vmatpush1.bf16.msra.mxu0 %v2224
    %2325 = vmatprep.subr.bf16.mxu0 %v2221
    %2326 = vmatpush1.bf16.msra.mxu0 %v2220
    %2327 = vmatprep.subr.bf16.mxu0 %v2217
    %2328 = vmatpush1.bf16.msra.mxu0 %v2216
    %2329 = vmatprep.subr.bf16.mxu0 %v2213
    %2330 = vmatpush1.bf16.msra.mxu0 %v2212
    %2331 = vmatprep.subr.bf16.mxu0 0
    %2332 = vmatpush2.bf16.msra.mxu0 0
    %2333 = vmatprep.subr.bf16.mxu0 0
    %2334 = vmatpush2.bf16.msra.mxu0 0
    %2335 = vmatprep.subr.bf16.mxu0 0
    %2336 = vmatpush2.bf16.msra.mxu0 0
    %2337 = vmatprep.subr.bf16.mxu0 0
    %2338 = vmatpush2.bf16.msra.mxu0 0
    %2339 = vmatprep.subr.bf16.mxu0 0
    %2340 = vmatpush2.bf16.msra.mxu0 0
    %2341 = vmatprep.subr.bf16.mxu0 0
    %2342 = vmatpush2.bf16.msra.mxu0 0
    %2343 = vmatprep.subr.bf16.mxu0 0
    %2344 = vmatpush2.bf16.msra.mxu0 0
    %2345 = vmatprep.subr.bf16.mxu0 0
    %2346 = vmatpush2.bf16.msra.mxu0 0
    %2347 = vmatprep.mubr.bf16.mxu0 0
    %2348 = vmatmul.mubr.bf16.gmra.mxu0 %v2072
    %v2349 = vpop.f32.mrf.mxu0
    %v2350 = vadd.f32 0.0, %v2349
    %v2351 = vpop.f32.mrf.mxu0
    %v2352 = vadd.f32 0.0, %v2351
    %v2353 = vpop.f32.mrf.mxu0
    %v2354 = vpop.f32.mrf.mxu0
    %2355 = vdwg.mxu0
    %v2356 = vadd.f32 %v2078, %v2309
    %v2357 = vadd.f32 %v2079, %v2311
    %v2358 = vadd.f32 %v2080, %v2350
    %v2359 = vadd.f32 %v2081, %v2352
    %v2360 = vxor.u32 %v2356, 2147483648
    %v2361 = vmul.f32 %v2360, 1.442695
    %v2362 = vpow.pop %v2361
    %v2363 = vadd.f32 %v2362, 1.0
    %v2364 = vrcp.pop %v2363
    %v2365 = vmul.f32 1.0, %v2364
    %v2366 = vxor.u32 %v2357, 2147483648
    %v2367 = vmul.f32 %v2366, 1.442695
    %v2368 = vpow.pop %v2367
    %v2369 = vadd.f32 %v2368, 1.0
    %v2370 = vrcp.pop %v2369
    %v2371 = vmul.f32 1.0, %v2370
    %v2372 = vtanh.pop %v2358
    %v2373 = vxor.u32 %v2359, 2147483648
    %v2374 = vmul.f32 %v2373, 1.442695
    %v2375 = vpow.pop %v2374
    %v2376 = vadd.f32 %v2375, 1.0
    %v2377 = vrcp.pop %v2376
    %v2378 = vmul.f32 1.0, %v2377
    %v2379 = vmul.f32 %v2371, %v2069
    %v2380 = vmul.f32 %v2365, %v2372
    %v2381 = vadd.f32 %v2379, %v2380
    %v2382 = vtanh.pop %v2381
    %v2383 = vmul.f32 %v2378, %v2382
    %v2384 = vpack.c.bf16 %v2383, %v2383
    %s2385 = scalar_lea.vmem [#allocation3], 20
    %2386 = vst [vmem:[%s2385] sm:$0xf] %v2384
    %s2387 = smul.u32 6, 4
    %s2388 = smul.addr %s2387, 8
    %s2389 = scalar_lea.vmem [#allocation2], %s2388
    %v2390 = vld [vmem:[%s2389] sm:$0xff]
    %v2391 = vld [vmem:[%s2389 + $0x8] sm:$0xff]
    %v2392 = vld [vmem:[%s2389 + $0x10] sm:$0xff]
    %v2393 = vld [vmem:[%s2389 + $0x18] sm:$0xff]
    %v2394 = vld [vmem:[#allocation9] sm:$0xff]
    %v2395 = vld [vmem:[#allocation9 + $0x8] sm:$0xff]
    %v2396 = vld [vmem:[#allocation9 + $0x10] sm:$0xff]
    %v2397 = vld [vmem:[#allocation9 + $0x18] sm:$0xff]
    %v2398 = vld [vmem:[#allocation9 + $0x20] sm:$0xff]
    %v2399 = vld [vmem:[#allocation9 + $0x28] sm:$0xff]
    %v2400 = vld [vmem:[#allocation9 + $0x30] sm:$0xff]
    %v2401 = vld [vmem:[#allocation9 + $0x38] sm:$0xff]
    %v2402 = vld [vmem:[#allocation9 + $0x40] sm:$0xff]
    %v2403 = vld [vmem:[#allocation9 + $0x48] sm:$0xff]
    %v2404 = vld [vmem:[#allocation9 + $0x50] sm:$0xff]
    %v2405 = vld [vmem:[#allocation9 + $0x58] sm:$0xff]
    %v2406 = vld [vmem:[#allocation9 + $0x60] sm:$0xff]
    %v2407 = vld [vmem:[#allocation9 + $0x68] sm:$0xff]
    %v2408 = vld [vmem:[#allocation9 + $0x70] sm:$0xff]
    %v2409 = vld [vmem:[#allocation9 + $0x78] sm:$0xff]
    %v2410 = vld [vmem:[#allocation9 + $0x80] sm:$0xff]
    %v2411 = vld [vmem:[#allocation9 + $0x88] sm:$0xff]
    %v2412 = vld [vmem:[#allocation9 + $0x90] sm:$0xff]
    %v2413 = vld [vmem:[#allocation9 + $0x98] sm:$0xff]
    %v2414 = vld [vmem:[#allocation9 + $0xa0] sm:$0xff]
    %v2415 = vld [vmem:[#allocation9 + $0xa8] sm:$0xff]
    %v2416 = vld [vmem:[#allocation9 + $0xb0] sm:$0xff]
    %v2417 = vld [vmem:[#allocation9 + $0xb8] sm:$0xff]
    %v2418 = vld [vmem:[#allocation9 + $0xc0] sm:$0xff]
    %v2419 = vld [vmem:[#allocation9 + $0xc8] sm:$0xff]
    %v2420 = vld [vmem:[#allocation9 + $0xd0] sm:$0xff]
    %v2421 = vld [vmem:[#allocation9 + $0xd8] sm:$0xff]
    %v2422 = vld [vmem:[#allocation9 + $0xe0] sm:$0xff]
    %v2423 = vld [vmem:[#allocation9 + $0xe8] sm:$0xff]
    %v2424 = vld [vmem:[#allocation9 + $0xf0] sm:$0xff]
    %v2425 = vld [vmem:[#allocation9 + $0xf8] sm:$0xff]
    %v2458 = vunpack.c.l.b16 %v2394
    %v2459 = vunpack.c.h.b16 %v2394
    %v2460 = vunpack.c.l.b16 %v2395
    %v2461 = vunpack.c.h.b16 %v2395
    %v2462 = vunpack.c.l.b16 %v2396
    %v2463 = vunpack.c.h.b16 %v2396
    %v2464 = vunpack.c.l.b16 %v2397
    %v2465 = vunpack.c.h.b16 %v2397
    %v2466 = vunpack.c.l.b16 %v2398
    %v2467 = vunpack.c.h.b16 %v2398
    %v2468 = vunpack.c.l.b16 %v2399
    %v2469 = vunpack.c.h.b16 %v2399
    %v2470 = vunpack.c.l.b16 %v2400
    %v2471 = vunpack.c.h.b16 %v2400
    %v2472 = vunpack.c.l.b16 %v2401
    %v2473 = vunpack.c.h.b16 %v2401
    %v2474 = vunpack.c.l.b16 %v2402
    %v2475 = vunpack.c.h.b16 %v2402
    %v2476 = vunpack.c.l.b16 %v2403
    %v2477 = vunpack.c.h.b16 %v2403
    %v2478 = vunpack.c.l.b16 %v2404
    %v2479 = vunpack.c.h.b16 %v2404
    %v2480 = vunpack.c.l.b16 %v2405
    %v2481 = vunpack.c.h.b16 %v2405
    %v2482 = vunpack.c.l.b16 %v2406
    %v2483 = vunpack.c.h.b16 %v2406
    %v2484 = vunpack.c.l.b16 %v2407
    %v2485 = vunpack.c.h.b16 %v2407
    %v2486 = vunpack.c.l.b16 %v2408
    %v2487 = vunpack.c.h.b16 %v2408
    %v2488 = vunpack.c.l.b16 %v2409
    %v2489 = vunpack.c.h.b16 %v2409
    %v2490 = vunpack.c.l.b16 %v2410
    %v2491 = vunpack.c.h.b16 %v2410
    %v2492 = vunpack.c.l.b16 %v2411
    %v2493 = vunpack.c.h.b16 %v2411
    %v2494 = vunpack.c.l.b16 %v2412
    %v2495 = vunpack.c.h.b16 %v2412
    %v2496 = vunpack.c.l.b16 %v2413
    %v2497 = vunpack.c.h.b16 %v2413
    %v2498 = vunpack.c.l.b16 %v2414
    %v2499 = vunpack.c.h.b16 %v2414
    %v2500 = vunpack.c.l.b16 %v2415
    %v2501 = vunpack.c.h.b16 %v2415
    %v2502 = vunpack.c.l.b16 %v2416
    %v2503 = vunpack.c.h.b16 %v2416
    %v2504 = vunpack.c.l.b16 %v2417
    %v2505 = vunpack.c.h.b16 %v2417
    %v2506 = vunpack.c.l.b16 %v2418
    %v2507 = vunpack.c.h.b16 %v2418
    %v2508 = vunpack.c.l.b16 %v2419
    %v2509 = vunpack.c.h.b16 %v2419
    %v2510 = vunpack.c.l.b16 %v2420
    %v2511 = vunpack.c.h.b16 %v2420
    %v2512 = vunpack.c.l.b16 %v2421
    %v2513 = vunpack.c.h.b16 %v2421
    %v2514 = vunpack.c.l.b16 %v2422
    %v2515 = vunpack.c.h.b16 %v2422
    %v2516 = vunpack.c.l.b16 %v2423
    %v2517 = vunpack.c.h.b16 %v2423
    %v2518 = vunpack.c.l.b16 %v2424
    %v2519 = vunpack.c.h.b16 %v2424
    %v2520 = vunpack.c.l.b16 %v2425
    %v2521 = vunpack.c.h.b16 %v2425
    %v2522 = vpack.c.b16 %v2462, %v2458
    %v2523 = vpack.c.b16 %v2463, %v2459
    %v2524 = vpack.c.b16 %v2464, %v2460
    %v2525 = vpack.c.b16 %v2465, %v2461
    %v2526 = vpack.c.b16 %v2470, %v2466
    %v2527 = vpack.c.b16 %v2471, %v2467
    %v2528 = vpack.c.b16 %v2472, %v2468
    %v2529 = vpack.c.b16 %v2473, %v2469
    %v2530 = vpack.c.b16 %v2478, %v2474
    %v2531 = vpack.c.b16 %v2479, %v2475
    %v2532 = vpack.c.b16 %v2480, %v2476
    %v2533 = vpack.c.b16 %v2481, %v2477
    %v2534 = vpack.c.b16 %v2486, %v2482
    %v2535 = vpack.c.b16 %v2487, %v2483
    %v2536 = vpack.c.b16 %v2488, %v2484
    %v2537 = vpack.c.b16 %v2489, %v2485
    %v2538 = vpack.c.b16 %v2494, %v2490
    %v2539 = vpack.c.b16 %v2495, %v2491
    %v2540 = vpack.c.b16 %v2496, %v2492
    %v2541 = vpack.c.b16 %v2497, %v2493
    %v2542 = vpack.c.b16 %v2502, %v2498
    %v2543 = vpack.c.b16 %v2503, %v2499
    %v2544 = vpack.c.b16 %v2504, %v2500
    %v2545 = vpack.c.b16 %v2505, %v2501
    %v2546 = vpack.c.b16 %v2510, %v2506
    %v2547 = vpack.c.b16 %v2511, %v2507
    %v2548 = vpack.c.b16 %v2512, %v2508
    %v2549 = vpack.c.b16 %v2513, %v2509
    %v2550 = vpack.c.b16 %v2518, %v2514
    %v2551 = vpack.c.b16 %v2519, %v2515
    %v2552 = vpack.c.b16 %v2520, %v2516
    %v2553 = vpack.c.b16 %v2521, %v2517
    %2586 = vmatprep.subr.bf16.mxu0 %v2551
    %2587 = vmatpush1.bf16.msra.mxu0 %v2550
    %2588 = vmatprep.subr.bf16.mxu0 %v2547
    %2589 = vmatpush1.bf16.msra.mxu0 %v2546
    %2590 = vmatprep.subr.bf16.mxu0 %v2543
    %2591 = vmatpush1.bf16.msra.mxu0 %v2542
    %2592 = vmatprep.subr.bf16.mxu0 %v2539
    %2593 = vmatpush1.bf16.msra.mxu0 %v2538
    %2594 = vmatprep.subr.bf16.mxu0 %v2535
    %2595 = vmatpush1.bf16.msra.mxu0 %v2534
    %2596 = vmatprep.subr.bf16.mxu0 %v2531
    %2597 = vmatpush1.bf16.msra.mxu0 %v2530
    %2598 = vmatprep.subr.bf16.mxu0 %v2527
    %2599 = vmatpush1.bf16.msra.mxu0 %v2526
    %2600 = vmatprep.subr.bf16.mxu0 %v2523
    %2601 = vmatpush1.bf16.msra.mxu0 %v2522
    %2602 = vmatprep.subr.bf16.mxu0 0
    %2603 = vmatpush2.bf16.msra.mxu0 0
    %2604 = vmatprep.subr.bf16.mxu0 0
    %2605 = vmatpush2.bf16.msra.mxu0 0
    %2606 = vmatprep.subr.bf16.mxu0 0
    %2607 = vmatpush2.bf16.msra.mxu0 0
    %2608 = vmatprep.subr.bf16.mxu0 0
    %2609 = vmatpush2.bf16.msra.mxu0 0
    %2610 = vmatprep.subr.bf16.mxu0 0
    %2611 = vmatpush2.bf16.msra.mxu0 0
    %2612 = vmatprep.subr.bf16.mxu0 0
    %2613 = vmatpush2.bf16.msra.mxu0 0
    %2614 = vmatprep.subr.bf16.mxu0 0
    %2615 = vmatpush2.bf16.msra.mxu0 0
    %2616 = vmatprep.subr.bf16.mxu0 0
    %2617 = vmatpush2.bf16.msra.mxu0 0
    %2618 = vmatprep.mubr.bf16.mxu0 0
    %2619 = vmatmul.mubr.bf16.gmra.mxu0 %v2384
    %v2620 = vpop.f32.mrf.mxu0
    %v2621 = vadd.f32 0.0, %v2620
    %v2622 = vpop.f32.mrf.mxu0
    %v2623 = vadd.f32 0.0, %v2622
    %v2624 = vpop.f32.mrf.mxu0
    %v2625 = vpop.f32.mrf.mxu0
    %2626 = vdwg.mxu0
    %2627 = vmatprep.subr.bf16.mxu0 %v2553
    %2628 = vmatpush1.bf16.msra.mxu0 %v2552
    %2629 = vmatprep.subr.bf16.mxu0 %v2549
    %2630 = vmatpush1.bf16.msra.mxu0 %v2548
    %2631 = vmatprep.subr.bf16.mxu0 %v2545
    %2632 = vmatpush1.bf16.msra.mxu0 %v2544
    %2633 = vmatprep.subr.bf16.mxu0 %v2541
    %2634 = vmatpush1.bf16.msra.mxu0 %v2540
    %2635 = vmatprep.subr.bf16.mxu0 %v2537
    %2636 = vmatpush1.bf16.msra.mxu0 %v2536
    %2637 = vmatprep.subr.bf16.mxu0 %v2533
    %2638 = vmatpush1.bf16.msra.mxu0 %v2532
    %2639 = vmatprep.subr.bf16.mxu0 %v2529
    %2640 = vmatpush1.bf16.msra.mxu0 %v2528
    %2641 = vmatprep.subr.bf16.mxu0 %v2525
    %2642 = vmatpush1.bf16.msra.mxu0 %v2524
    %2643 = vmatprep.subr.bf16.mxu0 0
    %2644 = vmatpush2.bf16.msra.mxu0 0
    %2645 = vmatprep.subr.bf16.mxu0 0
    %2646 = vmatpush2.bf16.msra.mxu0 0
    %2647 = vmatprep.subr.bf16.mxu0 0
    %2648 = vmatpush2.bf16.msra.mxu0 0
    %2649 = vmatprep.subr.bf16.mxu0 0
    %2650 = vmatpush2.bf16.msra.mxu0 0
    %2651 = vmatprep.subr.bf16.mxu0 0
    %2652 = vmatpush2.bf16.msra.mxu0 0
    %2653 = vmatprep.subr.bf16.mxu0 0
    %2654 = vmatpush2.bf16.msra.mxu0 0
    %2655 = vmatprep.subr.bf16.mxu0 0
    %2656 = vmatpush2.bf16.msra.mxu0 0
    %2657 = vmatprep.subr.bf16.mxu0 0
    %2658 = vmatpush2.bf16.msra.mxu0 0
    %2659 = vmatprep.mubr.bf16.mxu0 0
    %2660 = vmatmul.mubr.bf16.gmra.mxu0 %v2384
    %v2661 = vpop.f32.mrf.mxu0
    %v2662 = vadd.f32 0.0, %v2661
    %v2663 = vpop.f32.mrf.mxu0
    %v2664 = vadd.f32 0.0, %v2663
    %v2665 = vpop.f32.mrf.mxu0
    %v2666 = vpop.f32.mrf.mxu0
    %2667 = vdwg.mxu0
    %v2668 = vadd.f32 %v2390, %v2621
    %v2669 = vadd.f32 %v2391, %v2623
    %v2670 = vadd.f32 %v2392, %v2662
    %v2671 = vadd.f32 %v2393, %v2664
    %v2672 = vxor.u32 %v2668, 2147483648
    %v2673 = vmul.f32 %v2672, 1.442695
    %v2674 = vpow.pop %v2673
    %v2675 = vadd.f32 %v2674, 1.0
    %v2676 = vrcp.pop %v2675
    %v2677 = vmul.f32 1.0, %v2676
    %v2678 = vxor.u32 %v2669, 2147483648
    %v2679 = vmul.f32 %v2678, 1.442695
    %v2680 = vpow.pop %v2679
    %v2681 = vadd.f32 %v2680, 1.0
    %v2682 = vrcp.pop %v2681
    %v2683 = vmul.f32 1.0, %v2682
    %v2684 = vtanh.pop %v2670
    %v2685 = vxor.u32 %v2671, 2147483648
    %v2686 = vmul.f32 %v2685, 1.442695
    %v2687 = vpow.pop %v2686
    %v2688 = vadd.f32 %v2687, 1.0
    %v2689 = vrcp.pop %v2688
    %v2690 = vmul.f32 1.0, %v2689
    %v2691 = vmul.f32 %v2683, %v2381
    %v2692 = vmul.f32 %v2677, %v2684
    %v2693 = vadd.f32 %v2691, %v2692
    %v2694 = vtanh.pop %v2693
    %v2695 = vmul.f32 %v2690, %v2694
    %v2696 = vpack.c.bf16 %v2695, %v2695
    %s2697 = scalar_lea.vmem [#allocation3], 24
    %2698 = vst [vmem:[%s2697] sm:$0xf] %v2696
    %s2699 = smul.u32 7, 4
    %s2700 = smul.addr %s2699, 8
    %s2701 = scalar_lea.vmem [#allocation2], %s2700
    %v2702 = vld [vmem:[%s2701] sm:$0xff]
    %v2703 = vld [vmem:[%s2701 + $0x8] sm:$0xff]
    %v2704 = vld [vmem:[%s2701 + $0x10] sm:$0xff]
    %v2705 = vld [vmem:[%s2701 + $0x18] sm:$0xff]
    %v2706 = vld [vmem:[#allocation9] sm:$0xff]
    %v2707 = vld [vmem:[#allocation9 + $0x8] sm:$0xff]
    %v2708 = vld [vmem:[#allocation9 + $0x10] sm:$0xff]
    %v2709 = vld [vmem:[#allocation9 + $0x18] sm:$0xff]
    %v2710 = vld [vmem:[#allocation9 + $0x20] sm:$0xff]
    %v2711 = vld [vmem:[#allocation9 + $0x28] sm:$0xff]
    %v2712 = vld [vmem:[#allocation9 + $0x30] sm:$0xff]
    %v2713 = vld [vmem:[#allocation9 + $0x38] sm:$0xff]
    %v2714 = vld [vmem:[#allocation9 + $0x40] sm:$0xff]
    %v2715 = vld [vmem:[#allocation9 + $0x48] sm:$0xff]
    %v2716 = vld [vmem:[#allocation9 + $0x50] sm:$0xff]
    %v2717 = vld [vmem:[#allocation9 + $0x58] sm:$0xff]
    %v2718 = vld [vmem:[#allocation9 + $0x60] sm:$0xff]
    %v2719 = vld [vmem:[#allocation9 + $0x68] sm:$0xff]
    %v2720 = vld [vmem:[#allocation9 + $0x70] sm:$0xff]
    %v2721 = vld [vmem:[#allocation9 + $0x78] sm:$0xff]
    %v2722 = vld [vmem:[#allocation9 + $0x80] sm:$0xff]
    %v2723 = vld [vmem:[#allocation9 + $0x88] sm:$0xff]
    %v2724 = vld [vmem:[#allocation9 + $0x90] sm:$0xff]
    %v2725 = vld [vmem:[#allocation9 + $0x98] sm:$0xff]
    %v2726 = vld [vmem:[#allocation9 + $0xa0] sm:$0xff]
    %v2727 = vld [vmem:[#allocation9 + $0xa8] sm:$0xff]
    %v2728 = vld [vmem:[#allocation9 + $0xb0] sm:$0xff]
    %v2729 = vld [vmem:[#allocation9 + $0xb8] sm:$0xff]
    %v2730 = vld [vmem:[#allocation9 + $0xc0] sm:$0xff]
    %v2731 = vld [vmem:[#allocation9 + $0xc8] sm:$0xff]
    %v2732 = vld [vmem:[#allocation9 + $0xd0] sm:$0xff]
    %v2733 = vld [vmem:[#allocation9 + $0xd8] sm:$0xff]
    %v2734 = vld [vmem:[#allocation9 + $0xe0] sm:$0xff]
    %v2735 = vld [vmem:[#allocation9 + $0xe8] sm:$0xff]
    %v2736 = vld [vmem:[#allocation9 + $0xf0] sm:$0xff]
    %v2737 = vld [vmem:[#allocation9 + $0xf8] sm:$0xff]
    %v2770 = vunpack.c.l.b16 %v2706
    %v2771 = vunpack.c.h.b16 %v2706
    %v2772 = vunpack.c.l.b16 %v2707
    %v2773 = vunpack.c.h.b16 %v2707
    %v2774 = vunpack.c.l.b16 %v2708
    %v2775 = vunpack.c.h.b16 %v2708
    %v2776 = vunpack.c.l.b16 %v2709
    %v2777 = vunpack.c.h.b16 %v2709
    %v2778 = vunpack.c.l.b16 %v2710
    %v2779 = vunpack.c.h.b16 %v2710
    %v2780 = vunpack.c.l.b16 %v2711
    %v2781 = vunpack.c.h.b16 %v2711
    %v2782 = vunpack.c.l.b16 %v2712
    %v2783 = vunpack.c.h.b16 %v2712
    %v2784 = vunpack.c.l.b16 %v2713
    %v2785 = vunpack.c.h.b16 %v2713
    %v2786 = vunpack.c.l.b16 %v2714
    %v2787 = vunpack.c.h.b16 %v2714
    %v2788 = vunpack.c.l.b16 %v2715
    %v2789 = vunpack.c.h.b16 %v2715
    %v2790 = vunpack.c.l.b16 %v2716
    %v2791 = vunpack.c.h.b16 %v2716
    %v2792 = vunpack.c.l.b16 %v2717
    %v2793 = vunpack.c.h.b16 %v2717
    %v2794 = vunpack.c.l.b16 %v2718
    %v2795 = vunpack.c.h.b16 %v2718
    %v2796 = vunpack.c.l.b16 %v2719
    %v2797 = vunpack.c.h.b16 %v2719
    %v2798 = vunpack.c.l.b16 %v2720
    %v2799 = vunpack.c.h.b16 %v2720
    %v2800 = vunpack.c.l.b16 %v2721
    %v2801 = vunpack.c.h.b16 %v2721
    %v2802 = vunpack.c.l.b16 %v2722
    %v2803 = vunpack.c.h.b16 %v2722
    %v2804 = vunpack.c.l.b16 %v2723
    %v2805 = vunpack.c.h.b16 %v2723
    %v2806 = vunpack.c.l.b16 %v2724
    %v2807 = vunpack.c.h.b16 %v2724
    %v2808 = vunpack.c.l.b16 %v2725
    %v2809 = vunpack.c.h.b16 %v2725
    %v2810 = vunpack.c.l.b16 %v2726
    %v2811 = vunpack.c.h.b16 %v2726
    %v2812 = vunpack.c.l.b16 %v2727
    %v2813 = vunpack.c.h.b16 %v2727
    %v2814 = vunpack.c.l.b16 %v2728
    %v2815 = vunpack.c.h.b16 %v2728
    %v2816 = vunpack.c.l.b16 %v2729
    %v2817 = vunpack.c.h.b16 %v2729
    %v2818 = vunpack.c.l.b16 %v2730
    %v2819 = vunpack.c.h.b16 %v2730
    %v2820 = vunpack.c.l.b16 %v2731
    %v2821 = vunpack.c.h.b16 %v2731
    %v2822 = vunpack.c.l.b16 %v2732
    %v2823 = vunpack.c.h.b16 %v2732
    %v2824 = vunpack.c.l.b16 %v2733
    %v2825 = vunpack.c.h.b16 %v2733
    %v2826 = vunpack.c.l.b16 %v2734
    %v2827 = vunpack.c.h.b16 %v2734
    %v2828 = vunpack.c.l.b16 %v2735
    %v2829 = vunpack.c.h.b16 %v2735
    %v2830 = vunpack.c.l.b16 %v2736
    %v2831 = vunpack.c.h.b16 %v2736
    %v2832 = vunpack.c.l.b16 %v2737
    %v2833 = vunpack.c.h.b16 %v2737
    %v2834 = vpack.c.b16 %v2774, %v2770
    %v2835 = vpack.c.b16 %v2775, %v2771
    %v2836 = vpack.c.b16 %v2776, %v2772
    %v2837 = vpack.c.b16 %v2777, %v2773
    %v2838 = vpack.c.b16 %v2782, %v2778
    %v2839 = vpack.c.b16 %v2783, %v2779
    %v2840 = vpack.c.b16 %v2784, %v2780
    %v2841 = vpack.c.b16 %v2785, %v2781
    %v2842 = vpack.c.b16 %v2790, %v2786
    %v2843 = vpack.c.b16 %v2791, %v2787
    %v2844 = vpack.c.b16 %v2792, %v2788
    %v2845 = vpack.c.b16 %v2793, %v2789
    %v2846 = vpack.c.b16 %v2798, %v2794
    %v2847 = vpack.c.b16 %v2799, %v2795
    %v2848 = vpack.c.b16 %v2800, %v2796
    %v2849 = vpack.c.b16 %v2801, %v2797
    %v2850 = vpack.c.b16 %v2806, %v2802
    %v2851 = vpack.c.b16 %v2807, %v2803
    %v2852 = vpack.c.b16 %v2808, %v2804
    %v2853 = vpack.c.b16 %v2809, %v2805
    %v2854 = vpack.c.b16 %v2814, %v2810
    %v2855 = vpack.c.b16 %v2815, %v2811
    %v2856 = vpack.c.b16 %v2816, %v2812
    %v2857 = vpack.c.b16 %v2817, %v2813
    %v2858 = vpack.c.b16 %v2822, %v2818
    %v2859 = vpack.c.b16 %v2823, %v2819
    %v2860 = vpack.c.b16 %v2824, %v2820
    %v2861 = vpack.c.b16 %v2825, %v2821
    %v2862 = vpack.c.b16 %v2830, %v2826
    %v2863 = vpack.c.b16 %v2831, %v2827
    %v2864 = vpack.c.b16 %v2832, %v2828
    %v2865 = vpack.c.b16 %v2833, %v2829
    %2898 = vmatprep.subr.bf16.mxu0 %v2863
    %2899 = vmatpush1.bf16.msra.mxu0 %v2862
    %2900 = vmatprep.subr.bf16.mxu0 %v2859
    %2901 = vmatpush1.bf16.msra.mxu0 %v2858
    %2902 = vmatprep.subr.bf16.mxu0 %v2855
    %2903 = vmatpush1.bf16.msra.mxu0 %v2854
    %2904 = vmatprep.subr.bf16.mxu0 %v2851
    %2905 = vmatpush1.bf16.msra.mxu0 %v2850
    %2906 = vmatprep.subr.bf16.mxu0 %v2847
    %2907 = vmatpush1.bf16.msra.mxu0 %v2846
    %2908 = vmatprep.subr.bf16.mxu0 %v2843
    %2909 = vmatpush1.bf16.msra.mxu0 %v2842
    %2910 = vmatprep.subr.bf16.mxu0 %v2839
    %2911 = vmatpush1.bf16.msra.mxu0 %v2838
    %2912 = vmatprep.subr.bf16.mxu0 %v2835
    %2913 = vmatpush1.bf16.msra.mxu0 %v2834
    %2914 = vmatprep.subr.bf16.mxu0 0
    %2915 = vmatpush2.bf16.msra.mxu0 0
    %2916 = vmatprep.subr.bf16.mxu0 0
    %2917 = vmatpush2.bf16.msra.mxu0 0
    %2918 = vmatprep.subr.bf16.mxu0 0
    %2919 = vmatpush2.bf16.msra.mxu0 0
    %2920 = vmatprep.subr.bf16.mxu0 0
    %2921 = vmatpush2.bf16.msra.mxu0 0
    %2922 = vmatprep.subr.bf16.mxu0 0
    %2923 = vmatpush2.bf16.msra.mxu0 0
    %2924 = vmatprep.subr.bf16.mxu0 0
    %2925 = vmatpush2.bf16.msra.mxu0 0
    %2926 = vmatprep.subr.bf16.mxu0 0
    %2927 = vmatpush2.bf16.msra.mxu0 0
    %2928 = vmatprep.subr.bf16.mxu0 0
    %2929 = vmatpush2.bf16.msra.mxu0 0
    %2930 = vmatprep.mubr.bf16.mxu0 0
    %2931 = vmatmul.mubr.bf16.gmra.mxu0 %v2696
    %v2932 = vpop.f32.mrf.mxu0
    %v2933 = vadd.f32 0.0, %v2932
    %v2934 = vpop.f32.mrf.mxu0
    %v2935 = vadd.f32 0.0, %v2934
    %v2936 = vpop.f32.mrf.mxu0
    %v2937 = vpop.f32.mrf.mxu0
    %2938 = vdwg.mxu0
    %2939 = vmatprep.subr.bf16.mxu0 %v2865
    %2940 = vmatpush1.bf16.msra.mxu0 %v2864
    %2941 = vmatprep.subr.bf16.mxu0 %v2861
    %2942 = vmatpush1.bf16.msra.mxu0 %v2860
    %2943 = vmatprep.subr.bf16.mxu0 %v2857
    %2944 = vmatpush1.bf16.msra.mxu0 %v2856
    %2945 = vmatprep.subr.bf16.mxu0 %v2853
    %2946 = vmatpush1.bf16.msra.mxu0 %v2852
    %2947 = vmatprep.subr.bf16.mxu0 %v2849
    %2948 = vmatpush1.bf16.msra.mxu0 %v2848
    %2949 = vmatprep.subr.bf16.mxu0 %v2845
    %2950 = vmatpush1.bf16.msra.mxu0 %v2844
    %2951 = vmatprep.subr.bf16.mxu0 %v2841
    %2952 = vmatpush1.bf16.msra.mxu0 %v2840
    %2953 = vmatprep.subr.bf16.mxu0 %v2837
    %2954 = vmatpush1.bf16.msra.mxu0 %v2836
    %2955 = vmatprep.subr.bf16.mxu0 0
    %2956 = vmatpush2.bf16.msra.mxu0 0
    %2957 = vmatprep.subr.bf16.mxu0 0
    %2958 = vmatpush2.bf16.msra.mxu0 0
    %2959 = vmatprep.subr.bf16.mxu0 0
    %2960 = vmatpush2.bf16.msra.mxu0 0
    %2961 = vmatprep.subr.bf16.mxu0 0
    %2962 = vmatpush2.bf16.msra.mxu0 0
    %2963 = vmatprep.subr.bf16.mxu0 0
    %2964 = vmatpush2.bf16.msra.mxu0 0
    %2965 = vmatprep.subr.bf16.mxu0 0
    %2966 = vmatpush2.bf16.msra.mxu0 0
    %2967 = vmatprep.subr.bf16.mxu0 0
    %2968 = vmatpush2.bf16.msra.mxu0 0
    %2969 = vmatprep.subr.bf16.mxu0 0
    %2970 = vmatpush2.bf16.msra.mxu0 0
    %2971 = vmatprep.mubr.bf16.mxu0 0
    %2972 = vmatmul.mubr.bf16.gmra.mxu0 %v2696
    %v2973 = vpop.f32.mrf.mxu0
    %v2974 = vadd.f32 0.0, %v2973
    %v2975 = vpop.f32.mrf.mxu0
    %v2976 = vadd.f32 0.0, %v2975
    %v2977 = vpop.f32.mrf.mxu0
    %v2978 = vpop.f32.mrf.mxu0
    %2979 = vdwg.mxu0
    %v2980 = vadd.f32 %v2702, %v2933
    %v2981 = vadd.f32 %v2703, %v2935
    %v2982 = vadd.f32 %v2704, %v2974
    %v2983 = vadd.f32 %v2705, %v2976
    %v2984 = vxor.u32 %v2980, 2147483648
    %v2985 = vmul.f32 %v2984, 1.442695
    %v2986 = vpow.pop %v2985
    %v2987 = vadd.f32 %v2986, 1.0
    %v2988 = vrcp.pop %v2987
    %v2989 = vmul.f32 1.0, %v2988
    %v2990 = vxor.u32 %v2981, 2147483648
    %v2991 = vmul.f32 %v2990, 1.442695
    %v2992 = vpow.pop %v2991
    %v2993 = vadd.f32 %v2992, 1.0
    %v2994 = vrcp.pop %v2993
    %v2995 = vmul.f32 1.0, %v2994
    %v2996 = vtanh.pop %v2982
    %v2997 = vxor.u32 %v2983, 2147483648
    %v2998 = vmul.f32 %v2997, 1.442695
    %v2999 = vpow.pop %v2998
    %v3000 = vadd.f32 %v2999, 1.0
    %v3001 = vrcp.pop %v3000
    %v3002 = vmul.f32 1.0, %v3001
    %v3003 = vmul.f32 %v2995, %v2693
    %v3004 = vmul.f32 %v2989, %v2996
    %v3005 = vadd.f32 %v3003, %v3004
    %v3006 = vtanh.pop %v3005
    %v3007 = vmul.f32 %v3002, %v3006
    %v3008 = vpack.c.bf16 %v3007, %v3007
    %s3009 = scalar_lea.vmem [#allocation3], 28
    %3010 = vst [vmem:[%s3009] sm:$0xf] %v3008
    %3011 = vst [vmem:[%s10] sm:$0xff] %v3007
    %3012 = vst [vmem:[%s11] sm:$0xff] %v3005
    %v3013 = vld [vmem:[#allocation3] sm:$0xf]
    %v3014 = vld [vmem:[#allocation3 + $0x4] sm:$0xf]
    %v3015 = vld [vmem:[#allocation3 + $0x8] sm:$0xf]
    %v3016 = vld [vmem:[#allocation3 + $0xc] sm:$0xf]
    %v3017 = vld [vmem:[#allocation3 + $0x10] sm:$0xf]
    %v3018 = vld [vmem:[#allocation3 + $0x14] sm:$0xf]
    %v3019 = vld [vmem:[#allocation3 + $0x18] sm:$0xf]
    %v3020 = vld [vmem:[#allocation3 + $0x1c] sm:$0xf]
    %v3021 = vld [vmem:[#allocation7] sm:$0xff]
    %v3022 = vld [vmem:[#allocation7 + $0x8] sm:$0xff]
    %v3023 = vld [vmem:[#allocation7 + $0x10] sm:$0xff]
    %v3024 = vld [vmem:[#allocation7 + $0x18] sm:$0xff]
    %v3025 = vld [vmem:[#allocation7 + $0x20] sm:$0xff]
    %v3026 = vld [vmem:[#allocation7 + $0x28] sm:$0xff]
    %v3027 = vld [vmem:[#allocation7 + $0x30] sm:$0xff]
    %v3028 = vld [vmem:[#allocation7 + $0x38] sm:$0xff]
    %v3029 = vld [vmem:[#allocation7 + $0x40] sm:$0xff]
    %v3030 = vld [vmem:[#allocation7 + $0x48] sm:$0xff]
    %v3031 = vld [vmem:[#allocation7 + $0x50] sm:$0xff]
    %v3032 = vld [vmem:[#allocation7 + $0x58] sm:$0xff]
    %v3033 = vld [vmem:[#allocation7 + $0x60] sm:$0xff]
    %v3034 = vld [vmem:[#allocation7 + $0x68] sm:$0xff]
    %v3035 = vld [vmem:[#allocation7 + $0x70] sm:$0xff]
    %v3036 = vld [vmem:[#allocation7 + $0x78] sm:$0xff]
    %v3037 = vld [vmem:[#allocation7 + $0x80] sm:$0xff]
    %v3038 = vld [vmem:[#allocation7 + $0x88] sm:$0xff]
    %v3039 = vld [vmem:[#allocation7 + $0x90] sm:$0xff]
    %v3040 = vld [vmem:[#allocation7 + $0x98] sm:$0xff]
    %v3041 = vld [vmem:[#allocation7 + $0xa0] sm:$0xff]
    %v3042 = vld [vmem:[#allocation7 + $0xa8] sm:$0xff]
    %v3043 = vld [vmem:[#allocation7 + $0xb0] sm:$0xff]
    %v3044 = vld [vmem:[#allocation7 + $0xb8] sm:$0xff]
    %v3045 = vld [vmem:[#allocation7 + $0xc0] sm:$0xff]
    %v3046 = vld [vmem:[#allocation7 + $0xc8] sm:$0xff]
    %v3047 = vld [vmem:[#allocation7 + $0xd0] sm:$0xff]
    %v3048 = vld [vmem:[#allocation7 + $0xd8] sm:$0xff]
    %v3049 = vld [vmem:[#allocation7 + $0xe0] sm:$0xff]
    %v3050 = vld [vmem:[#allocation7 + $0xe8] sm:$0xff]
    %v3051 = vld [vmem:[#allocation7 + $0xf0] sm:$0xff]
    %v3052 = vld [vmem:[#allocation7 + $0xf8] sm:$0xff]
    %s3053 = scalar_lea.vmem %s4, 4
    %v3054 = vld [vmem:[%s3053] sm:$0xf]
    %v3056 = vlaneseq
    %v3057 = vshrl.u32 %v3056, 7
    %v3058 = vsub.s32 0, %v3057
    %v3059 = vrot.slane %v3054, %v3058
    %v3060 = vlaneseq
    %v3061 = vshrl.u32 %v3060, 7
    %v3062 = vsub.s32 1, %v3061
    %v3063 = vrot.slane %v3054, %v3062
    %v3064 = vlaneseq
    %v3065 = vshrl.u32 %v3064, 7
    %v3066 = vsub.s32 2, %v3065
    %v3067 = vrot.slane %v3054, %v3066
    %v3068 = vlaneseq
    %v3069 = vshrl.u32 %v3068, 7
    %v3070 = vsub.s32 3, %v3069
    %v3071 = vrot.slane %v3054, %v3070
    %v3084 = vunpack.c.l.b16 %v3013
    %v3085 = vunpack.c.l.b16 %v3014
    %v3086 = vunpack.c.l.b16 %v3015
    %v3087 = vunpack.c.l.b16 %v3016
    %v3088 = vunpack.c.l.b16 %v3017
    %v3089 = vunpack.c.l.b16 %v3018
    %v3090 = vunpack.c.l.b16 %v3019
    %v3091 = vunpack.c.l.b16 %v3020
    %v3092 = vpack.c.b16 %v3085, %v3084
    %v3093 = vpack.c.b16 %v3087, %v3086
    %v3094 = vpack.c.b16 %v3089, %v3088
    %v3095 = vpack.c.b16 %v3091, %v3090
    %v3132 = vunpack.c.l.b16 %v3021
    %v3133 = vunpack.c.h.b16 %v3021
    %v3134 = vunpack.c.l.b16 %v3022
    %v3135 = vunpack.c.h.b16 %v3022
    %v3136 = vunpack.c.l.b16 %v3023
    %v3137 = vunpack.c.h.b16 %v3023
    %v3138 = vunpack.c.l.b16 %v3024
    %v3139 = vunpack.c.h.b16 %v3024
    %v3140 = vunpack.c.l.b16 %v3025
    %v3141 = vunpack.c.h.b16 %v3025
    %v3142 = vunpack.c.l.b16 %v3026
    %v3143 = vunpack.c.h.b16 %v3026
    %v3144 = vunpack.c.l.b16 %v3027
    %v3145 = vunpack.c.h.b16 %v3027
    %v3146 = vunpack.c.l.b16 %v3028
    %v3147 = vunpack.c.h.b16 %v3028
    %v3148 = vunpack.c.l.b16 %v3029
    %v3149 = vunpack.c.h.b16 %v3029
    %v3150 = vunpack.c.l.b16 %v3030
    %v3151 = vunpack.c.h.b16 %v3030
    %v3152 = vunpack.c.l.b16 %v3031
    %v3153 = vunpack.c.h.b16 %v3031
    %v3154 = vunpack.c.l.b16 %v3032
    %v3155 = vunpack.c.h.b16 %v3032
    %v3156 = vunpack.c.l.b16 %v3033
    %v3157 = vunpack.c.h.b16 %v3033
    %v3158 = vunpack.c.l.b16 %v3034
    %v3159 = vunpack.c.h.b16 %v3034
    %v3160 = vunpack.c.l.b16 %v3035
    %v3161 = vunpack.c.h.b16 %v3035
    %v3162 = vunpack.c.l.b16 %v3036
    %v3163 = vunpack.c.h.b16 %v3036
    %v3164 = vunpack.c.l.b16 %v3037
    %v3165 = vunpack.c.h.b16 %v3037
    %v3166 = vunpack.c.l.b16 %v3038
    %v3167 = vunpack.c.h.b16 %v3038
    %v3168 = vunpack.c.l.b16 %v3039
    %v3169 = vunpack.c.h.b16 %v3039
    %v3170 = vunpack.c.l.b16 %v3040
    %v3171 = vunpack.c.h.b16 %v3040
    %v3172 = vunpack.c.l.b16 %v3041
    %v3173 = vunpack.c.h.b16 %v3041
    %v3174 = vunpack.c.l.b16 %v3042
    %v3175 = vunpack.c.h.b16 %v3042
    %v3176 = vunpack.c.l.b16 %v3043
    %v3177 = vunpack.c.h.b16 %v3043
    %v3178 = vunpack.c.l.b16 %v3044
    %v3179 = vunpack.c.h.b16 %v3044
    %v3180 = vunpack.c.l.b16 %v3045
    %v3181 = vunpack.c.h.b16 %v3045
    %v3182 = vunpack.c.l.b16 %v3046
    %v3183 = vunpack.c.h.b16 %v3046
    %v3184 = vunpack.c.l.b16 %v3047
    %v3185 = vunpack.c.h.b16 %v3047
    %v3186 = vunpack.c.l.b16 %v3048
    %v3187 = vunpack.c.h.b16 %v3048
    %v3188 = vunpack.c.l.b16 %v3049
    %v3189 = vunpack.c.h.b16 %v3049
    %v3190 = vunpack.c.l.b16 %v3050
    %v3191 = vunpack.c.h.b16 %v3050
    %v3192 = vunpack.c.l.b16 %v3051
    %v3193 = vunpack.c.h.b16 %v3051
    %v3194 = vunpack.c.l.b16 %v3052
    %v3195 = vunpack.c.h.b16 %v3052
    %v3196 = vpack.c.b16 %v3136, %v3132
    %v3197 = vpack.c.b16 %v3137, %v3133
    %v3198 = vpack.c.b16 %v3138, %v3134
    %v3199 = vpack.c.b16 %v3139, %v3135
    %v3200 = vpack.c.b16 %v3144, %v3140
    %v3201 = vpack.c.b16 %v3145, %v3141
    %v3202 = vpack.c.b16 %v3146, %v3142
    %v3203 = vpack.c.b16 %v3147, %v3143
    %v3204 = vpack.c.b16 %v3152, %v3148
    %v3205 = vpack.c.b16 %v3153, %v3149
    %v3206 = vpack.c.b16 %v3154, %v3150
    %v3207 = vpack.c.b16 %v3155, %v3151
    %v3208 = vpack.c.b16 %v3160, %v3156
    %v3209 = vpack.c.b16 %v3161, %v3157
    %v3210 = vpack.c.b16 %v3162, %v3158
    %v3211 = vpack.c.b16 %v3163, %v3159
    %v3212 = vpack.c.b16 %v3168, %v3164
    %v3213 = vpack.c.b16 %v3169, %v3165
    %v3214 = vpack.c.b16 %v3170, %v3166
    %v3215 = vpack.c.b16 %v3171, %v3167
    %v3216 = vpack.c.b16 %v3176, %v3172
    %v3217 = vpack.c.b16 %v3177, %v3173
    %v3218 = vpack.c.b16 %v3178, %v3174
    %v3219 = vpack.c.b16 %v3179, %v3175
    %v3220 = vpack.c.b16 %v3184, %v3180
    %v3221 = vpack.c.b16 %v3185, %v3181
    %v3222 = vpack.c.b16 %v3186, %v3182
    %v3223 = vpack.c.b16 %v3187, %v3183
    %v3224 = vpack.c.b16 %v3192, %v3188
    %v3225 = vpack.c.b16 %v3193, %v3189
    %v3226 = vpack.c.b16 %v3194, %v3190
    %v3227 = vpack.c.b16 %v3195, %v3191
    %3260 = vmatprep.subr.bf16.mxu0 %v3225
    %3261 = vmatpush1.bf16.msra.mxu0 %v3224
    %3262 = vmatprep.subr.bf16.mxu0 %v3221
    %3263 = vmatpush1.bf16.msra.mxu0 %v3220
    %3264 = vmatprep.subr.bf16.mxu0 %v3217
    %3265 = vmatpush1.bf16.msra.mxu0 %v3216
    %3266 = vmatprep.subr.bf16.mxu0 %v3213
    %3267 = vmatpush1.bf16.msra.mxu0 %v3212
    %3268 = vmatprep.subr.bf16.mxu0 %v3209
    %3269 = vmatpush1.bf16.msra.mxu0 %v3208
    %3270 = vmatprep.subr.bf16.mxu0 %v3205
    %3271 = vmatpush1.bf16.msra.mxu0 %v3204
    %3272 = vmatprep.subr.bf16.mxu0 %v3201
    %3273 = vmatpush1.bf16.msra.mxu0 %v3200
    %3274 = vmatprep.subr.bf16.mxu0 %v3197
    %3275 = vmatpush1.bf16.msra.mxu0 %v3196
    %3276 = vmatprep.subr.bf16.mxu0 0
    %3277 = vmatpush2.bf16.msra.mxu0 0
    %3278 = vmatprep.subr.bf16.mxu0 0
    %3279 = vmatpush2.bf16.msra.mxu0 0
    %3280 = vmatprep.subr.bf16.mxu0 0
    %3281 = vmatpush2.bf16.msra.mxu0 0
    %3282 = vmatprep.subr.bf16.mxu0 0
    %3283 = vmatpush2.bf16.msra.mxu0 0
    %3284 = vmatprep.subr.bf16.mxu0 0
    %3285 = vmatpush2.bf16.msra.mxu0 0
    %3286 = vmatprep.subr.bf16.mxu0 0
    %3287 = vmatpush2.bf16.msra.mxu0 0
    %3288 = vmatprep.subr.bf16.mxu0 0
    %3289 = vmatpush2.bf16.msra.mxu0 0
    %3290 = vmatprep.subr.bf16.mxu0 0
    %3291 = vmatpush2.bf16.msra.mxu0 0
    %3292 = vmatprep.mubr.bf16.mxu0 0
    %3293 = vmatmul.mubr.bf16.gmra.mxu0 %v3092
    %v3294 = vpop.f32.mrf.mxu0
    %v3295 = vadd.f32 %v3059, %v3294
    %v3296 = vpop.f32.mrf.mxu0
    %v3297 = vadd.f32 %v3063, %v3296
    %v3298 = vpop.f32.mrf.mxu0
    %v3299 = vadd.f32 %v3059, %v3298
    %v3300 = vpop.f32.mrf.mxu0
    %v3301 = vadd.f32 %v3063, %v3300
    %3302 = vmatprep.mubr.bf16.mxu0 0
    %3303 = vmatmul.mubr.bf16.gmra.mxu0 %v3093
    %v3304 = vpop.f32.mrf.mxu0
    %v3305 = vadd.f32 %v3059, %v3304
    %v3306 = vpop.f32.mrf.mxu0
    %v3307 = vadd.f32 %v3063, %v3306
    %v3308 = vpop.f32.mrf.mxu0
    %v3309 = vadd.f32 %v3059, %v3308
    %v3310 = vpop.f32.mrf.mxu0
    %v3311 = vadd.f32 %v3063, %v3310
    %3312 = vmatprep.mubr.bf16.mxu0 0
    %3313 = vmatmul.mubr.bf16.gmra.mxu0 %v3094
    %v3314 = vpop.f32.mrf.mxu0
    %v3315 = vadd.f32 %v3059, %v3314
    %v3316 = vpop.f32.mrf.mxu0
    %v3317 = vadd.f32 %v3063, %v3316
    %v3318 = vpop.f32.mrf.mxu0
    %v3319 = vadd.f32 %v3059, %v3318
    %v3320 = vpop.f32.mrf.mxu0
    %v3321 = vadd.f32 %v3063, %v3320
    %3322 = vmatprep.mubr.bf16.mxu0 0
    %3323 = vmatmul.mubr.bf16.gmra.mxu0 %v3095
    %v3324 = vpop.f32.mrf.mxu0
    %v3325 = vadd.f32 %v3059, %v3324
    %v3326 = vpop.f32.mrf.mxu0
    %v3327 = vadd.f32 %v3063, %v3326
    %v3328 = vpop.f32.mrf.mxu0
    %v3329 = vadd.f32 %v3059, %v3328
    %v3330 = vpop.f32.mrf.mxu0
    %v3331 = vadd.f32 %v3063, %v3330
    %3332 = vdwg.mxu0
    %3333 = vmatprep.subr.bf16.mxu0 %v3227
    %3334 = vmatpush1.bf16.msra.mxu0 %v3226
    %3335 = vmatprep.subr.bf16.mxu0 %v3223
    %3336 = vmatpush1.bf16.msra.mxu0 %v3222
    %3337 = vmatprep.subr.bf16.mxu0 %v3219
    %3338 = vmatpush1.bf16.msra.mxu0 %v3218
    %3339 = vmatprep.subr.bf16.mxu0 %v3215
    %3340 = vmatpush1.bf16.msra.mxu0 %v3214
    %3341 = vmatprep.subr.bf16.mxu0 %v3211
    %3342 = vmatpush1.bf16.msra.mxu0 %v3210
    %3343 = vmatprep.subr.bf16.mxu0 %v3207
    %3344 = vmatpush1.bf16.msra.mxu0 %v3206
    %3345 = vmatprep.subr.bf16.mxu0 %v3203
    %3346 = vmatpush1.bf16.msra.mxu0 %v3202
    %3347 = vmatprep.subr.bf16.mxu0 %v3199
    %3348 = vmatpush1.bf16.msra.mxu0 %v3198
    %3349 = vmatprep.subr.bf16.mxu0 0
    %3350 = vmatpush2.bf16.msra.mxu0 0
    %3351 = vmatprep.subr.bf16.mxu0 0
    %3352 = vmatpush2.bf16.msra.mxu0 0
    %3353 = vmatprep.subr.bf16.mxu0 0
    %3354 = vmatpush2.bf16.msra.mxu0 0
    %3355 = vmatprep.subr.bf16.mxu0 0
    %3356 = vmatpush2.bf16.msra.mxu0 0
    %3357 = vmatprep.subr.bf16.mxu0 0
    %3358 = vmatpush2.bf16.msra.mxu0 0
    %3359 = vmatprep.subr.bf16.mxu0 0
    %3360 = vmatpush2.bf16.msra.mxu0 0
    %3361 = vmatprep.subr.bf16.mxu0 0
    %3362 = vmatpush2.bf16.msra.mxu0 0
    %3363 = vmatprep.subr.bf16.mxu0 0
    %3364 = vmatpush2.bf16.msra.mxu0 0
    %3365 = vmatprep.mubr.bf16.mxu0 0
    %3366 = vmatmul.mubr.bf16.gmra.mxu0 %v3092
    %v3367 = vpop.f32.mrf.mxu0
    %v3368 = vadd.f32 %v3067, %v3367
    %v3369 = vpop.f32.mrf.mxu0
    %v3370 = vadd.f32 %v3071, %v3369
    %v3371 = vpop.f32.mrf.mxu0
    %v3372 = vadd.f32 %v3067, %v3371
    %v3373 = vpop.f32.mrf.mxu0
    %v3374 = vadd.f32 %v3071, %v3373
    %3375 = vmatprep.mubr.bf16.mxu0 0
    %3376 = vmatmul.mubr.bf16.gmra.mxu0 %v3093
    %v3377 = vpop.f32.mrf.mxu0
    %v3378 = vadd.f32 %v3067, %v3377
    %v3379 = vpop.f32.mrf.mxu0
    %v3380 = vadd.f32 %v3071, %v3379
    %v3381 = vpop.f32.mrf.mxu0
    %v3382 = vadd.f32 %v3067, %v3381
    %v3383 = vpop.f32.mrf.mxu0
    %v3384 = vadd.f32 %v3071, %v3383
    %3385 = vmatprep.mubr.bf16.mxu0 0
    %3386 = vmatmul.mubr.bf16.gmra.mxu0 %v3094
    %v3387 = vpop.f32.mrf.mxu0
    %v3388 = vadd.f32 %v3067, %v3387
    %v3389 = vpop.f32.mrf.mxu0
    %v3390 = vadd.f32 %v3071, %v3389
    %v3391 = vpop.f32.mrf.mxu0
    %v3392 = vadd.f32 %v3067, %v3391
    %v3393 = vpop.f32.mrf.mxu0
    %v3394 = vadd.f32 %v3071, %v3393
    %3395 = vmatprep.mubr.bf16.mxu0 0
    %3396 = vmatmul.mubr.bf16.gmra.mxu0 %v3095
    %v3397 = vpop.f32.mrf.mxu0
    %v3398 = vadd.f32 %v3067, %v3397
    %v3399 = vpop.f32.mrf.mxu0
    %v3400 = vadd.f32 %v3071, %v3399
    %v3401 = vpop.f32.mrf.mxu0
    %v3402 = vadd.f32 %v3067, %v3401
    %v3403 = vpop.f32.mrf.mxu0
    %v3404 = vadd.f32 %v3071, %v3403
    %3405 = vdwg.mxu0
    %3406 = vst [vmem:[#allocation2] sm:$0xff] %v3295
    %3407 = vst [vmem:[#allocation2 + $0x8] sm:$0xff] %v3297
    %3408 = vst [vmem:[#allocation2 + $0x10] sm:$0xff] %v3368
    %3409 = vst [vmem:[#allocation2 + $0x18] sm:$0xff] %v3370
    %3410 = vst [vmem:[#allocation2 + $0x20] sm:$0xff] %v3299
    %3411 = vst [vmem:[#allocation2 + $0x28] sm:$0xff] %v3301
    %3412 = vst [vmem:[#allocation2 + $0x30] sm:$0xff] %v3372
    %3413 = vst [vmem:[#allocation2 + $0x38] sm:$0xff] %v3374
    %3414 = vst [vmem:[#allocation2 + $0x40] sm:$0xff] %v3305
    %3415 = vst [vmem:[#allocation2 + $0x48] sm:$0xff] %v3307
    %3416 = vst [vmem:[#allocation2 + $0x50] sm:$0xff] %v3378
    %3417 = vst [vmem:[#allocation2 + $0x58] sm:$0xff] %v3380
    %3418 = vst [vmem:[#allocation2 + $0x60] sm:$0xff] %v3309
    %3419 = vst [vmem:[#allocation2 + $0x68] sm:$0xff] %v3311
    %3420 = vst [vmem:[#allocation2 + $0x70] sm:$0xff] %v3382
    %3421 = vst [vmem:[#allocation2 + $0x78] sm:$0xff] %v3384
    %3422 = vst [vmem:[#allocation2 + $0x80] sm:$0xff] %v3315
    %3423 = vst [vmem:[#allocation2 + $0x88] sm:$0xff] %v3317
    %3424 = vst [vmem:[#allocation2 + $0x90] sm:$0xff] %v3388
    %3425 = vst [vmem:[#allocation2 + $0x98] sm:$0xff] %v3390
    %3426 = vst [vmem:[#allocation2 + $0xa0] sm:$0xff] %v3319
    %3427 = vst [vmem:[#allocation2 + $0xa8] sm:$0xff] %v3321
    %3428 = vst [vmem:[#allocation2 + $0xb0] sm:$0xff] %v3392
    %3429 = vst [vmem:[#allocation2 + $0xb8] sm:$0xff] %v3394
    %3430 = vst [vmem:[#allocation2 + $0xc0] sm:$0xff] %v3325
    %3431 = vst [vmem:[#allocation2 + $0xc8] sm:$0xff] %v3327
    %3432 = vst [vmem:[#allocation2 + $0xd0] sm:$0xff] %v3398
    %3433 = vst [vmem:[#allocation2 + $0xd8] sm:$0xff] %v3400
    %3434 = vst [vmem:[#allocation2 + $0xe0] sm:$0xff] %v3329
    %3435 = vst [vmem:[#allocation2 + $0xe8] sm:$0xff] %v3331
    %3436 = vst [vmem:[#allocation2 + $0xf0] sm:$0xff] %v3402
    %3437 = vst [vmem:[#allocation2 + $0xf8] sm:$0xff] %v3404
    %s3438 = scalar_lea.vmem %s10, 8
    %v3439 = vld [vmem:[%s3438] sm:$0xff]
    %s3440 = scalar_lea.vmem %s11, 8
    %v3441 = vld [vmem:[%s3440] sm:$0xff]
    %v3442 = vld [vmem:[%s517] sm:$0xff]
    %v3443 = vld [vmem:[%s517 + $0x8] sm:$0xff]
    %v3444 = vld [vmem:[%s517 + $0x10] sm:$0xff]
    %v3445 = vld [vmem:[%s517 + $0x18] sm:$0xff]
    %v3446 = vpack.c.bf16 %v3439, %v3439
    %s3447 = scalar_lea.vmem [#allocation9], 256
    %v3448 = vld [vmem:[%s3447] sm:$0xff]
    %v3449 = vld [vmem:[%s3447 + $0x8] sm:$0xff]
    %v3450 = vld [vmem:[%s3447 + $0x10] sm:$0xff]
    %v3451 = vld [vmem:[%s3447 + $0x18] sm:$0xff]
    %v3452 = vld [vmem:[%s3447 + $0x20] sm:$0xff]
    %v3453 = vld [vmem:[%s3447 + $0x28] sm:$0xff]
    %v3454 = vld [vmem:[%s3447 + $0x30] sm:$0xff]
    %v3455 = vld [vmem:[%s3447 + $0x38] sm:$0xff]
    %v3456 = vld [vmem:[%s3447 + $0x40] sm:$0xff]
    %v3457 = vld [vmem:[%s3447 + $0x48] sm:$0xff]
    %v3458 = vld [vmem:[%s3447 + $0x50] sm:$0xff]
    %v3459 = vld [vmem:[%s3447 + $0x58] sm:$0xff]
    %v3460 = vld [vmem:[%s3447 + $0x60] sm:$0xff]
    %v3461 = vld [vmem:[%s3447 + $0x68] sm:$0xff]
    %v3462 = vld [vmem:[%s3447 + $0x70] sm:$0xff]
    %v3463 = vld [vmem:[%s3447 + $0x78] sm:$0xff]
    %v3464 = vld [vmem:[%s3447 + $0x80] sm:$0xff]
    %v3465 = vld [vmem:[%s3447 + $0x88] sm:$0xff]
    %v3466 = vld [vmem:[%s3447 + $0x90] sm:$0xff]
    %v3467 = vld [vmem:[%s3447 + $0x98] sm:$0xff]
    %v3468 = vld [vmem:[%s3447 + $0xa0] sm:$0xff]
    %v3469 = vld [vmem:[%s3447 + $0xa8] sm:$0xff]
    %v3470 = vld [vmem:[%s3447 + $0xb0] sm:$0xff]
    %v3471 = vld [vmem:[%s3447 + $0xb8] sm:$0xff]
    %v3472 = vld [vmem:[%s3447 + $0xc0] sm:$0xff]
    %v3473 = vld [vmem:[%s3447 + $0xc8] sm:$0xff]
    %v3474 = vld [vmem:[%s3447 + $0xd0] sm:$0xff]
    %v3475 = vld [vmem:[%s3447 + $0xd8] sm:$0xff]
    %v3476 = vld [vmem:[%s3447 + $0xe0] sm:$0xff]
    %v3477 = vld [vmem:[%s3447 + $0xe8] sm:$0xff]
    %v3478 = vld [vmem:[%s3447 + $0xf0] sm:$0xff]
    %v3479 = vld [vmem:[%s3447 + $0xf8] sm:$0xff]
    %v3512 = vunpack.c.l.b16 %v3448
    %v3513 = vunpack.c.h.b16 %v3448
    %v3514 = vunpack.c.l.b16 %v3449
    %v3515 = vunpack.c.h.b16 %v3449
    %v3516 = vunpack.c.l.b16 %v3450
    %v3517 = vunpack.c.h.b16 %v3450
    %v3518 = vunpack.c.l.b16 %v3451
    %v3519 = vunpack.c.h.b16 %v3451
    %v3520 = vunpack.c.l.b16 %v3452
    %v3521 = vunpack.c.h.b16 %v3452
    %v3522 = vunpack.c.l.b16 %v3453
    %v3523 = vunpack.c.h.b16 %v3453
    %v3524 = vunpack.c.l.b16 %v3454
    %v3525 = vunpack.c.h.b16 %v3454
    %v3526 = vunpack.c.l.b16 %v3455
    %v3527 = vunpack.c.h.b16 %v3455
    %v3528 = vunpack.c.l.b16 %v3456
    %v3529 = vunpack.c.h.b16 %v3456
    %v3530 = vunpack.c.l.b16 %v3457
    %v3531 = vunpack.c.h.b16 %v3457
    %v3532 = vunpack.c.l.b16 %v3458
    %v3533 = vunpack.c.h.b16 %v3458
    %v3534 = vunpack.c.l.b16 %v3459
    %v3535 = vunpack.c.h.b16 %v3459
    %v3536 = vunpack.c.l.b16 %v3460
    %v3537 = vunpack.c.h.b16 %v3460
    %v3538 = vunpack.c.l.b16 %v3461
    %v3539 = vunpack.c.h.b16 %v3461
    %v3540 = vunpack.c.l.b16 %v3462
    %v3541 = vunpack.c.h.b16 %v3462
    %v3542 = vunpack.c.l.b16 %v3463
    %v3543 = vunpack.c.h.b16 %v3463
    %v3544 = vunpack.c.l.b16 %v3464
    %v3545 = vunpack.c.h.b16 %v3464
    %v3546 = vunpack.c.l.b16 %v3465
    %v3547 = vunpack.c.h.b16 %v3465
    %v3548 = vunpack.c.l.b16 %v3466
    %v3549 = vunpack.c.h.b16 %v3466
    %v3550 = vunpack.c.l.b16 %v3467
    %v3551 = vunpack.c.h.b16 %v3467
    %v3552 = vunpack.c.l.b16 %v3468
    %v3553 = vunpack.c.h.b16 %v3468
    %v3554 = vunpack.c.l.b16 %v3469
    %v3555 = vunpack.c.h.b16 %v3469
    %v3556 = vunpack.c.l.b16 %v3470
    %v3557 = vunpack.c.h.b16 %v3470
    %v3558 = vunpack.c.l.b16 %v3471
    %v3559 = vunpack.c.h.b16 %v3471
    %v3560 = vunpack.c.l.b16 %v3472
    %v3561 = vunpack.c.h.b16 %v3472
    %v3562 = vunpack.c.l.b16 %v3473
    %v3563 = vunpack.c.h.b16 %v3473
    %v3564 = vunpack.c.l.b16 %v3474
    %v3565 = vunpack.c.h.b16 %v3474
    %v3566 = vunpack.c.l.b16 %v3475
    %v3567 = vunpack.c.h.b16 %v3475
    %v3568 = vunpack.c.l.b16 %v3476
    %v3569 = vunpack.c.h.b16 %v3476
    %v3570 = vunpack.c.l.b16 %v3477
    %v3571 = vunpack.c.h.b16 %v3477
    %v3572 = vunpack.c.l.b16 %v3478
    %v3573 = vunpack.c.h.b16 %v3478
    %v3574 = vunpack.c.l.b16 %v3479
    %v3575 = vunpack.c.h.b16 %v3479
    %v3576 = vpack.c.b16 %v3516, %v3512
    %v3577 = vpack.c.b16 %v3517, %v3513
    %v3578 = vpack.c.b16 %v3518, %v3514
    %v3579 = vpack.c.b16 %v3519, %v3515
    %v3580 = vpack.c.b16 %v3524, %v3520
    %v3581 = vpack.c.b16 %v3525, %v3521
    %v3582 = vpack.c.b16 %v3526, %v3522
    %v3583 = vpack.c.b16 %v3527, %v3523
    %v3584 = vpack.c.b16 %v3532, %v3528
    %v3585 = vpack.c.b16 %v3533, %v3529
    %v3586 = vpack.c.b16 %v3534, %v3530
    %v3587 = vpack.c.b16 %v3535, %v3531
    %v3588 = vpack.c.b16 %v3540, %v3536
    %v3589 = vpack.c.b16 %v3541, %v3537
    %v3590 = vpack.c.b16 %v3542, %v3538
    %v3591 = vpack.c.b16 %v3543, %v3539
    %v3592 = vpack.c.b16 %v3548, %v3544
    %v3593 = vpack.c.b16 %v3549, %v3545
    %v3594 = vpack.c.b16 %v3550, %v3546
    %v3595 = vpack.c.b16 %v3551, %v3547
    %v3596 = vpack.c.b16 %v3556, %v3552
    %v3597 = vpack.c.b16 %v3557, %v3553
    %v3598 = vpack.c.b16 %v3558, %v3554
    %v3599 = vpack.c.b16 %v3559, %v3555
    %v3600 = vpack.c.b16 %v3564, %v3560
    %v3601 = vpack.c.b16 %v3565, %v3561
    %v3602 = vpack.c.b16 %v3566, %v3562
    %v3603 = vpack.c.b16 %v3567, %v3563
    %v3604 = vpack.c.b16 %v3572, %v3568
    %v3605 = vpack.c.b16 %v3573, %v3569
    %v3606 = vpack.c.b16 %v3574, %v3570
    %v3607 = vpack.c.b16 %v3575, %v3571
    %3640 = vmatprep.subr.bf16.mxu0 %v3605
    %3641 = vmatpush1.bf16.msra.mxu0 %v3604
    %3642 = vmatprep.subr.bf16.mxu0 %v3601
    %3643 = vmatpush1.bf16.msra.mxu0 %v3600
    %3644 = vmatprep.subr.bf16.mxu0 %v3597
    %3645 = vmatpush1.bf16.msra.mxu0 %v3596
    %3646 = vmatprep.subr.bf16.mxu0 %v3593
    %3647 = vmatpush1.bf16.msra.mxu0 %v3592
    %3648 = vmatprep.subr.bf16.mxu0 %v3589
    %3649 = vmatpush1.bf16.msra.mxu0 %v3588
    %3650 = vmatprep.subr.bf16.mxu0 %v3585
    %3651 = vmatpush1.bf16.msra.mxu0 %v3584
    %3652 = vmatprep.subr.bf16.mxu0 %v3581
    %3653 = vmatpush1.bf16.msra.mxu0 %v3580
    %3654 = vmatprep.subr.bf16.mxu0 %v3577
    %3655 = vmatpush1.bf16.msra.mxu0 %v3576
    %3656 = vmatprep.subr.bf16.mxu0 0
    %3657 = vmatpush2.bf16.msra.mxu0 0
    %3658 = vmatprep.subr.bf16.mxu0 0
    %3659 = vmatpush2.bf16.msra.mxu0 0
    %3660 = vmatprep.subr.bf16.mxu0 0
    %3661 = vmatpush2.bf16.msra.mxu0 0
    %3662 = vmatprep.subr.bf16.mxu0 0
    %3663 = vmatpush2.bf16.msra.mxu0 0
    %3664 = vmatprep.subr.bf16.mxu0 0
    %3665 = vmatpush2.bf16.msra.mxu0 0
    %3666 = vmatprep.subr.bf16.mxu0 0
    %3667 = vmatpush2.bf16.msra.mxu0 0
    %3668 = vmatprep.subr.bf16.mxu0 0
    %3669 = vmatpush2.bf16.msra.mxu0 0
    %3670 = vmatprep.subr.bf16.mxu0 0
    %3671 = vmatpush2.bf16.msra.mxu0 0
    %3672 = vmatprep.mubr.bf16.mxu0 0
    %3673 = vmatmul.mubr.bf16.gmra.mxu0 %v3446
    %v3674 = vpop.f32.mrf.mxu0
    %v3675 = vadd.f32 0.0, %v3674
    %v3676 = vpop.f32.mrf.mxu0
    %v3677 = vadd.f32 0.0, %v3676
    %v3678 = vpop.f32.mrf.mxu0
    %v3679 = vpop.f32.mrf.mxu0
    %3680 = vdwg.mxu0
    %3681 = vmatprep.subr.bf16.mxu0 %v3607
    %3682 = vmatpush1.bf16.msra.mxu0 %v3606
    %3683 = vmatprep.subr.bf16.mxu0 %v3603
    %3684 = vmatpush1.bf16.msra.mxu0 %v3602
    %3685 = vmatprep.subr.bf16.mxu0 %v3599
    %3686 = vmatpush1.bf16.msra.mxu0 %v3598
    %3687 = vmatprep.subr.bf16.mxu0 %v3595
    %3688 = vmatpush1.bf16.msra.mxu0 %v3594
    %3689 = vmatprep.subr.bf16.mxu0 %v3591
    %3690 = vmatpush1.bf16.msra.mxu0 %v3590
    %3691 = vmatprep.subr.bf16.mxu0 %v3587
    %3692 = vmatpush1.bf16.msra.mxu0 %v3586
    %3693 = vmatprep.subr.bf16.mxu0 %v3583
    %3694 = vmatpush1.bf16.msra.mxu0 %v3582
    %3695 = vmatprep.subr.bf16.mxu0 %v3579
    %3696 = vmatpush1.bf16.msra.mxu0 %v3578
    %3697 = vmatprep.subr.bf16.mxu0 0
    %3698 = vmatpush2.bf16.msra.mxu0 0
    %3699 = vmatprep.subr.bf16.mxu0 0
    %3700 = vmatpush2.bf16.msra.mxu0 0
    %3701 = vmatprep.subr.bf16.mxu0 0
    %3702 = vmatpush2.bf16.msra.mxu0 0
    %3703 = vmatprep.subr.bf16.mxu0 0
    %3704 = vmatpush2.bf16.msra.mxu0 0
    %3705 = vmatprep.subr.bf16.mxu0 0
    %3706 = vmatpush2.bf16.msra.mxu0 0
    %3707 = vmatprep.subr.bf16.mxu0 0
    %3708 = vmatpush2.bf16.msra.mxu0 0
    %3709 = vmatprep.subr.bf16.mxu0 0
    %3710 = vmatpush2.bf16.msra.mxu0 0
    %3711 = vmatprep.subr.bf16.mxu0 0
    %3712 = vmatpush2.bf16.msra.mxu0 0
    %3713 = vmatprep.mubr.bf16.mxu0 0
    %3714 = vmatmul.mubr.bf16.gmra.mxu0 %v3446
    %v3715 = vpop.f32.mrf.mxu0
    %v3716 = vadd.f32 0.0, %v3715
    %v3717 = vpop.f32.mrf.mxu0
    %v3718 = vadd.f32 0.0, %v3717
    %v3719 = vpop.f32.mrf.mxu0
    %v3720 = vpop.f32.mrf.mxu0
    %3721 = vdwg.mxu0
    %v3722 = vadd.f32 %v3442, %v3675
    %v3723 = vadd.f32 %v3443, %v3677
    %v3724 = vadd.f32 %v3444, %v3716
    %v3725 = vadd.f32 %v3445, %v3718
    %v3726 = vxor.u32 %v3722, 2147483648
    %v3727 = vmul.f32 %v3726, 1.442695
    %v3728 = vpow.pop %v3727
    %v3729 = vadd.f32 %v3728, 1.0
    %v3730 = vrcp.pop %v3729
    %v3731 = vmul.f32 1.0, %v3730
    %v3732 = vxor.u32 %v3723, 2147483648
    %v3733 = vmul.f32 %v3732, 1.442695
    %v3734 = vpow.pop %v3733
    %v3735 = vadd.f32 %v3734, 1.0
    %v3736 = vrcp.pop %v3735
    %v3737 = vmul.f32 1.0, %v3736
    %v3738 = vtanh.pop %v3724
    %v3739 = vxor.u32 %v3725, 2147483648
    %v3740 = vmul.f32 %v3739, 1.442695
    %v3741 = vpow.pop %v3740
    %v3742 = vadd.f32 %v3741, 1.0
    %v3743 = vrcp.pop %v3742
    %v3744 = vmul.f32 1.0, %v3743
    %v3745 = vmul.f32 %v3737, %v3441
    %v3746 = vmul.f32 %v3731, %v3738
    %v3747 = vadd.f32 %v3745, %v3746
    %v3748 = vtanh.pop %v3747
    %v3749 = vmul.f32 %v3744, %v3748
    %v3750 = vpack.c.bf16 %v3749, %v3749
    %3751 = vst [vmem:[#allocation4] sm:$0xf] %v3750
    %v3752 = vld [vmem:[%s829] sm:$0xff]
    %v3753 = vld [vmem:[%s829 + $0x8] sm:$0xff]
    %v3754 = vld [vmem:[%s829 + $0x10] sm:$0xff]
    %v3755 = vld [vmem:[%s829 + $0x18] sm:$0xff]
    %v3756 = vld [vmem:[%s3447] sm:$0xff]
    %v3757 = vld [vmem:[%s3447 + $0x8] sm:$0xff]
    %v3758 = vld [vmem:[%s3447 + $0x10] sm:$0xff]
    %v3759 = vld [vmem:[%s3447 + $0x18] sm:$0xff]
    %v3760 = vld [vmem:[%s3447 + $0x20] sm:$0xff]
    %v3761 = vld [vmem:[%s3447 + $0x28] sm:$0xff]
    %v3762 = vld [vmem:[%s3447 + $0x30] sm:$0xff]
    %v3763 = vld [vmem:[%s3447 + $0x38] sm:$0xff]
    %v3764 = vld [vmem:[%s3447 + $0x40] sm:$0xff]
    %v3765 = vld [vmem:[%s3447 + $0x48] sm:$0xff]
    %v3766 = vld [vmem:[%s3447 + $0x50] sm:$0xff]
    %v3767 = vld [vmem:[%s3447 + $0x58] sm:$0xff]
    %v3768 = vld [vmem:[%s3447 + $0x60] sm:$0xff]
    %v3769 = vld [vmem:[%s3447 + $0x68] sm:$0xff]
    %v3770 = vld [vmem:[%s3447 + $0x70] sm:$0xff]
    %v3771 = vld [vmem:[%s3447 + $0x78] sm:$0xff]
    %v3772 = vld [vmem:[%s3447 + $0x80] sm:$0xff]
    %v3773 = vld [vmem:[%s3447 + $0x88] sm:$0xff]
    %v3774 = vld [vmem:[%s3447 + $0x90] sm:$0xff]
    %v3775 = vld [vmem:[%s3447 + $0x98] sm:$0xff]
    %v3776 = vld [vmem:[%s3447 + $0xa0] sm:$0xff]
    %v3777 = vld [vmem:[%s3447 + $0xa8] sm:$0xff]
    %v3778 = vld [vmem:[%s3447 + $0xb0] sm:$0xff]
    %v3779 = vld [vmem:[%s3447 + $0xb8] sm:$0xff]
    %v3780 = vld [vmem:[%s3447 + $0xc0] sm:$0xff]
    %v3781 = vld [vmem:[%s3447 + $0xc8] sm:$0xff]
    %v3782 = vld [vmem:[%s3447 + $0xd0] sm:$0xff]
    %v3783 = vld [vmem:[%s3447 + $0xd8] sm:$0xff]
    %v3784 = vld [vmem:[%s3447 + $0xe0] sm:$0xff]
    %v3785 = vld [vmem:[%s3447 + $0xe8] sm:$0xff]
    %v3786 = vld [vmem:[%s3447 + $0xf0] sm:$0xff]
    %v3787 = vld [vmem:[%s3447 + $0xf8] sm:$0xff]
    %v3820 = vunpack.c.l.b16 %v3756
    %v3821 = vunpack.c.h.b16 %v3756
    %v3822 = vunpack.c.l.b16 %v3757
    %v3823 = vunpack.c.h.b16 %v3757
    %v3824 = vunpack.c.l.b16 %v3758
    %v3825 = vunpack.c.h.b16 %v3758
    %v3826 = vunpack.c.l.b16 %v3759
    %v3827 = vunpack.c.h.b16 %v3759
    %v3828 = vunpack.c.l.b16 %v3760
    %v3829 = vunpack.c.h.b16 %v3760
    %v3830 = vunpack.c.l.b16 %v3761
    %v3831 = vunpack.c.h.b16 %v3761
    %v3832 = vunpack.c.l.b16 %v3762
    %v3833 = vunpack.c.h.b16 %v3762
    %v3834 = vunpack.c.l.b16 %v3763
    %v3835 = vunpack.c.h.b16 %v3763
    %v3836 = vunpack.c.l.b16 %v3764
    %v3837 = vunpack.c.h.b16 %v3764
    %v3838 = vunpack.c.l.b16 %v3765
    %v3839 = vunpack.c.h.b16 %v3765
    %v3840 = vunpack.c.l.b16 %v3766
    %v3841 = vunpack.c.h.b16 %v3766
    %v3842 = vunpack.c.l.b16 %v3767
    %v3843 = vunpack.c.h.b16 %v3767
    %v3844 = vunpack.c.l.b16 %v3768
    %v3845 = vunpack.c.h.b16 %v3768
    %v3846 = vunpack.c.l.b16 %v3769
    %v3847 = vunpack.c.h.b16 %v3769
    %v3848 = vunpack.c.l.b16 %v3770
    %v3849 = vunpack.c.h.b16 %v3770
    %v3850 = vunpack.c.l.b16 %v3771
    %v3851 = vunpack.c.h.b16 %v3771
    %v3852 = vunpack.c.l.b16 %v3772
    %v3853 = vunpack.c.h.b16 %v3772
    %v3854 = vunpack.c.l.b16 %v3773
    %v3855 = vunpack.c.h.b16 %v3773
    %v3856 = vunpack.c.l.b16 %v3774
    %v3857 = vunpack.c.h.b16 %v3774
    %v3858 = vunpack.c.l.b16 %v3775
    %v3859 = vunpack.c.h.b16 %v3775
    %v3860 = vunpack.c.l.b16 %v3776
    %v3861 = vunpack.c.h.b16 %v3776
    %v3862 = vunpack.c.l.b16 %v3777
    %v3863 = vunpack.c.h.b16 %v3777
    %v3864 = vunpack.c.l.b16 %v3778
    %v3865 = vunpack.c.h.b16 %v3778
    %v3866 = vunpack.c.l.b16 %v3779
    %v3867 = vunpack.c.h.b16 %v3779
    %v3868 = vunpack.c.l.b16 %v3780
    %v3869 = vunpack.c.h.b16 %v3780
    %v3870 = vunpack.c.l.b16 %v3781
    %v3871 = vunpack.c.h.b16 %v3781
    %v3872 = vunpack.c.l.b16 %v3782
    %v3873 = vunpack.c.h.b16 %v3782
    %v3874 = vunpack.c.l.b16 %v3783
    %v3875 = vunpack.c.h.b16 %v3783
    %v3876 = vunpack.c.l.b16 %v3784
    %v3877 = vunpack.c.h.b16 %v3784
    %v3878 = vunpack.c.l.b16 %v3785
    %v3879 = vunpack.c.h.b16 %v3785
    %v3880 = vunpack.c.l.b16 %v3786
    %v3881 = vunpack.c.h.b16 %v3786
    %v3882 = vunpack.c.l.b16 %v3787
    %v3883 = vunpack.c.h.b16 %v3787
    %v3884 = vpack.c.b16 %v3824, %v3820
    %v3885 = vpack.c.b16 %v3825, %v3821
    %v3886 = vpack.c.b16 %v3826, %v3822
    %v3887 = vpack.c.b16 %v3827, %v3823
    %v3888 = vpack.c.b16 %v3832, %v3828
    %v3889 = vpack.c.b16 %v3833, %v3829
    %v3890 = vpack.c.b16 %v3834, %v3830
    %v3891 = vpack.c.b16 %v3835, %v3831
    %v3892 = vpack.c.b16 %v3840, %v3836
    %v3893 = vpack.c.b16 %v3841, %v3837
    %v3894 = vpack.c.b16 %v3842, %v3838
    %v3895 = vpack.c.b16 %v3843, %v3839
    %v3896 = vpack.c.b16 %v3848, %v3844
    %v3897 = vpack.c.b16 %v3849, %v3845
    %v3898 = vpack.c.b16 %v3850, %v3846
    %v3899 = vpack.c.b16 %v3851, %v3847
    %v3900 = vpack.c.b16 %v3856, %v3852
    %v3901 = vpack.c.b16 %v3857, %v3853
    %v3902 = vpack.c.b16 %v3858, %v3854
    %v3903 = vpack.c.b16 %v3859, %v3855
    %v3904 = vpack.c.b16 %v3864, %v3860
    %v3905 = vpack.c.b16 %v3865, %v3861
    %v3906 = vpack.c.b16 %v3866, %v3862
    %v3907 = vpack.c.b16 %v3867, %v3863
    %v3908 = vpack.c.b16 %v3872, %v3868
    %v3909 = vpack.c.b16 %v3873, %v3869
    %v3910 = vpack.c.b16 %v3874, %v3870
    %v3911 = vpack.c.b16 %v3875, %v3871
    %v3912 = vpack.c.b16 %v3880, %v3876
    %v3913 = vpack.c.b16 %v3881, %v3877
    %v3914 = vpack.c.b16 %v3882, %v3878
    %v3915 = vpack.c.b16 %v3883, %v3879
    %3948 = vmatprep.subr.bf16.mxu0 %v3913
    %3949 = vmatpush1.bf16.msra.mxu0 %v3912
    %3950 = vmatprep.subr.bf16.mxu0 %v3909
    %3951 = vmatpush1.bf16.msra.mxu0 %v3908
    %3952 = vmatprep.subr.bf16.mxu0 %v3905
    %3953 = vmatpush1.bf16.msra.mxu0 %v3904
    %3954 = vmatprep.subr.bf16.mxu0 %v3901
    %3955 = vmatpush1.bf16.msra.mxu0 %v3900
    %3956 = vmatprep.subr.bf16.mxu0 %v3897
    %3957 = vmatpush1.bf16.msra.mxu0 %v3896
    %3958 = vmatprep.subr.bf16.mxu0 %v3893
    %3959 = vmatpush1.bf16.msra.mxu0 %v3892
    %3960 = vmatprep.subr.bf16.mxu0 %v3889
    %3961 = vmatpush1.bf16.msra.mxu0 %v3888
    %3962 = vmatprep.subr.bf16.mxu0 %v3885
    %3963 = vmatpush1.bf16.msra.mxu0 %v3884
    %3964 = vmatprep.subr.bf16.mxu0 0
    %3965 = vmatpush2.bf16.msra.mxu0 0
    %3966 = vmatprep.subr.bf16.mxu0 0
    %3967 = vmatpush2.bf16.msra.mxu0 0
    %3968 = vmatprep.subr.bf16.mxu0 0
    %3969 = vmatpush2.bf16.msra.mxu0 0
    %3970 = vmatprep.subr.bf16.mxu0 0
    %3971 = vmatpush2.bf16.msra.mxu0 0
    %3972 = vmatprep.subr.bf16.mxu0 0
    %3973 = vmatpush2.bf16.msra.mxu0 0
    %3974 = vmatprep.subr.bf16.mxu0 0
    %3975 = vmatpush2.bf16.msra.mxu0 0
    %3976 = vmatprep.subr.bf16.mxu0 0
    %3977 = vmatpush2.bf16.msra.mxu0 0
    %3978 = vmatprep.subr.bf16.mxu0 0
    %3979 = vmatpush2.bf16.msra.mxu0 0
    %3980 = vmatprep.mubr.bf16.mxu0 0
    %3981 = vmatmul.mubr.bf16.gmra.mxu0 %v3750
    %v3982 = vpop.f32.mrf.mxu0
    %v3983 = vadd.f32 0.0, %v3982
    %v3984 = vpop.f32.mrf.mxu0
    %v3985 = vadd.f32 0.0, %v3984
    %v3986 = vpop.f32.mrf.mxu0
    %v3987 = vpop.f32.mrf.mxu0
    %3988 = vdwg.mxu0
    %3989 = vmatprep.subr.bf16.mxu0 %v3915
    %3990 = vmatpush1.bf16.msra.mxu0 %v3914
    %3991 = vmatprep.subr.bf16.mxu0 %v3911
    %3992 = vmatpush1.bf16.msra.mxu0 %v3910
    %3993 = vmatprep.subr.bf16.mxu0 %v3907
    %3994 = vmatpush1.bf16.msra.mxu0 %v3906
    %3995 = vmatprep.subr.bf16.mxu0 %v3903
    %3996 = vmatpush1.bf16.msra.mxu0 %v3902
    %3997 = vmatprep.subr.bf16.mxu0 %v3899
    %3998 = vmatpush1.bf16.msra.mxu0 %v3898
    %3999 = vmatprep.subr.bf16.mxu0 %v3895
    %4000 = vmatpush1.bf16.msra.mxu0 %v3894
    %4001 = vmatprep.subr.bf16.mxu0 %v3891
    %4002 = vmatpush1.bf16.msra.mxu0 %v3890
    %4003 = vmatprep.subr.bf16.mxu0 %v3887
    %4004 = vmatpush1.bf16.msra.mxu0 %v3886
    %4005 = vmatprep.subr.bf16.mxu0 0
    %4006 = vmatpush2.bf16.msra.mxu0 0
    %4007 = vmatprep.subr.bf16.mxu0 0
    %4008 = vmatpush2.bf16.msra.mxu0 0
    %4009 = vmatprep.subr.bf16.mxu0 0
    %4010 = vmatpush2.bf16.msra.mxu0 0
    %4011 = vmatprep.subr.bf16.mxu0 0
    %4012 = vmatpush2.bf16.msra.mxu0 0
    %4013 = vmatprep.subr.bf16.mxu0 0
    %4014 = vmatpush2.bf16.msra.mxu0 0
    %4015 = vmatprep.subr.bf16.mxu0 0
    %4016 = vmatpush2.bf16.msra.mxu0 0
    %4017 = vmatprep.subr.bf16.mxu0 0
    %4018 = vmatpush2.bf16.msra.mxu0 0
    %4019 = vmatprep.subr.bf16.mxu0 0
    %4020 = vmatpush2.bf16.msra.mxu0 0
    %4021 = vmatprep.mubr.bf16.mxu0 0
    %4022 = vmatmul.mubr.bf16.gmra.mxu0 %v3750
    %v4023 = vpop.f32.mrf.mxu0
    %v4024 = vadd.f32 0.0, %v4023
    %v4025 = vpop.f32.mrf.mxu0
    %v4026 = vadd.f32 0.0, %v4025
    %v4027 = vpop.f32.mrf.mxu0
    %v4028 = vpop.f32.mrf.mxu0
    %4029 = vdwg.mxu0
    %v4030 = vadd.f32 %v3752, %v3983
    %v4031 = vadd.f32 %v3753, %v3985
    %v4032 = vadd.f32 %v3754, %v4024
    %v4033 = vadd.f32 %v3755, %v4026
    %v4034 = vxor.u32 %v4030, 2147483648
    %v4035 = vmul.f32 %v4034, 1.442695
    %v4036 = vpow.pop %v4035
    %v4037 = vadd.f32 %v4036, 1.0
    %v4038 = vrcp.pop %v4037
    %v4039 = vmul.f32 1.0, %v4038
    %v4040 = vxor.u32 %v4031, 2147483648
    %v4041 = vmul.f32 %v4040, 1.442695
    %v4042 = vpow.pop %v4041
    %v4043 = vadd.f32 %v4042, 1.0
    %v4044 = vrcp.pop %v4043
    %v4045 = vmul.f32 1.0, %v4044
    %v4046 = vtanh.pop %v4032
    %v4047 = vxor.u32 %v4033, 2147483648
    %v4048 = vmul.f32 %v4047, 1.442695
    %v4049 = vpow.pop %v4048
    %v4050 = vadd.f32 %v4049, 1.0
    %v4051 = vrcp.pop %v4050
    %v4052 = vmul.f32 1.0, %v4051
    %v4053 = vmul.f32 %v4045, %v3747
    %v4054 = vmul.f32 %v4039, %v4046
    %v4055 = vadd.f32 %v4053, %v4054
    %v4056 = vtanh.pop %v4055
    %v4057 = vmul.f32 %v4052, %v4056
    %v4058 = vpack.c.bf16 %v4057, %v4057
    %s4059 = scalar_lea.vmem [#allocation4], 4
    %4060 = vst [vmem:[%s4059] sm:$0xf] %v4058
    %v4061 = vld [vmem:[%s1141] sm:$0xff]
    %v4062 = vld [vmem:[%s1141 + $0x8] sm:$0xff]
    %v4063 = vld [vmem:[%s1141 + $0x10] sm:$0xff]
    %v4064 = vld [vmem:[%s1141 + $0x18] sm:$0xff]
    %v4065 = vld [vmem:[%s3447] sm:$0xff]
    %v4066 = vld [vmem:[%s3447 + $0x8] sm:$0xff]
    %v4067 = vld [vmem:[%s3447 + $0x10] sm:$0xff]
    %v4068 = vld [vmem:[%s3447 + $0x18] sm:$0xff]
    %v4069 = vld [vmem:[%s3447 + $0x20] sm:$0xff]
    %v4070 = vld [vmem:[%s3447 + $0x28] sm:$0xff]
    %v4071 = vld [vmem:[%s3447 + $0x30] sm:$0xff]
    %v4072 = vld [vmem:[%s3447 + $0x38] sm:$0xff]
    %v4073 = vld [vmem:[%s3447 + $0x40] sm:$0xff]
    %v4074 = vld [vmem:[%s3447 + $0x48] sm:$0xff]
    %v4075 = vld [vmem:[%s3447 + $0x50] sm:$0xff]
    %v4076 = vld [vmem:[%s3447 + $0x58] sm:$0xff]
    %v4077 = vld [vmem:[%s3447 + $0x60] sm:$0xff]
    %v4078 = vld [vmem:[%s3447 + $0x68] sm:$0xff]
    %v4079 = vld [vmem:[%s3447 + $0x70] sm:$0xff]
    %v4080 = vld [vmem:[%s3447 + $0x78] sm:$0xff]
    %v4081 = vld [vmem:[%s3447 + $0x80] sm:$0xff]
    %v4082 = vld [vmem:[%s3447 + $0x88] sm:$0xff]
    %v4083 = vld [vmem:[%s3447 + $0x90] sm:$0xff]
    %v4084 = vld [vmem:[%s3447 + $0x98] sm:$0xff]
    %v4085 = vld [vmem:[%s3447 + $0xa0] sm:$0xff]
    %v4086 = vld [vmem:[%s3447 + $0xa8] sm:$0xff]
    %v4087 = vld [vmem:[%s3447 + $0xb0] sm:$0xff]
    %v4088 = vld [vmem:[%s3447 + $0xb8] sm:$0xff]
    %v4089 = vld [vmem:[%s3447 + $0xc0] sm:$0xff]
    %v4090 = vld [vmem:[%s3447 + $0xc8] sm:$0xff]
    %v4091 = vld [vmem:[%s3447 + $0xd0] sm:$0xff]
    %v4092 = vld [vmem:[%s3447 + $0xd8] sm:$0xff]
    %v4093 = vld [vmem:[%s3447 + $0xe0] sm:$0xff]
    %v4094 = vld [vmem:[%s3447 + $0xe8] sm:$0xff]
    %v4095 = vld [vmem:[%s3447 + $0xf0] sm:$0xff]
    %v4096 = vld [vmem:[%s3447 + $0xf8] sm:$0xff]
    %v4129 = vunpack.c.l.b16 %v4065
    %v4130 = vunpack.c.h.b16 %v4065
    %v4131 = vunpack.c.l.b16 %v4066
    %v4132 = vunpack.c.h.b16 %v4066
    %v4133 = vunpack.c.l.b16 %v4067
    %v4134 = vunpack.c.h.b16 %v4067
    %v4135 = vunpack.c.l.b16 %v4068
    %v4136 = vunpack.c.h.b16 %v4068
    %v4137 = vunpack.c.l.b16 %v4069
    %v4138 = vunpack.c.h.b16 %v4069
    %v4139 = vunpack.c.l.b16 %v4070
    %v4140 = vunpack.c.h.b16 %v4070
    %v4141 = vunpack.c.l.b16 %v4071
    %v4142 = vunpack.c.h.b16 %v4071
    %v4143 = vunpack.c.l.b16 %v4072
    %v4144 = vunpack.c.h.b16 %v4072
    %v4145 = vunpack.c.l.b16 %v4073
    %v4146 = vunpack.c.h.b16 %v4073
    %v4147 = vunpack.c.l.b16 %v4074
    %v4148 = vunpack.c.h.b16 %v4074
    %v4149 = vunpack.c.l.b16 %v4075
    %v4150 = vunpack.c.h.b16 %v4075
    %v4151 = vunpack.c.l.b16 %v4076
    %v4152 = vunpack.c.h.b16 %v4076
    %v4153 = vunpack.c.l.b16 %v4077
    %v4154 = vunpack.c.h.b16 %v4077
    %v4155 = vunpack.c.l.b16 %v4078
    %v4156 = vunpack.c.h.b16 %v4078
    %v4157 = vunpack.c.l.b16 %v4079
    %v4158 = vunpack.c.h.b16 %v4079
    %v4159 = vunpack.c.l.b16 %v4080
    %v4160 = vunpack.c.h.b16 %v4080
    %v4161 = vunpack.c.l.b16 %v4081
    %v4162 = vunpack.c.h.b16 %v4081
    %v4163 = vunpack.c.l.b16 %v4082
    %v4164 = vunpack.c.h.b16 %v4082
    %v4165 = vunpack.c.l.b16 %v4083
    %v4166 = vunpack.c.h.b16 %v4083
    %v4167 = vunpack.c.l.b16 %v4084
    %v4168 = vunpack.c.h.b16 %v4084
    %v4169 = vunpack.c.l.b16 %v4085
    %v4170 = vunpack.c.h.b16 %v4085
    %v4171 = vunpack.c.l.b16 %v4086
    %v4172 = vunpack.c.h.b16 %v4086
    %v4173 = vunpack.c.l.b16 %v4087
    %v4174 = vunpack.c.h.b16 %v4087
    %v4175 = vunpack.c.l.b16 %v4088
    %v4176 = vunpack.c.h.b16 %v4088
    %v4177 = vunpack.c.l.b16 %v4089
    %v4178 = vunpack.c.h.b16 %v4089
    %v4179 = vunpack.c.l.b16 %v4090
    %v4180 = vunpack.c.h.b16 %v4090
    %v4181 = vunpack.c.l.b16 %v4091
    %v4182 = vunpack.c.h.b16 %v4091
    %v4183 = vunpack.c.l.b16 %v4092
    %v4184 = vunpack.c.h.b16 %v4092
    %v4185 = vunpack.c.l.b16 %v4093
    %v4186 = vunpack.c.h.b16 %v4093
    %v4187 = vunpack.c.l.b16 %v4094
    %v4188 = vunpack.c.h.b16 %v4094
    %v4189 = vunpack.c.l.b16 %v4095
    %v4190 = vunpack.c.h.b16 %v4095
    %v4191 = vunpack.c.l.b16 %v4096
    %v4192 = vunpack.c.h.b16 %v4096
    %v4193 = vpack.c.b16 %v4133, %v4129
    %v4194 = vpack.c.b16 %v4134, %v4130
    %v4195 = vpack.c.b16 %v4135, %v4131
    %v4196 = vpack.c.b16 %v4136, %v4132
    %v4197 = vpack.c.b16 %v4141, %v4137
    %v4198 = vpack.c.b16 %v4142, %v4138
    %v4199 = vpack.c.b16 %v4143, %v4139
    %v4200 = vpack.c.b16 %v4144, %v4140
    %v4201 = vpack.c.b16 %v4149, %v4145
    %v4202 = vpack.c.b16 %v4150, %v4146
    %v4203 = vpack.c.b16 %v4151, %v4147
    %v4204 = vpack.c.b16 %v4152, %v4148
    %v4205 = vpack.c.b16 %v4157, %v4153
    %v4206 = vpack.c.b16 %v4158, %v4154
    %v4207 = vpack.c.b16 %v4159, %v4155
    %v4208 = vpack.c.b16 %v4160, %v4156
    %v4209 = vpack.c.b16 %v4165, %v4161
    %v4210 = vpack.c.b16 %v4166, %v4162
    %v4211 = vpack.c.b16 %v4167, %v4163
    %v4212 = vpack.c.b16 %v4168, %v4164
    %v4213 = vpack.c.b16 %v4173, %v4169
    %v4214 = vpack.c.b16 %v4174, %v4170
    %v4215 = vpack.c.b16 %v4175, %v4171
    %v4216 = vpack.c.b16 %v4176, %v4172
    %v4217 = vpack.c.b16 %v4181, %v4177
    %v4218 = vpack.c.b16 %v4182, %v4178
    %v4219 = vpack.c.b16 %v4183, %v4179
    %v4220 = vpack.c.b16 %v4184, %v4180
    %v4221 = vpack.c.b16 %v4189, %v4185
    %v4222 = vpack.c.b16 %v4190, %v4186
    %v4223 = vpack.c.b16 %v4191, %v4187
    %v4224 = vpack.c.b16 %v4192, %v4188
    %4257 = vmatprep.subr.bf16.mxu0 %v4222
    %4258 = vmatpush1.bf16.msra.mxu0 %v4221
    %4259 = vmatprep.subr.bf16.mxu0 %v4218
    %4260 = vmatpush1.bf16.msra.mxu0 %v4217
    %4261 = vmatprep.subr.bf16.mxu0 %v4214
    %4262 = vmatpush1.bf16.msra.mxu0 %v4213
    %4263 = vmatprep.subr.bf16.mxu0 %v4210
    %4264 = vmatpush1.bf16.msra.mxu0 %v4209
    %4265 = vmatprep.subr.bf16.mxu0 %v4206
    %4266 = vmatpush1.bf16.msra.mxu0 %v4205
    %4267 = vmatprep.subr.bf16.mxu0 %v4202
    %4268 = vmatpush1.bf16.msra.mxu0 %v4201
    %4269 = vmatprep.subr.bf16.mxu0 %v4198
    %4270 = vmatpush1.bf16.msra.mxu0 %v4197
    %4271 = vmatprep.subr.bf16.mxu0 %v4194
    %4272 = vmatpush1.bf16.msra.mxu0 %v4193
    %4273 = vmatprep.subr.bf16.mxu0 0
    %4274 = vmatpush2.bf16.msra.mxu0 0
    %4275 = vmatprep.subr.bf16.mxu0 0
    %4276 = vmatpush2.bf16.msra.mxu0 0
    %4277 = vmatprep.subr.bf16.mxu0 0
    %4278 = vmatpush2.bf16.msra.mxu0 0
    %4279 = vmatprep.subr.bf16.mxu0 0
    %4280 = vmatpush2.bf16.msra.mxu0 0
    %4281 = vmatprep.subr.bf16.mxu0 0
    %4282 = vmatpush2.bf16.msra.mxu0 0
    %4283 = vmatprep.subr.bf16.mxu0 0
    %4284 = vmatpush2.bf16.msra.mxu0 0
    %4285 = vmatprep.subr.bf16.mxu0 0
    %4286 = vmatpush2.bf16.msra.mxu0 0
    %4287 = vmatprep.subr.bf16.mxu0 0
    %4288 = vmatpush2.bf16.msra.mxu0 0
    %4289 = vmatprep.mubr.bf16.mxu0 0
    %4290 = vmatmul.mubr.bf16.gmra.mxu0 %v4058
    %v4291 = vpop.f32.mrf.mxu0
    %v4292 = vadd.f32 0.0, %v4291
    %v4293 = vpop.f32.mrf.mxu0
    %v4294 = vadd.f32 0.0, %v4293
    %v4295 = vpop.f32.mrf.mxu0
    %v4296 = vpop.f32.mrf.mxu0
    %4297 = vdwg.mxu0
    %4298 = vmatprep.subr.bf16.mxu0 %v4224
    %4299 = vmatpush1.bf16.msra.mxu0 %v4223
    %4300 = vmatprep.subr.bf16.mxu0 %v4220
    %4301 = vmatpush1.bf16.msra.mxu0 %v4219
    %4302 = vmatprep.subr.bf16.mxu0 %v4216
    %4303 = vmatpush1.bf16.msra.mxu0 %v4215
    %4304 = vmatprep.subr.bf16.mxu0 %v4212
    %4305 = vmatpush1.bf16.msra.mxu0 %v4211
    %4306 = vmatprep.subr.bf16.mxu0 %v4208
    %4307 = vmatpush1.bf16.msra.mxu0 %v4207
    %4308 = vmatprep.subr.bf16.mxu0 %v4204
    %4309 = vmatpush1.bf16.msra.mxu0 %v4203
    %4310 = vmatprep.subr.bf16.mxu0 %v4200
    %4311 = vmatpush1.bf16.msra.mxu0 %v4199
    %4312 = vmatprep.subr.bf16.mxu0 %v4196
    %4313 = vmatpush1.bf16.msra.mxu0 %v4195
    %4314 = vmatprep.subr.bf16.mxu0 0
    %4315 = vmatpush2.bf16.msra.mxu0 0
    %4316 = vmatprep.subr.bf16.mxu0 0
    %4317 = vmatpush2.bf16.msra.mxu0 0
    %4318 = vmatprep.subr.bf16.mxu0 0
    %4319 = vmatpush2.bf16.msra.mxu0 0
    %4320 = vmatprep.subr.bf16.mxu0 0
    %4321 = vmatpush2.bf16.msra.mxu0 0
    %4322 = vmatprep.subr.bf16.mxu0 0
    %4323 = vmatpush2.bf16.msra.mxu0 0
    %4324 = vmatprep.subr.bf16.mxu0 0
    %4325 = vmatpush2.bf16.msra.mxu0 0
    %4326 = vmatprep.subr.bf16.mxu0 0
    %4327 = vmatpush2.bf16.msra.mxu0 0
    %4328 = vmatprep.subr.bf16.mxu0 0
    %4329 = vmatpush2.bf16.msra.mxu0 0
    %4330 = vmatprep.mubr.bf16.mxu0 0
    %4331 = vmatmul.mubr.bf16.gmra.mxu0 %v4058
    %v4332 = vpop.f32.mrf.mxu0
    %v4333 = vadd.f32 0.0, %v4332
    %v4334 = vpop.f32.mrf.mxu0
    %v4335 = vadd.f32 0.0, %v4334
    %v4336 = vpop.f32.mrf.mxu0
    %v4337 = vpop.f32.mrf.mxu0
    %4338 = vdwg.mxu0
    %v4339 = vadd.f32 %v4061, %v4292
    %v4340 = vadd.f32 %v4062, %v4294
    %v4341 = vadd.f32 %v4063, %v4333
    %v4342 = vadd.f32 %v4064, %v4335
    %v4343 = vxor.u32 %v4339, 2147483648
    %v4344 = vmul.f32 %v4343, 1.442695
    %v4345 = vpow.pop %v4344
    %v4346 = vadd.f32 %v4345, 1.0
    %v4347 = vrcp.pop %v4346
    %v4348 = vmul.f32 1.0, %v4347
    %v4349 = vxor.u32 %v4340, 2147483648
    %v4350 = vmul.f32 %v4349, 1.442695
    %v4351 = vpow.pop %v4350
    %v4352 = vadd.f32 %v4351, 1.0
    %v4353 = vrcp.pop %v4352
    %v4354 = vmul.f32 1.0, %v4353
    %v4355 = vtanh.pop %v4341
    %v4356 = vxor.u32 %v4342, 2147483648
    %v4357 = vmul.f32 %v4356, 1.442695
    %v4358 = vpow.pop %v4357
    %v4359 = vadd.f32 %v4358, 1.0
    %v4360 = vrcp.pop %v4359
    %v4361 = vmul.f32 1.0, %v4360
    %v4362 = vmul.f32 %v4354, %v4055
    %v4363 = vmul.f32 %v4348, %v4355
    %v4364 = vadd.f32 %v4362, %v4363
    %v4365 = vtanh.pop %v4364
    %v4366 = vmul.f32 %v4361, %v4365
    %v4367 = vpack.c.bf16 %v4366, %v4366
    %s4368 = scalar_lea.vmem [#allocation4], 8
    %4369 = vst [vmem:[%s4368] sm:$0xf] %v4367
    %v4370 = vld [vmem:[%s1453] sm:$0xff]
    %v4371 = vld [vmem:[%s1453 + $0x8] sm:$0xff]
    %v4372 = vld [vmem:[%s1453 + $0x10] sm:$0xff]
    %v4373 = vld [vmem:[%s1453 + $0x18] sm:$0xff]
    %v4374 = vld [vmem:[%s3447] sm:$0xff]
    %v4375 = vld [vmem:[%s3447 + $0x8] sm:$0xff]
    %v4376 = vld [vmem:[%s3447 + $0x10] sm:$0xff]
    %v4377 = vld [vmem:[%s3447 + $0x18] sm:$0xff]
    %v4378 = vld [vmem:[%s3447 + $0x20] sm:$0xff]
    %v4379 = vld [vmem:[%s3447 + $0x28] sm:$0xff]
    %v4380 = vld [vmem:[%s3447 + $0x30] sm:$0xff]
    %v4381 = vld [vmem:[%s3447 + $0x38] sm:$0xff]
    %v4382 = vld [vmem:[%s3447 + $0x40] sm:$0xff]
    %v4383 = vld [vmem:[%s3447 + $0x48] sm:$0xff]
    %v4384 = vld [vmem:[%s3447 + $0x50] sm:$0xff]
    %v4385 = vld [vmem:[%s3447 + $0x58] sm:$0xff]
    %v4386 = vld [vmem:[%s3447 + $0x60] sm:$0xff]
    %v4387 = vld [vmem:[%s3447 + $0x68] sm:$0xff]
    %v4388 = vld [vmem:[%s3447 + $0x70] sm:$0xff]
    %v4389 = vld [vmem:[%s3447 + $0x78] sm:$0xff]
    %v4390 = vld [vmem:[%s3447 + $0x80] sm:$0xff]
    %v4391 = vld [vmem:[%s3447 + $0x88] sm:$0xff]
    %v4392 = vld [vmem:[%s3447 + $0x90] sm:$0xff]
    %v4393 = vld [vmem:[%s3447 + $0x98] sm:$0xff]
    %v4394 = vld [vmem:[%s3447 + $0xa0] sm:$0xff]
    %v4395 = vld [vmem:[%s3447 + $0xa8] sm:$0xff]
    %v4396 = vld [vmem:[%s3447 + $0xb0] sm:$0xff]
    %v4397 = vld [vmem:[%s3447 + $0xb8] sm:$0xff]
    %v4398 = vld [vmem:[%s3447 + $0xc0] sm:$0xff]
    %v4399 = vld [vmem:[%s3447 + $0xc8] sm:$0xff]
    %v4400 = vld [vmem:[%s3447 + $0xd0] sm:$0xff]
    %v4401 = vld [vmem:[%s3447 + $0xd8] sm:$0xff]
    %v4402 = vld [vmem:[%s3447 + $0xe0] sm:$0xff]
    %v4403 = vld [vmem:[%s3447 + $0xe8] sm:$0xff]
    %v4404 = vld [vmem:[%s3447 + $0xf0] sm:$0xff]
    %v4405 = vld [vmem:[%s3447 + $0xf8] sm:$0xff]
    %v4438 = vunpack.c.l.b16 %v4374
    %v4439 = vunpack.c.h.b16 %v4374
    %v4440 = vunpack.c.l.b16 %v4375
    %v4441 = vunpack.c.h.b16 %v4375
    %v4442 = vunpack.c.l.b16 %v4376
    %v4443 = vunpack.c.h.b16 %v4376
    %v4444 = vunpack.c.l.b16 %v4377
    %v4445 = vunpack.c.h.b16 %v4377
    %v4446 = vunpack.c.l.b16 %v4378
    %v4447 = vunpack.c.h.b16 %v4378
    %v4448 = vunpack.c.l.b16 %v4379
    %v4449 = vunpack.c.h.b16 %v4379
    %v4450 = vunpack.c.l.b16 %v4380
    %v4451 = vunpack.c.h.b16 %v4380
    %v4452 = vunpack.c.l.b16 %v4381
    %v4453 = vunpack.c.h.b16 %v4381
    %v4454 = vunpack.c.l.b16 %v4382
    %v4455 = vunpack.c.h.b16 %v4382
    %v4456 = vunpack.c.l.b16 %v4383
    %v4457 = vunpack.c.h.b16 %v4383
    %v4458 = vunpack.c.l.b16 %v4384
    %v4459 = vunpack.c.h.b16 %v4384
    %v4460 = vunpack.c.l.b16 %v4385
    %v4461 = vunpack.c.h.b16 %v4385
    %v4462 = vunpack.c.l.b16 %v4386
    %v4463 = vunpack.c.h.b16 %v4386
    %v4464 = vunpack.c.l.b16 %v4387
    %v4465 = vunpack.c.h.b16 %v4387
    %v4466 = vunpack.c.l.b16 %v4388
    %v4467 = vunpack.c.h.b16 %v4388
    %v4468 = vunpack.c.l.b16 %v4389
    %v4469 = vunpack.c.h.b16 %v4389
    %v4470 = vunpack.c.l.b16 %v4390
    %v4471 = vunpack.c.h.b16 %v4390
    %v4472 = vunpack.c.l.b16 %v4391
    %v4473 = vunpack.c.h.b16 %v4391
    %v4474 = vunpack.c.l.b16 %v4392
    %v4475 = vunpack.c.h.b16 %v4392
    %v4476 = vunpack.c.l.b16 %v4393
    %v4477 = vunpack.c.h.b16 %v4393
    %v4478 = vunpack.c.l.b16 %v4394
    %v4479 = vunpack.c.h.b16 %v4394
    %v4480 = vunpack.c.l.b16 %v4395
    %v4481 = vunpack.c.h.b16 %v4395
    %v4482 = vunpack.c.l.b16 %v4396
    %v4483 = vunpack.c.h.b16 %v4396
    %v4484 = vunpack.c.l.b16 %v4397
    %v4485 = vunpack.c.h.b16 %v4397
    %v4486 = vunpack.c.l.b16 %v4398
    %v4487 = vunpack.c.h.b16 %v4398
    %v4488 = vunpack.c.l.b16 %v4399
    %v4489 = vunpack.c.h.b16 %v4399
    %v4490 = vunpack.c.l.b16 %v4400
    %v4491 = vunpack.c.h.b16 %v4400
    %v4492 = vunpack.c.l.b16 %v4401
    %v4493 = vunpack.c.h.b16 %v4401
    %v4494 = vunpack.c.l.b16 %v4402
    %v4495 = vunpack.c.h.b16 %v4402
    %v4496 = vunpack.c.l.b16 %v4403
    %v4497 = vunpack.c.h.b16 %v4403
    %v4498 = vunpack.c.l.b16 %v4404
    %v4499 = vunpack.c.h.b16 %v4404
    %v4500 = vunpack.c.l.b16 %v4405
    %v4501 = vunpack.c.h.b16 %v4405
    %v4502 = vpack.c.b16 %v4442, %v4438
    %v4503 = vpack.c.b16 %v4443, %v4439
    %v4504 = vpack.c.b16 %v4444, %v4440
    %v4505 = vpack.c.b16 %v4445, %v4441
    %v4506 = vpack.c.b16 %v4450, %v4446
    %v4507 = vpack.c.b16 %v4451, %v4447
    %v4508 = vpack.c.b16 %v4452, %v4448
    %v4509 = vpack.c.b16 %v4453, %v4449
    %v4510 = vpack.c.b16 %v4458, %v4454
    %v4511 = vpack.c.b16 %v4459, %v4455
    %v4512 = vpack.c.b16 %v4460, %v4456
    %v4513 = vpack.c.b16 %v4461, %v4457
    %v4514 = vpack.c.b16 %v4466, %v4462
    %v4515 = vpack.c.b16 %v4467, %v4463
    %v4516 = vpack.c.b16 %v4468, %v4464
    %v4517 = vpack.c.b16 %v4469, %v4465
    %v4518 = vpack.c.b16 %v4474, %v4470
    %v4519 = vpack.c.b16 %v4475, %v4471
    %v4520 = vpack.c.b16 %v4476, %v4472
    %v4521 = vpack.c.b16 %v4477, %v4473
    %v4522 = vpack.c.b16 %v4482, %v4478
    %v4523 = vpack.c.b16 %v4483, %v4479
    %v4524 = vpack.c.b16 %v4484, %v4480
    %v4525 = vpack.c.b16 %v4485, %v4481
    %v4526 = vpack.c.b16 %v4490, %v4486
    %v4527 = vpack.c.b16 %v4491, %v4487
    %v4528 = vpack.c.b16 %v4492, %v4488
    %v4529 = vpack.c.b16 %v4493, %v4489
    %v4530 = vpack.c.b16 %v4498, %v4494
    %v4531 = vpack.c.b16 %v4499, %v4495
    %v4532 = vpack.c.b16 %v4500, %v4496
    %v4533 = vpack.c.b16 %v4501, %v4497
    %4566 = vmatprep.subr.bf16.mxu0 %v4531
    %4567 = vmatpush1.bf16.msra.mxu0 %v4530
    %4568 = vmatprep.subr.bf16.mxu0 %v4527
    %4569 = vmatpush1.bf16.msra.mxu0 %v4526
    %4570 = vmatprep.subr.bf16.mxu0 %v4523
    %4571 = vmatpush1.bf16.msra.mxu0 %v4522
    %4572 = vmatprep.subr.bf16.mxu0 %v4519
    %4573 = vmatpush1.bf16.msra.mxu0 %v4518
    %4574 = vmatprep.subr.bf16.mxu0 %v4515
    %4575 = vmatpush1.bf16.msra.mxu0 %v4514
    %4576 = vmatprep.subr.bf16.mxu0 %v4511
    %4577 = vmatpush1.bf16.msra.mxu0 %v4510
    %4578 = vmatprep.subr.bf16.mxu0 %v4507
    %4579 = vmatpush1.bf16.msra.mxu0 %v4506
    %4580 = vmatprep.subr.bf16.mxu0 %v4503
    %4581 = vmatpush1.bf16.msra.mxu0 %v4502
    %4582 = vmatprep.subr.bf16.mxu0 0
    %4583 = vmatpush2.bf16.msra.mxu0 0
    %4584 = vmatprep.subr.bf16.mxu0 0
    %4585 = vmatpush2.bf16.msra.mxu0 0
    %4586 = vmatprep.subr.bf16.mxu0 0
    %4587 = vmatpush2.bf16.msra.mxu0 0
    %4588 = vmatprep.subr.bf16.mxu0 0
    %4589 = vmatpush2.bf16.msra.mxu0 0
    %4590 = vmatprep.subr.bf16.mxu0 0
    %4591 = vmatpush2.bf16.msra.mxu0 0
    %4592 = vmatprep.subr.bf16.mxu0 0
    %4593 = vmatpush2.bf16.msra.mxu0 0
    %4594 = vmatprep.subr.bf16.mxu0 0
    %4595 = vmatpush2.bf16.msra.mxu0 0
    %4596 = vmatprep.subr.bf16.mxu0 0
    %4597 = vmatpush2.bf16.msra.mxu0 0
    %4598 = vmatprep.mubr.bf16.mxu0 0
    %4599 = vmatmul.mubr.bf16.gmra.mxu0 %v4367
    %v4600 = vpop.f32.mrf.mxu0
    %v4601 = vadd.f32 0.0, %v4600
    %v4602 = vpop.f32.mrf.mxu0
    %v4603 = vadd.f32 0.0, %v4602
    %v4604 = vpop.f32.mrf.mxu0
    %v4605 = vpop.f32.mrf.mxu0
    %4606 = vdwg.mxu0
    %4607 = vmatprep.subr.bf16.mxu0 %v4533
    %4608 = vmatpush1.bf16.msra.mxu0 %v4532
    %4609 = vmatprep.subr.bf16.mxu0 %v4529
    %4610 = vmatpush1.bf16.msra.mxu0 %v4528
    %4611 = vmatprep.subr.bf16.mxu0 %v4525
    %4612 = vmatpush1.bf16.msra.mxu0 %v4524
    %4613 = vmatprep.subr.bf16.mxu0 %v4521
    %4614 = vmatpush1.bf16.msra.mxu0 %v4520
    %4615 = vmatprep.subr.bf16.mxu0 %v4517
    %4616 = vmatpush1.bf16.msra.mxu0 %v4516
    %4617 = vmatprep.subr.bf16.mxu0 %v4513
    %4618 = vmatpush1.bf16.msra.mxu0 %v4512
    %4619 = vmatprep.subr.bf16.mxu0 %v4509
    %4620 = vmatpush1.bf16.msra.mxu0 %v4508
    %4621 = vmatprep.subr.bf16.mxu0 %v4505
    %4622 = vmatpush1.bf16.msra.mxu0 %v4504
    %4623 = vmatprep.subr.bf16.mxu0 0
    %4624 = vmatpush2.bf16.msra.mxu0 0
    %4625 = vmatprep.subr.bf16.mxu0 0
    %4626 = vmatpush2.bf16.msra.mxu0 0
    %4627 = vmatprep.subr.bf16.mxu0 0
    %4628 = vmatpush2.bf16.msra.mxu0 0
    %4629 = vmatprep.subr.bf16.mxu0 0
    %4630 = vmatpush2.bf16.msra.mxu0 0
    %4631 = vmatprep.subr.bf16.mxu0 0
    %4632 = vmatpush2.bf16.msra.mxu0 0
    %4633 = vmatprep.subr.bf16.mxu0 0
    %4634 = vmatpush2.bf16.msra.mxu0 0
    %4635 = vmatprep.subr.bf16.mxu0 0
    %4636 = vmatpush2.bf16.msra.mxu0 0
    %4637 = vmatprep.subr.bf16.mxu0 0
    %4638 = vmatpush2.bf16.msra.mxu0 0
    %4639 = vmatprep.mubr.bf16.mxu0 0
    %4640 = vmatmul.mubr.bf16.gmra.mxu0 %v4367
    %v4641 = vpop.f32.mrf.mxu0
    %v4642 = vadd.f32 0.0, %v4641
    %v4643 = vpop.f32.mrf.mxu0
    %v4644 = vadd.f32 0.0, %v4643
    %v4645 = vpop.f32.mrf.mxu0
    %v4646 = vpop.f32.mrf.mxu0
    %4647 = vdwg.mxu0
    %v4648 = vadd.f32 %v4370, %v4601
    %v4649 = vadd.f32 %v4371, %v4603
    %v4650 = vadd.f32 %v4372, %v4642
    %v4651 = vadd.f32 %v4373, %v4644
    %v4652 = vxor.u32 %v4648, 2147483648
    %v4653 = vmul.f32 %v4652, 1.442695
    %v4654 = vpow.pop %v4653
    %v4655 = vadd.f32 %v4654, 1.0
    %v4656 = vrcp.pop %v4655
    %v4657 = vmul.f32 1.0, %v4656
    %v4658 = vxor.u32 %v4649, 2147483648
    %v4659 = vmul.f32 %v4658, 1.442695
    %v4660 = vpow.pop %v4659
    %v4661 = vadd.f32 %v4660, 1.0
    %v4662 = vrcp.pop %v4661
    %v4663 = vmul.f32 1.0, %v4662
    %v4664 = vtanh.pop %v4650
    %v4665 = vxor.u32 %v4651, 2147483648
    %v4666 = vmul.f32 %v4665, 1.442695
    %v4667 = vpow.pop %v4666
    %v4668 = vadd.f32 %v4667, 1.0
    %v4669 = vrcp.pop %v4668
    %v4670 = vmul.f32 1.0, %v4669
    %v4671 = vmul.f32 %v4663, %v4364
    %v4672 = vmul.f32 %v4657, %v4664
    %v4673 = vadd.f32 %v4671, %v4672
    %v4674 = vtanh.pop %v4673
    %v4675 = vmul.f32 %v4670, %v4674
    %v4676 = vpack.c.bf16 %v4675, %v4675
    %s4677 = scalar_lea.vmem [#allocation4], 12
    %4678 = vst [vmem:[%s4677] sm:$0xf] %v4676
    %v4679 = vld [vmem:[%s1765] sm:$0xff]
    %v4680 = vld [vmem:[%s1765 + $0x8] sm:$0xff]
    %v4681 = vld [vmem:[%s1765 + $0x10] sm:$0xff]
    %v4682 = vld [vmem:[%s1765 + $0x18] sm:$0xff]
    %v4683 = vld [vmem:[%s3447] sm:$0xff]
    %v4684 = vld [vmem:[%s3447 + $0x8] sm:$0xff]
    %v4685 = vld [vmem:[%s3447 + $0x10] sm:$0xff]
    %v4686 = vld [vmem:[%s3447 + $0x18] sm:$0xff]
    %v4687 = vld [vmem:[%s3447 + $0x20] sm:$0xff]
    %v4688 = vld [vmem:[%s3447 + $0x28] sm:$0xff]
    %v4689 = vld [vmem:[%s3447 + $0x30] sm:$0xff]
    %v4690 = vld [vmem:[%s3447 + $0x38] sm:$0xff]
    %v4691 = vld [vmem:[%s3447 + $0x40] sm:$0xff]
    %v4692 = vld [vmem:[%s3447 + $0x48] sm:$0xff]
    %v4693 = vld [vmem:[%s3447 + $0x50] sm:$0xff]
    %v4694 = vld [vmem:[%s3447 + $0x58] sm:$0xff]
    %v4695 = vld [vmem:[%s3447 + $0x60] sm:$0xff]
    %v4696 = vld [vmem:[%s3447 + $0x68] sm:$0xff]
    %v4697 = vld [vmem:[%s3447 + $0x70] sm:$0xff]
    %v4698 = vld [vmem:[%s3447 + $0x78] sm:$0xff]
    %v4699 = vld [vmem:[%s3447 + $0x80] sm:$0xff]
    %v4700 = vld [vmem:[%s3447 + $0x88] sm:$0xff]
    %v4701 = vld [vmem:[%s3447 + $0x90] sm:$0xff]
    %v4702 = vld [vmem:[%s3447 + $0x98] sm:$0xff]
    %v4703 = vld [vmem:[%s3447 + $0xa0] sm:$0xff]
    %v4704 = vld [vmem:[%s3447 + $0xa8] sm:$0xff]
    %v4705 = vld [vmem:[%s3447 + $0xb0] sm:$0xff]
    %v4706 = vld [vmem:[%s3447 + $0xb8] sm:$0xff]
    %v4707 = vld [vmem:[%s3447 + $0xc0] sm:$0xff]
    %v4708 = vld [vmem:[%s3447 + $0xc8] sm:$0xff]
    %v4709 = vld [vmem:[%s3447 + $0xd0] sm:$0xff]
    %v4710 = vld [vmem:[%s3447 + $0xd8] sm:$0xff]
    %v4711 = vld [vmem:[%s3447 + $0xe0] sm:$0xff]
    %v4712 = vld [vmem:[%s3447 + $0xe8] sm:$0xff]
    %v4713 = vld [vmem:[%s3447 + $0xf0] sm:$0xff]
    %v4714 = vld [vmem:[%s3447 + $0xf8] sm:$0xff]
    %v4747 = vunpack.c.l.b16 %v4683
    %v4748 = vunpack.c.h.b16 %v4683
    %v4749 = vunpack.c.l.b16 %v4684
    %v4750 = vunpack.c.h.b16 %v4684
    %v4751 = vunpack.c.l.b16 %v4685
    %v4752 = vunpack.c.h.b16 %v4685
    %v4753 = vunpack.c.l.b16 %v4686
    %v4754 = vunpack.c.h.b16 %v4686
    %v4755 = vunpack.c.l.b16 %v4687
    %v4756 = vunpack.c.h.b16 %v4687
    %v4757 = vunpack.c.l.b16 %v4688
    %v4758 = vunpack.c.h.b16 %v4688
    %v4759 = vunpack.c.l.b16 %v4689
    %v4760 = vunpack.c.h.b16 %v4689
    %v4761 = vunpack.c.l.b16 %v4690
    %v4762 = vunpack.c.h.b16 %v4690
    %v4763 = vunpack.c.l.b16 %v4691
    %v4764 = vunpack.c.h.b16 %v4691
    %v4765 = vunpack.c.l.b16 %v4692
    %v4766 = vunpack.c.h.b16 %v4692
    %v4767 = vunpack.c.l.b16 %v4693
    %v4768 = vunpack.c.h.b16 %v4693
    %v4769 = vunpack.c.l.b16 %v4694
    %v4770 = vunpack.c.h.b16 %v4694
    %v4771 = vunpack.c.l.b16 %v4695
    %v4772 = vunpack.c.h.b16 %v4695
    %v4773 = vunpack.c.l.b16 %v4696
    %v4774 = vunpack.c.h.b16 %v4696
    %v4775 = vunpack.c.l.b16 %v4697
    %v4776 = vunpack.c.h.b16 %v4697
    %v4777 = vunpack.c.l.b16 %v4698
    %v4778 = vunpack.c.h.b16 %v4698
    %v4779 = vunpack.c.l.b16 %v4699
    %v4780 = vunpack.c.h.b16 %v4699
    %v4781 = vunpack.c.l.b16 %v4700
    %v4782 = vunpack.c.h.b16 %v4700
    %v4783 = vunpack.c.l.b16 %v4701
    %v4784 = vunpack.c.h.b16 %v4701
    %v4785 = vunpack.c.l.b16 %v4702
    %v4786 = vunpack.c.h.b16 %v4702
    %v4787 = vunpack.c.l.b16 %v4703
    %v4788 = vunpack.c.h.b16 %v4703
    %v4789 = vunpack.c.l.b16 %v4704
    %v4790 = vunpack.c.h.b16 %v4704
    %v4791 = vunpack.c.l.b16 %v4705
    %v4792 = vunpack.c.h.b16 %v4705
    %v4793 = vunpack.c.l.b16 %v4706
    %v4794 = vunpack.c.h.b16 %v4706
    %v4795 = vunpack.c.l.b16 %v4707
    %v4796 = vunpack.c.h.b16 %v4707
    %v4797 = vunpack.c.l.b16 %v4708
    %v4798 = vunpack.c.h.b16 %v4708
    %v4799 = vunpack.c.l.b16 %v4709
    %v4800 = vunpack.c.h.b16 %v4709
    %v4801 = vunpack.c.l.b16 %v4710
    %v4802 = vunpack.c.h.b16 %v4710
    %v4803 = vunpack.c.l.b16 %v4711
    %v4804 = vunpack.c.h.b16 %v4711
    %v4805 = vunpack.c.l.b16 %v4712
    %v4806 = vunpack.c.h.b16 %v4712
    %v4807 = vunpack.c.l.b16 %v4713
    %v4808 = vunpack.c.h.b16 %v4713
    %v4809 = vunpack.c.l.b16 %v4714
    %v4810 = vunpack.c.h.b16 %v4714
    %v4811 = vpack.c.b16 %v4751, %v4747
    %v4812 = vpack.c.b16 %v4752, %v4748
    %v4813 = vpack.c.b16 %v4753, %v4749
    %v4814 = vpack.c.b16 %v4754, %v4750
    %v4815 = vpack.c.b16 %v4759, %v4755
    %v4816 = vpack.c.b16 %v4760, %v4756
    %v4817 = vpack.c.b16 %v4761, %v4757
    %v4818 = vpack.c.b16 %v4762, %v4758
    %v4819 = vpack.c.b16 %v4767, %v4763
    %v4820 = vpack.c.b16 %v4768, %v4764
    %v4821 = vpack.c.b16 %v4769, %v4765
    %v4822 = vpack.c.b16 %v4770, %v4766
    %v4823 = vpack.c.b16 %v4775, %v4771
    %v4824 = vpack.c.b16 %v4776, %v4772
    %v4825 = vpack.c.b16 %v4777, %v4773
    %v4826 = vpack.c.b16 %v4778, %v4774
    %v4827 = vpack.c.b16 %v4783, %v4779
    %v4828 = vpack.c.b16 %v4784, %v4780
    %v4829 = vpack.c.b16 %v4785, %v4781
    %v4830 = vpack.c.b16 %v4786, %v4782
    %v4831 = vpack.c.b16 %v4791, %v4787
    %v4832 = vpack.c.b16 %v4792, %v4788
    %v4833 = vpack.c.b16 %v4793, %v4789
    %v4834 = vpack.c.b16 %v4794, %v4790
    %v4835 = vpack.c.b16 %v4799, %v4795
    %v4836 = vpack.c.b16 %v4800, %v4796
    %v4837 = vpack.c.b16 %v4801, %v4797
    %v4838 = vpack.c.b16 %v4802, %v4798
    %v4839 = vpack.c.b16 %v4807, %v4803
    %v4840 = vpack.c.b16 %v4808, %v4804
    %v4841 = vpack.c.b16 %v4809, %v4805
    %v4842 = vpack.c.b16 %v4810, %v4806
    %4875 = vmatprep.subr.bf16.mxu0 %v4840
    %4876 = vmatpush1.bf16.msra.mxu0 %v4839
    %4877 = vmatprep.subr.bf16.mxu0 %v4836
    %4878 = vmatpush1.bf16.msra.mxu0 %v4835
    %4879 = vmatprep.subr.bf16.mxu0 %v4832
    %4880 = vmatpush1.bf16.msra.mxu0 %v4831
    %4881 = vmatprep.subr.bf16.mxu0 %v4828
    %4882 = vmatpush1.bf16.msra.mxu0 %v4827
    %4883 = vmatprep.subr.bf16.mxu0 %v4824
    %4884 = vmatpush1.bf16.msra.mxu0 %v4823
    %4885 = vmatprep.subr.bf16.mxu0 %v4820
    %4886 = vmatpush1.bf16.msra.mxu0 %v4819
    %4887 = vmatprep.subr.bf16.mxu0 %v4816
    %4888 = vmatpush1.bf16.msra.mxu0 %v4815
    %4889 = vmatprep.subr.bf16.mxu0 %v4812
    %4890 = vmatpush1.bf16.msra.mxu0 %v4811
    %4891 = vmatprep.subr.bf16.mxu0 0
    %4892 = vmatpush2.bf16.msra.mxu0 0
    %4893 = vmatprep.subr.bf16.mxu0 0
    %4894 = vmatpush2.bf16.msra.mxu0 0
    %4895 = vmatprep.subr.bf16.mxu0 0
    %4896 = vmatpush2.bf16.msra.mxu0 0
    %4897 = vmatprep.subr.bf16.mxu0 0
    %4898 = vmatpush2.bf16.msra.mxu0 0
    %4899 = vmatprep.subr.bf16.mxu0 0
    %4900 = vmatpush2.bf16.msra.mxu0 0
    %4901 = vmatprep.subr.bf16.mxu0 0
    %4902 = vmatpush2.bf16.msra.mxu0 0
    %4903 = vmatprep.subr.bf16.mxu0 0
    %4904 = vmatpush2.bf16.msra.mxu0 0
    %4905 = vmatprep.subr.bf16.mxu0 0
    %4906 = vmatpush2.bf16.msra.mxu0 0
    %4907 = vmatprep.mubr.bf16.mxu0 0
    %4908 = vmatmul.mubr.bf16.gmra.mxu0 %v4676
    %v4909 = vpop.f32.mrf.mxu0
    %v4910 = vadd.f32 0.0, %v4909
    %v4911 = vpop.f32.mrf.mxu0
    %v4912 = vadd.f32 0.0, %v4911
    %v4913 = vpop.f32.mrf.mxu0
    %v4914 = vpop.f32.mrf.mxu0
    %4915 = vdwg.mxu0
    %4916 = vmatprep.subr.bf16.mxu0 %v4842
    %4917 = vmatpush1.bf16.msra.mxu0 %v4841
    %4918 = vmatprep.subr.bf16.mxu0 %v4838
    %4919 = vmatpush1.bf16.msra.mxu0 %v4837
    %4920 = vmatprep.subr.bf16.mxu0 %v4834
    %4921 = vmatpush1.bf16.msra.mxu0 %v4833
    %4922 = vmatprep.subr.bf16.mxu0 %v4830
    %4923 = vmatpush1.bf16.msra.mxu0 %v4829
    %4924 = vmatprep.subr.bf16.mxu0 %v4826
    %4925 = vmatpush1.bf16.msra.mxu0 %v4825
    %4926 = vmatprep.subr.bf16.mxu0 %v4822
    %4927 = vmatpush1.bf16.msra.mxu0 %v4821
    %4928 = vmatprep.subr.bf16.mxu0 %v4818
    %4929 = vmatpush1.bf16.msra.mxu0 %v4817
    %4930 = vmatprep.subr.bf16.mxu0 %v4814
    %4931 = vmatpush1.bf16.msra.mxu0 %v4813
    %4932 = vmatprep.subr.bf16.mxu0 0
    %4933 = vmatpush2.bf16.msra.mxu0 0
    %4934 = vmatprep.subr.bf16.mxu0 0
    %4935 = vmatpush2.bf16.msra.mxu0 0
    %4936 = vmatprep.subr.bf16.mxu0 0
    %4937 = vmatpush2.bf16.msra.mxu0 0
    %4938 = vmatprep.subr.bf16.mxu0 0
    %4939 = vmatpush2.bf16.msra.mxu0 0
    %4940 = vmatprep.subr.bf16.mxu0 0
    %4941 = vmatpush2.bf16.msra.mxu0 0
    %4942 = vmatprep.subr.bf16.mxu0 0
    %4943 = vmatpush2.bf16.msra.mxu0 0
    %4944 = vmatprep.subr.bf16.mxu0 0
    %4945 = vmatpush2.bf16.msra.mxu0 0
    %4946 = vmatprep.subr.bf16.mxu0 0
    %4947 = vmatpush2.bf16.msra.mxu0 0
    %4948 = vmatprep.mubr.bf16.mxu0 0
    %4949 = vmatmul.mubr.bf16.gmra.mxu0 %v4676
    %v4950 = vpop.f32.mrf.mxu0
    %v4951 = vadd.f32 0.0, %v4950
    %v4952 = vpop.f32.mrf.mxu0
    %v4953 = vadd.f32 0.0, %v4952
    %v4954 = vpop.f32.mrf.mxu0
    %v4955 = vpop.f32.mrf.mxu0
    %4956 = vdwg.mxu0
    %v4957 = vadd.f32 %v4679, %v4910
    %v4958 = vadd.f32 %v4680, %v4912
    %v4959 = vadd.f32 %v4681, %v4951
    %v4960 = vadd.f32 %v4682, %v4953
    %v4961 = vxor.u32 %v4957, 2147483648
    %v4962 = vmul.f32 %v4961, 1.442695
    %v4963 = vpow.pop %v4962
    %v4964 = vadd.f32 %v4963, 1.0
    %v4965 = vrcp.pop %v4964
    %v4966 = vmul.f32 1.0, %v4965
    %v4967 = vxor.u32 %v4958, 2147483648
    %v4968 = vmul.f32 %v4967, 1.442695
    %v4969 = vpow.pop %v4968
    %v4970 = vadd.f32 %v4969, 1.0
    %v4971 = vrcp.pop %v4970
    %v4972 = vmul.f32 1.0, %v4971
    %v4973 = vtanh.pop %v4959
    %v4974 = vxor.u32 %v4960, 2147483648
    %v4975 = vmul.f32 %v4974, 1.442695
    %v4976 = vpow.pop %v4975
    %v4977 = vadd.f32 %v4976, 1.0
    %v4978 = vrcp.pop %v4977
    %v4979 = vmul.f32 1.0, %v4978
    %v4980 = vmul.f32 %v4972, %v4673
    %v4981 = vmul.f32 %v4966, %v4973
    %v4982 = vadd.f32 %v4980, %v4981
    %v4983 = vtanh.pop %v4982
    %v4984 = vmul.f32 %v4979, %v4983
    %v4985 = vpack.c.bf16 %v4984, %v4984
    %s4986 = scalar_lea.vmem [#allocation4], 16
    %4987 = vst [vmem:[%s4986] sm:$0xf] %v4985
    %v4988 = vld [vmem:[%s2077] sm:$0xff]
    %v4989 = vld [vmem:[%s2077 + $0x8] sm:$0xff]
    %v4990 = vld [vmem:[%s2077 + $0x10] sm:$0xff]
    %v4991 = vld [vmem:[%s2077 + $0x18] sm:$0xff]
    %v4992 = vld [vmem:[%s3447] sm:$0xff]
    %v4993 = vld [vmem:[%s3447 + $0x8] sm:$0xff]
    %v4994 = vld [vmem:[%s3447 + $0x10] sm:$0xff]
    %v4995 = vld [vmem:[%s3447 + $0x18] sm:$0xff]
    %v4996 = vld [vmem:[%s3447 + $0x20] sm:$0xff]
    %v4997 = vld [vmem:[%s3447 + $0x28] sm:$0xff]
    %v4998 = vld [vmem:[%s3447 + $0x30] sm:$0xff]
    %v4999 = vld [vmem:[%s3447 + $0x38] sm:$0xff]
    %v5000 = vld [vmem:[%s3447 + $0x40] sm:$0xff]
    %v5001 = vld [vmem:[%s3447 + $0x48] sm:$0xff]
    %v5002 = vld [vmem:[%s3447 + $0x50] sm:$0xff]
    %v5003 = vld [vmem:[%s3447 + $0x58] sm:$0xff]
    %v5004 = vld [vmem:[%s3447 + $0x60] sm:$0xff]
    %v5005 = vld [vmem:[%s3447 + $0x68] sm:$0xff]
    %v5006 = vld [vmem:[%s3447 + $0x70] sm:$0xff]
    %v5007 = vld [vmem:[%s3447 + $0x78] sm:$0xff]
    %v5008 = vld [vmem:[%s3447 + $0x80] sm:$0xff]
    %v5009 = vld [vmem:[%s3447 + $0x88] sm:$0xff]
    %v5010 = vld [vmem:[%s3447 + $0x90] sm:$0xff]
    %v5011 = vld [vmem:[%s3447 + $0x98] sm:$0xff]
    %v5012 = vld [vmem:[%s3447 + $0xa0] sm:$0xff]
    %v5013 = vld [vmem:[%s3447 + $0xa8] sm:$0xff]
    %v5014 = vld [vmem:[%s3447 + $0xb0] sm:$0xff]
    %v5015 = vld [vmem:[%s3447 + $0xb8] sm:$0xff]
    %v5016 = vld [vmem:[%s3447 + $0xc0] sm:$0xff]
    %v5017 = vld [vmem:[%s3447 + $0xc8] sm:$0xff]
    %v5018 = vld [vmem:[%s3447 + $0xd0] sm:$0xff]
    %v5019 = vld [vmem:[%s3447 + $0xd8] sm:$0xff]
    %v5020 = vld [vmem:[%s3447 + $0xe0] sm:$0xff]
    %v5021 = vld [vmem:[%s3447 + $0xe8] sm:$0xff]
    %v5022 = vld [vmem:[%s3447 + $0xf0] sm:$0xff]
    %v5023 = vld [vmem:[%s3447 + $0xf8] sm:$0xff]
    %v5056 = vunpack.c.l.b16 %v4992
    %v5057 = vunpack.c.h.b16 %v4992
    %v5058 = vunpack.c.l.b16 %v4993
    %v5059 = vunpack.c.h.b16 %v4993
    %v5060 = vunpack.c.l.b16 %v4994
    %v5061 = vunpack.c.h.b16 %v4994
    %v5062 = vunpack.c.l.b16 %v4995
    %v5063 = vunpack.c.h.b16 %v4995
    %v5064 = vunpack.c.l.b16 %v4996
    %v5065 = vunpack.c.h.b16 %v4996
    %v5066 = vunpack.c.l.b16 %v4997
    %v5067 = vunpack.c.h.b16 %v4997
    %v5068 = vunpack.c.l.b16 %v4998
    %v5069 = vunpack.c.h.b16 %v4998
    %v5070 = vunpack.c.l.b16 %v4999
    %v5071 = vunpack.c.h.b16 %v4999
    %v5072 = vunpack.c.l.b16 %v5000
    %v5073 = vunpack.c.h.b16 %v5000
    %v5074 = vunpack.c.l.b16 %v5001
    %v5075 = vunpack.c.h.b16 %v5001
    %v5076 = vunpack.c.l.b16 %v5002
    %v5077 = vunpack.c.h.b16 %v5002
    %v5078 = vunpack.c.l.b16 %v5003
    %v5079 = vunpack.c.h.b16 %v5003
    %v5080 = vunpack.c.l.b16 %v5004
    %v5081 = vunpack.c.h.b16 %v5004
    %v5082 = vunpack.c.l.b16 %v5005
    %v5083 = vunpack.c.h.b16 %v5005
    %v5084 = vunpack.c.l.b16 %v5006
    %v5085 = vunpack.c.h.b16 %v5006
    %v5086 = vunpack.c.l.b16 %v5007
    %v5087 = vunpack.c.h.b16 %v5007
    %v5088 = vunpack.c.l.b16 %v5008
    %v5089 = vunpack.c.h.b16 %v5008
    %v5090 = vunpack.c.l.b16 %v5009
    %v5091 = vunpack.c.h.b16 %v5009
    %v5092 = vunpack.c.l.b16 %v5010
    %v5093 = vunpack.c.h.b16 %v5010
    %v5094 = vunpack.c.l.b16 %v5011
    %v5095 = vunpack.c.h.b16 %v5011
    %v5096 = vunpack.c.l.b16 %v5012
    %v5097 = vunpack.c.h.b16 %v5012
    %v5098 = vunpack.c.l.b16 %v5013
    %v5099 = vunpack.c.h.b16 %v5013
    %v5100 = vunpack.c.l.b16 %v5014
    %v5101 = vunpack.c.h.b16 %v5014
    %v5102 = vunpack.c.l.b16 %v5015
    %v5103 = vunpack.c.h.b16 %v5015
    %v5104 = vunpack.c.l.b16 %v5016
    %v5105 = vunpack.c.h.b16 %v5016
    %v5106 = vunpack.c.l.b16 %v5017
    %v5107 = vunpack.c.h.b16 %v5017
    %v5108 = vunpack.c.l.b16 %v5018
    %v5109 = vunpack.c.h.b16 %v5018
    %v5110 = vunpack.c.l.b16 %v5019
    %v5111 = vunpack.c.h.b16 %v5019
    %v5112 = vunpack.c.l.b16 %v5020
    %v5113 = vunpack.c.h.b16 %v5020
    %v5114 = vunpack.c.l.b16 %v5021
    %v5115 = vunpack.c.h.b16 %v5021
    %v5116 = vunpack.c.l.b16 %v5022
    %v5117 = vunpack.c.h.b16 %v5022
    %v5118 = vunpack.c.l.b16 %v5023
    %v5119 = vunpack.c.h.b16 %v5023
    %v5120 = vpack.c.b16 %v5060, %v5056
    %v5121 = vpack.c.b16 %v5061, %v5057
    %v5122 = vpack.c.b16 %v5062, %v5058
    %v5123 = vpack.c.b16 %v5063, %v5059
    %v5124 = vpack.c.b16 %v5068, %v5064
    %v5125 = vpack.c.b16 %v5069, %v5065
    %v5126 = vpack.c.b16 %v5070, %v5066
    %v5127 = vpack.c.b16 %v5071, %v5067
    %v5128 = vpack.c.b16 %v5076, %v5072
    %v5129 = vpack.c.b16 %v5077, %v5073
    %v5130 = vpack.c.b16 %v5078, %v5074
    %v5131 = vpack.c.b16 %v5079, %v5075
    %v5132 = vpack.c.b16 %v5084, %v5080
    %v5133 = vpack.c.b16 %v5085, %v5081
    %v5134 = vpack.c.b16 %v5086, %v5082
    %v5135 = vpack.c.b16 %v5087, %v5083
    %v5136 = vpack.c.b16 %v5092, %v5088
    %v5137 = vpack.c.b16 %v5093, %v5089
    %v5138 = vpack.c.b16 %v5094, %v5090
    %v5139 = vpack.c.b16 %v5095, %v5091
    %v5140 = vpack.c.b16 %v5100, %v5096
    %v5141 = vpack.c.b16 %v5101, %v5097
    %v5142 = vpack.c.b16 %v5102, %v5098
    %v5143 = vpack.c.b16 %v5103, %v5099
    %v5144 = vpack.c.b16 %v5108, %v5104
    %v5145 = vpack.c.b16 %v5109, %v5105
    %v5146 = vpack.c.b16 %v5110, %v5106
    %v5147 = vpack.c.b16 %v5111, %v5107
    %v5148 = vpack.c.b16 %v5116, %v5112
    %v5149 = vpack.c.b16 %v5117, %v5113
    %v5150 = vpack.c.b16 %v5118, %v5114
    %v5151 = vpack.c.b16 %v5119, %v5115
    %5184 = vmatprep.subr.bf16.mxu0 %v5149
    %5185 = vmatpush1.bf16.msra.mxu0 %v5148
    %5186 = vmatprep.subr.bf16.mxu0 %v5145
    %5187 = vmatpush1.bf16.msra.mxu0 %v5144
    %5188 = vmatprep.subr.bf16.mxu0 %v5141
    %5189 = vmatpush1.bf16.msra.mxu0 %v5140
    %5190 = vmatprep.subr.bf16.mxu0 %v5137
    %5191 = vmatpush1.bf16.msra.mxu0 %v5136
    %5192 = vmatprep.subr.bf16.mxu0 %v5133
    %5193 = vmatpush1.bf16.msra.mxu0 %v5132
    %5194 = vmatprep.subr.bf16.mxu0 %v5129
    %5195 = vmatpush1.bf16.msra.mxu0 %v5128
    %5196 = vmatprep.subr.bf16.mxu0 %v5125
    %5197 = vmatpush1.bf16.msra.mxu0 %v5124
    %5198 = vmatprep.subr.bf16.mxu0 %v5121
    %5199 = vmatpush1.bf16.msra.mxu0 %v5120
    %5200 = vmatprep.subr.bf16.mxu0 0
    %5201 = vmatpush2.bf16.msra.mxu0 0
    %5202 = vmatprep.subr.bf16.mxu0 0
    %5203 = vmatpush2.bf16.msra.mxu0 0
    %5204 = vmatprep.subr.bf16.mxu0 0
    %5205 = vmatpush2.bf16.msra.mxu0 0
    %5206 = vmatprep.subr.bf16.mxu0 0
    %5207 = vmatpush2.bf16.msra.mxu0 0
    %5208 = vmatprep.subr.bf16.mxu0 0
    %5209 = vmatpush2.bf16.msra.mxu0 0
    %5210 = vmatprep.subr.bf16.mxu0 0
    %5211 = vmatpush2.bf16.msra.mxu0 0
    %5212 = vmatprep.subr.bf16.mxu0 0
    %5213 = vmatpush2.bf16.msra.mxu0 0
    %5214 = vmatprep.subr.bf16.mxu0 0
    %5215 = vmatpush2.bf16.msra.mxu0 0
    %5216 = vmatprep.mubr.bf16.mxu0 0
    %5217 = vmatmul.mubr.bf16.gmra.mxu0 %v4985
    %v5218 = vpop.f32.mrf.mxu0
    %v5219 = vadd.f32 0.0, %v5218
    %v5220 = vpop.f32.mrf.mxu0
    %v5221 = vadd.f32 0.0, %v5220
    %v5222 = vpop.f32.mrf.mxu0
    %v5223 = vpop.f32.mrf.mxu0
    %5224 = vdwg.mxu0
    %5225 = vmatprep.subr.bf16.mxu0 %v5151
    %5226 = vmatpush1.bf16.msra.mxu0 %v5150
    %5227 = vmatprep.subr.bf16.mxu0 %v5147
    %5228 = vmatpush1.bf16.msra.mxu0 %v5146
    %5229 = vmatprep.subr.bf16.mxu0 %v5143
    %5230 = vmatpush1.bf16.msra.mxu0 %v5142
    %5231 = vmatprep.subr.bf16.mxu0 %v5139
    %5232 = vmatpush1.bf16.msra.mxu0 %v5138
    %5233 = vmatprep.subr.bf16.mxu0 %v5135
    %5234 = vmatpush1.bf16.msra.mxu0 %v5134
    %5235 = vmatprep.subr.bf16.mxu0 %v5131
    %5236 = vmatpush1.bf16.msra.mxu0 %v5130
    %5237 = vmatprep.subr.bf16.mxu0 %v5127
    %5238 = vmatpush1.bf16.msra.mxu0 %v5126
    %5239 = vmatprep.subr.bf16.mxu0 %v5123
    %5240 = vmatpush1.bf16.msra.mxu0 %v5122
    %5241 = vmatprep.subr.bf16.mxu0 0
    %5242 = vmatpush2.bf16.msra.mxu0 0
    %5243 = vmatprep.subr.bf16.mxu0 0
    %5244 = vmatpush2.bf16.msra.mxu0 0
    %5245 = vmatprep.subr.bf16.mxu0 0
    %5246 = vmatpush2.bf16.msra.mxu0 0
    %5247 = vmatprep.subr.bf16.mxu0 0
    %5248 = vmatpush2.bf16.msra.mxu0 0
    %5249 = vmatprep.subr.bf16.mxu0 0
    %5250 = vmatpush2.bf16.msra.mxu0 0
    %5251 = vmatprep.subr.bf16.mxu0 0
    %5252 = vmatpush2.bf16.msra.mxu0 0
    %5253 = vmatprep.subr.bf16.mxu0 0
    %5254 = vmatpush2.bf16.msra.mxu0 0
    %5255 = vmatprep.subr.bf16.mxu0 0
    %5256 = vmatpush2.bf16.msra.mxu0 0
    %5257 = vmatprep.mubr.bf16.mxu0 0
    %5258 = vmatmul.mubr.bf16.gmra.mxu0 %v4985
    %v5259 = vpop.f32.mrf.mxu0
    %v5260 = vadd.f32 0.0, %v5259
    %v5261 = vpop.f32.mrf.mxu0
    %v5262 = vadd.f32 0.0, %v5261
    %v5263 = vpop.f32.mrf.mxu0
    %v5264 = vpop.f32.mrf.mxu0
    %5265 = vdwg.mxu0
    %v5266 = vadd.f32 %v4988, %v5219
    %v5267 = vadd.f32 %v4989, %v5221
    %v5268 = vadd.f32 %v4990, %v5260
    %v5269 = vadd.f32 %v4991, %v5262
    %v5270 = vxor.u32 %v5266, 2147483648
    %v5271 = vmul.f32 %v5270, 1.442695
    %v5272 = vpow.pop %v5271
    %v5273 = vadd.f32 %v5272, 1.0
    %v5274 = vrcp.pop %v5273
    %v5275 = vmul.f32 1.0, %v5274
    %v5276 = vxor.u32 %v5267, 2147483648
    %v5277 = vmul.f32 %v5276, 1.442695
    %v5278 = vpow.pop %v5277
    %v5279 = vadd.f32 %v5278, 1.0
    %v5280 = vrcp.pop %v5279
    %v5281 = vmul.f32 1.0, %v5280
    %v5282 = vtanh.pop %v5268
    %v5283 = vxor.u32 %v5269, 2147483648
    %v5284 = vmul.f32 %v5283, 1.442695
    %v5285 = vpow.pop %v5284
    %v5286 = vadd.f32 %v5285, 1.0
    %v5287 = vrcp.pop %v5286
    %v5288 = vmul.f32 1.0, %v5287
    %v5289 = vmul.f32 %v5281, %v4982
    %v5290 = vmul.f32 %v5275, %v5282
    %v5291 = vadd.f32 %v5289, %v5290
    %v5292 = vtanh.pop %v5291
    %v5293 = vmul.f32 %v5288, %v5292
    %v5294 = vpack.c.bf16 %v5293, %v5293
    %s5295 = scalar_lea.vmem [#allocation4], 20
    %5296 = vst [vmem:[%s5295] sm:$0xf] %v5294
    %v5297 = vld [vmem:[%s2389] sm:$0xff]
    %v5298 = vld [vmem:[%s2389 + $0x8] sm:$0xff]
    %v5299 = vld [vmem:[%s2389 + $0x10] sm:$0xff]
    %v5300 = vld [vmem:[%s2389 + $0x18] sm:$0xff]
    %v5301 = vld [vmem:[%s3447] sm:$0xff]
    %v5302 = vld [vmem:[%s3447 + $0x8] sm:$0xff]
    %v5303 = vld [vmem:[%s3447 + $0x10] sm:$0xff]
    %v5304 = vld [vmem:[%s3447 + $0x18] sm:$0xff]
    %v5305 = vld [vmem:[%s3447 + $0x20] sm:$0xff]
    %v5306 = vld [vmem:[%s3447 + $0x28] sm:$0xff]
    %v5307 = vld [vmem:[%s3447 + $0x30] sm:$0xff]
    %v5308 = vld [vmem:[%s3447 + $0x38] sm:$0xff]
    %v5309 = vld [vmem:[%s3447 + $0x40] sm:$0xff]
    %v5310 = vld [vmem:[%s3447 + $0x48] sm:$0xff]
    %v5311 = vld [vmem:[%s3447 + $0x50] sm:$0xff]
    %v5312 = vld [vmem:[%s3447 + $0x58] sm:$0xff]
    %v5313 = vld [vmem:[%s3447 + $0x60] sm:$0xff]
    %v5314 = vld [vmem:[%s3447 + $0x68] sm:$0xff]
    %v5315 = vld [vmem:[%s3447 + $0x70] sm:$0xff]
    %v5316 = vld [vmem:[%s3447 + $0x78] sm:$0xff]
    %v5317 = vld [vmem:[%s3447 + $0x80] sm:$0xff]
    %v5318 = vld [vmem:[%s3447 + $0x88] sm:$0xff]
    %v5319 = vld [vmem:[%s3447 + $0x90] sm:$0xff]
    %v5320 = vld [vmem:[%s3447 + $0x98] sm:$0xff]
    %v5321 = vld [vmem:[%s3447 + $0xa0] sm:$0xff]
    %v5322 = vld [vmem:[%s3447 + $0xa8] sm:$0xff]
    %v5323 = vld [vmem:[%s3447 + $0xb0] sm:$0xff]
    %v5324 = vld [vmem:[%s3447 + $0xb8] sm:$0xff]
    %v5325 = vld [vmem:[%s3447 + $0xc0] sm:$0xff]
    %v5326 = vld [vmem:[%s3447 + $0xc8] sm:$0xff]
    %v5327 = vld [vmem:[%s3447 + $0xd0] sm:$0xff]
    %v5328 = vld [vmem:[%s3447 + $0xd8] sm:$0xff]
    %v5329 = vld [vmem:[%s3447 + $0xe0] sm:$0xff]
    %v5330 = vld [vmem:[%s3447 + $0xe8] sm:$0xff]
    %v5331 = vld [vmem:[%s3447 + $0xf0] sm:$0xff]
    %v5332 = vld [vmem:[%s3447 + $0xf8] sm:$0xff]
    %v5365 = vunpack.c.l.b16 %v5301
    %v5366 = vunpack.c.h.b16 %v5301
    %v5367 = vunpack.c.l.b16 %v5302
    %v5368 = vunpack.c.h.b16 %v5302
    %v5369 = vunpack.c.l.b16 %v5303
    %v5370 = vunpack.c.h.b16 %v5303
    %v5371 = vunpack.c.l.b16 %v5304
    %v5372 = vunpack.c.h.b16 %v5304
    %v5373 = vunpack.c.l.b16 %v5305
    %v5374 = vunpack.c.h.b16 %v5305
    %v5375 = vunpack.c.l.b16 %v5306
    %v5376 = vunpack.c.h.b16 %v5306
    %v5377 = vunpack.c.l.b16 %v5307
    %v5378 = vunpack.c.h.b16 %v5307
    %v5379 = vunpack.c.l.b16 %v5308
    %v5380 = vunpack.c.h.b16 %v5308
    %v5381 = vunpack.c.l.b16 %v5309
    %v5382 = vunpack.c.h.b16 %v5309
    %v5383 = vunpack.c.l.b16 %v5310
    %v5384 = vunpack.c.h.b16 %v5310
    %v5385 = vunpack.c.l.b16 %v5311
    %v5386 = vunpack.c.h.b16 %v5311
    %v5387 = vunpack.c.l.b16 %v5312
    %v5388 = vunpack.c.h.b16 %v5312
    %v5389 = vunpack.c.l.b16 %v5313
    %v5390 = vunpack.c.h.b16 %v5313
    %v5391 = vunpack.c.l.b16 %v5314
    %v5392 = vunpack.c.h.b16 %v5314
    %v5393 = vunpack.c.l.b16 %v5315
    %v5394 = vunpack.c.h.b16 %v5315
    %v5395 = vunpack.c.l.b16 %v5316
    %v5396 = vunpack.c.h.b16 %v5316
    %v5397 = vunpack.c.l.b16 %v5317
    %v5398 = vunpack.c.h.b16 %v5317
    %v5399 = vunpack.c.l.b16 %v5318
    %v5400 = vunpack.c.h.b16 %v5318
    %v5401 = vunpack.c.l.b16 %v5319
    %v5402 = vunpack.c.h.b16 %v5319
    %v5403 = vunpack.c.l.b16 %v5320
    %v5404 = vunpack.c.h.b16 %v5320
    %v5405 = vunpack.c.l.b16 %v5321
    %v5406 = vunpack.c.h.b16 %v5321
    %v5407 = vunpack.c.l.b16 %v5322
    %v5408 = vunpack.c.h.b16 %v5322
    %v5409 = vunpack.c.l.b16 %v5323
    %v5410 = vunpack.c.h.b16 %v5323
    %v5411 = vunpack.c.l.b16 %v5324
    %v5412 = vunpack.c.h.b16 %v5324
    %v5413 = vunpack.c.l.b16 %v5325
    %v5414 = vunpack.c.h.b16 %v5325
    %v5415 = vunpack.c.l.b16 %v5326
    %v5416 = vunpack.c.h.b16 %v5326
    %v5417 = vunpack.c.l.b16 %v5327
    %v5418 = vunpack.c.h.b16 %v5327
    %v5419 = vunpack.c.l.b16 %v5328
    %v5420 = vunpack.c.h.b16 %v5328
    %v5421 = vunpack.c.l.b16 %v5329
    %v5422 = vunpack.c.h.b16 %v5329
    %v5423 = vunpack.c.l.b16 %v5330
    %v5424 = vunpack.c.h.b16 %v5330
    %v5425 = vunpack.c.l.b16 %v5331
    %v5426 = vunpack.c.h.b16 %v5331
    %v5427 = vunpack.c.l.b16 %v5332
    %v5428 = vunpack.c.h.b16 %v5332
    %v5429 = vpack.c.b16 %v5369, %v5365
    %v5430 = vpack.c.b16 %v5370, %v5366
    %v5431 = vpack.c.b16 %v5371, %v5367
    %v5432 = vpack.c.b16 %v5372, %v5368
    %v5433 = vpack.c.b16 %v5377, %v5373
    %v5434 = vpack.c.b16 %v5378, %v5374
    %v5435 = vpack.c.b16 %v5379, %v5375
    %v5436 = vpack.c.b16 %v5380, %v5376
    %v5437 = vpack.c.b16 %v5385, %v5381
    %v5438 = vpack.c.b16 %v5386, %v5382
    %v5439 = vpack.c.b16 %v5387, %v5383
    %v5440 = vpack.c.b16 %v5388, %v5384
    %v5441 = vpack.c.b16 %v5393, %v5389
    %v5442 = vpack.c.b16 %v5394, %v5390
    %v5443 = vpack.c.b16 %v5395, %v5391
    %v5444 = vpack.c.b16 %v5396, %v5392
    %v5445 = vpack.c.b16 %v5401, %v5397
    %v5446 = vpack.c.b16 %v5402, %v5398
    %v5447 = vpack.c.b16 %v5403, %v5399
    %v5448 = vpack.c.b16 %v5404, %v5400
    %v5449 = vpack.c.b16 %v5409, %v5405
    %v5450 = vpack.c.b16 %v5410, %v5406
    %v5451 = vpack.c.b16 %v5411, %v5407
    %v5452 = vpack.c.b16 %v5412, %v5408
    %v5453 = vpack.c.b16 %v5417, %v5413
    %v5454 = vpack.c.b16 %v5418, %v5414
    %v5455 = vpack.c.b16 %v5419, %v5415
    %v5456 = vpack.c.b16 %v5420, %v5416
    %v5457 = vpack.c.b16 %v5425, %v5421
    %v5458 = vpack.c.b16 %v5426, %v5422
    %v5459 = vpack.c.b16 %v5427, %v5423
    %v5460 = vpack.c.b16 %v5428, %v5424
    %5493 = vmatprep.subr.bf16.mxu0 %v5458
    %5494 = vmatpush1.bf16.msra.mxu0 %v5457
    %5495 = vmatprep.subr.bf16.mxu0 %v5454
    %5496 = vmatpush1.bf16.msra.mxu0 %v5453
    %5497 = vmatprep.subr.bf16.mxu0 %v5450
    %5498 = vmatpush1.bf16.msra.mxu0 %v5449
    %5499 = vmatprep.subr.bf16.mxu0 %v5446
    %5500 = vmatpush1.bf16.msra.mxu0 %v5445
    %5501 = vmatprep.subr.bf16.mxu0 %v5442
    %5502 = vmatpush1.bf16.msra.mxu0 %v5441
    %5503 = vmatprep.subr.bf16.mxu0 %v5438
    %5504 = vmatpush1.bf16.msra.mxu0 %v5437
    %5505 = vmatprep.subr.bf16.mxu0 %v5434
    %5506 = vmatpush1.bf16.msra.mxu0 %v5433
    %5507 = vmatprep.subr.bf16.mxu0 %v5430
    %5508 = vmatpush1.bf16.msra.mxu0 %v5429
    %5509 = vmatprep.subr.bf16.mxu0 0
    %5510 = vmatpush2.bf16.msra.mxu0 0
    %5511 = vmatprep.subr.bf16.mxu0 0
    %5512 = vmatpush2.bf16.msra.mxu0 0
    %5513 = vmatprep.subr.bf16.mxu0 0
    %5514 = vmatpush2.bf16.msra.mxu0 0
    %5515 = vmatprep.subr.bf16.mxu0 0
    %5516 = vmatpush2.bf16.msra.mxu0 0
    %5517 = vmatprep.subr.bf16.mxu0 0
    %5518 = vmatpush2.bf16.msra.mxu0 0
    %5519 = vmatprep.subr.bf16.mxu0 0
    %5520 = vmatpush2.bf16.msra.mxu0 0
    %5521 = vmatprep.subr.bf16.mxu0 0
    %5522 = vmatpush2.bf16.msra.mxu0 0
    %5523 = vmatprep.subr.bf16.mxu0 0
    %5524 = vmatpush2.bf16.msra.mxu0 0
    %5525 = vmatprep.mubr.bf16.mxu0 0
    %5526 = vmatmul.mubr.bf16.gmra.mxu0 %v5294
    %v5527 = vpop.f32.mrf.mxu0
    %v5528 = vadd.f32 0.0, %v5527
    %v5529 = vpop.f32.mrf.mxu0
    %v5530 = vadd.f32 0.0, %v5529
    %v5531 = vpop.f32.mrf.mxu0
    %v5532 = vpop.f32.mrf.mxu0
    %5533 = vdwg.mxu0
    %5534 = vmatprep.subr.bf16.mxu0 %v5460
    %5535 = vmatpush1.bf16.msra.mxu0 %v5459
    %5536 = vmatprep.subr.bf16.mxu0 %v5456
    %5537 = vmatpush1.bf16.msra.mxu0 %v5455
    %5538 = vmatprep.subr.bf16.mxu0 %v5452
    %5539 = vmatpush1.bf16.msra.mxu0 %v5451
    %5540 = vmatprep.subr.bf16.mxu0 %v5448
    %5541 = vmatpush1.bf16.msra.mxu0 %v5447
    %5542 = vmatprep.subr.bf16.mxu0 %v5444
    %5543 = vmatpush1.bf16.msra.mxu0 %v5443
    %5544 = vmatprep.subr.bf16.mxu0 %v5440
    %5545 = vmatpush1.bf16.msra.mxu0 %v5439
    %5546 = vmatprep.subr.bf16.mxu0 %v5436
    %5547 = vmatpush1.bf16.msra.mxu0 %v5435
    %5548 = vmatprep.subr.bf16.mxu0 %v5432
    %5549 = vmatpush1.bf16.msra.mxu0 %v5431
    %5550 = vmatprep.subr.bf16.mxu0 0
    %5551 = vmatpush2.bf16.msra.mxu0 0
    %5552 = vmatprep.subr.bf16.mxu0 0
    %5553 = vmatpush2.bf16.msra.mxu0 0
    %5554 = vmatprep.subr.bf16.mxu0 0
    %5555 = vmatpush2.bf16.msra.mxu0 0
    %5556 = vmatprep.subr.bf16.mxu0 0
    %5557 = vmatpush2.bf16.msra.mxu0 0
    %5558 = vmatprep.subr.bf16.mxu0 0
    %5559 = vmatpush2.bf16.msra.mxu0 0
    %5560 = vmatprep.subr.bf16.mxu0 0
    %5561 = vmatpush2.bf16.msra.mxu0 0
    %5562 = vmatprep.subr.bf16.mxu0 0
    %5563 = vmatpush2.bf16.msra.mxu0 0
    %5564 = vmatprep.subr.bf16.mxu0 0
    %5565 = vmatpush2.bf16.msra.mxu0 0
    %5566 = vmatprep.mubr.bf16.mxu0 0
    %5567 = vmatmul.mubr.bf16.gmra.mxu0 %v5294
    %v5568 = vpop.f32.mrf.mxu0
    %v5569 = vadd.f32 0.0, %v5568
    %v5570 = vpop.f32.mrf.mxu0
    %v5571 = vadd.f32 0.0, %v5570
    %v5572 = vpop.f32.mrf.mxu0
    %v5573 = vpop.f32.mrf.mxu0
    %5574 = vdwg.mxu0
    %v5575 = vadd.f32 %v5297, %v5528
    %v5576 = vadd.f32 %v5298, %v5530
    %v5577 = vadd.f32 %v5299, %v5569
    %v5578 = vadd.f32 %v5300, %v5571
    %v5579 = vxor.u32 %v5575, 2147483648
    %v5580 = vmul.f32 %v5579, 1.442695
    %v5581 = vpow.pop %v5580
    %v5582 = vadd.f32 %v5581, 1.0
    %v5583 = vrcp.pop %v5582
    %v5584 = vmul.f32 1.0, %v5583
    %v5585 = vxor.u32 %v5576, 2147483648
    %v5586 = vmul.f32 %v5585, 1.442695
    %v5587 = vpow.pop %v5586
    %v5588 = vadd.f32 %v5587, 1.0
    %v5589 = vrcp.pop %v5588
    %v5590 = vmul.f32 1.0, %v5589
    %v5591 = vtanh.pop %v5577
    %v5592 = vxor.u32 %v5578, 2147483648
    %v5593 = vmul.f32 %v5592, 1.442695
    %v5594 = vpow.pop %v5593
    %v5595 = vadd.f32 %v5594, 1.0
    %v5596 = vrcp.pop %v5595
    %v5597 = vmul.f32 1.0, %v5596
    %v5598 = vmul.f32 %v5590, %v5291
    %v5599 = vmul.f32 %v5584, %v5591
    %v5600 = vadd.f32 %v5598, %v5599
    %v5601 = vtanh.pop %v5600
    %v5602 = vmul.f32 %v5597, %v5601
    %v5603 = vpack.c.bf16 %v5602, %v5602
    %s5604 = scalar_lea.vmem [#allocation4], 24
    %5605 = vst [vmem:[%s5604] sm:$0xf] %v5603
    %v5606 = vld [vmem:[%s2701] sm:$0xff]
    %v5607 = vld [vmem:[%s2701 + $0x8] sm:$0xff]
    %v5608 = vld [vmem:[%s2701 + $0x10] sm:$0xff]
    %v5609 = vld [vmem:[%s2701 + $0x18] sm:$0xff]
    %v5610 = vld [vmem:[%s3447] sm:$0xff]
    %v5611 = vld [vmem:[%s3447 + $0x8] sm:$0xff]
    %v5612 = vld [vmem:[%s3447 + $0x10] sm:$0xff]
    %v5613 = vld [vmem:[%s3447 + $0x18] sm:$0xff]
    %v5614 = vld [vmem:[%s3447 + $0x20] sm:$0xff]
    %v5615 = vld [vmem:[%s3447 + $0x28] sm:$0xff]
    %v5616 = vld [vmem:[%s3447 + $0x30] sm:$0xff]
    %v5617 = vld [vmem:[%s3447 + $0x38] sm:$0xff]
    %v5618 = vld [vmem:[%s3447 + $0x40] sm:$0xff]
    %v5619 = vld [vmem:[%s3447 + $0x48] sm:$0xff]
    %v5620 = vld [vmem:[%s3447 + $0x50] sm:$0xff]
    %v5621 = vld [vmem:[%s3447 + $0x58] sm:$0xff]
    %v5622 = vld [vmem:[%s3447 + $0x60] sm:$0xff]
    %v5623 = vld [vmem:[%s3447 + $0x68] sm:$0xff]
    %v5624 = vld [vmem:[%s3447 + $0x70] sm:$0xff]
    %v5625 = vld [vmem:[%s3447 + $0x78] sm:$0xff]
    %v5626 = vld [vmem:[%s3447 + $0x80] sm:$0xff]
    %v5627 = vld [vmem:[%s3447 + $0x88] sm:$0xff]
    %v5628 = vld [vmem:[%s3447 + $0x90] sm:$0xff]
    %v5629 = vld [vmem:[%s3447 + $0x98] sm:$0xff]
    %v5630 = vld [vmem:[%s3447 + $0xa0] sm:$0xff]
    %v5631 = vld [vmem:[%s3447 + $0xa8] sm:$0xff]
    %v5632 = vld [vmem:[%s3447 + $0xb0] sm:$0xff]
    %v5633 = vld [vmem:[%s3447 + $0xb8] sm:$0xff]
    %v5634 = vld [vmem:[%s3447 + $0xc0] sm:$0xff]
    %v5635 = vld [vmem:[%s3447 + $0xc8] sm:$0xff]
    %v5636 = vld [vmem:[%s3447 + $0xd0] sm:$0xff]
    %v5637 = vld [vmem:[%s3447 + $0xd8] sm:$0xff]
    %v5638 = vld [vmem:[%s3447 + $0xe0] sm:$0xff]
    %v5639 = vld [vmem:[%s3447 + $0xe8] sm:$0xff]
    %v5640 = vld [vmem:[%s3447 + $0xf0] sm:$0xff]
    %v5641 = vld [vmem:[%s3447 + $0xf8] sm:$0xff]
    %v5674 = vunpack.c.l.b16 %v5610
    %v5675 = vunpack.c.h.b16 %v5610
    %v5676 = vunpack.c.l.b16 %v5611
    %v5677 = vunpack.c.h.b16 %v5611
    %v5678 = vunpack.c.l.b16 %v5612
    %v5679 = vunpack.c.h.b16 %v5612
    %v5680 = vunpack.c.l.b16 %v5613
    %v5681 = vunpack.c.h.b16 %v5613
    %v5682 = vunpack.c.l.b16 %v5614
    %v5683 = vunpack.c.h.b16 %v5614
    %v5684 = vunpack.c.l.b16 %v5615
    %v5685 = vunpack.c.h.b16 %v5615
    %v5686 = vunpack.c.l.b16 %v5616
    %v5687 = vunpack.c.h.b16 %v5616
    %v5688 = vunpack.c.l.b16 %v5617
    %v5689 = vunpack.c.h.b16 %v5617
    %v5690 = vunpack.c.l.b16 %v5618
    %v5691 = vunpack.c.h.b16 %v5618
    %v5692 = vunpack.c.l.b16 %v5619
    %v5693 = vunpack.c.h.b16 %v5619
    %v5694 = vunpack.c.l.b16 %v5620
    %v5695 = vunpack.c.h.b16 %v5620
    %v5696 = vunpack.c.l.b16 %v5621
    %v5697 = vunpack.c.h.b16 %v5621
    %v5698 = vunpack.c.l.b16 %v5622
    %v5699 = vunpack.c.h.b16 %v5622
    %v5700 = vunpack.c.l.b16 %v5623
    %v5701 = vunpack.c.h.b16 %v5623
    %v5702 = vunpack.c.l.b16 %v5624
    %v5703 = vunpack.c.h.b16 %v5624
    %v5704 = vunpack.c.l.b16 %v5625
    %v5705 = vunpack.c.h.b16 %v5625
    %v5706 = vunpack.c.l.b16 %v5626
    %v5707 = vunpack.c.h.b16 %v5626
    %v5708 = vunpack.c.l.b16 %v5627
    %v5709 = vunpack.c.h.b16 %v5627
    %v5710 = vunpack.c.l.b16 %v5628
    %v5711 = vunpack.c.h.b16 %v5628
    %v5712 = vunpack.c.l.b16 %v5629
    %v5713 = vunpack.c.h.b16 %v5629
    %v5714 = vunpack.c.l.b16 %v5630
    %v5715 = vunpack.c.h.b16 %v5630
    %v5716 = vunpack.c.l.b16 %v5631
    %v5717 = vunpack.c.h.b16 %v5631
    %v5718 = vunpack.c.l.b16 %v5632
    %v5719 = vunpack.c.h.b16 %v5632
    %v5720 = vunpack.c.l.b16 %v5633
    %v5721 = vunpack.c.h.b16 %v5633
    %v5722 = vunpack.c.l.b16 %v5634
    %v5723 = vunpack.c.h.b16 %v5634
    %v5724 = vunpack.c.l.b16 %v5635
    %v5725 = vunpack.c.h.b16 %v5635
    %v5726 = vunpack.c.l.b16 %v5636
    %v5727 = vunpack.c.h.b16 %v5636
    %v5728 = vunpack.c.l.b16 %v5637
    %v5729 = vunpack.c.h.b16 %v5637
    %v5730 = vunpack.c.l.b16 %v5638
    %v5731 = vunpack.c.h.b16 %v5638
    %v5732 = vunpack.c.l.b16 %v5639
    %v5733 = vunpack.c.h.b16 %v5639
    %v5734 = vunpack.c.l.b16 %v5640
    %v5735 = vunpack.c.h.b16 %v5640
    %v5736 = vunpack.c.l.b16 %v5641
    %v5737 = vunpack.c.h.b16 %v5641
    %v5738 = vpack.c.b16 %v5678, %v5674
    %v5739 = vpack.c.b16 %v5679, %v5675
    %v5740 = vpack.c.b16 %v5680, %v5676
    %v5741 = vpack.c.b16 %v5681, %v5677
    %v5742 = vpack.c.b16 %v5686, %v5682
    %v5743 = vpack.c.b16 %v5687, %v5683
    %v5744 = vpack.c.b16 %v5688, %v5684
    %v5745 = vpack.c.b16 %v5689, %v5685
    %v5746 = vpack.c.b16 %v5694, %v5690
    %v5747 = vpack.c.b16 %v5695, %v5691
    %v5748 = vpack.c.b16 %v5696, %v5692
    %v5749 = vpack.c.b16 %v5697, %v5693
    %v5750 = vpack.c.b16 %v5702, %v5698
    %v5751 = vpack.c.b16 %v5703, %v5699
    %v5752 = vpack.c.b16 %v5704, %v5700
    %v5753 = vpack.c.b16 %v5705, %v5701
    %v5754 = vpack.c.b16 %v5710, %v5706
    %v5755 = vpack.c.b16 %v5711, %v5707
    %v5756 = vpack.c.b16 %v5712, %v5708
    %v5757 = vpack.c.b16 %v5713, %v5709
    %v5758 = vpack.c.b16 %v5718, %v5714
    %v5759 = vpack.c.b16 %v5719, %v5715
    %v5760 = vpack.c.b16 %v5720, %v5716
    %v5761 = vpack.c.b16 %v5721, %v5717
    %v5762 = vpack.c.b16 %v5726, %v5722
    %v5763 = vpack.c.b16 %v5727, %v5723
    %v5764 = vpack.c.b16 %v5728, %v5724
    %v5765 = vpack.c.b16 %v5729, %v5725
    %v5766 = vpack.c.b16 %v5734, %v5730
    %v5767 = vpack.c.b16 %v5735, %v5731
    %v5768 = vpack.c.b16 %v5736, %v5732
    %v5769 = vpack.c.b16 %v5737, %v5733
    %5802 = vmatprep.subr.bf16.mxu0 %v5767
    %5803 = vmatpush1.bf16.msra.mxu0 %v5766
    %5804 = vmatprep.subr.bf16.mxu0 %v5763
    %5805 = vmatpush1.bf16.msra.mxu0 %v5762
    %5806 = vmatprep.subr.bf16.mxu0 %v5759
    %5807 = vmatpush1.bf16.msra.mxu0 %v5758
    %5808 = vmatprep.subr.bf16.mxu0 %v5755
    %5809 = vmatpush1.bf16.msra.mxu0 %v5754
    %5810 = vmatprep.subr.bf16.mxu0 %v5751
    %5811 = vmatpush1.bf16.msra.mxu0 %v5750
    %5812 = vmatprep.subr.bf16.mxu0 %v5747
    %5813 = vmatpush1.bf16.msra.mxu0 %v5746
    %5814 = vmatprep.subr.bf16.mxu0 %v5743
    %5815 = vmatpush1.bf16.msra.mxu0 %v5742
    %5816 = vmatprep.subr.bf16.mxu0 %v5739
    %5817 = vmatpush1.bf16.msra.mxu0 %v5738
    %5818 = vmatprep.subr.bf16.mxu0 0
    %5819 = vmatpush2.bf16.msra.mxu0 0
    %5820 = vmatprep.subr.bf16.mxu0 0
    %5821 = vmatpush2.bf16.msra.mxu0 0
    %5822 = vmatprep.subr.bf16.mxu0 0
    %5823 = vmatpush2.bf16.msra.mxu0 0
    %5824 = vmatprep.subr.bf16.mxu0 0
    %5825 = vmatpush2.bf16.msra.mxu0 0
    %5826 = vmatprep.subr.bf16.mxu0 0
    %5827 = vmatpush2.bf16.msra.mxu0 0
    %5828 = vmatprep.subr.bf16.mxu0 0
    %5829 = vmatpush2.bf16.msra.mxu0 0
    %5830 = vmatprep.subr.bf16.mxu0 0
    %5831 = vmatpush2.bf16.msra.mxu0 0
    %5832 = vmatprep.subr.bf16.mxu0 0
    %5833 = vmatpush2.bf16.msra.mxu0 0
    %5834 = vmatprep.mubr.bf16.mxu0 0
    %5835 = vmatmul.mubr.bf16.gmra.mxu0 %v5603
    %v5836 = vpop.f32.mrf.mxu0
    %v5837 = vadd.f32 0.0, %v5836
    %v5838 = vpop.f32.mrf.mxu0
    %v5839 = vadd.f32 0.0, %v5838
    %v5840 = vpop.f32.mrf.mxu0
    %v5841 = vpop.f32.mrf.mxu0
    %5842 = vdwg.mxu0
    %5843 = vmatprep.subr.bf16.mxu0 %v5769
    %5844 = vmatpush1.bf16.msra.mxu0 %v5768
    %5845 = vmatprep.subr.bf16.mxu0 %v5765
    %5846 = vmatpush1.bf16.msra.mxu0 %v5764
    %5847 = vmatprep.subr.bf16.mxu0 %v5761
    %5848 = vmatpush1.bf16.msra.mxu0 %v5760
    %5849 = vmatprep.subr.bf16.mxu0 %v5757
    %5850 = vmatpush1.bf16.msra.mxu0 %v5756
    %5851 = vmatprep.subr.bf16.mxu0 %v5753
    %5852 = vmatpush1.bf16.msra.mxu0 %v5752
    %5853 = vmatprep.subr.bf16.mxu0 %v5749
    %5854 = vmatpush1.bf16.msra.mxu0 %v5748
    %5855 = vmatprep.subr.bf16.mxu0 %v5745
    %5856 = vmatpush1.bf16.msra.mxu0 %v5744
    %5857 = vmatprep.subr.bf16.mxu0 %v5741
    %5858 = vmatpush1.bf16.msra.mxu0 %v5740
    %5859 = vmatprep.subr.bf16.mxu0 0
    %5860 = vmatpush2.bf16.msra.mxu0 0
    %5861 = vmatprep.subr.bf16.mxu0 0
    %5862 = vmatpush2.bf16.msra.mxu0 0
    %5863 = vmatprep.subr.bf16.mxu0 0
    %5864 = vmatpush2.bf16.msra.mxu0 0
    %5865 = vmatprep.subr.bf16.mxu0 0
    %5866 = vmatpush2.bf16.msra.mxu0 0
    %5867 = vmatprep.subr.bf16.mxu0 0
    %5868 = vmatpush2.bf16.msra.mxu0 0
    %5869 = vmatprep.subr.bf16.mxu0 0
    %5870 = vmatpush2.bf16.msra.mxu0 0
    %5871 = vmatprep.subr.bf16.mxu0 0
    %5872 = vmatpush2.bf16.msra.mxu0 0
    %5873 = vmatprep.subr.bf16.mxu0 0
    %5874 = vmatpush2.bf16.msra.mxu0 0
    %5875 = vmatprep.mubr.bf16.mxu0 0
    %5876 = vmatmul.mubr.bf16.gmra.mxu0 %v5603
    %v5877 = vpop.f32.mrf.mxu0
    %v5878 = vadd.f32 0.0, %v5877
    %v5879 = vpop.f32.mrf.mxu0
    %v5880 = vadd.f32 0.0, %v5879
    %v5881 = vpop.f32.mrf.mxu0
    %v5882 = vpop.f32.mrf.mxu0
    %5883 = vdwg.mxu0
    %v5884 = vadd.f32 %v5606, %v5837
    %v5885 = vadd.f32 %v5607, %v5839
    %v5886 = vadd.f32 %v5608, %v5878
    %v5887 = vadd.f32 %v5609, %v5880
    %v5888 = vxor.u32 %v5884, 2147483648
    %v5889 = vmul.f32 %v5888, 1.442695
    %v5890 = vpow.pop %v5889
    %v5891 = vadd.f32 %v5890, 1.0
    %v5892 = vrcp.pop %v5891
    %v5893 = vmul.f32 1.0, %v5892
    %v5894 = vxor.u32 %v5885, 2147483648
    %v5895 = vmul.f32 %v5894, 1.442695
    %v5896 = vpow.pop %v5895
    %v5897 = vadd.f32 %v5896, 1.0
    %v5898 = vrcp.pop %v5897
    %v5899 = vmul.f32 1.0, %v5898
    %v5900 = vtanh.pop %v5886
    %v5901 = vxor.u32 %v5887, 2147483648
    %v5902 = vmul.f32 %v5901, 1.442695
    %v5903 = vpow.pop %v5902
    %v5904 = vadd.f32 %v5903, 1.0
    %v5905 = vrcp.pop %v5904
    %v5906 = vmul.f32 1.0, %v5905
    %v5907 = vmul.f32 %v5899, %v5600
    %v5908 = vmul.f32 %v5893, %v5900
    %v5909 = vadd.f32 %v5907, %v5908
    %v5910 = vtanh.pop %v5909
    %v5911 = vmul.f32 %v5906, %v5910
    %v5912 = vpack.c.bf16 %v5911, %v5911
    %s5913 = scalar_lea.vmem [#allocation4], 28
    %5914 = vst [vmem:[%s5913] sm:$0xf] %v5912
    %5915 = vst [vmem:[%s3438] sm:$0xff] %v5911
    %5916 = vst [vmem:[%s3440] sm:$0xff] %v5909
    %v5917 = vld [vmem:[#allocation4] sm:$0xf]
    %v5918 = vld [vmem:[#allocation4 + $0x4] sm:$0xf]
    %v5919 = vld [vmem:[#allocation4 + $0x8] sm:$0xf]
    %v5920 = vld [vmem:[#allocation4 + $0xc] sm:$0xf]
    %v5921 = vld [vmem:[#allocation4 + $0x10] sm:$0xf]
    %v5922 = vld [vmem:[#allocation4 + $0x14] sm:$0xf]
    %v5923 = vld [vmem:[#allocation4 + $0x18] sm:$0xf]
    %v5924 = vld [vmem:[#allocation4 + $0x1c] sm:$0xf]
    %v5925 = vld [vmem:[%s5] sm:$0xf]
    %v5926 = vld [vmem:[%s5 + $0x4] sm:$0xf]
    %v5927 = vld [vmem:[%s5 + $0x8] sm:$0xf]
    %v5928 = vld [vmem:[%s5 + $0xc] sm:$0xf]
    %v5929 = vld [vmem:[%s5 + $0x10] sm:$0xf]
    %v5930 = vld [vmem:[%s5 + $0x14] sm:$0xf]
    %v5931 = vld [vmem:[%s5 + $0x18] sm:$0xf]
    %v5932 = vld [vmem:[%s5 + $0x1c] sm:$0xf]
    %v5933 = vld [vmem:[%s5 + $0x20] sm:$0xf]
    %v5934 = vld [vmem:[%s5 + $0x24] sm:$0xf]
    %v5935 = vld [vmem:[%s5 + $0x28] sm:$0xf]
    %v5936 = vld [vmem:[%s5 + $0x2c] sm:$0xf]
    %v5937 = vld [vmem:[%s5 + $0x30] sm:$0xf]
    %v5938 = vld [vmem:[%s5 + $0x34] sm:$0xf]
    %v5939 = vld [vmem:[%s5 + $0x38] sm:$0xf]
    %v5940 = vld [vmem:[%s5 + $0x3c] sm:$0xf]
    %v5941 = vld [vmem:[%s6] sm:$0x1]
    %v5943 = vlaneseq
    %v5944 = vshrl.u32 %v5943, 7
    %v5945 = vsub.s32 0, %v5944
    %v5946 = vrot.slane %v5941, %v5945
    %v5956 = vunpack.c.l.b16 %v5917
    %v5957 = vunpack.c.l.b16 %v5918
    %v5958 = vunpack.c.l.b16 %v5919
    %v5959 = vunpack.c.l.b16 %v5920
    %v5960 = vunpack.c.l.b16 %v5921
    %v5961 = vunpack.c.l.b16 %v5922
    %v5962 = vunpack.c.l.b16 %v5923
    %v5963 = vunpack.c.l.b16 %v5924
    %v5964 = vpack.c.b16 %v5957, %v5956
    %v5965 = vpack.c.b16 %v5959, %v5958
    %v5966 = vpack.c.b16 %v5961, %v5960
    %v5967 = vpack.c.b16 %v5963, %v5962
    %v5988 = vunpack.c.l.b16 %v5925
    %v5989 = vunpack.c.l.b16 %v5926
    %v5990 = vunpack.c.l.b16 %v5927
    %v5991 = vunpack.c.l.b16 %v5928
    %v5992 = vunpack.c.l.b16 %v5929
    %v5993 = vunpack.c.l.b16 %v5930
    %v5994 = vunpack.c.l.b16 %v5931
    %v5995 = vunpack.c.l.b16 %v5932
    %v5996 = vunpack.c.l.b16 %v5933
    %v5997 = vunpack.c.l.b16 %v5934
    %v5998 = vunpack.c.l.b16 %v5935
    %v5999 = vunpack.c.l.b16 %v5936
    %v6000 = vunpack.c.l.b16 %v5937
    %v6001 = vunpack.c.l.b16 %v5938
    %v6002 = vunpack.c.l.b16 %v5939
    %v6003 = vunpack.c.l.b16 %v5940
    %v6004 = vpack.c.b16 %v5989, %v5988
    %v6005 = vpack.c.b16 %v5991, %v5990
    %v6006 = vpack.c.b16 %v5993, %v5992
    %v6007 = vpack.c.b16 %v5995, %v5994
    %v6008 = vpack.c.b16 %v5997, %v5996
    %v6009 = vpack.c.b16 %v5999, %v5998
    %v6010 = vpack.c.b16 %v6001, %v6000
    %v6011 = vpack.c.b16 %v6003, %v6002
    %6020 = vmatprep.subr.bf16.mxu0 0
    %6021 = vmatpush1.bf16.msra.mxu0 %v6011
    %6022 = vmatprep.subr.bf16.mxu0 0
    %6023 = vmatpush1.bf16.msra.mxu0 %v6010
    %6024 = vmatprep.subr.bf16.mxu0 0
    %6025 = vmatpush1.bf16.msra.mxu0 %v6009
    %6026 = vmatprep.subr.bf16.mxu0 0
    %6027 = vmatpush1.bf16.msra.mxu0 %v6008
    %6028 = vmatprep.subr.bf16.mxu0 0
    %6029 = vmatpush1.bf16.msra.mxu0 %v6007
    %6030 = vmatprep.subr.bf16.mxu0 0
    %6031 = vmatpush1.bf16.msra.mxu0 %v6006
    %6032 = vmatprep.subr.bf16.mxu0 0
    %6033 = vmatpush1.bf16.msra.mxu0 %v6005
    %6034 = vmatprep.subr.bf16.mxu0 0
    %6035 = vmatpush1.bf16.msra.mxu0 %v6004
    %6036 = vmatprep.subr.bf16.mxu0 0
    %6037 = vmatpush2.bf16.msra.mxu0 0
    %6038 = vmatprep.subr.bf16.mxu0 0
    %6039 = vmatpush2.bf16.msra.mxu0 0
    %6040 = vmatprep.subr.bf16.mxu0 0
    %6041 = vmatpush2.bf16.msra.mxu0 0
    %6042 = vmatprep.subr.bf16.mxu0 0
    %6043 = vmatpush2.bf16.msra.mxu0 0
    %6044 = vmatprep.subr.bf16.mxu0 0
    %6045 = vmatpush2.bf16.msra.mxu0 0
    %6046 = vmatprep.subr.bf16.mxu0 0
    %6047 = vmatpush2.bf16.msra.mxu0 0
    %6048 = vmatprep.subr.bf16.mxu0 0
    %6049 = vmatpush2.bf16.msra.mxu0 0
    %6050 = vmatprep.subr.bf16.mxu0 0
    %6051 = vmatpush2.bf16.msra.mxu0 0
    %6052 = vmatprep.mubr.bf16.mxu0 0
    %6053 = vmatmul.mubr.bf16.gmra.mxu0 %v5964
    %v6054 = vpop.f32.mrf.mxu0
    %v6055 = vadd.f32 %v5946, %v6054
    %v6056 = vpop.f32.mrf.mxu0
    %v6057 = vpop.f32.mrf.mxu0
    %v6058 = vadd.f32 %v5946, %v6057
    %v6059 = vpop.f32.mrf.mxu0
    %6060 = vmatprep.mubr.bf16.mxu0 0
    %6061 = vmatmul.mubr.bf16.gmra.mxu0 %v5965
    %v6062 = vpop.f32.mrf.mxu0
    %v6063 = vadd.f32 %v5946, %v6062
    %v6064 = vpop.f32.mrf.mxu0
    %v6065 = vpop.f32.mrf.mxu0
    %v6066 = vadd.f32 %v5946, %v6065
    %v6067 = vpop.f32.mrf.mxu0
    %6068 = vmatprep.mubr.bf16.mxu0 0
    %6069 = vmatmul.mubr.bf16.gmra.mxu0 %v5966
    %v6070 = vpop.f32.mrf.mxu0
    %v6071 = vadd.f32 %v5946, %v6070
    %v6072 = vpop.f32.mrf.mxu0
    %v6073 = vpop.f32.mrf.mxu0
    %v6074 = vadd.f32 %v5946, %v6073
    %v6075 = vpop.f32.mrf.mxu0
    %6076 = vmatprep.mubr.bf16.mxu0 0
    %6077 = vmatmul.mubr.bf16.gmra.mxu0 %v5967
    %v6078 = vpop.f32.mrf.mxu0
    %v6079 = vadd.f32 %v5946, %v6078
    %v6080 = vpop.f32.mrf.mxu0
    %v6081 = vpop.f32.mrf.mxu0
    %v6082 = vadd.f32 %v5946, %v6081
    %v6083 = vpop.f32.mrf.mxu0
    %6084 = vdwg.mxu0
    %6085 = vst [vmem:[%s9] sm:$0xff] %v6055
    %6086 = vst [vmem:[%s9 + $0x8] sm:$0xff] %v6058
    %6087 = vst [vmem:[%s9 + $0x10] sm:$0xff] %v6063
    %6088 = vst [vmem:[%s9 + $0x18] sm:$0xff] %v6066
    %6089 = vst [vmem:[%s9 + $0x20] sm:$0xff] %v6071
    %6090 = vst [vmem:[%s9 + $0x28] sm:$0xff] %v6074
    %6091 = vst [vmem:[%s9 + $0x30] sm:$0xff] %v6079
    %6092 = vst [vmem:[%s9 + $0x38] sm:$0xff] %v6082
    // Predicated region
    $region54: #{forward.1} parent=1 // pred_check
      _
    $region55: #{forward.1} parent=1 // pred_check_branch
      %6094 = sbr.rel (0) target = $region57
    $region56: #{forward.1} parent=1 // pred_region
      _
    $region57: #{forward.1} parent=1 // pred_fallthru
      _
    // Predicated region
    $region58: #{forward.1} parent=1 // pred_check
      _
    $region59: #{forward.1} parent=1 // pred_check_branch
      %6096 = sbr.rel (0) target = $region61
    $region60: #{forward.1} parent=1 // pred_region
      _
    $region61: #{forward.1} parent=1 // pred_fallthru
      _
    // Predicated region
    $region62: #{forward.1} parent=1 // pred_check
      _
    $region63: #{forward.1} parent=1 // pred_check_branch
      %6098 = sbr.rel (0) target = $region65
    $region64: #{forward.1} parent=1 // pred_region
      _
    $region65: #{forward.1} parent=1 // pred_fallthru
      _
    // Predicated region
    $region66: #{forward.1} parent=1 // pred_check
      _
    $region67: #{forward.1} parent=1 // pred_check_branch
      %6100 = sbr.rel (0) target = $region69
    $region68: #{forward.1} parent=1 // pred_region
      _
    $region69: #{forward.1} parent=1 // pred_fallthru
      _
    // Predicated region
    $region70: #{forward.1} parent=1 // pred_check
      _
    $region71: #{forward.1} parent=1 // pred_check_branch
      %6102 = sbr.rel (0) target = $region73
    $region72: #{forward.1} parent=1 // pred_region
      _
    $region73: #{forward.1} parent=1 // pred_fallthru
      _
    // Predicated region
    $region74: #{forward.1} parent=1 // pred_check
      _
    $region75: #{forward.1} parent=1 // pred_check_branch
      %6104 = sbr.rel (0) target = $region77
    $region76: #{forward.1} parent=1 // pred_region
      _
    $region77: #{forward.1} parent=1 // pred_fallthru
      _
    %6105 = vsyncpa [#allocation6], 1
    %6106 = vsyncpa [#allocation8], 1

</llo_original>
